<compile_context>
chip_gen: v6e
topology: v6e:2x2x1
jax: 0.10.0
libtpu: 0.0.40
codegen_flags: <defaults>
</compile_context>

<pallas_src>
import math
import functools

import jax
import jax.numpy as jnp
from jax.experimental import pallas as pl
from jax.experimental.pallas import tpu as pltpu


def _layer_norm(x, gamma, beta, eps=1e-6):
    # Two-pass (centered) variance: robust when |mean| >> std (review concern).
    mean = jnp.mean(x, axis=-1, keepdims=True)
    xc = x - mean
    var = jnp.mean(xc * xc, axis=-1, keepdims=True)
    return xc * jax.lax.rsqrt(var + eps) * gamma + beta


def encoder_block_kernel(x_ref, bias_ref,
                         wq_ref, bq_ref, wk_ref, bk_ref,
                         wv_ref, bv_ref, wo_ref, bo_ref,
                         g1_ref, be1_ref, g2_ref, be2_ref,
                         w1_ref, b1_ref, w2_ref, b2_ref,
                         out_ref,
                         h_scr, kh_scr, vh_scr,
                         *, num_heads, compute_dtype):
    tq, D = out_ref.shape                    # query-tile rows, d_model
    S = x_ref.shape[0]                       # full sequence length
    d_k = D // num_heads
    cdt = compute_dtype
    f32 = jnp.float32
    approx_rcp = bool(jnp.dtype(cdt) == jnp.dtype(jnp.bfloat16))

    qi = pl.program_id(1)
    q_start = pl.multiple_of(qi * tq, tq)

    # ---- per-batch-element prologue (qi == 0): cache LN(x), K, V ------------
    @pl.when(qi == 0)
    def _():
        x_full = x_ref[...]                                    # (S, D) f32
        h = _layer_norm(x_full, g1_ref[...], be1_ref[...])     # (S, D) f32
        h_scr[...] = h
        hc = h.astype(cdt)
        k = (jnp.dot(hc, wk_ref[...], preferred_element_type=f32)
             + bk_ref[...]).astype(cdt)                        # (S, D) cdt
        v = (jnp.dot(hc, wv_ref[...], preferred_element_type=f32)
             + bv_ref[...]).astype(cdt)
        # head-major relayout paid once per batch element, not per query tile
        kh_scr[...] = k.reshape(S, num_heads, d_k).transpose(1, 0, 2)
        vh_scr[...] = v.reshape(S, num_heads, d_k).transpose(1, 0, 2)

    # ---- residual 1: x + attn(LN(x)) for this query tile ---------------------
    h_q = h_scr[pl.ds(q_start, tq), :]                         # (tq, D) f32
    # 1/sqrt(d_k) already folded into wq / bq on the host.
    q = (jnp.dot(h_q.astype(cdt), wq_ref[...], preferred_element_type=f32)
         + bq_ref[...]).astype(cdt)
    qh = q.reshape(tq, num_heads, d_k).transpose(1, 0, 2)      # (H, tq, d_k)

    kh = kh_scr[...]                                           # (H, S, d_k) cdt
    vh = vh_scr[...]

    scores = jnp.einsum("hqd,hkd->hqk", qh, kh,
                        preferred_element_type=f32)            # (H, tq, S) f32
    # Host-precomputed additive bias; finite -1e9 keeps fully-masked rows
    # NaN-free (intentional divergence from torch's -inf/NaN behaviour).
    scores = scores + bias_ref[...].astype(f32)[None, :, :]

    s_max = jnp.max(scores, axis=-1, keepdims=True)
    p = jnp.exp(scores - s_max)
    l = jnp.sum(p, axis=-1, keepdims=True)                     # (H, tq, 1)
    ctx = jnp.einsum("hqk,hkd->hqd", p.astype(cdt), vh,
                     preferred_element_type=f32)               # (H, tq, d_k)
    # Normalize the small context tensor (not the (H,tq,S) probs); approx
    # reciprocal rides the EUP slot on the bf16 path.
    ctx = ctx * pl.reciprocal(l, approx=approx_rcp)

    # Per-head output projection summed over heads: avoids the
    # (H,tq,d_k) -> (tq,D) transpose/relayout before the W_o matmul.
    attn_out = jnp.sum(
        jnp.einsum("hqd,hdo->hqo", ctx.astype(cdt), wo_ref[...],
                   preferred_element_type=f32),
        axis=0) + bo_ref[...]
    # TODO(synk): dropout omitted (eval-mode identity); training-mode dropout
    # would use pltpu.prng_seed / pltpu.prng_random_bits.
    x_q = x_ref[pl.ds(q_start, tq), :]                         # (tq, D) f32
    x1 = x_q + attn_out

    # ---- residual 2: x1 + FF(LN(x1)) -----------------------------------------
    h2 = _layer_norm(x1, g2_ref[...], be2_ref[...])
    ff = jnp.dot(h2.astype(cdt), w1_ref[...],
                 preferred_element_type=f32) + b1_ref[...]
    ff = jnp.maximum(ff, 0.0)
    ff = jnp.dot(ff.astype(cdt), w2_ref[...],
                 preferred_element_type=f32) + b2_ref[...]

    out_ref[...] = (x1 + ff).astype(out_ref.dtype)


def encoder_block(x, src_mask, params, *, num_heads, q_tile=None,
                  use_bf16=True, out_dtype=jnp.float32):
    """Pre-norm encoder block (eval mode). grid = (batch, query-tile)."""
    B, S, D = x.shape
    assert D % num_heads == 0
    d_k = D // num_heads
    d_ff = params["w1"].shape[1]
    tq = q_tile if q_tile is not None else S
    assert S % tq == 0 and (tq % 8 == 0 or tq == S)
    n_q = S // tq

    cdt = jnp.bfloat16 if use_bf16 else jnp.float32
    wbytes = 2 if use_bf16 else 4
    scale = 1.0 / math.sqrt(d_k)

    # Fold 1/sqrt(d_k) into the Q projection (host-side, before the cast).
    wq = (params["wq"] * scale).astype(cdt)
    bq = params["bq"] * scale
    wk = params["wk"].astype(cdt); wv = params["wv"].astype(cdt)
    w1 = params["w1"].astype(cdt); w2 = params["w2"].astype(cdt)
    # W_o pre-reshaped to (H, d_k, D) for the per-head output projection.
    wo = params["wo"].reshape(num_heads, d_k, D).astype(cdt)

    # Mask -> additive bias on the host; bf16 (half the per-step DMA) when the
    # (tq, S) block shape is bf16-tile friendly, else f32.
    bias_dtype = jnp.bfloat16 if (tq % 16 == 0 or tq == S) else jnp.float32
    attn_bias = jnp.where(src_mask == 0, jnp.float32(-1e9),
                          jnp.float32(0.0)).astype(bias_dtype)

    def const_spec(shape, buffered):
        idx = lambda b, qi, _n=len(shape): (0,) * _n
        if buffered:
            # Constant index map -> fetched once; single buffer halves weight
            # VMEM residency (matters most on v7x's 64 MiB).
            return pl.BlockSpec(shape, idx, pipeline_mode=pl.Buffered(1))
        return pl.BlockSpec(shape, idx)

    def build(weight_buffered):
        cs = functools.partial(const_spec, buffered=weight_buffered)
        in_specs = [
            # x: full sequence per batch element (constant in qi -> one DMA per
            # batch element); needed at qi==0 for K/V and per-step residuals.
            # TODO(synk): for very long S on v7x (64 MiB VMEM), stream K/V tiles
            # with a flash-style online softmax instead of a resident slab.
            pl.BlockSpec((None, S, D), lambda b, qi: (b, 0, 0)),
            pl.BlockSpec((None, tq, S), lambda b, qi: (b, qi, 0)),  # attn bias
            cs((D, D)), cs((1, D)),                     # W_q (scaled), b_q
            cs((D, D)), cs((1, D)),                     # W_k, b_k
            cs((D, D)), cs((1, D)),                     # W_v, b_v
            cs((num_heads, d_k, D)), cs((1, D)),        # W_o (head-major), b_o
            cs((1, D)), cs((1, D)),                     # ln1 gamma, beta
            cs((1, D)), cs((1, D)),                     # ln2 gamma, beta
            cs((D, d_ff)), cs((1, d_ff)),               # ff linear1
            cs((d_ff, D)), cs((1, D)),                  # ff linear2
        ]
        scratch_shapes = [
            pltpu.VMEM((S, D), jnp.float32),            # cached LN(x)
            pltpu.VMEM((num_heads, S, d_k), cdt),       # cached K (head-major)
            pltpu.VMEM((num_heads, S, d_k), cdt),       # cached V (head-major)
        ]

        # VMEM budget: weights x1 (when single-buffered) else x2; streamed
        # blocks x2; scratch and internal activations x1.
        out_bytes = jnp.dtype(out_dtype).itemsize
        bias_bytes = jnp.dtype(bias_dtype).itemsize
        weight_bytes = ((4 * D * D + 2 * D * d_ff) * wbytes
                        + (8 * D + d_ff) * 4)
        weight_bytes *= 1 if weight_buffered else 2
        block_bytes = 2 * (S * D * 4 + tq * S * bias_bytes + tq * D * out_bytes)
        scratch_bytes = S * D * 4 + 2 * S * D * wbytes
        act_bytes = (16 * S * D                         # qi==0 prologue peak
                     + 8 * num_heads * tq * S           # scores + probs (f32)
                     + 24 * tq * D + 8 * tq * d_ff)     # per-tile activations
        est = weight_bytes + block_bytes + scratch_bytes + act_bytes
        try:
            vmem_cap = pltpu.get_tpu_info().vmem_capacity_bytes
        except Exception:
            vmem_cap = 64 * 1024 * 1024                 # v7x per-TC (smallest)
        vmem_limit = int(min(max(int(est * 1.5), 16 * 1024 * 1024),
                             int(0.9 * vmem_cap)))

        flops = int(2 * B * S * (4 * D * D + 2 * D * d_ff + 2 * S * D))
        bytes_accessed = int(B * S * D * (4 + out_bytes)
                             + B * S * S * bias_bytes
                             + (4 * D * D + 2 * D * d_ff) * wbytes)
        cost = pl.CostEstimate(flops=flops,
                               transcendentals=int(B * num_heads * S * S),
                               bytes_accessed=bytes_accessed)

        kernel = functools.partial(encoder_block_kernel,
                                   num_heads=num_heads, compute_dtype=cdt)
        return pl.pallas_call(
            kernel,
            out_shape=jax.ShapeDtypeStruct((B, S, D), out_dtype),
            grid_spec=pltpu.PrefetchScalarGridSpec(
                num_scalar_prefetch=0,
                grid=(B, n_q),
                in_specs=in_specs,
                out_specs=pl.BlockSpec((None, tq, D), lambda b, qi: (b, qi, 0)),
                scratch_shapes=scratch_shapes,
            ),
            compiler_params=pltpu.CompilerParams(
                # batch stays "parallel" (v7x megacore); qi MUST be "arbitrary"
                # because the K/V scratch carries state across query tiles.
                dimension_semantics=("parallel", "arbitrary"),
                vmem_limit_bytes=vmem_limit),
            cost_estimate=cost,
        )(x, attn_bias,
          wq, bq, wk, params["bk"], wv, params["bv"], wo, params["bo"],
          params["g1"], params["be1"], params["g2"], params["be2"],
          w1, params["b1"], w2, params["b2"])

    try:
        return build(weight_buffered=True)
    except Exception:
        # TODO(synk): pl.Buffered(1) rejected by this toolchain; fall back to
        # default double-buffered weight blocks (correctness unchanged).
        return build(weight_buffered=False)


def _reference(x, src_mask, p, num_heads):
    # pure-JAX f32 reference (pre-norm encoder block, eval-mode dropout)
    def ln(x, g, b, eps=1e-6):
        m = jnp.mean(x, -1, keepdims=True)
        v = jnp.mean((x - m) ** 2, -1, keepdims=True)
        return (x - m) / jnp.sqrt(v + eps) * g + b

    B, S, D = x.shape
    d_k = D // num_heads
    h = ln(x, p["g1"], p["be1"])
    q = h @ p["wq"] + p["bq"]
    k = h @ p["wk"] + p["bk"]
    v = h @ p["wv"] + p["bv"]
    q = q.reshape(B, S, num_heads, d_k).transpose(0, 2, 1, 3)
    k = k.reshape(B, S, num_heads, d_k).transpose(0, 2, 1, 3)
    v = v.reshape(B, S, num_heads, d_k).transpose(0, 2, 1, 3)
    scores = jnp.einsum("bhqd,bhkd->bhqk", q, k) / math.sqrt(d_k)
    scores = jnp.where(src_mask[:, None, :, :] == 0.0, -jnp.inf, scores)
    attn = jax.nn.softmax(scores, axis=-1)
    ctx = jnp.einsum("bhqk,bhkd->bhqd", attn, v)
    ctx = ctx.transpose(0, 2, 1, 3).reshape(B, S, D)
    x1 = x + (ctx @ p["wo"] + p["bo"])
    h2 = ln(x1, p["g2"], p["be2"])
    ff = jnp.maximum(h2 @ p["w1"] + p["b1"], 0.0) @ p["w2"] + p["b2"]
    return x1 + ff


if __name__ == "__main__":
    # 2 query tiles -> exercises the per-batch K/V caching across grid steps.
    B, S, D, H, DFF, TQ = 2, 32, 32, 4, 64, 16
    key = jax.random.PRNGKey(0)
    ks = jax.random.split(key, 8)

    def lin(k, fan_in, fan_out):
        bound = 1.0 / math.sqrt(fan_in)
        kw, kb = jax.random.split(k)
        w = jax.random.uniform(kw, (fan_in, fan_out), jnp.float32, -bound, bound)
        b = jax.random.uniform(kb, (1, fan_out), jnp.float32, -bound, bound)
        return w, b

    wq, bq = lin(ks[0], D, D)
    wk, bk = lin(ks[1], D, D)
    wv, bv = lin(ks[2], D, D)
    wo, bo = lin(ks[3], D, D)
    w1, b1 = lin(ks[4], D, DFF)
    w2, b2 = lin(ks[5], DFF, D)
    params = dict(
        wq=wq, bq=bq, wk=wk, bk=bk, wv=wv, bv=bv, wo=wo, bo=bo,
        g1=jnp.ones((1, D), jnp.float32), be1=jnp.zeros((1, D), jnp.float32),
        g2=jnp.ones((1, D), jnp.float32), be2=jnp.zeros((1, D), jnp.float32),
        w1=w1, b1=b1, w2=w2, b2=b2,
    )

    x = jax.random.normal(ks[6], (B, S, D), jnp.float32)
    # causal mask (every query row keeps at least one key)
    mask = (jnp.arange(S)[None, :] <= jnp.arange(S)[:, None]).astype(jnp.float32)
    src_mask = jnp.broadcast_to(mask, (B, S, S))

    ref = _reference(x, src_mask, params, H)

    # Primary bf16-MXU path (tolerance sized for bf16 operand rounding).
    out_bf16 = jax.block_until_ready(
        encoder_block(x, src_mask, params, num_heads=H, q_tile=TQ, use_bf16=True))
    assert jnp.allclose(out_bf16, ref, atol=1e-1, rtol=1e-1), "bf16 path mismatch"

    # f32 path: tight check of the kernel structure (K/V caching across tiles,
    # batched heads, masked softmax, per-head output projection, residuals).
    out_f32 = jax.block_until_ready(
        encoder_block(x, src_mask, params, num_heads=H, q_tile=TQ, use_bf16=False))
    assert jnp.allclose(out_f32, ref, atol=2e-3, rtol=2e-3), "f32 path mismatch"

    print("KERNEL_OK")
</pallas_src>

<mosaic_0001>
module attributes {stable_mosaic.version = 11 : i64} {
  func.func @encoder_block_kernel(%arg0: i32, %arg1: i32, %arg2: memref<1x32x32xf32, #tpu.memory_space<vmem>>, %arg3: memref<1x16x32xbf16, #tpu.memory_space<vmem>>, %arg4: memref<32x32xbf16, #tpu.memory_space<vmem>>, %arg5: memref<1x32xf32, #tpu.memory_space<vmem>>, %arg6: memref<32x32xbf16, #tpu.memory_space<vmem>>, %arg7: memref<1x32xf32, #tpu.memory_space<vmem>>, %arg8: memref<32x32xbf16, #tpu.memory_space<vmem>>, %arg9: memref<1x32xf32, #tpu.memory_space<vmem>>, %arg10: memref<4x8x32xbf16, #tpu.memory_space<vmem>>, %arg11: memref<1x32xf32, #tpu.memory_space<vmem>>, %arg12: memref<1x32xf32, #tpu.memory_space<vmem>>, %arg13: memref<1x32xf32, #tpu.memory_space<vmem>>, %arg14: memref<1x32xf32, #tpu.memory_space<vmem>>, %arg15: memref<1x32xf32, #tpu.memory_space<vmem>>, %arg16: memref<32x64xbf16, #tpu.memory_space<vmem>>, %arg17: memref<1x64xf32, #tpu.memory_space<vmem>>, %arg18: memref<64x32xbf16, #tpu.memory_space<vmem>>, %arg19: memref<1x32xf32, #tpu.memory_space<vmem>>, %arg20: memref<1x16x32xf32, #tpu.memory_space<vmem>>, %arg21: memref<32x32xf32, #tpu.memory_space<vmem>>, %arg22: memref<4x32x8xbf16, #tpu.memory_space<vmem>>, %arg23: memref<4x32x8xbf16, #tpu.memory_space<vmem>>) attributes {dimension_semantics = [#tpu.dimension_semantics<parallel>, #tpu.dimension_semantics<arbitrary>], iteration_bounds = array<i64: 2, 2>, scalar_prefetch = 0 : i64, scratch_operands = 3 : i64, tpu.core_type = #tpu.core_type<tc>, window_params = [{transform_indices = @transform_0, window_bounds = array<i64: 1, 32, 32>}, {transform_indices = @transform_1, window_bounds = array<i64: 1, 16, 32>}, {pipeline_mode = #tpu.pipeline_mode<synchronous>, transform_indices = @transform_2, window_bounds = array<i64: 32, 32>}, {pipeline_mode = #tpu.pipeline_mode<synchronous>, transform_indices = @transform_3, window_bounds = array<i64: 1, 32>}, {pipeline_mode = #tpu.pipeline_mode<synchronous>, transform_indices = @transform_4, window_bounds = array<i64: 32, 32>}, {pipeline_mode = #tpu.pipeline_mode<synchronous>, transform_indices = @transform_5, window_bounds = array<i64: 1, 32>}, {pipeline_mode = #tpu.pipeline_mode<synchronous>, transform_indices = @transform_6, window_bounds = array<i64: 32, 32>}, {pipeline_mode = #tpu.pipeline_mode<synchronous>, transform_indices = @transform_7, window_bounds = array<i64: 1, 32>}, {pipeline_mode = #tpu.pipeline_mode<synchronous>, transform_indices = @transform_8, window_bounds = array<i64: 4, 8, 32>}, {pipeline_mode = #tpu.pipeline_mode<synchronous>, transform_indices = @transform_9, window_bounds = array<i64: 1, 32>}, {pipeline_mode = #tpu.pipeline_mode<synchronous>, transform_indices = @transform_10, window_bounds = array<i64: 1, 32>}, {pipeline_mode = #tpu.pipeline_mode<synchronous>, transform_indices = @transform_11, window_bounds = array<i64: 1, 32>}, {pipeline_mode = #tpu.pipeline_mode<synchronous>, transform_indices = @transform_12, window_bounds = array<i64: 1, 32>}, {pipeline_mode = #tpu.pipeline_mode<synchronous>, transform_indices = @transform_13, window_bounds = array<i64: 1, 32>}, {pipeline_mode = #tpu.pipeline_mode<synchronous>, transform_indices = @transform_14, window_bounds = array<i64: 32, 64>}, {pipeline_mode = #tpu.pipeline_mode<synchronous>, transform_indices = @transform_15, window_bounds = array<i64: 1, 64>}, {pipeline_mode = #tpu.pipeline_mode<synchronous>, transform_indices = @transform_16, window_bounds = array<i64: 64, 32>}, {pipeline_mode = #tpu.pipeline_mode<synchronous>, transform_indices = @transform_17, window_bounds = array<i64: 1, 32>}, {transform_indices = @transform_18, window_bounds = array<i64: 1, 16, 32>}]} {
    %c16_i32 = arith.constant 16 : i32
    %0 = arith.muli %arg1, %c16_i32 : i32
    %1 = tpu.assume_multiple %0, 16 : i32
    %c0_i32 = arith.constant 0 : i32
    %2 = arith.cmpi eq, %arg1, %c0_i32 : i32
    %3 = arith.extui %2 : i1 to i32
    %c0_i32_0 = arith.constant 0 : i32
    %4 = arith.cmpi ne, %3, %c0_i32_0 : i32
    scf.if %4 {
      %c0_50 = arith.constant 0 : index
      %c0_51 = arith.constant 0 : index
      %c0_52 = arith.constant 0 : index
      %88 = vector.load %arg2[%c0_50, %c0_51, %c0_52] : memref<1x32x32xf32, #tpu.memory_space<vmem>>, vector<1x32x32xf32>
      %89 = vector.shape_cast %88 : vector<1x32x32xf32> to vector<32x32xf32>
      %c0_53 = arith.constant 0 : index
      %c0_54 = arith.constant 0 : index
      %90 = vector.load %arg12[%c0_53, %c0_54] : memref<1x32xf32, #tpu.memory_space<vmem>>, vector<1x32xf32>
      %c0_55 = arith.constant 0 : index
      %c0_56 = arith.constant 0 : index
      %91 = vector.load %arg13[%c0_55, %c0_56] : memref<1x32xf32, #tpu.memory_space<vmem>>, vector<1x32xf32>
      %cst_57 = arith.constant dense<0.000000e+00> : vector<32xf32>
      %92 = vector.multi_reduction <add>, %89, %cst_57 [1] : vector<32x32xf32> to vector<32xf32>
      %93 = vector.shape_cast %92 : vector<32xf32> to vector<32x1xf32>
      %cst_58 = arith.constant 3.200000e+01 : f32
      %94 = vector.broadcast %cst_58 : f32 to vector<32x1xf32>
      %95 = arith.divf %93, %94 : vector<32x1xf32>
      %96 = vector.broadcast %95 : vector<32x1xf32> to vector<32x32xf32>
      %97 = arith.subf %89, %96 : vector<32x32xf32>
      %98 = arith.mulf %97, %97 : vector<32x32xf32>
      %cst_59 = arith.constant dense<0.000000e+00> : vector<32xf32>
      %99 = vector.multi_reduction <add>, %98, %cst_59 [1] : vector<32x32xf32> to vector<32xf32>
      %100 = vector.shape_cast %99 : vector<32xf32> to vector<32x1xf32>
      %cst_60 = arith.constant 3.200000e+01 : f32
      %101 = vector.broadcast %cst_60 : f32 to vector<32x1xf32>
      %102 = arith.divf %100, %101 : vector<32x1xf32>
      %cst_61 = arith.constant 9.99999997E-7 : f32
      %103 = vector.broadcast %cst_61 : f32 to vector<32x1xf32>
      %104 = arith.addf %102, %103 : vector<32x1xf32>
      %105 = math.rsqrt %104 : vector<32x1xf32>
      %106 = vector.broadcast %105 : vector<32x1xf32> to vector<32x32xf32>
      %107 = arith.mulf %97, %106 : vector<32x32xf32>
      %108 = vector.broadcast %90 : vector<1x32xf32> to vector<32x32xf32>
      %109 = arith.mulf %107, %108 : vector<32x32xf32>
      %110 = vector.broadcast %91 : vector<1x32xf32> to vector<32x32xf32>
      %111 = arith.addf %109, %110 : vector<32x32xf32>
      %c0_62 = arith.constant 0 : index
      %c0_63 = arith.constant 0 : index
      %112 = vector.load %arg21[%c0_62, %c0_63] : memref<32x32xf32, #tpu.memory_space<vmem>>, vector<32x32xf32>
      tpu.vector_store %arg21[%c0_62, %c0_63], %111 {strides = array<i32>} : memref<32x32xf32, #tpu.memory_space<vmem>>, vector<32x32xf32>,
      %113 = arith.truncf %111 : vector<32x32xf32> to vector<32x32xbf16>
      %c0_64 = arith.constant 0 : index
      %c0_65 = arith.constant 0 : index
      %114 = vector.load %arg6[%c0_64, %c0_65] : memref<32x32xbf16, #tpu.memory_space<vmem>>, vector<32x32xbf16>
      %cst_66 = arith.constant dense<0.000000e+00> : vector<32x32xf32>
      %115 = tpu.matmul %113, %114, %cst_66 {dimension_numbers = #tpu.dot_dimension_numbers<[1], [0], [0], [1], [0, 0, 1, 1], [], []>} : vector<32x32xbf16>, vector<32x32xbf16>, vector<32x32xf32> -> vector<32x32xf32>
      %c0_67 = arith.constant 0 : index
      %c0_68 = arith.constant 0 : index
      %116 = vector.load %arg7[%c0_67, %c0_68] : memref<1x32xf32, #tpu.memory_space<vmem>>, vector<1x32xf32>
      %117 = vector.broadcast %116 : vector<1x32xf32> to vector<32x32xf32>
      %118 = arith.addf %115, %117 : vector<32x32xf32>
      %119 = arith.truncf %118 : vector<32x32xf32> to vector<32x32xbf16>
      %c0_69 = arith.constant 0 : index
      %c0_70 = arith.constant 0 : index
      %120 = vector.load %arg8[%c0_69, %c0_70] : memref<32x32xbf16, #tpu.memory_space<vmem>>, vector<32x32xbf16>
      %cst_71 = arith.constant dense<0.000000e+00> : vector<32x32xf32>
      %121 = tpu.matmul %113, %120, %cst_71 {dimension_numbers = #tpu.dot_dimension_numbers<[1], [0], [0], [1], [0, 0, 1, 1], [], []>} : vector<32x32xbf16>, vector<32x32xbf16>, vector<32x32xf32> -> vector<32x32xf32>
      %c0_72 = arith.constant 0 : index
      %c0_73 = arith.constant 0 : index
      %122 = vector.load %arg9[%c0_72, %c0_73] : memref<1x32xf32, #tpu.memory_space<vmem>>, vector<1x32xf32>
      %123 = vector.broadcast %122 : vector<1x32xf32> to vector<32x32xf32>
      %124 = arith.addf %121, %123 : vector<32x32xf32>
      %125 = arith.truncf %124 : vector<32x32xf32> to vector<32x32xbf16>
      %126 = vector.shape_cast %119 : vector<32x32xbf16> to vector<32x4x8xbf16>
      %127 = tpu.transpose %126, [1, 0, 2] : vector<32x4x8xbf16> -> vector<4x32x8xbf16>
      %c0_74 = arith.constant 0 : index
      %c0_75 = arith.constant 0 : index
      %c0_76 = arith.constant 0 : index
      %128 = vector.load %arg22[%c0_74, %c0_75, %c0_76] : memref<4x32x8xbf16, #tpu.memory_space<vmem>>, vector<4x32x8xbf16>
      tpu.vector_store %arg22[%c0_74, %c0_75, %c0_76], %127 {strides = array<i32>} : memref<4x32x8xbf16, #tpu.memory_space<vmem>>, vector<4x32x8xbf16>,
      %129 = vector.shape_cast %125 : vector<32x32xbf16> to vector<32x4x8xbf16>
      %130 = tpu.transpose %129, [1, 0, 2] : vector<32x4x8xbf16> -> vector<4x32x8xbf16>
      %c0_77 = arith.constant 0 : index
      %c0_78 = arith.constant 0 : index
      %c0_79 = arith.constant 0 : index
      %131 = vector.load %arg23[%c0_77, %c0_78, %c0_79] : memref<4x32x8xbf16, #tpu.memory_space<vmem>>, vector<4x32x8xbf16>
      tpu.vector_store %arg23[%c0_77, %c0_78, %c0_79], %130 {strides = array<i32>} : memref<4x32x8xbf16, #tpu.memory_space<vmem>>, vector<4x32x8xbf16>,
    } else {
    }
    %5 = arith.index_cast %1 : i32 to index
    %c0 = arith.constant 0 : index
    %6 = vector.load %arg21[%5, %c0] : memref<32x32xf32, #tpu.memory_space<vmem>>, vector<16x32xf32>
    %7 = arith.truncf %6 : vector<16x32xf32> to vector<16x32xbf16>
    %c0_1 = arith.constant 0 : index
    %c0_2 = arith.constant 0 : index
    %8 = vector.load %arg4[%c0_1, %c0_2] : memref<32x32xbf16, #tpu.memory_space<vmem>>, vector<32x32xbf16>
    %cst = arith.constant dense<0.000000e+00> : vector<16x32xf32>
    %9 = tpu.matmul %7, %8, %cst {dimension_numbers = #tpu.dot_dimension_numbers<[1], [0], [0], [1], [0, 0, 1, 1], [], []>} : vector<16x32xbf16>, vector<32x32xbf16>, vector<16x32xf32> -> vector<16x32xf32>
    %c0_3 = arith.constant 0 : index
    %c0_4 = arith.constant 0 : index
    %10 = vector.load %arg5[%c0_3, %c0_4] : memref<1x32xf32, #tpu.memory_space<vmem>>, vector<1x32xf32>
    %11 = vector.broadcast %10 : vector<1x32xf32> to vector<16x32xf32>
    %12 = arith.addf %9, %11 : vector<16x32xf32>
    %13 = arith.truncf %12 : vector<16x32xf32> to vector<16x32xbf16>
    %14 = vector.shape_cast %13 : vector<16x32xbf16> to vector<16x4x8xbf16>
    %15 = tpu.transpose %14, [1, 0, 2] : vector<16x4x8xbf16> -> vector<4x16x8xbf16>
    %c0_5 = arith.constant 0 : index
    %c0_6 = arith.constant 0 : index
    %c0_7 = arith.constant 0 : index
    %16 = vector.load %arg22[%c0_5, %c0_6, %c0_7] : memref<4x32x8xbf16, #tpu.memory_space<vmem>>, vector<4x32x8xbf16>
    %c0_8 = arith.constant 0 : index
    %c0_9 = arith.constant 0 : index
    %c0_10 = arith.constant 0 : index
    %17 = vector.load %arg23[%c0_8, %c0_9, %c0_10] : memref<4x32x8xbf16, #tpu.memory_space<vmem>>, vector<4x32x8xbf16>
    "tpu.trace_start"() <{level = 10 : i32, message = "hqd,hkd->hqk"}> : () -> ()
    %cst_11 = arith.constant dense<0.000000e+00> : vector<4x16x32xf32>
    %18 = tpu.matmul %15, %16, %cst_11 {dimension_numbers = #tpu.dot_dimension_numbers<[2], [2], [1], [1], [0, 0, 0, 1, 1, 1], [0], [0]>} : vector<4x16x8xbf16>, vector<4x32x8xbf16>, vector<4x16x32xf32> -> vector<4x16x32xf32>
    "tpu.trace_stop"() : () -> ()
    %c0_12 = arith.constant 0 : index
    %c0_13 = arith.constant 0 : index
    %c0_14 = arith.constant 0 : index
    %19 = vector.load %arg3[%c0_12, %c0_13, %c0_14] : memref<1x16x32xbf16, #tpu.memory_space<vmem>>, vector<1x16x32xbf16>
    %20 = vector.shape_cast %19 : vector<1x16x32xbf16> to vector<16x32xbf16>
    %21 = arith.extf %20 : vector<16x32xbf16> to vector<16x32xf32>
    %22 = vector.shape_cast %21 : vector<16x32xf32> to vector<1x16x32xf32>
    %23 = vector.broadcast %22 : vector<1x16x32xf32> to vector<4x16x32xf32>
    %24 = arith.addf %18, %23 : vector<4x16x32xf32>
    %cst_15 = arith.constant dense<0xFF800000> : vector<4x16xf32>
    %25 = vector.multi_reduction <maximumf>, %24, %cst_15 [2] : vector<4x16x32xf32> to vector<4x16xf32>
    %26 = vector.shape_cast %25 : vector<4x16xf32> to vector<4x16x1xf32>
    %27 = vector.broadcast %26 : vector<4x16x1xf32> to vector<4x16x32xf32>
    %28 = arith.subf %24, %27 : vector<4x16x32xf32>
    %29 = math.exp %28 : vector<4x16x32xf32>
    %cst_16 = arith.constant dense<0.000000e+00> : vector<4x16xf32>
    %30 = vector.multi_reduction <add>, %29, %cst_16 [2] : vector<4x16x32xf32> to vector<4x16xf32>
    %31 = vector.shape_cast %30 : vector<4x16xf32> to vector<4x16x1xf32>
    %32 = arith.truncf %29 : vector<4x16x32xf32> to vector<4x16x32xbf16>
    "tpu.trace_start"() <{level = 10 : i32, message = "hqk,hkd->hqd"}> : () -> ()
    %cst_17 = arith.constant dense<0.000000e+00> : vector<4x16x8xf32>
    %33 = tpu.matmul %32, %17, %cst_17 {dimension_numbers = #tpu.dot_dimension_numbers<[2], [1], [1], [2], [0, 0, 0, 1, 1, 2], [0], [0]>} : vector<4x16x32xbf16>, vector<4x32x8xbf16>, vector<4x16x8xf32> -> vector<4x16x8xf32>
    "tpu.trace_stop"() : () -> ()
    %34 = tpu.reciprocal %31 {approx = true} : vector<4x16x1xf32> -> vector<4x16x1xf32>
    %35 = vector.broadcast %34 : vector<4x16x1xf32> to vector<4x16x8xf32>
    %36 = arith.mulf %33, %35 : vector<4x16x8xf32>
    %37 = arith.truncf %36 : vector<4x16x8xf32> to vector<4x16x8xbf16>
    %c0_18 = arith.constant 0 : index
    %c0_19 = arith.constant 0 : index
    %c0_20 = arith.constant 0 : index
    %38 = vector.load %arg10[%c0_18, %c0_19, %c0_20] : memref<4x8x32xbf16, #tpu.memory_space<vmem>>, vector<4x8x32xbf16>
    "tpu.trace_start"() <{level = 10 : i32, message = "hqd,hdo->hqo"}> : () -> ()
    %cst_21 = arith.constant dense<0.000000e+00> : vector<4x16x32xf32>
    %39 = tpu.matmul %37, %38, %cst_21 {dimension_numbers = #tpu.dot_dimension_numbers<[2], [1], [1], [2], [0, 0, 0, 1, 1, 2], [0], [0]>} : vector<4x16x8xbf16>, vector<4x8x32xbf16>, vector<4x16x32xf32> -> vector<4x16x32xf32>
    "tpu.trace_stop"() : () -> ()
    %cst_22 = arith.constant dense<0.000000e+00> : vector<16x32xf32>
    %40 = vector.multi_reduction <add>, %39, %cst_22 [0] : vector<4x16x32xf32> to vector<16x32xf32>
    %c0_23 = arith.constant 0 : index
    %c0_24 = arith.constant 0 : index
    %41 = vector.load %arg11[%c0_23, %c0_24] : memref<1x32xf32, #tpu.memory_space<vmem>>, vector<1x32xf32>
    %42 = vector.broadcast %41 : vector<1x32xf32> to vector<16x32xf32>
    %43 = arith.addf %40, %42 : vector<16x32xf32>
    %c0_25 = arith.constant 0 : index
    %44 = arith.index_cast %1 : i32 to index
    %c0_26 = arith.constant 0 : index
    %45 = vector.load %arg2[%c0_25, %44, %c0_26] : memref<1x32x32xf32, #tpu.memory_space<vmem>>, vector<1x16x32xf32>
    %46 = vector.shape_cast %45 : vector<1x16x32xf32> to vector<16x32xf32>
    %47 = arith.addf %46, %43 : vector<16x32xf32>
    %c0_27 = arith.constant 0 : index
    %c0_28 = arith.constant 0 : index
    %48 = vector.load %arg14[%c0_27, %c0_28] : memref<1x32xf32, #tpu.memory_space<vmem>>, vector<1x32xf32>
    %c0_29 = arith.constant 0 : index
    %c0_30 = arith.constant 0 : index
    %49 = vector.load %arg15[%c0_29, %c0_30] : memref<1x32xf32, #tpu.memory_space<vmem>>, vector<1x32xf32>
    %cst_31 = arith.constant dense<0.000000e+00> : vector<16xf32>
    %50 = vector.multi_reduction <add>, %47, %cst_31 [1] : vector<16x32xf32> to vector<16xf32>
    %51 = vector.shape_cast %50 : vector<16xf32> to vector<16x1xf32>
    %cst_32 = arith.constant 3.200000e+01 : f32
    %52 = vector.broadcast %cst_32 : f32 to vector<16x1xf32>
    %53 = arith.divf %51, %52 : vector<16x1xf32>
    %54 = vector.broadcast %53 : vector<16x1xf32> to vector<16x32xf32>
    %55 = arith.subf %47, %54 : vector<16x32xf32>
    %56 = arith.mulf %55, %55 : vector<16x32xf32>
    %cst_33 = arith.constant dense<0.000000e+00> : vector<16xf32>
    %57 = vector.multi_reduction <add>, %56, %cst_33 [1] : vector<16x32xf32> to vector<16xf32>
    %58 = vector.shape_cast %57 : vector<16xf32> to vector<16x1xf32>
    %cst_34 = arith.constant 3.200000e+01 : f32
    %59 = vector.broadcast %cst_34 : f32 to vector<16x1xf32>
    %60 = arith.divf %58, %59 : vector<16x1xf32>
    %cst_35 = arith.constant 9.99999997E-7 : f32
    %61 = vector.broadcast %cst_35 : f32 to vector<16x1xf32>
    %62 = arith.addf %60, %61 : vector<16x1xf32>
    %63 = math.rsqrt %62 : vector<16x1xf32>
    %64 = vector.broadcast %63 : vector<16x1xf32> to vector<16x32xf32>
    %65 = arith.mulf %55, %64 : vector<16x32xf32>
    %66 = vector.broadcast %48 : vector<1x32xf32> to vector<16x32xf32>
    %67 = arith.mulf %65, %66 : vector<16x32xf32>
    %68 = vector.broadcast %49 : vector<1x32xf32> to vector<16x32xf32>
    %69 = arith.addf %67, %68 : vector<16x32xf32>
    %70 = arith.truncf %69 : vector<16x32xf32> to vector<16x32xbf16>
    %c0_36 = arith.constant 0 : index
    %c0_37 = arith.constant 0 : index
    %71 = vector.load %arg16[%c0_36, %c0_37] : memref<32x64xbf16, #tpu.memory_space<vmem>>, vector<32x64xbf16>
    %cst_38 = arith.constant dense<0.000000e+00> : vector<16x64xf32>
    %72 = tpu.matmul %70, %71, %cst_38 {dimension_numbers = #tpu.dot_dimension_numbers<[1], [0], [0], [1], [0, 0, 1, 1], [], []>} : vector<16x32xbf16>, vector<32x64xbf16>, vector<16x64xf32> -> vector<16x64xf32>
    %c0_39 = arith.constant 0 : index
    %c0_40 = arith.constant 0 : index
    %73 = vector.load %arg17[%c0_39, %c0_40] : memref<1x64xf32, #tpu.memory_space<vmem>>, vector<1x64xf32>
    %74 = vector.broadcast %73 : vector<1x64xf32> to vector<16x64xf32>
    %75 = arith.addf %72, %74 : vector<16x64xf32>
    %cst_41 = arith.constant 0.000000e+00 : f32
    %76 = vector.broadcast %cst_41 : f32 to vector<16x64xf32>
    %77 = arith.maximumf %75, %76 : vector<16x64xf32>
    %78 = arith.truncf %77 : vector<16x64xf32> to vector<16x64xbf16>
    %c0_42 = arith.constant 0 : index
    %c0_43 = arith.constant 0 : index
    %79 = vector.load %arg18[%c0_42, %c0_43] : memref<64x32xbf16, #tpu.memory_space<vmem>>, vector<64x32xbf16>
    %cst_44 = arith.constant dense<0.000000e+00> : vector<16x32xf32>
    %80 = tpu.matmul %78, %79, %cst_44 {dimension_numbers = #tpu.dot_dimension_numbers<[1], [0], [0], [1], [0, 0, 1, 1], [], []>} : vector<16x64xbf16>, vector<64x32xbf16>, vector<16x32xf32> -> vector<16x32xf32>
    %c0_45 = arith.constant 0 : index
    %c0_46 = arith.constant 0 : index
    %81 = vector.load %arg19[%c0_45, %c0_46] : memref<1x32xf32, #tpu.memory_space<vmem>>, vector<1x32xf32>
    %82 = vector.broadcast %81 : vector<1x32xf32> to vector<16x32xf32>
    %83 = arith.addf %80, %82 : vector<16x32xf32>
    %84 = arith.addf %47, %83 : vector<16x32xf32>
    %c0_47 = arith.constant 0 : index
    %c0_48 = arith.constant 0 : index
    %c0_49 = arith.constant 0 : index
    %85 = vector.load %arg20[%c0_47, %c0_48, %c0_49] : memref<1x16x32xf32, #tpu.memory_space<vmem>>, vector<1x16x32xf32>
    %86 = vector.shape_cast %85 : vector<1x16x32xf32> to vector<16x32xf32>
    %87 = vector.shape_cast %84 : vector<16x32xf32> to vector<1x16x32xf32>
    tpu.vector_store %arg20[%c0_47, %c0_48, %c0_49], %87 {strides = array<i32>} : memref<1x16x32xf32, #tpu.memory_space<vmem>>, vector<1x16x32xf32>,
    return
  }
  func.func @transform_0(%arg0: i32, %arg1: i32) -> (i32, i32, i32) {
    %c0_i32 = arith.constant 0 : i32
    %c0_i32_0 = arith.constant 0 : i32
    %c0_i32_1 = arith.constant 0 : i32
    return %arg0, %c0_i32, %c0_i32_0 : i32, i32, i32
  }
  func.func @transform_1(%arg0: i32, %arg1: i32) -> (i32, i32, i32) {
    %c0_i32 = arith.constant 0 : i32
    %c0_i32_0 = arith.constant 0 : i32
    return %arg0, %arg1, %c0_i32 : i32, i32, i32
  }
  func.func @transform_2(%arg0: i32, %arg1: i32) -> (i32, i32) {
    %c0_i32 = arith.constant 0 : i32
    %c0_i32_0 = arith.constant 0 : i32
    %c0_i32_1 = arith.constant 0 : i32
    return %c0_i32, %c0_i32_0 : i32, i32
  }
  func.func @transform_3(%arg0: i32, %arg1: i32) -> (i32, i32) {
    %c0_i32 = arith.constant 0 : i32
    %c0_i32_0 = arith.constant 0 : i32
    %c0_i32_1 = arith.constant 0 : i32
    return %c0_i32, %c0_i32_0 : i32, i32
  }
  func.func @transform_4(%arg0: i32, %arg1: i32) -> (i32, i32) {
    %c0_i32 = arith.constant 0 : i32
    %c0_i32_0 = arith.constant 0 : i32
    %c0_i32_1 = arith.constant 0 : i32
    return %c0_i32, %c0_i32_0 : i32, i32
  }
  func.func @transform_5(%arg0: i32, %arg1: i32) -> (i32, i32) {
    %c0_i32 = arith.constant 0 : i32
    %c0_i32_0 = arith.constant 0 : i32
    %c0_i32_1 = arith.constant 0 : i32
    return %c0_i32, %c0_i32_0 : i32, i32
  }
  func.func @transform_6(%arg0: i32, %arg1: i32) -> (i32, i32) {
    %c0_i32 = arith.constant 0 : i32
    %c0_i32_0 = arith.constant 0 : i32
    %c0_i32_1 = arith.constant 0 : i32
    return %c0_i32, %c0_i32_0 : i32, i32
  }
  func.func @transform_7(%arg0: i32, %arg1: i32) -> (i32, i32) {
    %c0_i32 = arith.constant 0 : i32
    %c0_i32_0 = arith.constant 0 : i32
    %c0_i32_1 = arith.constant 0 : i32
    return %c0_i32, %c0_i32_0 : i32, i32
  }
  func.func @transform_8(%arg0: i32, %arg1: i32) -> (i32, i32, i32) {
    %c0_i32 = arith.constant 0 : i32
    %c0_i32_0 = arith.constant 0 : i32
    %c0_i32_1 = arith.constant 0 : i32
    %c0_i32_2 = arith.constant 0 : i32
    return %c0_i32, %c0_i32_0, %c0_i32_1 : i32, i32, i32
  }
  func.func @transform_9(%arg0: i32, %arg1: i32) -> (i32, i32) {
    %c0_i32 = arith.constant 0 : i32
    %c0_i32_0 = arith.constant 0 : i32
    %c0_i32_1 = arith.constant 0 : i32
    return %c0_i32, %c0_i32_0 : i32, i32
  }
  func.func @transform_10(%arg0: i32, %arg1: i32) -> (i32, i32) {
    %c0_i32 = arith.constant 0 : i32
    %c0_i32_0 = arith.constant 0 : i32
    %c0_i32_1 = arith.constant 0 : i32
    return %c0_i32, %c0_i32_0 : i32, i32
  }
  func.func @transform_11(%arg0: i32, %arg1: i32) -> (i32, i32) {
    %c0_i32 = arith.constant 0 : i32
    %c0_i32_0 = arith.constant 0 : i32
    %c0_i32_1 = arith.constant 0 : i32
    return %c0_i32, %c0_i32_0 : i32, i32
  }
  func.func @transform_12(%arg0: i32, %arg1: i32) -> (i32, i32) {
    %c0_i32 = arith.constant 0 : i32
    %c0_i32_0 = arith.constant 0 : i32
    %c0_i32_1 = arith.constant 0 : i32
    return %c0_i32, %c0_i32_0 : i32, i32
  }
  func.func @transform_13(%arg0: i32, %arg1: i32) -> (i32, i32) {
    %c0_i32 = arith.constant 0 : i32
    %c0_i32_0 = arith.constant 0 : i32
    %c0_i32_1 = arith.constant 0 : i32
    return %c0_i32, %c0_i32_0 : i32, i32
  }
  func.func @transform_14(%arg0: i32, %arg1: i32) -> (i32, i32) {
    %c0_i32 = arith.constant 0 : i32
    %c0_i32_0 = arith.constant 0 : i32
    %c0_i32_1 = arith.constant 0 : i32
    return %c0_i32, %c0_i32_0 : i32, i32
  }
  func.func @transform_15(%arg0: i32, %arg1: i32) -> (i32, i32) {
    %c0_i32 = arith.constant 0 : i32
    %c0_i32_0 = arith.constant 0 : i32
    %c0_i32_1 = arith.constant 0 : i32
    return %c0_i32, %c0_i32_0 : i32, i32
  }
  func.func @transform_16(%arg0: i32, %arg1: i32) -> (i32, i32) {
    %c0_i32 = arith.constant 0 : i32
    %c0_i32_0 = arith.constant 0 : i32
    %c0_i32_1 = arith.constant 0 : i32
    return %c0_i32, %c0_i32_0 : i32, i32
  }
  func.func @transform_17(%arg0: i32, %arg1: i32) -> (i32, i32) {
    %c0_i32 = arith.constant 0 : i32
    %c0_i32_0 = arith.constant 0 : i32
    %c0_i32_1 = arith.constant 0 : i32
    return %c0_i32, %c0_i32_0 : i32, i32
  }
  func.func @transform_18(%arg0: i32, %arg1: i32) -> (i32, i32, i32) {
    %c0_i32 = arith.constant 0 : i32
    %c0_i32_0 = arith.constant 0 : i32
    return %arg0, %arg1, %c0_i32 : i32, i32, i32
  }
}

module attributes {stable_mosaic.version = 11 : i64} {
  func.func @encoder_block_kernel(%arg0: i32, %arg1: i32, %arg2: memref<1x32x32xf32, #tpu.memory_space<vmem>>, %arg3: memref<1x16x32xbf16, #tpu.memory_space<vmem>>, %arg4: memref<32x32xbf16, #tpu.memory_space<vmem>>, %arg5: memref<1x32xf32, #tpu.memory_space<vmem>>, %arg6: memref<32x32xbf16, #tpu.memory_space<vmem>>, %arg7: memref<1x32xf32, #tpu.memory_space<vmem>>, %arg8: memref<32x32xbf16, #tpu.memory_space<vmem>>, %arg9: memref<1x32xf32, #tpu.memory_space<vmem>>, %arg10: memref<4x8x32xbf16, #tpu.memory_space<vmem>>, %arg11: memref<1x32xf32, #tpu.memory_space<vmem>>, %arg12: memref<1x32xf32, #tpu.memory_space<vmem>>, %arg13: memref<1x32xf32, #tpu.memory_space<vmem>>, %arg14: memref<1x32xf32, #tpu.memory_space<vmem>>, %arg15: memref<1x32xf32, #tpu.memory_space<vmem>>, %arg16: memref<32x64xbf16, #tpu.memory_space<vmem>>, %arg17: memref<1x64xf32, #tpu.memory_space<vmem>>, %arg18: memref<64x32xbf16, #tpu.memory_space<vmem>>, %arg19: memref<1x32xf32, #tpu.memory_space<vmem>>, %arg20: memref<1x16x32xf32, #tpu.memory_space<vmem>>, %arg21: memref<32x32xf32, #tpu.memory_space<vmem>>, %arg22: memref<4x32x8xbf16, #tpu.memory_space<vmem>>, %arg23: memref<4x32x8xbf16, #tpu.memory_space<vmem>>) attributes {dimension_semantics = [#tpu.dimension_semantics<parallel>, #tpu.dimension_semantics<arbitrary>], iteration_bounds = array<i64: 2, 2>, scalar_prefetch = 0 : i64, scratch_operands = 3 : i64, tpu.core_type = #tpu.core_type<tc>, window_params = [{transform_indices = @transform_0, window_bounds = array<i64: 1, 32, 32>}, {transform_indices = @transform_1, window_bounds = array<i64: 1, 16, 32>}, {pipeline_mode = #tpu.pipeline_mode<synchronous>, transform_indices = @transform_2, window_bounds = array<i64: 32, 32>}, {pipeline_mode = #tpu.pipeline_mode<synchronous>, transform_indices = @transform_3, window_bounds = array<i64: 1, 32>}, {pipeline_mode = #tpu.pipeline_mode<synchronous>, transform_indices = @transform_4, window_bounds = array<i64: 32, 32>}, {pipeline_mode = #tpu.pipeline_mode<synchronous>, transform_indices = @transform_5, window_bounds = array<i64: 1, 32>}, {pipeline_mode = #tpu.pipeline_mode<synchronous>, transform_indices = @transform_6, window_bounds = array<i64: 32, 32>}, {pipeline_mode = #tpu.pipeline_mode<synchronous>, transform_indices = @transform_7, window_bounds = array<i64: 1, 32>}, {pipeline_mode = #tpu.pipeline_mode<synchronous>, transform_indices = @transform_8, window_bounds = array<i64: 4, 8, 32>}, {pipeline_mode = #tpu.pipeline_mode<synchronous>, transform_indices = @transform_9, window_bounds = array<i64: 1, 32>}, {pipeline_mode = #tpu.pipeline_mode<synchronous>, transform_indices = @transform_10, window_bounds = array<i64: 1, 32>}, {pipeline_mode = #tpu.pipeline_mode<synchronous>, transform_indices = @transform_11, window_bounds = array<i64: 1, 32>}, {pipeline_mode = #tpu.pipeline_mode<synchronous>, transform_indices = @transform_12, window_bounds = array<i64: 1, 32>}, {pipeline_mode = #tpu.pipeline_mode<synchronous>, transform_indices = @transform_13, window_bounds = array<i64: 1, 32>}, {pipeline_mode = #tpu.pipeline_mode<synchronous>, transform_indices = @transform_14, window_bounds = array<i64: 32, 64>}, {pipeline_mode = #tpu.pipeline_mode<synchronous>, transform_indices = @transform_15, window_bounds = array<i64: 1, 64>}, {pipeline_mode = #tpu.pipeline_mode<synchronous>, transform_indices = @transform_16, window_bounds = array<i64: 64, 32>}, {pipeline_mode = #tpu.pipeline_mode<synchronous>, transform_indices = @transform_17, window_bounds = array<i64: 1, 32>}, {transform_indices = @transform_18, window_bounds = array<i64: 1, 16, 32>}]} {
    %c16_i32 = arith.constant 16 : i32
    %0 = arith.muli %arg1, %c16_i32 : i32
    %1 = tpu.assume_multiple %0, 16 : i32
    %c0_i32 = arith.constant 0 : i32
    %2 = arith.cmpi eq, %arg1, %c0_i32 : i32
    %3 = arith.extui %2 : i1 to i32
    %c0_i32_0 = arith.constant 0 : i32
    %4 = arith.cmpi ne, %3, %c0_i32_0 : i32
    scf.if %4 {
      %c0_50 = arith.constant 0 : index
      %c0_51 = arith.constant 0 : index
      %c0_52 = arith.constant 0 : index
      %88 = vector.load %arg2[%c0_50, %c0_51, %c0_52] : memref<1x32x32xf32, #tpu.memory_space<vmem>>, vector<1x32x32xf32>
      %89 = vector.shape_cast %88 : vector<1x32x32xf32> to vector<32x32xf32>
      %c0_53 = arith.constant 0 : index
      %c0_54 = arith.constant 0 : index
      %90 = vector.load %arg12[%c0_53, %c0_54] : memref<1x32xf32, #tpu.memory_space<vmem>>, vector<1x32xf32>
      %c0_55 = arith.constant 0 : index
      %c0_56 = arith.constant 0 : index
      %91 = vector.load %arg13[%c0_55, %c0_56] : memref<1x32xf32, #tpu.memory_space<vmem>>, vector<1x32xf32>
      %cst_57 = arith.constant dense<0.000000e+00> : vector<32xf32>
      %92 = vector.multi_reduction <add>, %89, %cst_57 [1] : vector<32x32xf32> to vector<32xf32>
      %93 = vector.shape_cast %92 : vector<32xf32> to vector<32x1xf32>
      %cst_58 = arith.constant 3.200000e+01 : f32
      %94 = vector.broadcast %cst_58 : f32 to vector<32x1xf32>
      %95 = arith.divf %93, %94 : vector<32x1xf32>
      %96 = vector.broadcast %95 : vector<32x1xf32> to vector<32x32xf32>
      %97 = arith.subf %89, %96 : vector<32x32xf32>
      %98 = arith.mulf %97, %97 : vector<32x32xf32>
      %cst_59 = arith.constant dense<0.000000e+00> : vector<32xf32>
      %99 = vector.multi_reduction <add>, %98, %cst_59 [1] : vector<32x32xf32> to vector<32xf32>
      %100 = vector.shape_cast %99 : vector<32xf32> to vector<32x1xf32>
      %cst_60 = arith.constant 3.200000e+01 : f32
      %101 = vector.broadcast %cst_60 : f32 to vector<32x1xf32>
      %102 = arith.divf %100, %101 : vector<32x1xf32>
      %cst_61 = arith.constant 9.99999997E-7 : f32
      %103 = vector.broadcast %cst_61 : f32 to vector<32x1xf32>
      %104 = arith.addf %102, %103 : vector<32x1xf32>
      %105 = math.rsqrt %104 : vector<32x1xf32>
      %106 = vector.broadcast %105 : vector<32x1xf32> to vector<32x32xf32>
      %107 = arith.mulf %97, %106 : vector<32x32xf32>
      %108 = vector.broadcast %90 : vector<1x32xf32> to vector<32x32xf32>
      %109 = arith.mulf %107, %108 : vector<32x32xf32>
      %110 = vector.broadcast %91 : vector<1x32xf32> to vector<32x32xf32>
      %111 = arith.addf %109, %110 : vector<32x32xf32>
      %c0_62 = arith.constant 0 : index
      %c0_63 = arith.constant 0 : index
      %112 = vector.load %arg21[%c0_62, %c0_63] : memref<32x32xf32, #tpu.memory_space<vmem>>, vector<32x32xf32>
      tpu.vector_store %arg21[%c0_62, %c0_63], %111 {strides = array<i32>} : memref<32x32xf32, #tpu.memory_space<vmem>>, vector<32x32xf32>,
      %113 = arith.truncf %111 : vector<32x32xf32> to vector<32x32xbf16>
      %c0_64 = arith.constant 0 : index
      %c0_65 = arith.constant 0 : index
      %114 = vector.load %arg6[%c0_64, %c0_65] : memref<32x32xbf16, #tpu.memory_space<vmem>>, vector<32x32xbf16>
      %cst_66 = arith.constant dense<0.000000e+00> : vector<32x32xf32>
      %115 = tpu.matmul %113, %114, %cst_66 {dimension_numbers = #tpu.dot_dimension_numbers<[1], [0], [0], [1], [0, 0, 1, 1], [], []>} : vector<32x32xbf16>, vector<32x32xbf16>, vector<32x32xf32> -> vector<32x32xf32>
      %c0_67 = arith.constant 0 : index
      %c0_68 = arith.constant 0 : index
      %116 = vector.load %arg7[%c0_67, %c0_68] : memref<1x32xf32, #tpu.memory_space<vmem>>, vector<1x32xf32>
      %117 = vector.broadcast %116 : vector<1x32xf32> to vector<32x32xf32>
      %118 = arith.addf %115, %117 : vector<32x32xf32>
      %119 = arith.truncf %118 : vector<32x32xf32> to vector<32x32xbf16>
      %c0_69 = arith.constant 0 : index
      %c0_70 = arith.constant 0 : index
      %120 = vector.load %arg8[%c0_69, %c0_70] : memref<32x32xbf16, #tpu.memory_space<vmem>>, vector<32x32xbf16>
      %cst_71 = arith.constant dense<0.000000e+00> : vector<32x32xf32>
      %121 = tpu.matmul %113, %120, %cst_71 {dimension_numbers = #tpu.dot_dimension_numbers<[1], [0], [0], [1], [0, 0, 1, 1], [], []>} : vector<32x32xbf16>, vector<32x32xbf16>, vector<32x32xf32> -> vector<32x32xf32>
      %c0_72 = arith.constant 0 : index
      %c0_73 = arith.constant 0 : index
      %122 = vector.load %arg9[%c0_72, %c0_73] : memref<1x32xf32, #tpu.memory_space<vmem>>, vector<1x32xf32>
      %123 = vector.broadcast %122 : vector<1x32xf32> to vector<32x32xf32>
      %124 = arith.addf %121, %123 : vector<32x32xf32>
      %125 = arith.truncf %124 : vector<32x32xf32> to vector<32x32xbf16>
      %126 = vector.shape_cast %119 : vector<32x32xbf16> to vector<32x4x8xbf16>
      %127 = tpu.transpose %126, [1, 0, 2] : vector<32x4x8xbf16> -> vector<4x32x8xbf16>
      %c0_74 = arith.constant 0 : index
      %c0_75 = arith.constant 0 : index
      %c0_76 = arith.constant 0 : index
      %128 = vector.load %arg22[%c0_74, %c0_75, %c0_76] : memref<4x32x8xbf16, #tpu.memory_space<vmem>>, vector<4x32x8xbf16>
      tpu.vector_store %arg22[%c0_74, %c0_75, %c0_76], %127 {strides = array<i32>} : memref<4x32x8xbf16, #tpu.memory_space<vmem>>, vector<4x32x8xbf16>,
      %129 = vector.shape_cast %125 : vector<32x32xbf16> to vector<32x4x8xbf16>
      %130 = tpu.transpose %129, [1, 0, 2] : vector<32x4x8xbf16> -> vector<4x32x8xbf16>
      %c0_77 = arith.constant 0 : index
      %c0_78 = arith.constant 0 : index
      %c0_79 = arith.constant 0 : index
      %131 = vector.load %arg23[%c0_77, %c0_78, %c0_79] : memref<4x32x8xbf16, #tpu.memory_space<vmem>>, vector<4x32x8xbf16>
      tpu.vector_store %arg23[%c0_77, %c0_78, %c0_79], %130 {strides = array<i32>} : memref<4x32x8xbf16, #tpu.memory_space<vmem>>, vector<4x32x8xbf16>,
    } else {
    }
    %5 = arith.index_cast %1 : i32 to index
    %c0 = arith.constant 0 : index
    %6 = vector.load %arg21[%5, %c0] : memref<32x32xf32, #tpu.memory_space<vmem>>, vector<16x32xf32>
    %7 = arith.truncf %6 : vector<16x32xf32> to vector<16x32xbf16>
    %c0_1 = arith.constant 0 : index
    %c0_2 = arith.constant 0 : index
    %8 = vector.load %arg4[%c0_1, %c0_2] : memref<32x32xbf16, #tpu.memory_space<vmem>>, vector<32x32xbf16>
    %cst = arith.constant dense<0.000000e+00> : vector<16x32xf32>
    %9 = tpu.matmul %7, %8, %cst {dimension_numbers = #tpu.dot_dimension_numbers<[1], [0], [0], [1], [0, 0, 1, 1], [], []>} : vector<16x32xbf16>, vector<32x32xbf16>, vector<16x32xf32> -> vector<16x32xf32>
    %c0_3 = arith.constant 0 : index
    %c0_4 = arith.constant 0 : index
    %10 = vector.load %arg5[%c0_3, %c0_4] : memref<1x32xf32, #tpu.memory_space<vmem>>, vector<1x32xf32>
    %11 = vector.broadcast %10 : vector<1x32xf32> to vector<16x32xf32>
    %12 = arith.addf %9, %11 : vector<16x32xf32>
    %13 = arith.truncf %12 : vector<16x32xf32> to vector<16x32xbf16>
    %14 = vector.shape_cast %13 : vector<16x32xbf16> to vector<16x4x8xbf16>
    %15 = tpu.transpose %14, [1, 0, 2] : vector<16x4x8xbf16> -> vector<4x16x8xbf16>
    %c0_5 = arith.constant 0 : index
    %c0_6 = arith.constant 0 : index
    %c0_7 = arith.constant 0 : index
    %16 = vector.load %arg22[%c0_5, %c0_6, %c0_7] : memref<4x32x8xbf16, #tpu.memory_space<vmem>>, vector<4x32x8xbf16>
    %c0_8 = arith.constant 0 : index
    %c0_9 = arith.constant 0 : index
    %c0_10 = arith.constant 0 : index
    %17 = vector.load %arg23[%c0_8, %c0_9, %c0_10] : memref<4x32x8xbf16, #tpu.memory_space<vmem>>, vector<4x32x8xbf16>
    "tpu.trace_start"() <{level = 10 : i32, message = "hqd,hkd->hqk"}> : () -> ()
    %cst_11 = arith.constant dense<0.000000e+00> : vector<4x16x32xf32>
    %18 = tpu.matmul %15, %16, %cst_11 {dimension_numbers = #tpu.dot_dimension_numbers<[2], [2], [1], [1], [0, 0, 0, 1, 1, 1], [0], [0]>} : vector<4x16x8xbf16>, vector<4x32x8xbf16>, vector<4x16x32xf32> -> vector<4x16x32xf32>
    "tpu.trace_stop"() : () -> ()
    %c0_12 = arith.constant 0 : index
    %c0_13 = arith.constant 0 : index
    %c0_14 = arith.constant 0 : index
    %19 = vector.load %arg3[%c0_12, %c0_13, %c0_14] : memref<1x16x32xbf16, #tpu.memory_space<vmem>>, vector<1x16x32xbf16>
    %20 = vector.shape_cast %19 : vector<1x16x32xbf16> to vector<16x32xbf16>
    %21 = arith.extf %20 : vector<16x32xbf16> to vector<16x32xf32>
    %22 = vector.shape_cast %21 : vector<16x32xf32> to vector<1x16x32xf32>
    %23 = vector.broadcast %22 : vector<1x16x32xf32> to vector<4x16x32xf32>
    %24 = arith.addf %18, %23 : vector<4x16x32xf32>
    %cst_15 = arith.constant dense<0xFF800000> : vector<4x16xf32>
    %25 = vector.multi_reduction <maximumf>, %24, %cst_15 [2] : vector<4x16x32xf32> to vector<4x16xf32>
    %26 = vector.shape_cast %25 : vector<4x16xf32> to vector<4x16x1xf32>
    %27 = vector.broadcast %26 : vector<4x16x1xf32> to vector<4x16x32xf32>
    %28 = arith.subf %24, %27 : vector<4x16x32xf32>
    %29 = math.exp %28 : vector<4x16x32xf32>
    %cst_16 = arith.constant dense<0.000000e+00> : vector<4x16xf32>
    %30 = vector.multi_reduction <add>, %29, %cst_16 [2] : vector<4x16x32xf32> to vector<4x16xf32>
    %31 = vector.shape_cast %30 : vector<4x16xf32> to vector<4x16x1xf32>
    %32 = arith.truncf %29 : vector<4x16x32xf32> to vector<4x16x32xbf16>
    "tpu.trace_start"() <{level = 10 : i32, message = "hqk,hkd->hqd"}> : () -> ()
    %cst_17 = arith.constant dense<0.000000e+00> : vector<4x16x8xf32>
    %33 = tpu.matmul %32, %17, %cst_17 {dimension_numbers = #tpu.dot_dimension_numbers<[2], [1], [1], [2], [0, 0, 0, 1, 1, 2], [0], [0]>} : vector<4x16x32xbf16>, vector<4x32x8xbf16>, vector<4x16x8xf32> -> vector<4x16x8xf32>
    "tpu.trace_stop"() : () -> ()
    %34 = tpu.reciprocal %31 {approx = true} : vector<4x16x1xf32> -> vector<4x16x1xf32>
    %35 = vector.broadcast %34 : vector<4x16x1xf32> to vector<4x16x8xf32>
    %36 = arith.mulf %33, %35 : vector<4x16x8xf32>
    %37 = arith.truncf %36 : vector<4x16x8xf32> to vector<4x16x8xbf16>
    %c0_18 = arith.constant 0 : index
    %c0_19 = arith.constant 0 : index
    %c0_20 = arith.constant 0 : index
    %38 = vector.load %arg10[%c0_18, %c0_19, %c0_20] : memref<4x8x32xbf16, #tpu.memory_space<vmem>>, vector<4x8x32xbf16>
    "tpu.trace_start"() <{level = 10 : i32, message = "hqd,hdo->hqo"}> : () -> ()
    %cst_21 = arith.constant dense<0.000000e+00> : vector<4x16x32xf32>
    %39 = tpu.matmul %37, %38, %cst_21 {dimension_numbers = #tpu.dot_dimension_numbers<[2], [1], [1], [2], [0, 0, 0, 1, 1, 2], [0], [0]>} : vector<4x16x8xbf16>, vector<4x8x32xbf16>, vector<4x16x32xf32> -> vector<4x16x32xf32>
    "tpu.trace_stop"() : () -> ()
    %cst_22 = arith.constant dense<0.000000e+00> : vector<16x32xf32>
    %40 = vector.multi_reduction <add>, %39, %cst_22 [0] : vector<4x16x32xf32> to vector<16x32xf32>
    %c0_23 = arith.constant 0 : index
    %c0_24 = arith.constant 0 : index
    %41 = vector.load %arg11[%c0_23, %c0_24] : memref<1x32xf32, #tpu.memory_space<vmem>>, vector<1x32xf32>
    %42 = vector.broadcast %41 : vector<1x32xf32> to vector<16x32xf32>
    %43 = arith.addf %40, %42 : vector<16x32xf32>
    %c0_25 = arith.constant 0 : index
    %44 = arith.index_cast %1 : i32 to index
    %c0_26 = arith.constant 0 : index
    %45 = vector.load %arg2[%c0_25, %44, %c0_26] : memref<1x32x32xf32, #tpu.memory_space<vmem>>, vector<1x16x32xf32>
    %46 = vector.shape_cast %45 : vector<1x16x32xf32> to vector<16x32xf32>
    %47 = arith.addf %46, %43 : vector<16x32xf32>
    %c0_27 = arith.constant 0 : index
    %c0_28 = arith.constant 0 : index
    %48 = vector.load %arg14[%c0_27, %c0_28] : memref<1x32xf32, #tpu.memory_space<vmem>>, vector<1x32xf32>
    %c0_29 = arith.constant 0 : index
    %c0_30 = arith.constant 0 : index
    %49 = vector.load %arg15[%c0_29, %c0_30] : memref<1x32xf32, #tpu.memory_space<vmem>>, vector<1x32xf32>
    %cst_31 = arith.constant dense<0.000000e+00> : vector<16xf32>
    %50 = vector.multi_reduction <add>, %47, %cst_31 [1] : vector<16x32xf32> to vector<16xf32>
    %51 = vector.shape_cast %50 : vector<16xf32> to vector<16x1xf32>
    %cst_32 = arith.constant 3.200000e+01 : f32
    %52 = vector.broadcast %cst_32 : f32 to vector<16x1xf32>
    %53 = arith.divf %51, %52 : vector<16x1xf32>
    %54 = vector.broadcast %53 : vector<16x1xf32> to vector<16x32xf32>
    %55 = arith.subf %47, %54 : vector<16x32xf32>
    %56 = arith.mulf %55, %55 : vector<16x32xf32>
    %cst_33 = arith.constant dense<0.000000e+00> : vector<16xf32>
    %57 = vector.multi_reduction <add>, %56, %cst_33 [1] : vector<16x32xf32> to vector<16xf32>
    %58 = vector.shape_cast %57 : vector<16xf32> to vector<16x1xf32>
    %cst_34 = arith.constant 3.200000e+01 : f32
    %59 = vector.broadcast %cst_34 : f32 to vector<16x1xf32>
    %60 = arith.divf %58, %59 : vector<16x1xf32>
    %cst_35 = arith.constant 9.99999997E-7 : f32
    %61 = vector.broadcast %cst_35 : f32 to vector<16x1xf32>
    %62 = arith.addf %60, %61 : vector<16x1xf32>
    %63 = math.rsqrt %62 : vector<16x1xf32>
    %64 = vector.broadcast %63 : vector<16x1xf32> to vector<16x32xf32>
    %65 = arith.mulf %55, %64 : vector<16x32xf32>
    %66 = vector.broadcast %48 : vector<1x32xf32> to vector<16x32xf32>
    %67 = arith.mulf %65, %66 : vector<16x32xf32>
    %68 = vector.broadcast %49 : vector<1x32xf32> to vector<16x32xf32>
    %69 = arith.addf %67, %68 : vector<16x32xf32>
    %70 = arith.truncf %69 : vector<16x32xf32> to vector<16x32xbf16>
    %c0_36 = arith.constant 0 : index
    %c0_37 = arith.constant 0 : index
    %71 = vector.load %arg16[%c0_36, %c0_37] : memref<32x64xbf16, #tpu.memory_space<vmem>>, vector<32x64xbf16>
    %cst_38 = arith.constant dense<0.000000e+00> : vector<16x64xf32>
    %72 = tpu.matmul %70, %71, %cst_38 {dimension_numbers = #tpu.dot_dimension_numbers<[1], [0], [0], [1], [0, 0, 1, 1], [], []>} : vector<16x32xbf16>, vector<32x64xbf16>, vector<16x64xf32> -> vector<16x64xf32>
    %c0_39 = arith.constant 0 : index
    %c0_40 = arith.constant 0 : index
    %73 = vector.load %arg17[%c0_39, %c0_40] : memref<1x64xf32, #tpu.memory_space<vmem>>, vector<1x64xf32>
    %74 = vector.broadcast %73 : vector<1x64xf32> to vector<16x64xf32>
    %75 = arith.addf %72, %74 : vector<16x64xf32>
    %cst_41 = arith.constant 0.000000e+00 : f32
    %76 = vector.broadcast %cst_41 : f32 to vector<16x64xf32>
    %77 = arith.maximumf %75, %76 : vector<16x64xf32>
    %78 = arith.truncf %77 : vector<16x64xf32> to vector<16x64xbf16>
    %c0_42 = arith.constant 0 : index
    %c0_43 = arith.constant 0 : index
    %79 = vector.load %arg18[%c0_42, %c0_43] : memref<64x32xbf16, #tpu.memory_space<vmem>>, vector<64x32xbf16>
    %cst_44 = arith.constant dense<0.000000e+00> : vector<16x32xf32>
    %80 = tpu.matmul %78, %79, %cst_44 {dimension_numbers = #tpu.dot_dimension_numbers<[1], [0], [0], [1], [0, 0, 1, 1], [], []>} : vector<16x64xbf16>, vector<64x32xbf16>, vector<16x32xf32> -> vector<16x32xf32>
    %c0_45 = arith.constant 0 : index
    %c0_46 = arith.constant 0 : index
    %81 = vector.load %arg19[%c0_45, %c0_46] : memref<1x32xf32, #tpu.memory_space<vmem>>, vector<1x32xf32>
    %82 = vector.broadcast %81 : vector<1x32xf32> to vector<16x32xf32>
    %83 = arith.addf %80, %82 : vector<16x32xf32>
    %84 = arith.addf %47, %83 : vector<16x32xf32>
    %c0_47 = arith.constant 0 : index
    %c0_48 = arith.constant 0 : index
    %c0_49 = arith.constant 0 : index
    %85 = vector.load %arg20[%c0_47, %c0_48, %c0_49] : memref<1x16x32xf32, #tpu.memory_space<vmem>>, vector<1x16x32xf32>
    %86 = vector.shape_cast %85 : vector<1x16x32xf32> to vector<16x32xf32>
    %87 = vector.shape_cast %84 : vector<16x32xf32> to vector<1x16x32xf32>
    tpu.vector_store %arg20[%c0_47, %c0_48, %c0_49], %87 {strides = array<i32>} : memref<1x16x32xf32, #tpu.memory_space<vmem>>, vector<1x16x32xf32>,
    return
  }
  func.func @transform_0(%arg0: i32, %arg1: i32) -> (i32, i32, i32) {
    %c0_i32 = arith.constant 0 : i32
    %c0_i32_0 = arith.constant 0 : i32
    %c0_i32_1 = arith.constant 0 : i32
    return %arg0, %c0_i32, %c0_i32_0 : i32, i32, i32
  }
  func.func @transform_1(%arg0: i32, %arg1: i32) -> (i32, i32, i32) {
    %c0_i32 = arith.constant 0 : i32
    %c0_i32_0 = arith.constant 0 : i32
    return %arg0, %arg1, %c0_i32 : i32, i32, i32
  }
  func.func @transform_2(%arg0: i32, %arg1: i32) -> (i32, i32) {
    %c0_i32 = arith.constant 0 : i32
    %c0_i32_0 = arith.constant 0 : i32
    %c0_i32_1 = arith.constant 0 : i32
    return %c0_i32, %c0_i32_0 : i32, i32
  }
  func.func @transform_3(%arg0: i32, %arg1: i32) -> (i32, i32) {
    %c0_i32 = arith.constant 0 : i32
    %c0_i32_0 = arith.constant 0 : i32
    %c0_i32_1 = arith.constant 0 : i32
    return %c0_i32, %c0_i32_0 : i32, i32
  }
  func.func @transform_4(%arg0: i32, %arg1: i32) -> (i32, i32) {
    %c0_i32 = arith.constant 0 : i32
    %c0_i32_0 = arith.constant 0 : i32
    %c0_i32_1 = arith.constant 0 : i32
    return %c0_i32, %c0_i32_0 : i32, i32
  }
  func.func @transform_5(%arg0: i32, %arg1: i32) -> (i32, i32) {
    %c0_i32 = arith.constant 0 : i32
    %c0_i32_0 = arith.constant 0 : i32
    %c0_i32_1 = arith.constant 0 : i32
    return %c0_i32, %c0_i32_0 : i32, i32
  }
  func.func @transform_6(%arg0: i32, %arg1: i32) -> (i32, i32) {
    %c0_i32 = arith.constant 0 : i32
    %c0_i32_0 = arith.constant 0 : i32
    %c0_i32_1 = arith.constant 0 : i32
    return %c0_i32, %c0_i32_0 : i32, i32
  }
  func.func @transform_7(%arg0: i32, %arg1: i32) -> (i32, i32) {
    %c0_i32 = arith.constant 0 : i32
    %c0_i32_0 = arith.constant 0 : i32
    %c0_i32_1 = arith.constant 0 : i32
    return %c0_i32, %c0_i32_0 : i32, i32
  }
  func.func @transform_8(%arg0: i32, %arg1: i32) -> (i32, i32, i32) {
    %c0_i32 = arith.constant 0 : i32
    %c0_i32_0 = arith.constant 0 : i32
    %c0_i32_1 = arith.constant 0 : i32
    %c0_i32_2 = arith.constant 0 : i32
    return %c0_i32, %c0_i32_0, %c0_i32_1 : i32, i32, i32
  }
  func.func @transform_9(%arg0: i32, %arg1: i32) -> (i32, i32) {
    %c0_i32 = arith.constant 0 : i32
    %c0_i32_0 = arith.constant 0 : i32
    %c0_i32_1 = arith.constant 0 : i32
    return %c0_i32, %c0_i32_0 : i32, i32
  }
  func.func @transform_10(%arg0: i32, %arg1: i32) -> (i32, i32) {
    %c0_i32 = arith.constant 0 : i32
    %c0_i32_0 = arith.constant 0 : i32
    %c0_i32_1 = arith.constant 0 : i32
    return %c0_i32, %c0_i32_0 : i32, i32
  }
  func.func @transform_11(%arg0: i32, %arg1: i32) -> (i32, i32) {
    %c0_i32 = arith.constant 0 : i32
    %c0_i32_0 = arith.constant 0 : i32
    %c0_i32_1 = arith.constant 0 : i32
    return %c0_i32, %c0_i32_0 : i32, i32
  }
  func.func @transform_12(%arg0: i32, %arg1: i32) -> (i32, i32) {
    %c0_i32 = arith.constant 0 : i32
    %c0_i32_0 = arith.constant 0 : i32
    %c0_i32_1 = arith.constant 0 : i32
    return %c0_i32, %c0_i32_0 : i32, i32
  }
  func.func @transform_13(%arg0: i32, %arg1: i32) -> (i32, i32) {
    %c0_i32 = arith.constant 0 : i32
    %c0_i32_0 = arith.constant 0 : i32
    %c0_i32_1 = arith.constant 0 : i32
    return %c0_i32, %c0_i32_0 : i32, i32
  }
  func.func @transform_14(%arg0: i32, %arg1: i32) -> (i32, i32) {
    %c0_i32 = arith.constant 0 : i32
    %c0_i32_0 = arith.constant 0 : i32
    %c0_i32_1 = arith.constant 0 : i32
    return %c0_i32, %c0_i32_0 : i32, i32
  }
  func.func @transform_15(%arg0: i32, %arg1: i32) -> (i32, i32) {
    %c0_i32 = arith.constant 0 : i32
    %c0_i32_0 = arith.constant 0 : i32
    %c0_i32_1 = arith.constant 0 : i32
    return %c0_i32, %c0_i32_0 : i32, i32
  }
  func.func @transform_16(%arg0: i32, %arg1: i32) -> (i32, i32) {
    %c0_i32 = arith.constant 0 : i32
    %c0_i32_0 = arith.constant 0 : i32
    %c0_i32_1 = arith.constant 0 : i32
    return %c0_i32, %c0_i32_0 : i32, i32
  }
  func.func @transform_17(%arg0: i32, %arg1: i32) -> (i32, i32) {
    %c0_i32 = arith.constant 0 : i32
    %c0_i32_0 = arith.constant 0 : i32
    %c0_i32_1 = arith.constant 0 : i32
    return %c0_i32, %c0_i32_0 : i32, i32
  }
  func.func @transform_18(%arg0: i32, %arg1: i32) -> (i32, i32, i32) {
    %c0_i32 = arith.constant 0 : i32
    %c0_i32_0 = arith.constant 0 : i32
    return %arg0, %arg1, %c0_i32 : i32, i32, i32
  }
}

</mosaic_0001>

<llo_original>
// kernel: tpu_custom_call.1
$region0: #{tpu_custom_call.1}
  #allocation0 [shape = 'u32[]', space=smem, size = 0x4, offset = 0x4, fixed_abs, tag = 'smem constant byte address 0x4 - core index']
  #allocation1 [shape = 'u32[144,128]{1,0:T(1,128)}', space=vmem, size = 0x12000, scoped, tag = 'internal scratch']
  #allocation2 [shape = 'f32[32,32]{1,0:T(8,128)}', space=vmem, size = 0x4000, scoped, tag = 'scratch operand']
  #allocation3 [shape = 'bf16[4,32,8]{2,1,0:T(8,128)(2,1)}', space=vmem, size = 0x8000, scoped, tag = 'scratch operand']
  #allocation4 [shape = 'bf16[4,32,8]{2,1,0:T(8,128)(2,1)}', space=vmem, size = 0x8000, scoped, tag = 'scratch operand']
  %s0 = inlined_call_operand.hbm [shape: f32[2,32,32], index: 0, kind: input, shape index: {}]
  %s1 = inlined_call_operand.vmem [shape: bf16[2,32,32], index: 1, kind: input, shape index: {}]
  %s2 = inlined_call_operand.vmem [shape: bf16[32,32], index: 2, kind: input, shape index: {}]
  %s3 = inlined_call_operand.vmem [shape: f32[1,32], index: 3, kind: input, shape index: {}]
  %s4 = inlined_call_operand.hbm [shape: bf16[32,32], index: 4, kind: input, shape index: {}]
  %s5 = inlined_call_operand.vmem [shape: f32[1,32], index: 5, kind: input, shape index: {}]
  %s6 = inlined_call_operand.hbm [shape: bf16[32,32], index: 6, kind: input, shape index: {}]
  %s7 = inlined_call_operand.vmem [shape: f32[1,32], index: 7, kind: input, shape index: {}]
  %s8 = inlined_call_operand.hbm [shape: bf16[4,8,32], index: 8, kind: input, shape index: {}]
  %s9 = inlined_call_operand.vmem [shape: f32[1,32], index: 9, kind: input, shape index: {}]
  %s10 = inlined_call_operand.vmem [shape: f32[1,32], index: 10, kind: input, shape index: {}]
  %s11 = inlined_call_operand.vmem [shape: f32[1,32], index: 11, kind: input, shape index: {}]
  %s12 = inlined_call_operand.vmem [shape: f32[1,32], index: 12, kind: input, shape index: {}]
  %s13 = inlined_call_operand.vmem [shape: f32[1,32], index: 13, kind: input, shape index: {}]
  %s14 = inlined_call_operand.hbm [shape: bf16[32,64], index: 14, kind: input, shape index: {}]
  %s15 = inlined_call_operand.vmem [shape: f32[1,64], index: 15, kind: input, shape index: {}]
  %s16 = inlined_call_operand.vmem [shape: bf16[64,32], index: 16, kind: input, shape index: {}]
  %s17 = inlined_call_operand.vmem [shape: f32[1,32], index: 17, kind: input, shape index: {}]
  %s18 = inlined_call_operand.hbm [shape: f32[2,32,32], index: 18, kind: output, shape index: {}]
  %s19 = sld [smem:[#allocation0]]
  $region129: #{tpu_custom_call.1} parent=0
    _
  %s21 = ssub.s32 1, %s19
  %s22 = scalar_select 0, %s21, %s19
  $region1: #{tpu_custom_call.1} parent=0
    #allocation5 [shape = 'u8[32768]{0}', space=vmem, size = 0x8000, scoped, tag = 'input window, operand 0']
    #allocation6 [shape = 's32[2]{0}', space=sflag, size = 0x8, scoped, tag = 'scoped memory for tpu_custom_call.1']
    #allocation7 [shape = 's32[2]{0}', space=sflag, size = 0x8, scoped, tag = 'scoped memory for tpu_custom_call.1']
    #allocation8 [shape = 'u8[8192]{0}', space=vmem, size = 0x2000, scoped, tag = 'input window, operand 4, single buffered']
    #allocation9 [shape = 's32[1]{0}', space=sflag, size = 0x4, scoped, tag = 'scoped memory for tpu_custom_call.1']
    #allocation10 [shape = 'u8[8192]{0}', space=vmem, size = 0x2000, scoped, tag = 'input window, operand 6, single buffered']
    #allocation11 [shape = 'u8[8192]{0}', space=vmem, size = 0x2000, scoped, tag = 'input window, operand 8, single buffered']
    #allocation12 [shape = 's32[1]{0}', space=sflag, size = 0x4, scoped, tag = 'scoped memory for tpu_custom_call.1']
    #allocation13 [shape = 'u8[8192]{0}', space=vmem, size = 0x2000, scoped, tag = 'input window, operand 14, single buffered']
    #allocation14 [shape = 'u8[16384]{0}', space=vmem, size = 0x4000, scoped, tag = 'output window, operand 0']
    %23 = vsyncpa [#allocation6], 0
    %s24 = scalar_lea.sflag [#allocation6], 1
    %25 = vsyncpa %s24, 0
    %26 = vsyncpa [#allocation9], 0
    %27 = vsyncpa [#allocation12], 0
    %28 = vsyncpa [#allocation7], 0
    %s29 = scalar_lea.sflag [#allocation7], 1
    %30 = vsyncpa %s29, 0
    loop: start=0, step=1, limit=6
    $region2: #{tpu_custom_call.1} parent=1 // loop_pre_header
      _
    $region3: #{tpu_custom_call.1} parent=1 // loop_header
      %s32 = sphi 0, %s36
      %p33 = scmp.ge.s32.totalorder %s32, 6
      %s39 = sphi 0, %s51
      %s40 = sphi 0, %s47
      %s41 = sphi 0, %s39
      %s42 = sphi 0, %s40
      %s43 = sphi 0, %s41
      %s44 = sphi 0, %s42
      %s54 = sphi 0, %s56
      %s57 = sphi 0, %s54
      %s58 = sphi 0, %s57
      %s74 = sphi 0, %s58
      %s82 = sphi 0, %s84
      %s85 = sphi 0, %s82
      %s86 = sphi 0, %s85
      %s102 = sphi 0, %s86
      %s106 = sphi 0, %s106
      %s108 = sphi 0, %s106
      %s109 = sphi 0, %s108
      %s123 = sphi 0, %s109
      %s127 = sphi 0, %s127
      %s129 = sphi 0, %s127
      %s130 = sphi 0, %s129
      %s144 = sphi 0, %s130
      %s148 = sphi 0, %s148
      %s150 = sphi 0, %s148
      %s151 = sphi 0, %s150
      %s165 = sphi 0, %s151
      %s169 = sphi 0, %s169
      %s171 = sphi 0, %s169
      %s172 = sphi 0, %s171
      %s186 = sphi 0, %s172
      %s190 = sphi 0, %s190
      %s192 = sphi 0, %s190
      %s193 = sphi 0, %s192
      %s207 = sphi 0, %s193
      %s211 = sphi 0, %s211
      %s213 = sphi 0, %s211
      %s214 = sphi 0, %s213
      %s228 = sphi 0, %s214
      %s232 = sphi 0, %s232
      %s234 = sphi 0, %s232
      %s235 = sphi 0, %s234
      %s249 = sphi 0, %s235
      %s253 = sphi 0, %s253
      %s255 = sphi 0, %s253
      %s256 = sphi 0, %s255
      %s270 = sphi 0, %s256
      %s274 = sphi 0, %s274
      %s276 = sphi 0, %s274
      %s277 = sphi 0, %s276
      %s291 = sphi 0, %s277
      %s295 = sphi 0, %s295
      %s297 = sphi 0, %s295
      %s298 = sphi 0, %s297
      %s312 = sphi 0, %s298
      %s316 = sphi 0, %s316
      %s318 = sphi 0, %s316
      %s319 = sphi 0, %s318
      %s333 = sphi 0, %s319
      %s337 = sphi 0, %s337
      %s339 = sphi 0, %s337
      %s340 = sphi 0, %s339
      %s354 = sphi 0, %s340
      %s358 = sphi 0, %s358
      %s360 = sphi 0, %s358
      %s361 = sphi 0, %s360
      %s375 = sphi 0, %s361
      %s379 = sphi 0, %s379
      %s381 = sphi 0, %s379
      %s382 = sphi 0, %s381
      %s396 = sphi 0, %s382
      %s400 = sphi 0, %s400
      %s402 = sphi 0, %s400
      %s403 = sphi 0, %s402
      %s417 = sphi 0, %s403
      %s421 = sphi 0, %s421
      %s423 = sphi 0, %s421
      %s424 = sphi 0, %s423
      %s438 = sphi 0, %s424
      %s446 = sphi 0, %s448
      %s449 = sphi 0, %s446
      %s450 = sphi 0, %s449
      %s466 = sphi 0, %s450
    $region4: #{tpu_custom_call.1} parent=1 // loop_header_branch
      %35 = sbr.rel (%p33) target = $region8
    $region5: #{tpu_custom_call.1} parent=1 // loop_body
      %s37 = ssub.s32 %s32, 1
      %s38 = ssub.s32 %s32, 2
      %s45 = sadd.s32 1, %s40
      %p46 = scmp.ge.s32.totalorder %s45, 2
      %s47 = scalar_select %p46, 0, %s45
      %s48 = sadd.s32 1, %s39
      %s49 = scalar_select %p46, %s48, %s39
      %p50 = scmp.ge.s32.totalorder %s49, 2
      %s51 = scalar_select %p50, 0, %s49
      %s52 = ssub.s32 %s39, %s51
      %p53 = scmp.eq.s32.totalorder %s52, 0
      %s55 = sadd.s32 %s54, 1
      %s56 = scalar_select %p53, %s54, %s55
      %p59 = pneg %p53
      %p60 = scmp.eq.s32.totalorder %s32, 3
      %p61 = por %p59, %p60
      %p62 = scmp.ne.s32.totalorder %s54, %s57
      %p63 = scmp.eq.s32.totalorder %s32, 0
      %p64 = por %p62, %p63
      %p65 = scmp.ne.s32.totalorder %s54, %s57
      %p66 = scmp.eq.s32.totalorder %s37, 3
      %p67 = por %p65, %p66
      %p68 = scmp.ne.s32.totalorder %s57, %s58
      %p69 = scmp.eq.s32.totalorder %s37, 0
      %p70 = por %p68, %p69
      %p71 = scmp.ne.s32.totalorder %s57, %s58
      %p72 = scmp.eq.s32.totalorder %s38, 3
      %p73 = por %p71, %p72
      %p75 = scmp.ne.s32.totalorder %s58, %s74
      %p76 = scmp.eq.s32.totalorder %s38, 0
      %p77 = por %p75, %p76
      %s78 = ssub.s32 %s39, %s51
      %s79 = ssub.s32 %s40, %s47
      %s80 = sor.u32 %s78, %s79
      %p81 = scmp.eq.s32.totalorder %s80, 0
      %s83 = sadd.s32 %s82, 1
      %s84 = scalar_select %p81, %s82, %s83
      %p87 = pneg %p81
      %p88 = scmp.eq.s32.totalorder %s32, 3
      %p89 = por %p87, %p88
      %p90 = scmp.ne.s32.totalorder %s82, %s85
      %p91 = scmp.eq.s32.totalorder %s32, 0
      %p92 = por %p90, %p91
      %p93 = scmp.ne.s32.totalorder %s82, %s85
      %p94 = scmp.eq.s32.totalorder %s37, 3
      %p95 = por %p93, %p94
      %p96 = scmp.ne.s32.totalorder %s85, %s86
      %p97 = scmp.eq.s32.totalorder %s37, 0
      %p98 = por %p96, %p97
      %p99 = scmp.ne.s32.totalorder %s85, %s86
      %p100 = scmp.eq.s32.totalorder %s38, 3
      %p101 = por %p99, %p100
      %p103 = scmp.ne.s32.totalorder %s86, %s102
      %p104 = scmp.eq.s32.totalorder %s38, 0
      %p105 = por %p103, %p104
      %s107 = sadd.s32 %s106, 1
      %p110 = scmp.eq.s32.totalorder %s32, 3
      %p111 = scmp.ne.s32.totalorder %s106, %s108
      %p112 = scmp.eq.s32.totalorder %s32, 0
      %p113 = por %p111, %p112
      %p114 = scmp.ne.s32.totalorder %s106, %s108
      %p115 = scmp.eq.s32.totalorder %s37, 3
      %p116 = por %p114, %p115
      %p117 = scmp.ne.s32.totalorder %s108, %s109
      %p118 = scmp.eq.s32.totalorder %s37, 0
      %p119 = por %p117, %p118
      %p120 = scmp.ne.s32.totalorder %s108, %s109
      %p121 = scmp.eq.s32.totalorder %s38, 3
      %p122 = por %p120, %p121
      %p124 = scmp.ne.s32.totalorder %s109, %s123
      %p125 = scmp.eq.s32.totalorder %s38, 0
      %p126 = por %p124, %p125
      %s128 = sadd.s32 %s127, 1
      %p131 = scmp.eq.s32.totalorder %s32, 3
      %p132 = scmp.ne.s32.totalorder %s127, %s129
      %p133 = scmp.eq.s32.totalorder %s32, 0
      %p134 = por %p132, %p133
      %p135 = scmp.ne.s32.totalorder %s127, %s129
      %p136 = scmp.eq.s32.totalorder %s37, 3
      %p137 = por %p135, %p136
      %p138 = scmp.ne.s32.totalorder %s129, %s130
      %p139 = scmp.eq.s32.totalorder %s37, 0
      %p140 = por %p138, %p139
      %p141 = scmp.ne.s32.totalorder %s129, %s130
      %p142 = scmp.eq.s32.totalorder %s38, 3
      %p143 = por %p141, %p142
      %p145 = scmp.ne.s32.totalorder %s130, %s144
      %p146 = scmp.eq.s32.totalorder %s38, 0
      %p147 = por %p145, %p146
      %s149 = sadd.s32 %s148, 1
      %p152 = scmp.eq.s32.totalorder %s32, 3
      %p153 = scmp.ne.s32.totalorder %s148, %s150
      %p154 = scmp.eq.s32.totalorder %s32, 0
      %p155 = por %p153, %p154
      %p156 = scmp.ne.s32.totalorder %s148, %s150
      %p157 = scmp.eq.s32.totalorder %s37, 3
      %p158 = por %p156, %p157
      %p159 = scmp.ne.s32.totalorder %s150, %s151
      %p160 = scmp.eq.s32.totalorder %s37, 0
      %p161 = por %p159, %p160
      %p162 = scmp.ne.s32.totalorder %s150, %s151
      %p163 = scmp.eq.s32.totalorder %s38, 3
      %p164 = por %p162, %p163
      %p166 = scmp.ne.s32.totalorder %s151, %s165
      %p167 = scmp.eq.s32.totalorder %s38, 0
      %p168 = por %p166, %p167
      %s170 = sadd.s32 %s169, 1
      %p173 = scmp.eq.s32.totalorder %s32, 3
      %p174 = scmp.ne.s32.totalorder %s169, %s171
      %p175 = scmp.eq.s32.totalorder %s32, 0
      %p176 = por %p174, %p175
      %p177 = scmp.ne.s32.totalorder %s169, %s171
      %p178 = scmp.eq.s32.totalorder %s37, 3
      %p179 = por %p177, %p178
      %p180 = scmp.ne.s32.totalorder %s171, %s172
      %p181 = scmp.eq.s32.totalorder %s37, 0
      %p182 = por %p180, %p181
      %p183 = scmp.ne.s32.totalorder %s171, %s172
      %p184 = scmp.eq.s32.totalorder %s38, 3
      %p185 = por %p183, %p184
      %p187 = scmp.ne.s32.totalorder %s172, %s186
      %p188 = scmp.eq.s32.totalorder %s38, 0
      %p189 = por %p187, %p188
      %s191 = sadd.s32 %s190, 1
      %p194 = scmp.eq.s32.totalorder %s32, 3
      %p195 = scmp.ne.s32.totalorder %s190, %s192
      %p196 = scmp.eq.s32.totalorder %s32, 0
      %p197 = por %p195, %p196
      %p198 = scmp.ne.s32.totalorder %s190, %s192
      %p199 = scmp.eq.s32.totalorder %s37, 3
      %p200 = por %p198, %p199
      %p201 = scmp.ne.s32.totalorder %s192, %s193
      %p202 = scmp.eq.s32.totalorder %s37, 0
      %p203 = por %p201, %p202
      %p204 = scmp.ne.s32.totalorder %s192, %s193
      %p205 = scmp.eq.s32.totalorder %s38, 3
      %p206 = por %p204, %p205
      %p208 = scmp.ne.s32.totalorder %s193, %s207
      %p209 = scmp.eq.s32.totalorder %s38, 0
      %p210 = por %p208, %p209
      %s212 = sadd.s32 %s211, 1
      %p215 = scmp.eq.s32.totalorder %s32, 3
      %p216 = scmp.ne.s32.totalorder %s211, %s213
      %p217 = scmp.eq.s32.totalorder %s32, 0
      %p218 = por %p216, %p217
      %p219 = scmp.ne.s32.totalorder %s211, %s213
      %p220 = scmp.eq.s32.totalorder %s37, 3
      %p221 = por %p219, %p220
      %p222 = scmp.ne.s32.totalorder %s213, %s214
      %p223 = scmp.eq.s32.totalorder %s37, 0
      %p224 = por %p222, %p223
      %p225 = scmp.ne.s32.totalorder %s213, %s214
      %p226 = scmp.eq.s32.totalorder %s38, 3
      %p227 = por %p225, %p226
      %p229 = scmp.ne.s32.totalorder %s214, %s228
      %p230 = scmp.eq.s32.totalorder %s38, 0
      %p231 = por %p229, %p230
      %s233 = sadd.s32 %s232, 1
      %p236 = scmp.eq.s32.totalorder %s32, 3
      %p237 = scmp.ne.s32.totalorder %s232, %s234
      %p238 = scmp.eq.s32.totalorder %s32, 0
      %p239 = por %p237, %p238
      %p240 = scmp.ne.s32.totalorder %s232, %s234
      %p241 = scmp.eq.s32.totalorder %s37, 3
      %p242 = por %p240, %p241
      %p243 = scmp.ne.s32.totalorder %s234, %s235
      %p244 = scmp.eq.s32.totalorder %s37, 0
      %p245 = por %p243, %p244
      %p246 = scmp.ne.s32.totalorder %s234, %s235
      %p247 = scmp.eq.s32.totalorder %s38, 3
      %p248 = por %p246, %p247
      %p250 = scmp.ne.s32.totalorder %s235, %s249
      %p251 = scmp.eq.s32.totalorder %s38, 0
      %p252 = por %p250, %p251
      %s254 = sadd.s32 %s253, 1
      %p257 = scmp.eq.s32.totalorder %s32, 3
      %p258 = scmp.ne.s32.totalorder %s253, %s255
      %p259 = scmp.eq.s32.totalorder %s32, 0
      %p260 = por %p258, %p259
      %p261 = scmp.ne.s32.totalorder %s253, %s255
      %p262 = scmp.eq.s32.totalorder %s37, 3
      %p263 = por %p261, %p262
      %p264 = scmp.ne.s32.totalorder %s255, %s256
      %p265 = scmp.eq.s32.totalorder %s37, 0
      %p266 = por %p264, %p265
      %p267 = scmp.ne.s32.totalorder %s255, %s256
      %p268 = scmp.eq.s32.totalorder %s38, 3
      %p269 = por %p267, %p268
      %p271 = scmp.ne.s32.totalorder %s256, %s270
      %p272 = scmp.eq.s32.totalorder %s38, 0
      %p273 = por %p271, %p272
      %s275 = sadd.s32 %s274, 1
      %p278 = scmp.eq.s32.totalorder %s32, 3
      %p279 = scmp.ne.s32.totalorder %s274, %s276
      %p280 = scmp.eq.s32.totalorder %s32, 0
      %p281 = por %p279, %p280
      %p282 = scmp.ne.s32.totalorder %s274, %s276
      %p283 = scmp.eq.s32.totalorder %s37, 3
      %p284 = por %p282, %p283
      %p285 = scmp.ne.s32.totalorder %s276, %s277
      %p286 = scmp.eq.s32.totalorder %s37, 0
      %p287 = por %p285, %p286
      %p288 = scmp.ne.s32.totalorder %s276, %s277
      %p289 = scmp.eq.s32.totalorder %s38, 3
      %p290 = por %p288, %p289
      %p292 = scmp.ne.s32.totalorder %s277, %s291
      %p293 = scmp.eq.s32.totalorder %s38, 0
      %p294 = por %p292, %p293
      %s296 = sadd.s32 %s295, 1
      %p299 = scmp.eq.s32.totalorder %s32, 3
      %p300 = scmp.ne.s32.totalorder %s295, %s297
      %p301 = scmp.eq.s32.totalorder %s32, 0
      %p302 = por %p300, %p301
      %p303 = scmp.ne.s32.totalorder %s295, %s297
      %p304 = scmp.eq.s32.totalorder %s37, 3
      %p305 = por %p303, %p304
      %p306 = scmp.ne.s32.totalorder %s297, %s298
      %p307 = scmp.eq.s32.totalorder %s37, 0
      %p308 = por %p306, %p307
      %p309 = scmp.ne.s32.totalorder %s297, %s298
      %p310 = scmp.eq.s32.totalorder %s38, 3
      %p311 = por %p309, %p310
      %p313 = scmp.ne.s32.totalorder %s298, %s312
      %p314 = scmp.eq.s32.totalorder %s38, 0
      %p315 = por %p313, %p314
      %s317 = sadd.s32 %s316, 1
      %p320 = scmp.eq.s32.totalorder %s32, 3
      %p321 = scmp.ne.s32.totalorder %s316, %s318
      %p322 = scmp.eq.s32.totalorder %s32, 0
      %p323 = por %p321, %p322
      %p324 = scmp.ne.s32.totalorder %s316, %s318
      %p325 = scmp.eq.s32.totalorder %s37, 3
      %p326 = por %p324, %p325
      %p327 = scmp.ne.s32.totalorder %s318, %s319
      %p328 = scmp.eq.s32.totalorder %s37, 0
      %p329 = por %p327, %p328
      %p330 = scmp.ne.s32.totalorder %s318, %s319
      %p331 = scmp.eq.s32.totalorder %s38, 3
      %p332 = por %p330, %p331
      %p334 = scmp.ne.s32.totalorder %s319, %s333
      %p335 = scmp.eq.s32.totalorder %s38, 0
      %p336 = por %p334, %p335
      %s338 = sadd.s32 %s337, 1
      %p341 = scmp.eq.s32.totalorder %s32, 3
      %p342 = scmp.ne.s32.totalorder %s337, %s339
      %p343 = scmp.eq.s32.totalorder %s32, 0
      %p344 = por %p342, %p343
      %p345 = scmp.ne.s32.totalorder %s337, %s339
      %p346 = scmp.eq.s32.totalorder %s37, 3
      %p347 = por %p345, %p346
      %p348 = scmp.ne.s32.totalorder %s339, %s340
      %p349 = scmp.eq.s32.totalorder %s37, 0
      %p350 = por %p348, %p349
      %p351 = scmp.ne.s32.totalorder %s339, %s340
      %p352 = scmp.eq.s32.totalorder %s38, 3
      %p353 = por %p351, %p352
      %p355 = scmp.ne.s32.totalorder %s340, %s354
      %p356 = scmp.eq.s32.totalorder %s38, 0
      %p357 = por %p355, %p356
      %s359 = sadd.s32 %s358, 1
      %p362 = scmp.eq.s32.totalorder %s32, 3
      %p363 = scmp.ne.s32.totalorder %s358, %s360
      %p364 = scmp.eq.s32.totalorder %s32, 0
      %p365 = por %p363, %p364
      %p366 = scmp.ne.s32.totalorder %s358, %s360
      %p367 = scmp.eq.s32.totalorder %s37, 3
      %p368 = por %p366, %p367
      %p369 = scmp.ne.s32.totalorder %s360, %s361
      %p370 = scmp.eq.s32.totalorder %s37, 0
      %p371 = por %p369, %p370
      %p372 = scmp.ne.s32.totalorder %s360, %s361
      %p373 = scmp.eq.s32.totalorder %s38, 3
      %p374 = por %p372, %p373
      %p376 = scmp.ne.s32.totalorder %s361, %s375
      %p377 = scmp.eq.s32.totalorder %s38, 0
      %p378 = por %p376, %p377
      %s380 = sadd.s32 %s379, 1
      %p383 = scmp.eq.s32.totalorder %s32, 3
      %p384 = scmp.ne.s32.totalorder %s379, %s381
      %p385 = scmp.eq.s32.totalorder %s32, 0
      %p386 = por %p384, %p385
      %p387 = scmp.ne.s32.totalorder %s379, %s381
      %p388 = scmp.eq.s32.totalorder %s37, 3
      %p389 = por %p387, %p388
      %p390 = scmp.ne.s32.totalorder %s381, %s382
      %p391 = scmp.eq.s32.totalorder %s37, 0
      %p392 = por %p390, %p391
      %p393 = scmp.ne.s32.totalorder %s381, %s382
      %p394 = scmp.eq.s32.totalorder %s38, 3
      %p395 = por %p393, %p394
      %p397 = scmp.ne.s32.totalorder %s382, %s396
      %p398 = scmp.eq.s32.totalorder %s38, 0
      %p399 = por %p397, %p398
      %s401 = sadd.s32 %s400, 1
      %p404 = scmp.eq.s32.totalorder %s32, 3
      %p405 = scmp.ne.s32.totalorder %s400, %s402
      %p406 = scmp.eq.s32.totalorder %s32, 0
      %p407 = por %p405, %p406
      %p408 = scmp.ne.s32.totalorder %s400, %s402
      %p409 = scmp.eq.s32.totalorder %s37, 3
      %p410 = por %p408, %p409
      %p411 = scmp.ne.s32.totalorder %s402, %s403
      %p412 = scmp.eq.s32.totalorder %s37, 0
      %p413 = por %p411, %p412
      %p414 = scmp.ne.s32.totalorder %s402, %s403
      %p415 = scmp.eq.s32.totalorder %s38, 3
      %p416 = por %p414, %p415
      %p418 = scmp.ne.s32.totalorder %s403, %s417
      %p419 = scmp.eq.s32.totalorder %s38, 0
      %p420 = por %p418, %p419
      %s422 = sadd.s32 %s421, 1
      %p425 = scmp.eq.s32.totalorder %s32, 3
      %p426 = scmp.ne.s32.totalorder %s421, %s423
      %p427 = scmp.eq.s32.totalorder %s32, 0
      %p428 = por %p426, %p427
      %p429 = scmp.ne.s32.totalorder %s421, %s423
      %p430 = scmp.eq.s32.totalorder %s37, 3
      %p431 = por %p429, %p430
      %p432 = scmp.ne.s32.totalorder %s423, %s424
      %p433 = scmp.eq.s32.totalorder %s37, 0
      %p434 = por %p432, %p433
      %p435 = scmp.ne.s32.totalorder %s423, %s424
      %p436 = scmp.eq.s32.totalorder %s38, 3
      %p437 = por %p435, %p436
      %p439 = scmp.ne.s32.totalorder %s424, %s438
      %p440 = scmp.eq.s32.totalorder %s38, 0
      %p441 = por %p439, %p440
      %s442 = ssub.s32 %s39, %s51
      %s443 = ssub.s32 %s40, %s47
      %s444 = sor.u32 %s442, %s443
      %p445 = scmp.eq.s32.totalorder %s444, 0
      %s447 = sadd.s32 %s446, 1
      %s448 = scalar_select %p445, %s446, %s447
      %p451 = pneg %p445
      %p452 = scmp.eq.s32.totalorder %s32, 3
      %p453 = por %p451, %p452
      %p454 = scmp.ne.s32.totalorder %s446, %s449
      %p455 = scmp.eq.s32.totalorder %s32, 0
      %p456 = por %p454, %p455
      %p457 = scmp.ne.s32.totalorder %s446, %s449
      %p458 = scmp.eq.s32.totalorder %s37, 3
      %p459 = por %p457, %p458
      %p460 = scmp.ne.s32.totalorder %s449, %s450
      %p461 = scmp.eq.s32.totalorder %s37, 0
      %p462 = por %p460, %p461
      %p463 = scmp.ne.s32.totalorder %s449, %s450
      %p464 = scmp.eq.s32.totalorder %s38, 3
      %p465 = por %p463, %p464
      %p467 = scmp.ne.s32.totalorder %s450, %s466
      %p468 = scmp.eq.s32.totalorder %s38, 0
      %p469 = por %p467, %p468
      %p470 = scmp.le.s32.totalorder 1, %s32
      %p471 = scmp.lt.s32.totalorder %s32, 5
      %p472 = pnand %p470, %p471
      %p473 = pneg %p472
      // Predicated region
      $region9: #{tpu_custom_call.1} parent=5 // pred_check
        _
      $region10: #{tpu_custom_call.1} parent=5 // pred_check_branch
        %475 = sbr.rel (%p472) target = $region12
      $region11: #{tpu_custom_call.1} parent=5 // pred_region
        %s476 = ssub.s32 %s32, 1
        // Predicated region
        $region13: #{tpu_custom_call.1} parent=11 // pred_check
          %p477 = pneg %p119
        $region14: #{tpu_custom_call.1} parent=11 // pred_check_branch
          %479 = sbr.rel (%p477) target = $region16
        $region15: #{tpu_custom_call.1} parent=11 // pred_region
          _
        $region16: #{tpu_custom_call.1} parent=11 // pred_fallthru
          _
        // Predicated region
        $region17: #{tpu_custom_call.1} parent=11 // pred_check
          %p480 = pneg %p140
        $region18: #{tpu_custom_call.1} parent=11 // pred_check_branch
          %482 = sbr.rel (%p480) target = $region20
        $region19: #{tpu_custom_call.1} parent=11 // pred_region
          _
        $region20: #{tpu_custom_call.1} parent=11 // pred_fallthru
          _
        // Predicated region
        $region21: #{tpu_custom_call.1} parent=11 // pred_check
          %p483 = pneg %p161
        $region22: #{tpu_custom_call.1} parent=11 // pred_check_branch
          %485 = sbr.rel (%p483) target = $region24
        $region23: #{tpu_custom_call.1} parent=11 // pred_region
          %s487 = ssub.s32 256, 256
          %488 = vsyncadd [#allocation9], %s487
          %s489 = sshll.u32 [#allocation8], 4
          %s490 = int_to_ptr.vmem [resolvable:$true] %s489
          %495 = dma.hbm_to_vmem [thread:$0]  %s4, 256, %s490, [#allocation9], 64, 64, 4
        $region24: #{tpu_custom_call.1} parent=11 // pred_fallthru
          _
        // Predicated region
        $region25: #{tpu_custom_call.1} parent=11 // pred_check
          %p496 = pneg %p182
        $region26: #{tpu_custom_call.1} parent=11 // pred_check_branch
          %498 = sbr.rel (%p496) target = $region28
        $region27: #{tpu_custom_call.1} parent=11 // pred_region
          _
        $region28: #{tpu_custom_call.1} parent=11 // pred_fallthru
          _
        // Predicated region
        $region29: #{tpu_custom_call.1} parent=11 // pred_check
          %p499 = pneg %p203
        $region30: #{tpu_custom_call.1} parent=11 // pred_check_branch
          %501 = sbr.rel (%p499) target = $region32
        $region31: #{tpu_custom_call.1} parent=11 // pred_region
          %s503 = ssub.s32 256, 256
          %504 = vsyncadd [#allocation9], %s503
          %s505 = sshll.u32 [#allocation10], 4
          %s506 = int_to_ptr.vmem [resolvable:$true] %s505
          %511 = dma.hbm_to_vmem [thread:$0]  %s6, 256, %s506, [#allocation9], 64, 64, 4
        $region32: #{tpu_custom_call.1} parent=11 // pred_fallthru
          _
        // Predicated region
        $region33: #{tpu_custom_call.1} parent=11 // pred_check
          %p512 = pneg %p224
        $region34: #{tpu_custom_call.1} parent=11 // pred_check_branch
          %514 = sbr.rel (%p512) target = $region36
        $region35: #{tpu_custom_call.1} parent=11 // pred_region
          _
        $region36: #{tpu_custom_call.1} parent=11 // pred_fallthru
          _
        // Predicated region
        $region37: #{tpu_custom_call.1} parent=11 // pred_check
          %p515 = pneg %p245
        $region38: #{tpu_custom_call.1} parent=11 // pred_check_branch
          %517 = sbr.rel (%p515) target = $region40
        $region39: #{tpu_custom_call.1} parent=11 // pred_region
          %s519 = ssub.s32 256, 256
          %520 = vsyncadd [#allocation12], %s519
          %s521 = sshll.u32 [#allocation11], 4
          %s522 = int_to_ptr.vmem [resolvable:$true] %s521
          %527 = dma.hbm_to_vmem [thread:$0]  %s8, 256, %s522, [#allocation12], 64, 64, 4
        $region40: #{tpu_custom_call.1} parent=11 // pred_fallthru
          _
        // Predicated region
        $region41: #{tpu_custom_call.1} parent=11 // pred_check
          %p528 = pneg %p266
        $region42: #{tpu_custom_call.1} parent=11 // pred_check_branch
          %530 = sbr.rel (%p528) target = $region44
        $region43: #{tpu_custom_call.1} parent=11 // pred_region
          _
        $region44: #{tpu_custom_call.1} parent=11 // pred_fallthru
          _
        // Predicated region
        $region45: #{tpu_custom_call.1} parent=11 // pred_check
          %p531 = pneg %p287
        $region46: #{tpu_custom_call.1} parent=11 // pred_check_branch
          %533 = sbr.rel (%p531) target = $region48
        $region47: #{tpu_custom_call.1} parent=11 // pred_region
          _
        $region48: #{tpu_custom_call.1} parent=11 // pred_fallthru
          _
        // Predicated region
        $region49: #{tpu_custom_call.1} parent=11 // pred_check
          %p534 = pneg %p308
        $region50: #{tpu_custom_call.1} parent=11 // pred_check_branch
          %536 = sbr.rel (%p534) target = $region52
        $region51: #{tpu_custom_call.1} parent=11 // pred_region
          _
        $region52: #{tpu_custom_call.1} parent=11 // pred_fallthru
          _
        // Predicated region
        $region53: #{tpu_custom_call.1} parent=11 // pred_check
          %p537 = pneg %p329
        $region54: #{tpu_custom_call.1} parent=11 // pred_check_branch
          %539 = sbr.rel (%p537) target = $region56
        $region55: #{tpu_custom_call.1} parent=11 // pred_region
          _
        $region56: #{tpu_custom_call.1} parent=11 // pred_fallthru
          _
        // Predicated region
        $region57: #{tpu_custom_call.1} parent=11 // pred_check
          %p540 = pneg %p350
        $region58: #{tpu_custom_call.1} parent=11 // pred_check_branch
          %542 = sbr.rel (%p540) target = $region60
        $region59: #{tpu_custom_call.1} parent=11 // pred_region
          _
        $region60: #{tpu_custom_call.1} parent=11 // pred_fallthru
          _
        // Predicated region
        $region61: #{tpu_custom_call.1} parent=11 // pred_check
          %p543 = pneg %p371
        $region62: #{tpu_custom_call.1} parent=11 // pred_check_branch
          %545 = sbr.rel (%p543) target = $region64
        $region63: #{tpu_custom_call.1} parent=11 // pred_region
          %s547 = ssub.s32 256, 256
          %548 = vsyncadd [#allocation12], %s547
          %s549 = sshll.u32 [#allocation13], 4
          %s550 = int_to_ptr.vmem [resolvable:$true] %s549
          %555 = dma.hbm_to_vmem [thread:$0]  %s14, 256, %s550, [#allocation12], 64, 64, 4
        $region64: #{tpu_custom_call.1} parent=11 // pred_fallthru
          _
        // Predicated region
        $region65: #{tpu_custom_call.1} parent=11 // pred_check
          %p556 = pneg %p392
        $region66: #{tpu_custom_call.1} parent=11 // pred_check_branch
          %558 = sbr.rel (%p556) target = $region68
        $region67: #{tpu_custom_call.1} parent=11 // pred_region
          _
        $region68: #{tpu_custom_call.1} parent=11 // pred_fallthru
          _
        // Predicated region
        $region69: #{tpu_custom_call.1} parent=11 // pred_check
          %p559 = pneg %p413
        $region70: #{tpu_custom_call.1} parent=11 // pred_check_branch
          %561 = sbr.rel (%p559) target = $region72
        $region71: #{tpu_custom_call.1} parent=11 // pred_region
          _
        $region72: #{tpu_custom_call.1} parent=11 // pred_fallthru
          _
        // Predicated region
        $region73: #{tpu_custom_call.1} parent=11 // pred_check
          %p562 = pneg %p434
        $region74: #{tpu_custom_call.1} parent=11 // pred_check_branch
          %564 = sbr.rel (%p562) target = $region76
        $region75: #{tpu_custom_call.1} parent=11 // pred_region
          _
        $region76: #{tpu_custom_call.1} parent=11 // pred_fallthru
          _
      $region12: #{tpu_custom_call.1} parent=5 // pred_fallthru
        _
      %p565 = scmp.lt.s32.totalorder %s32, 4
      // Predicated region
      $region77: #{tpu_custom_call.1} parent=5 // pred_check
        %p566 = pneg %p565
      $region78: #{tpu_custom_call.1} parent=5 // pred_check_branch
        %568 = sbr.rel (%p566) target = $region80
      $region79: #{tpu_custom_call.1} parent=5 // pred_region
        // Predicated region
        $region81: #{tpu_custom_call.1} parent=79 // pred_check
          %p569 = pneg %p64
        $region82: #{tpu_custom_call.1} parent=79 // pred_check_branch
          %571 = sbr.rel (%p569) target = $region84
        $region83: #{tpu_custom_call.1} parent=79 // pred_region
          %s572 = sand.u32 %s54, 1
          %s573 = scalar_lea.sflag [#allocation6], %s572
          %s574 = sand.u32 %s54, 1
          %s575 = smul.addr %s574, 32
          %s576 = scalar_lea.vmem [#allocation5], %s575
          %s578 = ssub.s32 512, 512
          %579 = vsyncadd %s573, %s578
          %s580 = smul.addr %s39, 4
          %s581 = smul.addr %s580, 128
          %s582 = scalar_lea.hbm %s0, %s581
          %s583 = sshll.u32 %s576, 4
          %s584 = int_to_ptr.vmem [resolvable:$true] %s583
          %589 = dma.hbm_to_vmem [thread:$0]  %s582, 512, %s584, %s573, 128, 128, 8
        $region84: #{tpu_custom_call.1} parent=79 // pred_fallthru
          _
        // Predicated region
        $region85: #{tpu_custom_call.1} parent=79 // pred_check
          %p590 = pneg %p92
        $region86: #{tpu_custom_call.1} parent=79 // pred_check_branch
          %592 = sbr.rel (%p590) target = $region88
        $region87: #{tpu_custom_call.1} parent=79 // pred_region
          %s593 = smul.u32 2, %s40
          %p594 = scmp.lt.s32.totalorder %s39, 1
          %s595 = scalar_select %p594, %s39, 1
          %p596 = scmp.lt.s32.totalorder %s593, 3
          %s597 = scalar_select %p596, %s593, 3
          %s598 = smul.addr %s595, 4
          %s599 = sadd.s32 %s597, %s598
          %s600 = smul.addr %s599, 4
          %s601 = scalar_lea.vmem %s1, %s600
          %s602 = smul.u32 2, %s40
        $region88: #{tpu_custom_call.1} parent=79 // pred_fallthru
          _
      $region80: #{tpu_custom_call.1} parent=5 // pred_fallthru
        _
      %p603 = scmp.le.s32.totalorder 1, %s32
      %p604 = scmp.lt.s32.totalorder %s32, 5
      %p605 = pnand %p603, %p604
      %p606 = pneg %p605
      // Predicated region
      $region89: #{tpu_custom_call.1} parent=5 // pred_check
        _
      $region90: #{tpu_custom_call.1} parent=5 // pred_check_branch
        %608 = sbr.rel (%p605) target = $region92
      $region91: #{tpu_custom_call.1} parent=5 // pred_region
        %s609 = ssub.s32 %s32, 1
        %s610 = sand.u32 %s57, 1
        %s611 = scalar_lea.sflag [#allocation6], %s610
        %s612 = sand.u32 %s57, 1
        %s613 = smul.addr %s612, 32
        %s614 = scalar_lea.vmem [#allocation5], %s613
        // Predicated region
        $region93: #{tpu_custom_call.1} parent=91 // pred_check
          %p615 = pneg %p70
        $region94: #{tpu_custom_call.1} parent=91 // pred_check_branch
          %617 = sbr.rel (%p615) target = $region96
        $region95: #{tpu_custom_call.1} parent=91 // pred_region
          %618 = dma.done %s611, 512
        $region96: #{tpu_custom_call.1} parent=91 // pred_fallthru
          _
        // Predicated region
        $region97: #{tpu_custom_call.1} parent=91 // pred_check
          %p619 = pneg %p161
        $region98: #{tpu_custom_call.1} parent=91 // pred_check_branch
          %621 = sbr.rel (%p619) target = $region100
        $region99: #{tpu_custom_call.1} parent=91 // pred_region
          %622 = dma.done [#allocation9], 256
        $region100: #{tpu_custom_call.1} parent=91 // pred_fallthru
          _
        // Predicated region
        $region101: #{tpu_custom_call.1} parent=91 // pred_check
          %p623 = pneg %p203
        $region102: #{tpu_custom_call.1} parent=91 // pred_check_branch
          %625 = sbr.rel (%p623) target = $region104
        $region103: #{tpu_custom_call.1} parent=91 // pred_region
          %626 = dma.done [#allocation9], 256
        $region104: #{tpu_custom_call.1} parent=91 // pred_fallthru
          _
        // Predicated region
        $region105: #{tpu_custom_call.1} parent=91 // pred_check
          %p627 = pneg %p245
        $region106: #{tpu_custom_call.1} parent=91 // pred_check_branch
          %629 = sbr.rel (%p627) target = $region108
        $region107: #{tpu_custom_call.1} parent=91 // pred_region
          %630 = dma.done [#allocation12], 256
        $region108: #{tpu_custom_call.1} parent=91 // pred_fallthru
          _
        // Predicated region
        $region109: #{tpu_custom_call.1} parent=91 // pred_check
          %p631 = pneg %p371
        $region110: #{tpu_custom_call.1} parent=91 // pred_check_branch
          %633 = sbr.rel (%p631) target = $region112
        $region111: #{tpu_custom_call.1} parent=91 // pred_region
          %634 = dma.done [#allocation12], 256
        $region112: #{tpu_custom_call.1} parent=91 // pred_fallthru
          _
        %s635 = sand.u32 %s57, 1
        %s636 = scalar_lea.sflag [#allocation6], %s635
        %s637 = sand.u32 %s57, 1
        %s638 = smul.addr %s637, 32
        %s639 = scalar_lea.vmem [#allocation5], %s638
        %p640 = pneg %p70
        %p641 = pneg %p67
        %s642 = smul.u32 2, %s42
        %p643 = scmp.lt.s32.totalorder %s41, 1
        %s644 = scalar_select %p643, %s41, 1
        %p645 = scmp.lt.s32.totalorder %s642, 3
        %s646 = scalar_select %p645, %s642, 3
        %s647 = smul.addr %s644, 4
        %s648 = sadd.s32 %s646, %s647
        %s649 = smul.addr %s648, 4
        %s650 = scalar_lea.vmem %s1, %s649
        %p651 = pneg %p98
        %p652 = pneg %p95
        %p653 = pneg %p119
        %p654 = pneg %p116
        %p655 = pneg %p140
        %p656 = pneg %p137
        %p657 = pneg %p161
        %p658 = pneg %p158
        %p659 = pneg %p182
        %p660 = pneg %p179
        %p661 = pneg %p203
        %p662 = pneg %p200
        %p663 = pneg %p224
        %p664 = pneg %p221
        %p665 = pneg %p245
        %p666 = pneg %p242
        %p667 = pneg %p266
        %p668 = pneg %p263
        %p669 = pneg %p287
        %p670 = pneg %p284
        %p671 = pneg %p308
        %p672 = pneg %p305
        %p673 = pneg %p329
        %p674 = pneg %p326
        %p675 = pneg %p350
        %p676 = pneg %p347
        %p677 = pneg %p371
        %p678 = pneg %p368
        %p679 = pneg %p392
        %p680 = pneg %p389
        %p681 = pneg %p413
        %p682 = pneg %p410
        %p683 = pneg %p434
        %p684 = pneg %p431
        %p685 = pneg %p462
        %p686 = pneg %p459
        %s687 = sand.u32 %s449, 1
        %s688 = scalar_lea.sflag [#allocation7], %s687
        %s689 = sand.u32 %s449, 1
        %s690 = smul.addr %s689, 16
        %s691 = scalar_lea.vmem [#allocation14], %s690
        %s692 = smul.u32 2, %s42
        %p693 = scmp.lt.s32.totalorder %s41, 1
        %s694 = scalar_select %p693, %s41, 1
        %p695 = scmp.lt.s32.totalorder %s692, 3
        %s696 = scalar_select %p695, %s692, 3
        %s697 = smul.addr %s694, 4
        %s698 = sadd.s32 %s696, %s697
        %s699 = smul.addr %s698, 4
        %s700 = scalar_lea.vmem %s1, %s699
        %s701 = smul.u32 2, %s42
        %s702 = smul.u32 2, %s42
        %s704 = smul.u32 %s42, 16
        %p705 = scmp.eq.s32.totalorder %s42, 0
        // Predicated region
        $region113: #{tpu_custom_call.1} parent=91 // pred_check
          %p706 = pneg %p705
        $region114: #{tpu_custom_call.1} parent=91 // pred_check_branch
          %708 = sbr.rel (%p706) target = $region116
        $region115: #{tpu_custom_call.1} parent=91 // pred_region
          %v709 = vld [vmem:[%s614] sm:$0xff]
          %v710 = vld [vmem:[%s614 + $0x8] sm:$0xff]
          %v711 = vld [vmem:[%s614 + $0x10] sm:$0xff]
          %v712 = vld [vmem:[%s614 + $0x18] sm:$0xff]
          %v713 = vld [vmem:[%s10] sm:$0x1]
          %v714 = vld [vmem:[%s11] sm:$0x1]
          %vm715 = vcmask 261120
          %v716 = vsel %vm715, %v709, 0.0
          %717 = vadd.xlane.f32.xlu0 %v716
          %v718 = vpop.xlane.xlu0 %717
          %v719 = vsel %vm715, %v710, 0.0
          %720 = vadd.xlane.f32.xlu0 %v719
          %v721 = vpop.xlane.xlu0 %720
          %v722 = vsel %vm715, %v711, 0.0
          %723 = vadd.xlane.f32.xlu0 %v722
          %v724 = vpop.xlane.xlu0 %723
          %v725 = vsel %vm715, %v712, 0.0
          %726 = vadd.xlane.f32.xlu0 %v725
          %v727 = vpop.xlane.xlu0 %726
          %v728 = vrcp.pop 32.0
          %v729 = vmul.f32 %v718, %v728
          %v730 = vmul.f32 %v721, %v728
          %v731 = vmul.f32 %v724, %v728
          %v732 = vmul.f32 %v727, %v728
          %v733 = vsub.f32 %v709, %v729
          %v734 = vsub.f32 %v710, %v730
          %v735 = vsub.f32 %v711, %v731
          %v736 = vsub.f32 %v712, %v732
          %v737 = vmul.f32 %v733, %v733
          %v738 = vmul.f32 %v734, %v734
          %v739 = vmul.f32 %v735, %v735
          %v740 = vmul.f32 %v736, %v736
          %v741 = vsel %vm715, %v737, 0.0
          %742 = vadd.xlane.f32.xlu0 %v741
          %v743 = vpop.xlane.xlu0 %742
          %v744 = vsel %vm715, %v738, 0.0
          %745 = vadd.xlane.f32.xlu0 %v744
          %v746 = vpop.xlane.xlu0 %745
          %v747 = vsel %vm715, %v739, 0.0
          %748 = vadd.xlane.f32.xlu0 %v747
          %v749 = vpop.xlane.xlu0 %748
          %v750 = vsel %vm715, %v740, 0.0
          %751 = vadd.xlane.f32.xlu0 %v750
          %v752 = vpop.xlane.xlu0 %751
          %v753 = vmul.f32 %v743, %v728
          %v754 = vmul.f32 %v746, %v728
          %v755 = vmul.f32 %v749, %v728
          %v756 = vmul.f32 %v752, %v728
          %v757 = vadd.f32 %v753, 1e-06
          %v758 = vadd.f32 %v754, 1e-06
          %v759 = vadd.f32 %v755, 1e-06
          %v760 = vadd.f32 %v756, 1e-06
          %v761 = vrsqrt.pop %v757
          %v762 = vrsqrt.pop %v758
          %v763 = vrsqrt.pop %v759
          %v764 = vrsqrt.pop %v760
          %v765 = vmul.f32 %v733, %v761
          %v766 = vmul.f32 %v734, %v762
          %v767 = vmul.f32 %v735, %v763
          %v768 = vmul.f32 %v736, %v764
          %v770 = vlaneseq
          %v771 = vshrl.u32 %v770, 7
          %v772 = vsub.s32 0, %v771
          %v773 = vrot.slane %v713, %v772
          %v775 = vmul.f32 %v765, %v773
          %v776 = vmul.f32 %v766, %v773
          %v777 = vmul.f32 %v767, %v773
          %v778 = vmul.f32 %v768, %v773
          %v780 = vlaneseq
          %v781 = vshrl.u32 %v780, 7
          %v782 = vsub.s32 0, %v781
          %v783 = vrot.slane %v714, %v782
          %v785 = vadd.f32 %v775, %v783
          %v786 = vadd.f32 %v776, %v783
          %v787 = vadd.f32 %v777, %v783
          %v788 = vadd.f32 %v778, %v783
          %789 = vst.msk [vmem:[#allocation2] sm:$0xff] %vm715, %v785
          %790 = vst.msk [vmem:[#allocation2 + $0x8] sm:$0xff] %vm715, %v786
          %791 = vst.msk [vmem:[#allocation2 + $0x10] sm:$0xff] %vm715, %v787
          %792 = vst.msk [vmem:[#allocation2 + $0x18] sm:$0xff] %vm715, %v788
          %v793 = vpack.c.bf16 %v786, %v785
          %v794 = vpack.c.bf16 %v788, %v787
          %v795 = vld [vmem:[#allocation8] sm:$0xf]
          %v796 = vld [vmem:[#allocation8 + $0x4] sm:$0xf]
          %v797 = vld [vmem:[#allocation8 + $0x8] sm:$0xf]
          %v798 = vld [vmem:[#allocation8 + $0xc] sm:$0xf]
          %v799 = vld [vmem:[%s5] sm:$0x1]
          %v801 = vlaneseq
          %v802 = vshrl.u32 %v801, 7
          %v803 = vsub.s32 0, %v802
          %v804 = vrot.slane %v799, %v803
          %v810 = vunpack.c.l.b16 %v795
          %v811 = vunpack.c.l.b16 %v796
          %v812 = vunpack.c.l.b16 %v797
          %v813 = vunpack.c.l.b16 %v798
          %v814 = vpack.c.b16 %v811, %v810
          %v815 = vpack.c.b16 %v813, %v812
          %v819 = vsel %vm715, %v793, 0
          %v822 = vsel %vm715, %v794, 0
          %824 = vmatprep.subr.bf16.mxu0 0
          %825 = vmatpush1.bf16.msra.mxu0 0
          %826 = vmatprep.subr.bf16.mxu0 0
          %827 = vmatpush1.bf16.msra.mxu0 0
          %828 = vmatprep.subr.bf16.mxu0 0
          %829 = vmatpush1.bf16.msra.mxu0 0
          %830 = vmatprep.subr.bf16.mxu0 0
          %831 = vmatpush1.bf16.msra.mxu0 0
          %832 = vmatprep.subr.bf16.mxu0 0
          %833 = vmatpush1.bf16.msra.mxu0 0
          %834 = vmatprep.subr.bf16.mxu0 0
          %835 = vmatpush1.bf16.msra.mxu0 0
          %836 = vmatprep.subr.bf16.mxu0 0
          %837 = vmatpush1.bf16.msra.mxu0 %v815
          %838 = vmatprep.subr.bf16.mxu0 0
          %839 = vmatpush1.bf16.msra.mxu0 %v814
          %840 = vmatprep.subr.bf16.mxu0 0
          %841 = vmatpush2.bf16.msra.mxu0 0
          %842 = vmatprep.subr.bf16.mxu0 0
          %843 = vmatpush2.bf16.msra.mxu0 0
          %844 = vmatprep.subr.bf16.mxu0 0
          %845 = vmatpush2.bf16.msra.mxu0 0
          %846 = vmatprep.subr.bf16.mxu0 0
          %847 = vmatpush2.bf16.msra.mxu0 0
          %848 = vmatprep.subr.bf16.mxu0 0
          %849 = vmatpush2.bf16.msra.mxu0 0
          %850 = vmatprep.subr.bf16.mxu0 0
          %851 = vmatpush2.bf16.msra.mxu0 0
          %852 = vmatprep.subr.bf16.mxu0 0
          %853 = vmatpush2.bf16.msra.mxu0 0
          %854 = vmatprep.subr.bf16.mxu0 0
          %855 = vmatpush2.bf16.msra.mxu0 0
          %856 = vmatprep.mubr.bf16.mxu0 0
          %857 = vmatmul.mubr.bf16.gmra.mxu0 %v819
          %v858 = vpop.f32.mrf.mxu0
          %v859 = vadd.f32 %v804, %v858
          %v860 = vpop.f32.mrf.mxu0
          %v861 = vpop.f32.mrf.mxu0
          %v862 = vadd.f32 %v804, %v861
          %v863 = vpop.f32.mrf.mxu0
          %864 = vmatprep.mubr.bf16.mxu0 0
          %865 = vmatmul.mubr.bf16.gmra.mxu0 %v822
          %v866 = vpop.f32.mrf.mxu0
          %v867 = vadd.f32 %v804, %v866
          %v868 = vpop.f32.mrf.mxu0
          %v869 = vpop.f32.mrf.mxu0
          %v870 = vadd.f32 %v804, %v869
          %v871 = vpop.f32.mrf.mxu0
          %872 = vdwg.mxu0
          %v873 = vpack.c.bf16 %v862, %v859
          %v874 = vpack.c.bf16 %v870, %v867
          %v875 = vld [vmem:[#allocation10] sm:$0xf]
          %v876 = vld [vmem:[#allocation10 + $0x4] sm:$0xf]
          %v877 = vld [vmem:[#allocation10 + $0x8] sm:$0xf]
          %v878 = vld [vmem:[#allocation10 + $0xc] sm:$0xf]
          %v879 = vld [vmem:[%s7] sm:$0x1]
          %v881 = vlaneseq
          %v882 = vshrl.u32 %v881, 7
          %v883 = vsub.s32 0, %v882
          %v884 = vrot.slane %v879, %v883
          %v890 = vunpack.c.l.b16 %v875
          %v891 = vunpack.c.l.b16 %v876
          %v892 = vunpack.c.l.b16 %v877
          %v893 = vunpack.c.l.b16 %v878
          %v894 = vpack.c.b16 %v891, %v890
          %v895 = vpack.c.b16 %v893, %v892
          %898 = vmatprep.subr.bf16.mxu0 0
          %899 = vmatpush1.bf16.msra.mxu0 0
          %900 = vmatprep.subr.bf16.mxu0 0
          %901 = vmatpush1.bf16.msra.mxu0 0
          %902 = vmatprep.subr.bf16.mxu0 0
          %903 = vmatpush1.bf16.msra.mxu0 0
          %904 = vmatprep.subr.bf16.mxu0 0
          %905 = vmatpush1.bf16.msra.mxu0 0
          %906 = vmatprep.subr.bf16.mxu0 0
          %907 = vmatpush1.bf16.msra.mxu0 0
          %908 = vmatprep.subr.bf16.mxu0 0
          %909 = vmatpush1.bf16.msra.mxu0 0
          %910 = vmatprep.subr.bf16.mxu0 0
          %911 = vmatpush1.bf16.msra.mxu0 %v895
          %912 = vmatprep.subr.bf16.mxu0 0
          %913 = vmatpush1.bf16.msra.mxu0 %v894
          %914 = vmatprep.subr.bf16.mxu0 0
          %915 = vmatpush2.bf16.msra.mxu0 0
          %916 = vmatprep.subr.bf16.mxu0 0
          %917 = vmatpush2.bf16.msra.mxu0 0
          %918 = vmatprep.subr.bf16.mxu0 0
          %919 = vmatpush2.bf16.msra.mxu0 0
          %920 = vmatprep.subr.bf16.mxu0 0
          %921 = vmatpush2.bf16.msra.mxu0 0
          %922 = vmatprep.subr.bf16.mxu0 0
          %923 = vmatpush2.bf16.msra.mxu0 0
          %924 = vmatprep.subr.bf16.mxu0 0
          %925 = vmatpush2.bf16.msra.mxu0 0
          %926 = vmatprep.subr.bf16.mxu0 0
          %927 = vmatpush2.bf16.msra.mxu0 0
          %928 = vmatprep.subr.bf16.mxu0 0
          %929 = vmatpush2.bf16.msra.mxu0 0
          %930 = vmatprep.mubr.bf16.mxu0 0
          %931 = vmatmul.mubr.bf16.gmra.mxu0 %v819
          %v932 = vpop.f32.mrf.mxu0
          %v933 = vadd.f32 %v884, %v932
          %v934 = vpop.f32.mrf.mxu0
          %v935 = vpop.f32.mrf.mxu0
          %v936 = vadd.f32 %v884, %v935
          %v937 = vpop.f32.mrf.mxu0
          %938 = vmatprep.mubr.bf16.mxu0 0
          %939 = vmatmul.mubr.bf16.gmra.mxu0 %v822
          %v940 = vpop.f32.mrf.mxu0
          %v941 = vadd.f32 %v884, %v940
          %v942 = vpop.f32.mrf.mxu0
          %v943 = vpop.f32.mrf.mxu0
          %v944 = vadd.f32 %v884, %v943
          %v945 = vpop.f32.mrf.mxu0
          %946 = vdwg.mxu0
          %v947 = vpack.c.bf16 %v936, %v933
          %v948 = vpack.c.bf16 %v944, %v941
          %951 = vrot.lane.b32.xlu0 %v873, 120
          %v952 = vpop.permute.xlu0 %951
          %953 = vrot.lane.b32.xlu0 %v874, 120
          %v954 = vpop.permute.xlu0 %953
          %955 = vrot.lane.b32.xlu0 %v873, 112
          %v956 = vpop.permute.xlu0 %955
          %957 = vrot.lane.b32.xlu0 %v874, 112
          %v958 = vpop.permute.xlu0 %957
          %959 = vrot.lane.b32.xlu0 %v873, 104
          %v960 = vpop.permute.xlu0 %959
          %961 = vrot.lane.b32.xlu0 %v874, 104
          %v962 = vpop.permute.xlu0 %961
          %v965 = vpack.i.b16 %v952, %v873
          %v967 = vshrl.u32 %v873, 16
          %v968 = vshrl.u32 %v952, 16
          %v969 = vpack.i.b16 %v968, %v967
          %v973 = vpack.i.b16 %v960, %v956
          %v975 = vshrl.u32 %v956, 16
          %v976 = vshrl.u32 %v960, 16
          %v977 = vpack.i.b16 %v976, %v975
          %v980 = vpack.i.b16 0, 0
          %v982 = vshrl.u32 0, 16
          %v983 = vpack.i.b16 %v982, %v982
          %v987 = vpack.i.b16 %v954, %v874
          %v989 = vshrl.u32 %v874, 16
          %v990 = vshrl.u32 %v954, 16
          %v991 = vpack.i.b16 %v990, %v989
          %v995 = vpack.i.b16 %v962, %v958
          %v997 = vshrl.u32 %v958, 16
          %v998 = vshrl.u32 %v962, 16
          %v999 = vpack.i.b16 %v998, %v997
          %v1001 = vcombine.high %v965, %v980
          %v1003 = vunpack.c.l.s4 1983009808
          %v1004 = vunpack.c.0.s8 %v1003
          %v1005 = vlaneseq
          %v1006 = vshrl.u32 %v1005, 7
          %v1007 = vsub.s32 %v1004, %v1006
          %v1008 = vrot.slane %v965, %v1007
          %v1010 = vunpack.c.l.s4 1983009808
          %v1011 = vunpack.c.0.s8 %v1010
          %v1012 = vlaneseq
          %v1013 = vshrl.u32 %v1012, 7
          %v1014 = vsub.s32 %v1011, %v1013
          %v1015 = vrot.slane %v1001, %v1014
          %v1016 = vcombine.high %v973, %v980
          %v1018 = vunpack.c.l.s4 1983009808
          %v1019 = vunpack.c.0.s8 %v1018
          %v1020 = vlaneseq
          %v1021 = vshrl.u32 %v1020, 7
          %v1022 = vsub.s32 %v1019, %v1021
          %v1023 = vrot.slane %v973, %v1022
          %v1025 = vunpack.c.l.s4 1983009808
          %v1026 = vunpack.c.0.s8 %v1025
          %v1027 = vlaneseq
          %v1028 = vshrl.u32 %v1027, 7
          %v1029 = vsub.s32 %v1026, %v1028
          %v1030 = vrot.slane %v1016, %v1029
          %v1031 = vcombine.low %v1008, %v1023
          %v1032 = vcombine.high %v1008, %v1023
          %v1034 = vunpack.c.l.s4 1934713408
          %v1035 = vunpack.c.0.s8 %v1034
          %v1036 = vlaneseq
          %v1037 = vshrl.u32 %v1036, 7
          %v1038 = vsub.s32 %v1035, %v1037
          %v1039 = vrot.slane %v1031, %v1038
          %v1041 = vunpack.c.l.s4 1934713408
          %v1042 = vunpack.c.0.s8 %v1041
          %v1043 = vlaneseq
          %v1044 = vshrl.u32 %v1043, 7
          %v1045 = vsub.s32 %v1042, %v1044
          %v1046 = vrot.slane %v1032, %v1045
          %v1047 = vcombine.low %v1015, %v1030
          %v1048 = vcombine.high %v1015, %v1030
          %v1050 = vunpack.c.l.s4 1934713408
          %v1051 = vunpack.c.0.s8 %v1050
          %v1052 = vlaneseq
          %v1053 = vshrl.u32 %v1052, 7
          %v1054 = vsub.s32 %v1051, %v1053
          %v1055 = vrot.slane %v1047, %v1054
          %v1057 = vunpack.c.l.s4 1934713408
          %v1058 = vunpack.c.0.s8 %v1057
          %v1059 = vlaneseq
          %v1060 = vshrl.u32 %v1059, 7
          %v1061 = vsub.s32 %v1058, %v1060
          %v1062 = vrot.slane %v1048, %v1061
          %v1063 = vcombine.high %v1039, 0
          %v1064 = vcombine.high %v1046, 0
          %v1065 = vcombine.high %v1055, 0
          %v1066 = vcombine.high %v1062, 0
          %v1067 = vcombine.high %v969, %v983
          %v1069 = vunpack.c.l.s4 1983009808
          %v1070 = vunpack.c.0.s8 %v1069
          %v1071 = vlaneseq
          %v1072 = vshrl.u32 %v1071, 7
          %v1073 = vsub.s32 %v1070, %v1072
          %v1074 = vrot.slane %v969, %v1073
          %v1076 = vunpack.c.l.s4 1983009808
          %v1077 = vunpack.c.0.s8 %v1076
          %v1078 = vlaneseq
          %v1079 = vshrl.u32 %v1078, 7
          %v1080 = vsub.s32 %v1077, %v1079
          %v1081 = vrot.slane %v1067, %v1080
          %v1082 = vcombine.high %v977, %v983
          %v1084 = vunpack.c.l.s4 1983009808
          %v1085 = vunpack.c.0.s8 %v1084
          %v1086 = vlaneseq
          %v1087 = vshrl.u32 %v1086, 7
          %v1088 = vsub.s32 %v1085, %v1087
          %v1089 = vrot.slane %v977, %v1088
          %v1091 = vunpack.c.l.s4 1983009808
          %v1092 = vunpack.c.0.s8 %v1091
          %v1093 = vlaneseq
          %v1094 = vshrl.u32 %v1093, 7
          %v1095 = vsub.s32 %v1092, %v1094
          %v1096 = vrot.slane %v1082, %v1095
          %v1097 = vcombine.low %v1074, %v1089
          %v1098 = vcombine.high %v1074, %v1089
          %v1100 = vunpack.c.l.s4 1934713408
          %v1101 = vunpack.c.0.s8 %v1100
          %v1102 = vlaneseq
          %v1103 = vshrl.u32 %v1102, 7
          %v1104 = vsub.s32 %v1101, %v1103
          %v1105 = vrot.slane %v1097, %v1104
          %v1107 = vunpack.c.l.s4 1934713408
          %v1108 = vunpack.c.0.s8 %v1107
          %v1109 = vlaneseq
          %v1110 = vshrl.u32 %v1109, 7
          %v1111 = vsub.s32 %v1108, %v1110
          %v1112 = vrot.slane %v1098, %v1111
          %v1113 = vcombine.low %v1081, %v1096
          %v1114 = vcombine.high %v1081, %v1096
          %v1116 = vunpack.c.l.s4 1934713408
          %v1117 = vunpack.c.0.s8 %v1116
          %v1118 = vlaneseq
          %v1119 = vshrl.u32 %v1118, 7
          %v1120 = vsub.s32 %v1117, %v1119
          %v1121 = vrot.slane %v1113, %v1120
          %v1123 = vunpack.c.l.s4 1934713408
          %v1124 = vunpack.c.0.s8 %v1123
          %v1125 = vlaneseq
          %v1126 = vshrl.u32 %v1125, 7
          %v1127 = vsub.s32 %v1124, %v1126
          %v1128 = vrot.slane %v1114, %v1127
          %v1129 = vcombine.high %v1105, 0
          %v1130 = vcombine.high %v1112, 0
          %v1131 = vcombine.high %v1121, 0
          %v1132 = vcombine.high %v1128, 0
          %v1133 = vcombine.high %v987, %v980
          %v1135 = vunpack.c.l.s4 1983009808
          %v1136 = vunpack.c.0.s8 %v1135
          %v1137 = vlaneseq
          %v1138 = vshrl.u32 %v1137, 7
          %v1139 = vsub.s32 %v1136, %v1138
          %v1140 = vrot.slane %v987, %v1139
          %v1142 = vunpack.c.l.s4 1983009808
          %v1143 = vunpack.c.0.s8 %v1142
          %v1144 = vlaneseq
          %v1145 = vshrl.u32 %v1144, 7
          %v1146 = vsub.s32 %v1143, %v1145
          %v1147 = vrot.slane %v1133, %v1146
          %v1148 = vcombine.high %v995, %v980
          %v1150 = vunpack.c.l.s4 1983009808
          %v1151 = vunpack.c.0.s8 %v1150
          %v1152 = vlaneseq
          %v1153 = vshrl.u32 %v1152, 7
          %v1154 = vsub.s32 %v1151, %v1153
          %v1155 = vrot.slane %v995, %v1154
          %v1157 = vunpack.c.l.s4 1983009808
          %v1158 = vunpack.c.0.s8 %v1157
          %v1159 = vlaneseq
          %v1160 = vshrl.u32 %v1159, 7
          %v1161 = vsub.s32 %v1158, %v1160
          %v1162 = vrot.slane %v1148, %v1161
          %v1163 = vcombine.low %v1140, %v1155
          %v1164 = vcombine.high %v1140, %v1155
          %v1166 = vunpack.c.l.s4 1934713408
          %v1167 = vunpack.c.0.s8 %v1166
          %v1168 = vlaneseq
          %v1169 = vshrl.u32 %v1168, 7
          %v1170 = vsub.s32 %v1167, %v1169
          %v1171 = vrot.slane %v1163, %v1170
          %v1173 = vunpack.c.l.s4 1934713408
          %v1174 = vunpack.c.0.s8 %v1173
          %v1175 = vlaneseq
          %v1176 = vshrl.u32 %v1175, 7
          %v1177 = vsub.s32 %v1174, %v1176
          %v1178 = vrot.slane %v1164, %v1177
          %v1179 = vcombine.low %v1147, %v1162
          %v1180 = vcombine.high %v1147, %v1162
          %v1182 = vunpack.c.l.s4 1934713408
          %v1183 = vunpack.c.0.s8 %v1182
          %v1184 = vlaneseq
          %v1185 = vshrl.u32 %v1184, 7
          %v1186 = vsub.s32 %v1183, %v1185
          %v1187 = vrot.slane %v1179, %v1186
          %v1189 = vunpack.c.l.s4 1934713408
          %v1190 = vunpack.c.0.s8 %v1189
          %v1191 = vlaneseq
          %v1192 = vshrl.u32 %v1191, 7
          %v1193 = vsub.s32 %v1190, %v1192
          %v1194 = vrot.slane %v1180, %v1193
          %v1195 = vcombine.high %v1171, 0
          %v1196 = vcombine.high %v1178, 0
          %v1197 = vcombine.high %v1187, 0
          %v1198 = vcombine.high %v1194, 0
          %v1199 = vcombine.high %v991, %v983
          %v1201 = vunpack.c.l.s4 1983009808
          %v1202 = vunpack.c.0.s8 %v1201
          %v1203 = vlaneseq
          %v1204 = vshrl.u32 %v1203, 7
          %v1205 = vsub.s32 %v1202, %v1204
          %v1206 = vrot.slane %v991, %v1205
          %v1208 = vunpack.c.l.s4 1983009808
          %v1209 = vunpack.c.0.s8 %v1208
          %v1210 = vlaneseq
          %v1211 = vshrl.u32 %v1210, 7
          %v1212 = vsub.s32 %v1209, %v1211
          %v1213 = vrot.slane %v1199, %v1212
          %v1214 = vcombine.high %v999, %v983
          %v1216 = vunpack.c.l.s4 1983009808
          %v1217 = vunpack.c.0.s8 %v1216
          %v1218 = vlaneseq
          %v1219 = vshrl.u32 %v1218, 7
          %v1220 = vsub.s32 %v1217, %v1219
          %v1221 = vrot.slane %v999, %v1220
          %v1223 = vunpack.c.l.s4 1983009808
          %v1224 = vunpack.c.0.s8 %v1223
          %v1225 = vlaneseq
          %v1226 = vshrl.u32 %v1225, 7
          %v1227 = vsub.s32 %v1224, %v1226
          %v1228 = vrot.slane %v1214, %v1227
          %v1229 = vcombine.low %v1206, %v1221
          %v1230 = vcombine.high %v1206, %v1221
          %v1232 = vunpack.c.l.s4 1934713408
          %v1233 = vunpack.c.0.s8 %v1232
          %v1234 = vlaneseq
          %v1235 = vshrl.u32 %v1234, 7
          %v1236 = vsub.s32 %v1233, %v1235
          %v1237 = vrot.slane %v1229, %v1236
          %v1239 = vunpack.c.l.s4 1934713408
          %v1240 = vunpack.c.0.s8 %v1239
          %v1241 = vlaneseq
          %v1242 = vshrl.u32 %v1241, 7
          %v1243 = vsub.s32 %v1240, %v1242
          %v1244 = vrot.slane %v1230, %v1243
          %v1245 = vcombine.low %v1213, %v1228
          %v1246 = vcombine.high %v1213, %v1228
          %v1248 = vunpack.c.l.s4 1934713408
          %v1249 = vunpack.c.0.s8 %v1248
          %v1250 = vlaneseq
          %v1251 = vshrl.u32 %v1250, 7
          %v1252 = vsub.s32 %v1249, %v1251
          %v1253 = vrot.slane %v1245, %v1252
          %v1255 = vunpack.c.l.s4 1934713408
          %v1256 = vunpack.c.0.s8 %v1255
          %v1257 = vlaneseq
          %v1258 = vshrl.u32 %v1257, 7
          %v1259 = vsub.s32 %v1256, %v1258
          %v1260 = vrot.slane %v1246, %v1259
          %v1261 = vcombine.high %v1237, 0
          %v1262 = vcombine.high %v1244, 0
          %v1263 = vcombine.high %v1253, 0
          %v1264 = vcombine.high %v1260, 0
          %v1265 = vcombine.low %v1039, %v1046
          %v1267 = vunpack.c.l.s4 1983009808
          %v1268 = vunpack.c.0.s8 %v1267
          %v1269 = vlaneseq
          %v1270 = vshrl.u32 %v1269, 7
          %v1271 = vsub.s32 %v1268, %v1270
          %v1272 = vrot.slane %v1265, %v1271
          %v1273 = vcombine.low %v1063, %v1064
          %v1275 = vunpack.c.l.s4 1983009808
          %v1276 = vunpack.c.0.s8 %v1275
          %v1277 = vlaneseq
          %v1278 = vshrl.u32 %v1277, 7
          %v1279 = vsub.s32 %v1276, %v1278
          %v1280 = vrot.slane %v1273, %v1279
          %v1281 = vcombine.low %v1055, %v1062
          %v1283 = vunpack.c.l.s4 1983009808
          %v1284 = vunpack.c.0.s8 %v1283
          %v1285 = vlaneseq
          %v1286 = vshrl.u32 %v1285, 7
          %v1287 = vsub.s32 %v1284, %v1286
          %v1288 = vrot.slane %v1281, %v1287
          %v1289 = vcombine.low %v1065, %v1066
          %v1291 = vunpack.c.l.s4 1983009808
          %v1292 = vunpack.c.0.s8 %v1291
          %v1293 = vlaneseq
          %v1294 = vshrl.u32 %v1293, 7
          %v1295 = vsub.s32 %v1292, %v1294
          %v1296 = vrot.slane %v1289, %v1295
          %v1297 = vcombine.low %v1272, %v1280
          %v1299 = vunpack.c.l.s4 1934713408
          %v1300 = vunpack.c.0.s8 %v1299
          %v1301 = vlaneseq
          %v1302 = vshrl.u32 %v1301, 7
          %v1303 = vsub.s32 %v1300, %v1302
          %v1304 = vrot.slane %v1297, %v1303
          %v1305 = vcombine.low %v1288, %v1296
          %v1307 = vunpack.c.l.s4 1934713408
          %v1308 = vunpack.c.0.s8 %v1307
          %v1309 = vlaneseq
          %v1310 = vshrl.u32 %v1309, 7
          %v1311 = vsub.s32 %v1308, %v1310
          %v1312 = vrot.slane %v1305, %v1311
          %v1313 = vcombine.low %v1304, %v1312
          %v1314 = vcombine.high %v1304, %v1312
          %v1315 = vcombine.low %v1105, %v1112
          %v1317 = vunpack.c.l.s4 1983009808
          %v1318 = vunpack.c.0.s8 %v1317
          %v1319 = vlaneseq
          %v1320 = vshrl.u32 %v1319, 7
          %v1321 = vsub.s32 %v1318, %v1320
          %v1322 = vrot.slane %v1315, %v1321
          %v1323 = vcombine.low %v1129, %v1130
          %v1325 = vunpack.c.l.s4 1983009808
          %v1326 = vunpack.c.0.s8 %v1325
          %v1327 = vlaneseq
          %v1328 = vshrl.u32 %v1327, 7
          %v1329 = vsub.s32 %v1326, %v1328
          %v1330 = vrot.slane %v1323, %v1329
          %v1331 = vcombine.low %v1121, %v1128
          %v1333 = vunpack.c.l.s4 1983009808
          %v1334 = vunpack.c.0.s8 %v1333
          %v1335 = vlaneseq
          %v1336 = vshrl.u32 %v1335, 7
          %v1337 = vsub.s32 %v1334, %v1336
          %v1338 = vrot.slane %v1331, %v1337
          %v1339 = vcombine.low %v1131, %v1132
          %v1341 = vunpack.c.l.s4 1983009808
          %v1342 = vunpack.c.0.s8 %v1341
          %v1343 = vlaneseq
          %v1344 = vshrl.u32 %v1343, 7
          %v1345 = vsub.s32 %v1342, %v1344
          %v1346 = vrot.slane %v1339, %v1345
          %v1347 = vcombine.low %v1322, %v1330
          %v1349 = vunpack.c.l.s4 1934713408
          %v1350 = vunpack.c.0.s8 %v1349
          %v1351 = vlaneseq
          %v1352 = vshrl.u32 %v1351, 7
          %v1353 = vsub.s32 %v1350, %v1352
          %v1354 = vrot.slane %v1347, %v1353
          %v1355 = vcombine.low %v1338, %v1346
          %v1357 = vunpack.c.l.s4 1934713408
          %v1358 = vunpack.c.0.s8 %v1357
          %v1359 = vlaneseq
          %v1360 = vshrl.u32 %v1359, 7
          %v1361 = vsub.s32 %v1358, %v1360
          %v1362 = vrot.slane %v1355, %v1361
          %v1363 = vcombine.low %v1354, %v1362
          %v1364 = vcombine.high %v1354, %v1362
          %v1365 = vcombine.low %v1171, %v1178
          %v1367 = vunpack.c.l.s4 1983009808
          %v1368 = vunpack.c.0.s8 %v1367
          %v1369 = vlaneseq
          %v1370 = vshrl.u32 %v1369, 7
          %v1371 = vsub.s32 %v1368, %v1370
          %v1372 = vrot.slane %v1365, %v1371
          %v1373 = vcombine.low %v1195, %v1196
          %v1375 = vunpack.c.l.s4 1983009808
          %v1376 = vunpack.c.0.s8 %v1375
          %v1377 = vlaneseq
          %v1378 = vshrl.u32 %v1377, 7
          %v1379 = vsub.s32 %v1376, %v1378
          %v1380 = vrot.slane %v1373, %v1379
          %v1381 = vcombine.low %v1187, %v1194
          %v1383 = vunpack.c.l.s4 1983009808
          %v1384 = vunpack.c.0.s8 %v1383
          %v1385 = vlaneseq
          %v1386 = vshrl.u32 %v1385, 7
          %v1387 = vsub.s32 %v1384, %v1386
          %v1388 = vrot.slane %v1381, %v1387
          %v1389 = vcombine.low %v1197, %v1198
          %v1391 = vunpack.c.l.s4 1983009808
          %v1392 = vunpack.c.0.s8 %v1391
          %v1393 = vlaneseq
          %v1394 = vshrl.u32 %v1393, 7
          %v1395 = vsub.s32 %v1392, %v1394
          %v1396 = vrot.slane %v1389, %v1395
          %v1397 = vcombine.low %v1372, %v1380
          %v1399 = vunpack.c.l.s4 1934713408
          %v1400 = vunpack.c.0.s8 %v1399
          %v1401 = vlaneseq
          %v1402 = vshrl.u32 %v1401, 7
          %v1403 = vsub.s32 %v1400, %v1402
          %v1404 = vrot.slane %v1397, %v1403
          %v1405 = vcombine.low %v1388, %v1396
          %v1407 = vunpack.c.l.s4 1934713408
          %v1408 = vunpack.c.0.s8 %v1407
          %v1409 = vlaneseq
          %v1410 = vshrl.u32 %v1409, 7
          %v1411 = vsub.s32 %v1408, %v1410
          %v1412 = vrot.slane %v1405, %v1411
          %v1413 = vcombine.low %v1404, %v1412
          %v1414 = vcombine.high %v1404, %v1412
          %v1415 = vcombine.low %v1237, %v1244
          %v1417 = vunpack.c.l.s4 1983009808
          %v1418 = vunpack.c.0.s8 %v1417
          %v1419 = vlaneseq
          %v1420 = vshrl.u32 %v1419, 7
          %v1421 = vsub.s32 %v1418, %v1420
          %v1422 = vrot.slane %v1415, %v1421
          %v1423 = vcombine.low %v1261, %v1262
          %v1425 = vunpack.c.l.s4 1983009808
          %v1426 = vunpack.c.0.s8 %v1425
          %v1427 = vlaneseq
          %v1428 = vshrl.u32 %v1427, 7
          %v1429 = vsub.s32 %v1426, %v1428
          %v1430 = vrot.slane %v1423, %v1429
          %v1431 = vcombine.low %v1253, %v1260
          %v1433 = vunpack.c.l.s4 1983009808
          %v1434 = vunpack.c.0.s8 %v1433
          %v1435 = vlaneseq
          %v1436 = vshrl.u32 %v1435, 7
          %v1437 = vsub.s32 %v1434, %v1436
          %v1438 = vrot.slane %v1431, %v1437
          %v1439 = vcombine.low %v1263, %v1264
          %v1441 = vunpack.c.l.s4 1983009808
          %v1442 = vunpack.c.0.s8 %v1441
          %v1443 = vlaneseq
          %v1444 = vshrl.u32 %v1443, 7
          %v1445 = vsub.s32 %v1442, %v1444
          %v1446 = vrot.slane %v1439, %v1445
          %v1447 = vcombine.low %v1422, %v1430
          %v1449 = vunpack.c.l.s4 1934713408
          %v1450 = vunpack.c.0.s8 %v1449
          %v1451 = vlaneseq
          %v1452 = vshrl.u32 %v1451, 7
          %v1453 = vsub.s32 %v1450, %v1452
          %v1454 = vrot.slane %v1447, %v1453
          %v1455 = vcombine.low %v1438, %v1446
          %v1457 = vunpack.c.l.s4 1934713408
          %v1458 = vunpack.c.0.s8 %v1457
          %v1459 = vlaneseq
          %v1460 = vshrl.u32 %v1459, 7
          %v1461 = vsub.s32 %v1458, %v1460
          %v1462 = vrot.slane %v1455, %v1461
          %v1463 = vcombine.low %v1454, %v1462
          %v1464 = vcombine.high %v1454, %v1462
          %v1467 = vpack.i.b16 %v1363, %v1313
          %v1468 = vshrl.u32 %v1313, 16
          %v1469 = vshrl.u32 %v1363, 16
          %v1470 = vpack.i.b16 %v1469, %v1468
          %v1473 = vpack.i.b16 %v1364, %v1314
          %v1474 = vshrl.u32 %v1314, 16
          %v1475 = vshrl.u32 %v1364, 16
          %v1476 = vpack.i.b16 %v1475, %v1474
          %v1479 = vpack.i.b16 %v1463, %v1413
          %v1480 = vshrl.u32 %v1413, 16
          %v1481 = vshrl.u32 %v1463, 16
          %v1482 = vpack.i.b16 %v1481, %v1480
          %v1485 = vpack.i.b16 %v1464, %v1414
          %v1486 = vshrl.u32 %v1414, 16
          %v1487 = vshrl.u32 %v1464, 16
          %v1488 = vpack.i.b16 %v1487, %v1486
          %v1489 = vunpack.c.l.b16 %v1467
          %v1490 = vunpack.c.h.b16 %v1467
          %v1491 = vunpack.c.l.b16 %v1479
          %v1492 = vunpack.c.h.b16 %v1479
          %v1493 = vunpack.c.l.b16 %v1470
          %v1494 = vunpack.c.h.b16 %v1470
          %v1495 = vunpack.c.l.b16 %v1482
          %v1496 = vunpack.c.h.b16 %v1482
          %v1497 = vunpack.c.l.b16 %v1473
          %v1498 = vunpack.c.h.b16 %v1473
          %v1499 = vunpack.c.l.b16 %v1485
          %v1500 = vunpack.c.h.b16 %v1485
          %v1501 = vunpack.c.l.b16 %v1476
          %v1502 = vunpack.c.h.b16 %v1476
          %v1503 = vunpack.c.l.b16 %v1488
          %v1504 = vunpack.c.h.b16 %v1488
          %v1505 = vpack.c.b16 %v1489, %v1489
          %v1506 = vpack.c.b16 %v1490, %v1490
          %v1507 = vpack.c.b16 %v1491, %v1491
          %v1508 = vpack.c.b16 %v1492, %v1492
          %v1509 = vpack.c.b16 %v1493, %v1493
          %v1510 = vpack.c.b16 %v1494, %v1494
          %v1511 = vpack.c.b16 %v1495, %v1495
          %v1512 = vpack.c.b16 %v1496, %v1496
          %v1513 = vpack.c.b16 %v1497, %v1497
          %v1514 = vpack.c.b16 %v1498, %v1498
          %v1515 = vpack.c.b16 %v1499, %v1499
          %v1516 = vpack.c.b16 %v1500, %v1500
          %v1517 = vpack.c.b16 %v1501, %v1501
          %v1518 = vpack.c.b16 %v1502, %v1502
          %v1519 = vpack.c.b16 %v1503, %v1503
          %v1520 = vpack.c.b16 %v1504, %v1504
          %vm1537 = vcmask 60416
          %1538 = vst.msk [vmem:[#allocation3] sm:$0xf] %vm1537, %v1505
          %1539 = vst.msk [vmem:[#allocation3 + $0x4] sm:$0xf] %vm1537, %v1506
          %1540 = vst.msk [vmem:[#allocation3 + $0x8] sm:$0xf] %vm1537, %v1507
          %1541 = vst.msk [vmem:[#allocation3 + $0xc] sm:$0xf] %vm1537, %v1508
          %1542 = vst.msk [vmem:[#allocation3 + $0x10] sm:$0xf] %vm1537, %v1509
          %1543 = vst.msk [vmem:[#allocation3 + $0x14] sm:$0xf] %vm1537, %v1510
          %1544 = vst.msk [vmem:[#allocation3 + $0x18] sm:$0xf] %vm1537, %v1511
          %1545 = vst.msk [vmem:[#allocation3 + $0x1c] sm:$0xf] %vm1537, %v1512
          %1546 = vst.msk [vmem:[#allocation3 + $0x20] sm:$0xf] %vm1537, %v1513
          %1547 = vst.msk [vmem:[#allocation3 + $0x24] sm:$0xf] %vm1537, %v1514
          %1548 = vst.msk [vmem:[#allocation3 + $0x28] sm:$0xf] %vm1537, %v1515
          %1549 = vst.msk [vmem:[#allocation3 + $0x2c] sm:$0xf] %vm1537, %v1516
          %1550 = vst.msk [vmem:[#allocation3 + $0x30] sm:$0xf] %vm1537, %v1517
          %1551 = vst.msk [vmem:[#allocation3 + $0x34] sm:$0xf] %vm1537, %v1518
          %1552 = vst.msk [vmem:[#allocation3 + $0x38] sm:$0xf] %vm1537, %v1519
          %1553 = vst.msk [vmem:[#allocation3 + $0x3c] sm:$0xf] %vm1537, %v1520
          %1556 = vrot.lane.b32.xlu0 %v947, 120
          %v1557 = vpop.permute.xlu0 %1556
          %1558 = vrot.lane.b32.xlu0 %v948, 120
          %v1559 = vpop.permute.xlu0 %1558
          %1560 = vrot.lane.b32.xlu0 %v947, 112
          %v1561 = vpop.permute.xlu0 %1560
          %1562 = vrot.lane.b32.xlu0 %v948, 112
          %v1563 = vpop.permute.xlu0 %1562
          %1564 = vrot.lane.b32.xlu0 %v947, 104
          %v1565 = vpop.permute.xlu0 %1564
          %1566 = vrot.lane.b32.xlu0 %v948, 104
          %v1567 = vpop.permute.xlu0 %1566
          %v1570 = vpack.i.b16 %v1557, %v947
          %v1572 = vshrl.u32 %v947, 16
          %v1573 = vshrl.u32 %v1557, 16
          %v1574 = vpack.i.b16 %v1573, %v1572
          %v1578 = vpack.i.b16 %v1565, %v1561
          %v1580 = vshrl.u32 %v1561, 16
          %v1581 = vshrl.u32 %v1565, 16
          %v1582 = vpack.i.b16 %v1581, %v1580
          %v1586 = vpack.i.b16 %v1559, %v948
          %v1588 = vshrl.u32 %v948, 16
          %v1589 = vshrl.u32 %v1559, 16
          %v1590 = vpack.i.b16 %v1589, %v1588
          %v1594 = vpack.i.b16 %v1567, %v1563
          %v1596 = vshrl.u32 %v1563, 16
          %v1597 = vshrl.u32 %v1567, 16
          %v1598 = vpack.i.b16 %v1597, %v1596
          %v1600 = vcombine.high %v1570, %v980
          %v1602 = vunpack.c.l.s4 1983009808
          %v1603 = vunpack.c.0.s8 %v1602
          %v1604 = vlaneseq
          %v1605 = vshrl.u32 %v1604, 7
          %v1606 = vsub.s32 %v1603, %v1605
          %v1607 = vrot.slane %v1570, %v1606
          %v1609 = vunpack.c.l.s4 1983009808
          %v1610 = vunpack.c.0.s8 %v1609
          %v1611 = vlaneseq
          %v1612 = vshrl.u32 %v1611, 7
          %v1613 = vsub.s32 %v1610, %v1612
          %v1614 = vrot.slane %v1600, %v1613
          %v1615 = vcombine.high %v1578, %v980
          %v1617 = vunpack.c.l.s4 1983009808
          %v1618 = vunpack.c.0.s8 %v1617
          %v1619 = vlaneseq
          %v1620 = vshrl.u32 %v1619, 7
          %v1621 = vsub.s32 %v1618, %v1620
          %v1622 = vrot.slane %v1578, %v1621
          %v1624 = vunpack.c.l.s4 1983009808
          %v1625 = vunpack.c.0.s8 %v1624
          %v1626 = vlaneseq
          %v1627 = vshrl.u32 %v1626, 7
          %v1628 = vsub.s32 %v1625, %v1627
          %v1629 = vrot.slane %v1615, %v1628
          %v1630 = vcombine.low %v1607, %v1622
          %v1631 = vcombine.high %v1607, %v1622
          %v1633 = vunpack.c.l.s4 1934713408
          %v1634 = vunpack.c.0.s8 %v1633
          %v1635 = vlaneseq
          %v1636 = vshrl.u32 %v1635, 7
          %v1637 = vsub.s32 %v1634, %v1636
          %v1638 = vrot.slane %v1630, %v1637
          %v1640 = vunpack.c.l.s4 1934713408
          %v1641 = vunpack.c.0.s8 %v1640
          %v1642 = vlaneseq
          %v1643 = vshrl.u32 %v1642, 7
          %v1644 = vsub.s32 %v1641, %v1643
          %v1645 = vrot.slane %v1631, %v1644
          %v1646 = vcombine.low %v1614, %v1629
          %v1647 = vcombine.high %v1614, %v1629
          %v1649 = vunpack.c.l.s4 1934713408
          %v1650 = vunpack.c.0.s8 %v1649
          %v1651 = vlaneseq
          %v1652 = vshrl.u32 %v1651, 7
          %v1653 = vsub.s32 %v1650, %v1652
          %v1654 = vrot.slane %v1646, %v1653
          %v1656 = vunpack.c.l.s4 1934713408
          %v1657 = vunpack.c.0.s8 %v1656
          %v1658 = vlaneseq
          %v1659 = vshrl.u32 %v1658, 7
          %v1660 = vsub.s32 %v1657, %v1659
          %v1661 = vrot.slane %v1647, %v1660
          %v1662 = vcombine.high %v1638, 0
          %v1663 = vcombine.high %v1645, 0
          %v1664 = vcombine.high %v1654, 0
          %v1665 = vcombine.high %v1661, 0
          %v1666 = vcombine.high %v1574, %v983
          %v1668 = vunpack.c.l.s4 1983009808
          %v1669 = vunpack.c.0.s8 %v1668
          %v1670 = vlaneseq
          %v1671 = vshrl.u32 %v1670, 7
          %v1672 = vsub.s32 %v1669, %v1671
          %v1673 = vrot.slane %v1574, %v1672
          %v1675 = vunpack.c.l.s4 1983009808
          %v1676 = vunpack.c.0.s8 %v1675
          %v1677 = vlaneseq
          %v1678 = vshrl.u32 %v1677, 7
          %v1679 = vsub.s32 %v1676, %v1678
          %v1680 = vrot.slane %v1666, %v1679
          %v1681 = vcombine.high %v1582, %v983
          %v1683 = vunpack.c.l.s4 1983009808
          %v1684 = vunpack.c.0.s8 %v1683
          %v1685 = vlaneseq
          %v1686 = vshrl.u32 %v1685, 7
          %v1687 = vsub.s32 %v1684, %v1686
          %v1688 = vrot.slane %v1582, %v1687
          %v1690 = vunpack.c.l.s4 1983009808
          %v1691 = vunpack.c.0.s8 %v1690
          %v1692 = vlaneseq
          %v1693 = vshrl.u32 %v1692, 7
          %v1694 = vsub.s32 %v1691, %v1693
          %v1695 = vrot.slane %v1681, %v1694
          %v1696 = vcombine.low %v1673, %v1688
          %v1697 = vcombine.high %v1673, %v1688
          %v1699 = vunpack.c.l.s4 1934713408
          %v1700 = vunpack.c.0.s8 %v1699
          %v1701 = vlaneseq
          %v1702 = vshrl.u32 %v1701, 7
          %v1703 = vsub.s32 %v1700, %v1702
          %v1704 = vrot.slane %v1696, %v1703
          %v1706 = vunpack.c.l.s4 1934713408
          %v1707 = vunpack.c.0.s8 %v1706
          %v1708 = vlaneseq
          %v1709 = vshrl.u32 %v1708, 7
          %v1710 = vsub.s32 %v1707, %v1709
          %v1711 = vrot.slane %v1697, %v1710
          %v1712 = vcombine.low %v1680, %v1695
          %v1713 = vcombine.high %v1680, %v1695
          %v1715 = vunpack.c.l.s4 1934713408
          %v1716 = vunpack.c.0.s8 %v1715
          %v1717 = vlaneseq
          %v1718 = vshrl.u32 %v1717, 7
          %v1719 = vsub.s32 %v1716, %v1718
          %v1720 = vrot.slane %v1712, %v1719
          %v1722 = vunpack.c.l.s4 1934713408
          %v1723 = vunpack.c.0.s8 %v1722
          %v1724 = vlaneseq
          %v1725 = vshrl.u32 %v1724, 7
          %v1726 = vsub.s32 %v1723, %v1725
          %v1727 = vrot.slane %v1713, %v1726
          %v1728 = vcombine.high %v1704, 0
          %v1729 = vcombine.high %v1711, 0
          %v1730 = vcombine.high %v1720, 0
          %v1731 = vcombine.high %v1727, 0
          %v1732 = vcombine.high %v1586, %v980
          %v1734 = vunpack.c.l.s4 1983009808
          %v1735 = vunpack.c.0.s8 %v1734
          %v1736 = vlaneseq
          %v1737 = vshrl.u32 %v1736, 7
          %v1738 = vsub.s32 %v1735, %v1737
          %v1739 = vrot.slane %v1586, %v1738
          %v1741 = vunpack.c.l.s4 1983009808
          %v1742 = vunpack.c.0.s8 %v1741
          %v1743 = vlaneseq
          %v1744 = vshrl.u32 %v1743, 7
          %v1745 = vsub.s32 %v1742, %v1744
          %v1746 = vrot.slane %v1732, %v1745
          %v1747 = vcombine.high %v1594, %v980
          %v1749 = vunpack.c.l.s4 1983009808
          %v1750 = vunpack.c.0.s8 %v1749
          %v1751 = vlaneseq
          %v1752 = vshrl.u32 %v1751, 7
          %v1753 = vsub.s32 %v1750, %v1752
          %v1754 = vrot.slane %v1594, %v1753
          %v1756 = vunpack.c.l.s4 1983009808
          %v1757 = vunpack.c.0.s8 %v1756
          %v1758 = vlaneseq
          %v1759 = vshrl.u32 %v1758, 7
          %v1760 = vsub.s32 %v1757, %v1759
          %v1761 = vrot.slane %v1747, %v1760
          %v1762 = vcombine.low %v1739, %v1754
          %v1763 = vcombine.high %v1739, %v1754
          %v1765 = vunpack.c.l.s4 1934713408
          %v1766 = vunpack.c.0.s8 %v1765
          %v1767 = vlaneseq
          %v1768 = vshrl.u32 %v1767, 7
          %v1769 = vsub.s32 %v1766, %v1768
          %v1770 = vrot.slane %v1762, %v1769
          %v1772 = vunpack.c.l.s4 1934713408
          %v1773 = vunpack.c.0.s8 %v1772
          %v1774 = vlaneseq
          %v1775 = vshrl.u32 %v1774, 7
          %v1776 = vsub.s32 %v1773, %v1775
          %v1777 = vrot.slane %v1763, %v1776
          %v1778 = vcombine.low %v1746, %v1761
          %v1779 = vcombine.high %v1746, %v1761
          %v1781 = vunpack.c.l.s4 1934713408
          %v1782 = vunpack.c.0.s8 %v1781
          %v1783 = vlaneseq
          %v1784 = vshrl.u32 %v1783, 7
          %v1785 = vsub.s32 %v1782, %v1784
          %v1786 = vrot.slane %v1778, %v1785
          %v1788 = vunpack.c.l.s4 1934713408
          %v1789 = vunpack.c.0.s8 %v1788
          %v1790 = vlaneseq
          %v1791 = vshrl.u32 %v1790, 7
          %v1792 = vsub.s32 %v1789, %v1791
          %v1793 = vrot.slane %v1779, %v1792
          %v1794 = vcombine.high %v1770, 0
          %v1795 = vcombine.high %v1777, 0
          %v1796 = vcombine.high %v1786, 0
          %v1797 = vcombine.high %v1793, 0
          %v1798 = vcombine.high %v1590, %v983
          %v1800 = vunpack.c.l.s4 1983009808
          %v1801 = vunpack.c.0.s8 %v1800
          %v1802 = vlaneseq
          %v1803 = vshrl.u32 %v1802, 7
          %v1804 = vsub.s32 %v1801, %v1803
          %v1805 = vrot.slane %v1590, %v1804
          %v1807 = vunpack.c.l.s4 1983009808
          %v1808 = vunpack.c.0.s8 %v1807
          %v1809 = vlaneseq
          %v1810 = vshrl.u32 %v1809, 7
          %v1811 = vsub.s32 %v1808, %v1810
          %v1812 = vrot.slane %v1798, %v1811
          %v1813 = vcombine.high %v1598, %v983
          %v1815 = vunpack.c.l.s4 1983009808
          %v1816 = vunpack.c.0.s8 %v1815
          %v1817 = vlaneseq
          %v1818 = vshrl.u32 %v1817, 7
          %v1819 = vsub.s32 %v1816, %v1818
          %v1820 = vrot.slane %v1598, %v1819
          %v1822 = vunpack.c.l.s4 1983009808
          %v1823 = vunpack.c.0.s8 %v1822
          %v1824 = vlaneseq
          %v1825 = vshrl.u32 %v1824, 7
          %v1826 = vsub.s32 %v1823, %v1825
          %v1827 = vrot.slane %v1813, %v1826
          %v1828 = vcombine.low %v1805, %v1820
          %v1829 = vcombine.high %v1805, %v1820
          %v1831 = vunpack.c.l.s4 1934713408
          %v1832 = vunpack.c.0.s8 %v1831
          %v1833 = vlaneseq
          %v1834 = vshrl.u32 %v1833, 7
          %v1835 = vsub.s32 %v1832, %v1834
          %v1836 = vrot.slane %v1828, %v1835
          %v1838 = vunpack.c.l.s4 1934713408
          %v1839 = vunpack.c.0.s8 %v1838
          %v1840 = vlaneseq
          %v1841 = vshrl.u32 %v1840, 7
          %v1842 = vsub.s32 %v1839, %v1841
          %v1843 = vrot.slane %v1829, %v1842
          %v1844 = vcombine.low %v1812, %v1827
          %v1845 = vcombine.high %v1812, %v1827
          %v1847 = vunpack.c.l.s4 1934713408
          %v1848 = vunpack.c.0.s8 %v1847
          %v1849 = vlaneseq
          %v1850 = vshrl.u32 %v1849, 7
          %v1851 = vsub.s32 %v1848, %v1850
          %v1852 = vrot.slane %v1844, %v1851
          %v1854 = vunpack.c.l.s4 1934713408
          %v1855 = vunpack.c.0.s8 %v1854
          %v1856 = vlaneseq
          %v1857 = vshrl.u32 %v1856, 7
          %v1858 = vsub.s32 %v1855, %v1857
          %v1859 = vrot.slane %v1845, %v1858
          %v1860 = vcombine.high %v1836, 0
          %v1861 = vcombine.high %v1843, 0
          %v1862 = vcombine.high %v1852, 0
          %v1863 = vcombine.high %v1859, 0
          %v1864 = vcombine.low %v1638, %v1645
          %v1866 = vunpack.c.l.s4 1983009808
          %v1867 = vunpack.c.0.s8 %v1866
          %v1868 = vlaneseq
          %v1869 = vshrl.u32 %v1868, 7
          %v1870 = vsub.s32 %v1867, %v1869
          %v1871 = vrot.slane %v1864, %v1870
          %v1872 = vcombine.low %v1662, %v1663
          %v1874 = vunpack.c.l.s4 1983009808
          %v1875 = vunpack.c.0.s8 %v1874
          %v1876 = vlaneseq
          %v1877 = vshrl.u32 %v1876, 7
          %v1878 = vsub.s32 %v1875, %v1877
          %v1879 = vrot.slane %v1872, %v1878
          %v1880 = vcombine.low %v1654, %v1661
          %v1882 = vunpack.c.l.s4 1983009808
          %v1883 = vunpack.c.0.s8 %v1882
          %v1884 = vlaneseq
          %v1885 = vshrl.u32 %v1884, 7
          %v1886 = vsub.s32 %v1883, %v1885
          %v1887 = vrot.slane %v1880, %v1886
          %v1888 = vcombine.low %v1664, %v1665
          %v1890 = vunpack.c.l.s4 1983009808
          %v1891 = vunpack.c.0.s8 %v1890
          %v1892 = vlaneseq
          %v1893 = vshrl.u32 %v1892, 7
          %v1894 = vsub.s32 %v1891, %v1893
          %v1895 = vrot.slane %v1888, %v1894
          %v1896 = vcombine.low %v1871, %v1879
          %v1898 = vunpack.c.l.s4 1934713408
          %v1899 = vunpack.c.0.s8 %v1898
          %v1900 = vlaneseq
          %v1901 = vshrl.u32 %v1900, 7
          %v1902 = vsub.s32 %v1899, %v1901
          %v1903 = vrot.slane %v1896, %v1902
          %v1904 = vcombine.low %v1887, %v1895
          %v1906 = vunpack.c.l.s4 1934713408
          %v1907 = vunpack.c.0.s8 %v1906
          %v1908 = vlaneseq
          %v1909 = vshrl.u32 %v1908, 7
          %v1910 = vsub.s32 %v1907, %v1909
          %v1911 = vrot.slane %v1904, %v1910
          %v1912 = vcombine.low %v1903, %v1911
          %v1913 = vcombine.high %v1903, %v1911
          %v1914 = vcombine.low %v1704, %v1711
          %v1916 = vunpack.c.l.s4 1983009808
          %v1917 = vunpack.c.0.s8 %v1916
          %v1918 = vlaneseq
          %v1919 = vshrl.u32 %v1918, 7
          %v1920 = vsub.s32 %v1917, %v1919
          %v1921 = vrot.slane %v1914, %v1920
          %v1922 = vcombine.low %v1728, %v1729
          %v1924 = vunpack.c.l.s4 1983009808
          %v1925 = vunpack.c.0.s8 %v1924
          %v1926 = vlaneseq
          %v1927 = vshrl.u32 %v1926, 7
          %v1928 = vsub.s32 %v1925, %v1927
          %v1929 = vrot.slane %v1922, %v1928
          %v1930 = vcombine.low %v1720, %v1727
          %v1932 = vunpack.c.l.s4 1983009808
          %v1933 = vunpack.c.0.s8 %v1932
          %v1934 = vlaneseq
          %v1935 = vshrl.u32 %v1934, 7
          %v1936 = vsub.s32 %v1933, %v1935
          %v1937 = vrot.slane %v1930, %v1936
          %v1938 = vcombine.low %v1730, %v1731
          %v1940 = vunpack.c.l.s4 1983009808
          %v1941 = vunpack.c.0.s8 %v1940
          %v1942 = vlaneseq
          %v1943 = vshrl.u32 %v1942, 7
          %v1944 = vsub.s32 %v1941, %v1943
          %v1945 = vrot.slane %v1938, %v1944
          %v1946 = vcombine.low %v1921, %v1929
          %v1948 = vunpack.c.l.s4 1934713408
          %v1949 = vunpack.c.0.s8 %v1948
          %v1950 = vlaneseq
          %v1951 = vshrl.u32 %v1950, 7
          %v1952 = vsub.s32 %v1949, %v1951
          %v1953 = vrot.slane %v1946, %v1952
          %v1954 = vcombine.low %v1937, %v1945
          %v1956 = vunpack.c.l.s4 1934713408
          %v1957 = vunpack.c.0.s8 %v1956
          %v1958 = vlaneseq
          %v1959 = vshrl.u32 %v1958, 7
          %v1960 = vsub.s32 %v1957, %v1959
          %v1961 = vrot.slane %v1954, %v1960
          %v1962 = vcombine.low %v1953, %v1961
          %v1963 = vcombine.high %v1953, %v1961
          %v1964 = vcombine.low %v1770, %v1777
          %v1966 = vunpack.c.l.s4 1983009808
          %v1967 = vunpack.c.0.s8 %v1966
          %v1968 = vlaneseq
          %v1969 = vshrl.u32 %v1968, 7
          %v1970 = vsub.s32 %v1967, %v1969
          %v1971 = vrot.slane %v1964, %v1970
          %v1972 = vcombine.low %v1794, %v1795
          %v1974 = vunpack.c.l.s4 1983009808
          %v1975 = vunpack.c.0.s8 %v1974
          %v1976 = vlaneseq
          %v1977 = vshrl.u32 %v1976, 7
          %v1978 = vsub.s32 %v1975, %v1977
          %v1979 = vrot.slane %v1972, %v1978
          %v1980 = vcombine.low %v1786, %v1793
          %v1982 = vunpack.c.l.s4 1983009808
          %v1983 = vunpack.c.0.s8 %v1982
          %v1984 = vlaneseq
          %v1985 = vshrl.u32 %v1984, 7
          %v1986 = vsub.s32 %v1983, %v1985
          %v1987 = vrot.slane %v1980, %v1986
          %v1988 = vcombine.low %v1796, %v1797
          %v1990 = vunpack.c.l.s4 1983009808
          %v1991 = vunpack.c.0.s8 %v1990
          %v1992 = vlaneseq
          %v1993 = vshrl.u32 %v1992, 7
          %v1994 = vsub.s32 %v1991, %v1993
          %v1995 = vrot.slane %v1988, %v1994
          %v1996 = vcombine.low %v1971, %v1979
          %v1998 = vunpack.c.l.s4 1934713408
          %v1999 = vunpack.c.0.s8 %v1998
          %v2000 = vlaneseq
          %v2001 = vshrl.u32 %v2000, 7
          %v2002 = vsub.s32 %v1999, %v2001
          %v2003 = vrot.slane %v1996, %v2002
          %v2004 = vcombine.low %v1987, %v1995
          %v2006 = vunpack.c.l.s4 1934713408
          %v2007 = vunpack.c.0.s8 %v2006
          %v2008 = vlaneseq
          %v2009 = vshrl.u32 %v2008, 7
          %v2010 = vsub.s32 %v2007, %v2009
          %v2011 = vrot.slane %v2004, %v2010
          %v2012 = vcombine.low %v2003, %v2011
          %v2013 = vcombine.high %v2003, %v2011
          %v2014 = vcombine.low %v1836, %v1843
          %v2016 = vunpack.c.l.s4 1983009808
          %v2017 = vunpack.c.0.s8 %v2016
          %v2018 = vlaneseq
          %v2019 = vshrl.u32 %v2018, 7
          %v2020 = vsub.s32 %v2017, %v2019
          %v2021 = vrot.slane %v2014, %v2020
          %v2022 = vcombine.low %v1860, %v1861
          %v2024 = vunpack.c.l.s4 1983009808
          %v2025 = vunpack.c.0.s8 %v2024
          %v2026 = vlaneseq
          %v2027 = vshrl.u32 %v2026, 7
          %v2028 = vsub.s32 %v2025, %v2027
          %v2029 = vrot.slane %v2022, %v2028
          %v2030 = vcombine.low %v1852, %v1859
          %v2032 = vunpack.c.l.s4 1983009808
          %v2033 = vunpack.c.0.s8 %v2032
          %v2034 = vlaneseq
          %v2035 = vshrl.u32 %v2034, 7
          %v2036 = vsub.s32 %v2033, %v2035
          %v2037 = vrot.slane %v2030, %v2036
          %v2038 = vcombine.low %v1862, %v1863
          %v2040 = vunpack.c.l.s4 1983009808
          %v2041 = vunpack.c.0.s8 %v2040
          %v2042 = vlaneseq
          %v2043 = vshrl.u32 %v2042, 7
          %v2044 = vsub.s32 %v2041, %v2043
          %v2045 = vrot.slane %v2038, %v2044
          %v2046 = vcombine.low %v2021, %v2029
          %v2048 = vunpack.c.l.s4 1934713408
          %v2049 = vunpack.c.0.s8 %v2048
          %v2050 = vlaneseq
          %v2051 = vshrl.u32 %v2050, 7
          %v2052 = vsub.s32 %v2049, %v2051
          %v2053 = vrot.slane %v2046, %v2052
          %v2054 = vcombine.low %v2037, %v2045
          %v2056 = vunpack.c.l.s4 1934713408
          %v2057 = vunpack.c.0.s8 %v2056
          %v2058 = vlaneseq
          %v2059 = vshrl.u32 %v2058, 7
          %v2060 = vsub.s32 %v2057, %v2059
          %v2061 = vrot.slane %v2054, %v2060
          %v2062 = vcombine.low %v2053, %v2061
          %v2063 = vcombine.high %v2053, %v2061
          %v2066 = vpack.i.b16 %v1962, %v1912
          %v2067 = vshrl.u32 %v1912, 16
          %v2068 = vshrl.u32 %v1962, 16
          %v2069 = vpack.i.b16 %v2068, %v2067
          %v2072 = vpack.i.b16 %v1963, %v1913
          %v2073 = vshrl.u32 %v1913, 16
          %v2074 = vshrl.u32 %v1963, 16
          %v2075 = vpack.i.b16 %v2074, %v2073
          %v2078 = vpack.i.b16 %v2062, %v2012
          %v2079 = vshrl.u32 %v2012, 16
          %v2080 = vshrl.u32 %v2062, 16
          %v2081 = vpack.i.b16 %v2080, %v2079
          %v2084 = vpack.i.b16 %v2063, %v2013
          %v2085 = vshrl.u32 %v2013, 16
          %v2086 = vshrl.u32 %v2063, 16
          %v2087 = vpack.i.b16 %v2086, %v2085
          %v2088 = vunpack.c.l.b16 %v2066
          %v2089 = vunpack.c.h.b16 %v2066
          %v2090 = vunpack.c.l.b16 %v2078
          %v2091 = vunpack.c.h.b16 %v2078
          %v2092 = vunpack.c.l.b16 %v2069
          %v2093 = vunpack.c.h.b16 %v2069
          %v2094 = vunpack.c.l.b16 %v2081
          %v2095 = vunpack.c.h.b16 %v2081
          %v2096 = vunpack.c.l.b16 %v2072
          %v2097 = vunpack.c.h.b16 %v2072
          %v2098 = vunpack.c.l.b16 %v2084
          %v2099 = vunpack.c.h.b16 %v2084
          %v2100 = vunpack.c.l.b16 %v2075
          %v2101 = vunpack.c.h.b16 %v2075
          %v2102 = vunpack.c.l.b16 %v2087
          %v2103 = vunpack.c.h.b16 %v2087
          %v2104 = vpack.c.b16 %v2088, %v2088
          %v2105 = vpack.c.b16 %v2089, %v2089
          %v2106 = vpack.c.b16 %v2090, %v2090
          %v2107 = vpack.c.b16 %v2091, %v2091
          %v2108 = vpack.c.b16 %v2092, %v2092
          %v2109 = vpack.c.b16 %v2093, %v2093
          %v2110 = vpack.c.b16 %v2094, %v2094
          %v2111 = vpack.c.b16 %v2095, %v2095
          %v2112 = vpack.c.b16 %v2096, %v2096
          %v2113 = vpack.c.b16 %v2097, %v2097
          %v2114 = vpack.c.b16 %v2098, %v2098
          %v2115 = vpack.c.b16 %v2099, %v2099
          %v2116 = vpack.c.b16 %v2100, %v2100
          %v2117 = vpack.c.b16 %v2101, %v2101
          %v2118 = vpack.c.b16 %v2102, %v2102
          %v2119 = vpack.c.b16 %v2103, %v2103
          %2136 = vst.msk [vmem:[#allocation4] sm:$0xf] %vm1537, %v2104
          %2137 = vst.msk [vmem:[#allocation4 + $0x4] sm:$0xf] %vm1537, %v2105
          %2138 = vst.msk [vmem:[#allocation4 + $0x8] sm:$0xf] %vm1537, %v2106
          %2139 = vst.msk [vmem:[#allocation4 + $0xc] sm:$0xf] %vm1537, %v2107
          %2140 = vst.msk [vmem:[#allocation4 + $0x10] sm:$0xf] %vm1537, %v2108
          %2141 = vst.msk [vmem:[#allocation4 + $0x14] sm:$0xf] %vm1537, %v2109
          %2142 = vst.msk [vmem:[#allocation4 + $0x18] sm:$0xf] %vm1537, %v2110
          %2143 = vst.msk [vmem:[#allocation4 + $0x1c] sm:$0xf] %vm1537, %v2111
          %2144 = vst.msk [vmem:[#allocation4 + $0x20] sm:$0xf] %vm1537, %v2112
          %2145 = vst.msk [vmem:[#allocation4 + $0x24] sm:$0xf] %vm1537, %v2113
          %2146 = vst.msk [vmem:[#allocation4 + $0x28] sm:$0xf] %vm1537, %v2114
          %2147 = vst.msk [vmem:[#allocation4 + $0x2c] sm:$0xf] %vm1537, %v2115
          %2148 = vst.msk [vmem:[#allocation4 + $0x30] sm:$0xf] %vm1537, %v2116
          %2149 = vst.msk [vmem:[#allocation4 + $0x34] sm:$0xf] %vm1537, %v2117
          %2150 = vst.msk [vmem:[#allocation4 + $0x38] sm:$0xf] %vm1537, %v2118
          %2151 = vst.msk [vmem:[#allocation4 + $0x3c] sm:$0xf] %vm1537, %v2119
        $region116: #{tpu_custom_call.1} parent=91 // pred_fallthru
          _
        %s2152 = scalar_lea.vmem [#allocation2], %s704
        %v2153 = vld [vmem:[%s2152] sm:$0xff]
        %v2154 = vld [vmem:[%s2152 + $0x8] sm:$0xff]
        %v2155 = vpack.c.bf16 %v2154, %v2153
        %v2156 = vld [vmem:[%s2] sm:$0xf]
        %v2157 = vld [vmem:[%s2 + $0x4] sm:$0xf]
        %v2158 = vld [vmem:[%s2 + $0x8] sm:$0xf]
        %v2159 = vld [vmem:[%s2 + $0xc] sm:$0xf]
        %v2160 = vld [vmem:[%s3] sm:$0x1]
        %v2162 = vlaneseq
        %v2163 = vshrl.u32 %v2162, 7
        %v2164 = vsub.s32 0, %v2163
        %v2165 = vrot.slane %v2160, %v2164
        %v2171 = vunpack.c.l.b16 %v2156
        %v2172 = vunpack.c.l.b16 %v2157
        %v2173 = vunpack.c.l.b16 %v2158
        %v2174 = vunpack.c.l.b16 %v2159
        %v2175 = vpack.c.b16 %v2172, %v2171
        %v2176 = vpack.c.b16 %v2174, %v2173
        %vm2179 = vcmask 261120
        %v2181 = vsel %vm2179, %v2155, 0
        %2183 = vmatprep.subr.bf16.mxu0 0
        %2184 = vmatpush1.bf16.msra.mxu0 0
        %2185 = vmatprep.subr.bf16.mxu0 0
        %2186 = vmatpush1.bf16.msra.mxu0 0
        %2187 = vmatprep.subr.bf16.mxu0 0
        %2188 = vmatpush1.bf16.msra.mxu0 0
        %2189 = vmatprep.subr.bf16.mxu0 0
        %2190 = vmatpush1.bf16.msra.mxu0 0
        %2191 = vmatprep.subr.bf16.mxu0 0
        %2192 = vmatpush1.bf16.msra.mxu0 0
        %2193 = vmatprep.subr.bf16.mxu0 0
        %2194 = vmatpush1.bf16.msra.mxu0 0
        %2195 = vmatprep.subr.bf16.mxu0 0
        %2196 = vmatpush1.bf16.msra.mxu0 %v2176
        %2197 = vmatprep.subr.bf16.mxu0 0
        %2198 = vmatpush1.bf16.msra.mxu0 %v2175
        %2199 = vmatprep.subr.bf16.mxu0 0
        %2200 = vmatpush2.bf16.msra.mxu0 0
        %2201 = vmatprep.subr.bf16.mxu0 0
        %2202 = vmatpush2.bf16.msra.mxu0 0
        %2203 = vmatprep.subr.bf16.mxu0 0
        %2204 = vmatpush2.bf16.msra.mxu0 0
        %2205 = vmatprep.subr.bf16.mxu0 0
        %2206 = vmatpush2.bf16.msra.mxu0 0
        %2207 = vmatprep.subr.bf16.mxu0 0
        %2208 = vmatpush2.bf16.msra.mxu0 0
        %2209 = vmatprep.subr.bf16.mxu0 0
        %2210 = vmatpush2.bf16.msra.mxu0 0
        %2211 = vmatprep.subr.bf16.mxu0 0
        %2212 = vmatpush2.bf16.msra.mxu0 0
        %2213 = vmatprep.subr.bf16.mxu0 0
        %2214 = vmatpush2.bf16.msra.mxu0 0
        %2215 = vmatprep.mubr.bf16.mxu0 0
        %2216 = vmatmul.mubr.bf16.gmra.mxu0 %v2181
        %v2217 = vpop.f32.mrf.mxu0
        %v2218 = vadd.f32 %v2165, %v2217
        %v2219 = vpop.f32.mrf.mxu0
        %v2220 = vpop.f32.mrf.mxu0
        %v2221 = vadd.f32 %v2165, %v2220
        %v2222 = vpop.f32.mrf.mxu0
        %2223 = vdwg.mxu0
        %v2224 = vpack.c.bf16 %v2221, %v2218
        %2226 = vrot.lane.b32.xlu0 %v2224, 120
        %v2227 = vpop.permute.xlu0 %2226
        %2228 = vrot.lane.b32.xlu0 %v2224, 112
        %v2229 = vpop.permute.xlu0 %2228
        %2230 = vrot.lane.b32.xlu0 %v2224, 104
        %v2231 = vpop.permute.xlu0 %2230
        %v2234 = vpack.i.b16 %v2227, %v2224
        %v2236 = vshrl.u32 %v2224, 16
        %v2237 = vshrl.u32 %v2227, 16
        %v2238 = vpack.i.b16 %v2237, %v2236
        %v2242 = vpack.i.b16 %v2231, %v2229
        %v2244 = vshrl.u32 %v2229, 16
        %v2245 = vshrl.u32 %v2231, 16
        %v2246 = vpack.i.b16 %v2245, %v2244
        %v2249 = vpack.i.b16 0, 0
        %v2251 = vshrl.u32 0, 16
        %v2252 = vpack.i.b16 %v2251, %v2251
        %v2254 = vcombine.high %v2234, %v2249
        %v2256 = vunpack.c.l.s4 1983009808
        %v2257 = vunpack.c.0.s8 %v2256
        %v2258 = vlaneseq
        %v2259 = vshrl.u32 %v2258, 7
        %v2260 = vsub.s32 %v2257, %v2259
        %v2261 = vrot.slane %v2234, %v2260
        %v2263 = vunpack.c.l.s4 1983009808
        %v2264 = vunpack.c.0.s8 %v2263
        %v2265 = vlaneseq
        %v2266 = vshrl.u32 %v2265, 7
        %v2267 = vsub.s32 %v2264, %v2266
        %v2268 = vrot.slane %v2254, %v2267
        %v2269 = vcombine.high %v2242, %v2249
        %v2271 = vunpack.c.l.s4 1983009808
        %v2272 = vunpack.c.0.s8 %v2271
        %v2273 = vlaneseq
        %v2274 = vshrl.u32 %v2273, 7
        %v2275 = vsub.s32 %v2272, %v2274
        %v2276 = vrot.slane %v2242, %v2275
        %v2278 = vunpack.c.l.s4 1983009808
        %v2279 = vunpack.c.0.s8 %v2278
        %v2280 = vlaneseq
        %v2281 = vshrl.u32 %v2280, 7
        %v2282 = vsub.s32 %v2279, %v2281
        %v2283 = vrot.slane %v2269, %v2282
        %v2284 = vcombine.low %v2261, %v2276
        %v2285 = vcombine.high %v2261, %v2276
        %v2287 = vunpack.c.l.s4 1934713408
        %v2288 = vunpack.c.0.s8 %v2287
        %v2289 = vlaneseq
        %v2290 = vshrl.u32 %v2289, 7
        %v2291 = vsub.s32 %v2288, %v2290
        %v2292 = vrot.slane %v2284, %v2291
        %v2294 = vunpack.c.l.s4 1934713408
        %v2295 = vunpack.c.0.s8 %v2294
        %v2296 = vlaneseq
        %v2297 = vshrl.u32 %v2296, 7
        %v2298 = vsub.s32 %v2295, %v2297
        %v2299 = vrot.slane %v2285, %v2298
        %v2300 = vcombine.low %v2268, %v2283
        %v2301 = vcombine.high %v2268, %v2283
        %v2303 = vunpack.c.l.s4 1934713408
        %v2304 = vunpack.c.0.s8 %v2303
        %v2305 = vlaneseq
        %v2306 = vshrl.u32 %v2305, 7
        %v2307 = vsub.s32 %v2304, %v2306
        %v2308 = vrot.slane %v2300, %v2307
        %v2310 = vunpack.c.l.s4 1934713408
        %v2311 = vunpack.c.0.s8 %v2310
        %v2312 = vlaneseq
        %v2313 = vshrl.u32 %v2312, 7
        %v2314 = vsub.s32 %v2311, %v2313
        %v2315 = vrot.slane %v2301, %v2314
        %v2316 = vcombine.high %v2292, 0
        %v2317 = vcombine.high %v2299, 0
        %v2318 = vcombine.high %v2308, 0
        %v2319 = vcombine.high %v2315, 0
        %v2320 = vcombine.high %v2238, %v2252
        %v2322 = vunpack.c.l.s4 1983009808
        %v2323 = vunpack.c.0.s8 %v2322
        %v2324 = vlaneseq
        %v2325 = vshrl.u32 %v2324, 7
        %v2326 = vsub.s32 %v2323, %v2325
        %v2327 = vrot.slane %v2238, %v2326
        %v2329 = vunpack.c.l.s4 1983009808
        %v2330 = vunpack.c.0.s8 %v2329
        %v2331 = vlaneseq
        %v2332 = vshrl.u32 %v2331, 7
        %v2333 = vsub.s32 %v2330, %v2332
        %v2334 = vrot.slane %v2320, %v2333
        %v2335 = vcombine.high %v2246, %v2252
        %v2337 = vunpack.c.l.s4 1983009808
        %v2338 = vunpack.c.0.s8 %v2337
        %v2339 = vlaneseq
        %v2340 = vshrl.u32 %v2339, 7
        %v2341 = vsub.s32 %v2338, %v2340
        %v2342 = vrot.slane %v2246, %v2341
        %v2344 = vunpack.c.l.s4 1983009808
        %v2345 = vunpack.c.0.s8 %v2344
        %v2346 = vlaneseq
        %v2347 = vshrl.u32 %v2346, 7
        %v2348 = vsub.s32 %v2345, %v2347
        %v2349 = vrot.slane %v2335, %v2348
        %v2350 = vcombine.low %v2327, %v2342
        %v2351 = vcombine.high %v2327, %v2342
        %v2353 = vunpack.c.l.s4 1934713408
        %v2354 = vunpack.c.0.s8 %v2353
        %v2355 = vlaneseq
        %v2356 = vshrl.u32 %v2355, 7
        %v2357 = vsub.s32 %v2354, %v2356
        %v2358 = vrot.slane %v2350, %v2357
        %v2360 = vunpack.c.l.s4 1934713408
        %v2361 = vunpack.c.0.s8 %v2360
        %v2362 = vlaneseq
        %v2363 = vshrl.u32 %v2362, 7
        %v2364 = vsub.s32 %v2361, %v2363
        %v2365 = vrot.slane %v2351, %v2364
        %v2366 = vcombine.low %v2334, %v2349
        %v2367 = vcombine.high %v2334, %v2349
        %v2369 = vunpack.c.l.s4 1934713408
        %v2370 = vunpack.c.0.s8 %v2369
        %v2371 = vlaneseq
        %v2372 = vshrl.u32 %v2371, 7
        %v2373 = vsub.s32 %v2370, %v2372
        %v2374 = vrot.slane %v2366, %v2373
        %v2376 = vunpack.c.l.s4 1934713408
        %v2377 = vunpack.c.0.s8 %v2376
        %v2378 = vlaneseq
        %v2379 = vshrl.u32 %v2378, 7
        %v2380 = vsub.s32 %v2377, %v2379
        %v2381 = vrot.slane %v2367, %v2380
        %v2382 = vcombine.high %v2358, 0
        %v2383 = vcombine.high %v2365, 0
        %v2384 = vcombine.high %v2374, 0
        %v2385 = vcombine.high %v2381, 0
        %v2386 = vcombine.low %v2292, %v2299
        %v2388 = vunpack.c.l.s4 1983009808
        %v2389 = vunpack.c.0.s8 %v2388
        %v2390 = vlaneseq
        %v2391 = vshrl.u32 %v2390, 7
        %v2392 = vsub.s32 %v2389, %v2391
        %v2393 = vrot.slane %v2386, %v2392
        %v2394 = vcombine.low %v2316, %v2317
        %v2396 = vunpack.c.l.s4 1983009808
        %v2397 = vunpack.c.0.s8 %v2396
        %v2398 = vlaneseq
        %v2399 = vshrl.u32 %v2398, 7
        %v2400 = vsub.s32 %v2397, %v2399
        %v2401 = vrot.slane %v2394, %v2400
        %v2402 = vcombine.low %v2308, %v2315
        %v2404 = vunpack.c.l.s4 1983009808
        %v2405 = vunpack.c.0.s8 %v2404
        %v2406 = vlaneseq
        %v2407 = vshrl.u32 %v2406, 7
        %v2408 = vsub.s32 %v2405, %v2407
        %v2409 = vrot.slane %v2402, %v2408
        %v2410 = vcombine.low %v2318, %v2319
        %v2412 = vunpack.c.l.s4 1983009808
        %v2413 = vunpack.c.0.s8 %v2412
        %v2414 = vlaneseq
        %v2415 = vshrl.u32 %v2414, 7
        %v2416 = vsub.s32 %v2413, %v2415
        %v2417 = vrot.slane %v2410, %v2416
        %v2418 = vcombine.low %v2393, %v2401
        %v2420 = vunpack.c.l.s4 1934713408
        %v2421 = vunpack.c.0.s8 %v2420
        %v2422 = vlaneseq
        %v2423 = vshrl.u32 %v2422, 7
        %v2424 = vsub.s32 %v2421, %v2423
        %v2425 = vrot.slane %v2418, %v2424
        %v2426 = vcombine.low %v2409, %v2417
        %v2428 = vunpack.c.l.s4 1934713408
        %v2429 = vunpack.c.0.s8 %v2428
        %v2430 = vlaneseq
        %v2431 = vshrl.u32 %v2430, 7
        %v2432 = vsub.s32 %v2429, %v2431
        %v2433 = vrot.slane %v2426, %v2432
        %v2434 = vcombine.low %v2425, %v2433
        %v2435 = vcombine.high %v2425, %v2433
        %v2436 = vcombine.low %v2358, %v2365
        %v2438 = vunpack.c.l.s4 1983009808
        %v2439 = vunpack.c.0.s8 %v2438
        %v2440 = vlaneseq
        %v2441 = vshrl.u32 %v2440, 7
        %v2442 = vsub.s32 %v2439, %v2441
        %v2443 = vrot.slane %v2436, %v2442
        %v2444 = vcombine.low %v2382, %v2383
        %v2446 = vunpack.c.l.s4 1983009808
        %v2447 = vunpack.c.0.s8 %v2446
        %v2448 = vlaneseq
        %v2449 = vshrl.u32 %v2448, 7
        %v2450 = vsub.s32 %v2447, %v2449
        %v2451 = vrot.slane %v2444, %v2450
        %v2452 = vcombine.low %v2374, %v2381
        %v2454 = vunpack.c.l.s4 1983009808
        %v2455 = vunpack.c.0.s8 %v2454
        %v2456 = vlaneseq
        %v2457 = vshrl.u32 %v2456, 7
        %v2458 = vsub.s32 %v2455, %v2457
        %v2459 = vrot.slane %v2452, %v2458
        %v2460 = vcombine.low %v2384, %v2385
        %v2462 = vunpack.c.l.s4 1983009808
        %v2463 = vunpack.c.0.s8 %v2462
        %v2464 = vlaneseq
        %v2465 = vshrl.u32 %v2464, 7
        %v2466 = vsub.s32 %v2463, %v2465
        %v2467 = vrot.slane %v2460, %v2466
        %v2468 = vcombine.low %v2443, %v2451
        %v2470 = vunpack.c.l.s4 1934713408
        %v2471 = vunpack.c.0.s8 %v2470
        %v2472 = vlaneseq
        %v2473 = vshrl.u32 %v2472, 7
        %v2474 = vsub.s32 %v2471, %v2473
        %v2475 = vrot.slane %v2468, %v2474
        %v2476 = vcombine.low %v2459, %v2467
        %v2478 = vunpack.c.l.s4 1934713408
        %v2479 = vunpack.c.0.s8 %v2478
        %v2480 = vlaneseq
        %v2481 = vshrl.u32 %v2480, 7
        %v2482 = vsub.s32 %v2479, %v2481
        %v2483 = vrot.slane %v2476, %v2482
        %v2484 = vcombine.low %v2475, %v2483
        %v2485 = vcombine.high %v2475, %v2483
        %v2488 = vpack.i.b16 %v2484, %v2434
        %v2489 = vshrl.u32 %v2434, 16
        %v2490 = vshrl.u32 %v2484, 16
        %v2491 = vpack.i.b16 %v2490, %v2489
        %v2494 = vpack.i.b16 %v2485, %v2435
        %v2495 = vshrl.u32 %v2435, 16
        %v2496 = vshrl.u32 %v2485, 16
        %v2497 = vpack.i.b16 %v2496, %v2495
        %v2498 = vld [vmem:[#allocation3] sm:$0xf]
        %v2499 = vld [vmem:[#allocation3 + $0x4] sm:$0xf]
        %v2500 = vld [vmem:[#allocation3 + $0x8] sm:$0xf]
        %v2501 = vld [vmem:[#allocation3 + $0xc] sm:$0xf]
        %v2502 = vld [vmem:[#allocation3 + $0x10] sm:$0xf]
        %v2503 = vld [vmem:[#allocation3 + $0x14] sm:$0xf]
        %v2504 = vld [vmem:[#allocation3 + $0x18] sm:$0xf]
        %v2505 = vld [vmem:[#allocation3 + $0x1c] sm:$0xf]
        %v2506 = vld [vmem:[#allocation3 + $0x20] sm:$0xf]
        %v2507 = vld [vmem:[#allocation3 + $0x24] sm:$0xf]
        %v2508 = vld [vmem:[#allocation3 + $0x28] sm:$0xf]
        %v2509 = vld [vmem:[#allocation3 + $0x2c] sm:$0xf]
        %v2510 = vld [vmem:[#allocation3 + $0x30] sm:$0xf]
        %v2511 = vld [vmem:[#allocation3 + $0x34] sm:$0xf]
        %v2512 = vld [vmem:[#allocation3 + $0x38] sm:$0xf]
        %v2513 = vld [vmem:[#allocation3 + $0x3c] sm:$0xf]
        %v2514 = vld [vmem:[#allocation4] sm:$0xf]
        %v2515 = vld [vmem:[#allocation4 + $0x4] sm:$0xf]
        %v2516 = vld [vmem:[#allocation4 + $0x8] sm:$0xf]
        %v2517 = vld [vmem:[#allocation4 + $0xc] sm:$0xf]
        %v2518 = vld [vmem:[#allocation4 + $0x10] sm:$0xf]
        %v2519 = vld [vmem:[#allocation4 + $0x14] sm:$0xf]
        %v2520 = vld [vmem:[#allocation4 + $0x18] sm:$0xf]
        %v2521 = vld [vmem:[#allocation4 + $0x1c] sm:$0xf]
        %v2522 = vld [vmem:[#allocation4 + $0x20] sm:$0xf]
        %v2523 = vld [vmem:[#allocation4 + $0x24] sm:$0xf]
        %v2524 = vld [vmem:[#allocation4 + $0x28] sm:$0xf]
        %v2525 = vld [vmem:[#allocation4 + $0x2c] sm:$0xf]
        %v2526 = vld [vmem:[#allocation4 + $0x30] sm:$0xf]
        %v2527 = vld [vmem:[#allocation4 + $0x34] sm:$0xf]
        %v2528 = vld [vmem:[#allocation4 + $0x38] sm:$0xf]
        %v2529 = vld [vmem:[#allocation4 + $0x3c] sm:$0xf]
        %v2530 = vld [vmem:[%s700] sm:$0xf]
        %v2531 = vld [vmem:[%s700 + $0x4] sm:$0xf]
        %v2532 = vunpack.c.l.bf16 %v2530
        %v2533 = vunpack.c.l.bf16 %v2531
        %v2538 = vunpack.c.l.b16 %v2498
        %v2539 = vunpack.c.l.b16 %v2499
        %v2540 = vunpack.c.l.b16 %v2500
        %v2541 = vunpack.c.l.b16 %v2501
        %v2542 = vpack.c.b16 %v2539, %v2538
        %v2543 = vpack.c.b16 %v2541, %v2540
        %vm2544 = vcmask 64512
        %v2546 = vsel %vm2544, %v2488, 0
        %v2549 = vsel %vm2544, %v2542, 0
        %v2552 = vsel %vm2544, %v2543, 0
        %2554 = vmatprep.subr.bf16.mxu0 0
        %2555 = vmatpush1.bf16.xpose.msra.mxu0 0
        %2556 = vmatprep.subr.bf16.mxu0 0
        %2557 = vmatpush1.bf16.xpose.msra.mxu0 0
        %2558 = vmatprep.subr.bf16.mxu0 0
        %2559 = vmatpush1.bf16.xpose.msra.mxu0 0
        %2560 = vmatprep.subr.bf16.mxu0 0
        %2561 = vmatpush1.bf16.xpose.msra.mxu0 0
        %2562 = vmatprep.subr.bf16.mxu0 0
        %2563 = vmatpush1.bf16.xpose.msra.mxu0 0
        %2564 = vmatprep.subr.bf16.mxu0 0
        %2565 = vmatpush1.bf16.xpose.msra.mxu0 0
        %2566 = vmatprep.subr.bf16.mxu0 0
        %2567 = vmatpush1.bf16.xpose.msra.mxu0 %v2552
        %2568 = vmatprep.subr.bf16.mxu0 0
        %2569 = vmatpush1.bf16.xpose.msra.mxu0 %v2549
        %2570 = vmatprep.subr.bf16.mxu0 0
        %2571 = vmatpush2.bf16.xpose.msra.mxu0 0
        %2572 = vmatprep.subr.bf16.mxu0 0
        %2573 = vmatpush2.bf16.xpose.msra.mxu0 0
        %2574 = vmatprep.subr.bf16.mxu0 0
        %2575 = vmatpush2.bf16.xpose.msra.mxu0 0
        %2576 = vmatprep.subr.bf16.mxu0 0
        %2577 = vmatpush2.bf16.xpose.msra.mxu0 0
        %2578 = vmatprep.subr.bf16.mxu0 0
        %2579 = vmatpush2.bf16.xpose.msra.mxu0 0
        %2580 = vmatprep.subr.bf16.mxu0 0
        %2581 = vmatpush2.bf16.xpose.msra.mxu0 0
        %2582 = vmatprep.subr.bf16.mxu0 0
        %2583 = vmatpush2.bf16.xpose.msra.mxu0 0
        %2584 = vmatprep.subr.bf16.mxu0 0
        %2585 = vmatpush2.bf16.xpose.msra.mxu0 0
        %2586 = vmatprep.mubr.bf16.mxu0 0
        %2587 = vmatmul.mubr.bf16.gmra.mxu0 %v2546
        %v2588 = vpop.f32.mrf.mxu0
        %v2589 = vadd.f32 %v2532, %v2588
        %v2590 = vpop.f32.mrf.mxu0
        %v2591 = vpop.f32.mrf.mxu0
        %v2592 = vadd.f32 %v2533, %v2591
        %v2593 = vpop.f32.mrf.mxu0
        %2594 = vdwg.mxu0
        %v2599 = vunpack.c.l.b16 %v2502
        %v2600 = vunpack.c.l.b16 %v2503
        %v2601 = vunpack.c.l.b16 %v2504
        %v2602 = vunpack.c.l.b16 %v2505
        %v2603 = vpack.c.b16 %v2600, %v2599
        %v2604 = vpack.c.b16 %v2602, %v2601
        %v2606 = vsel %vm2544, %v2491, 0
        %v2609 = vsel %vm2544, %v2603, 0
        %v2612 = vsel %vm2544, %v2604, 0
        %2614 = vmatprep.subr.bf16.mxu0 0
        %2615 = vmatpush1.bf16.xpose.msra.mxu0 0
        %2616 = vmatprep.subr.bf16.mxu0 0
        %2617 = vmatpush1.bf16.xpose.msra.mxu0 0
        %2618 = vmatprep.subr.bf16.mxu0 0
        %2619 = vmatpush1.bf16.xpose.msra.mxu0 0
        %2620 = vmatprep.subr.bf16.mxu0 0
        %2621 = vmatpush1.bf16.xpose.msra.mxu0 0
        %2622 = vmatprep.subr.bf16.mxu0 0
        %2623 = vmatpush1.bf16.xpose.msra.mxu0 0
        %2624 = vmatprep.subr.bf16.mxu0 0
        %2625 = vmatpush1.bf16.xpose.msra.mxu0 0
        %2626 = vmatprep.subr.bf16.mxu0 0
        %2627 = vmatpush1.bf16.xpose.msra.mxu0 %v2612
        %2628 = vmatprep.subr.bf16.mxu0 0
        %2629 = vmatpush1.bf16.xpose.msra.mxu0 %v2609
        %2630 = vmatprep.subr.bf16.mxu0 0
        %2631 = vmatpush2.bf16.xpose.msra.mxu0 0
        %2632 = vmatprep.subr.bf16.mxu0 0
        %2633 = vmatpush2.bf16.xpose.msra.mxu0 0
        %2634 = vmatprep.subr.bf16.mxu0 0
        %2635 = vmatpush2.bf16.xpose.msra.mxu0 0
        %2636 = vmatprep.subr.bf16.mxu0 0
        %2637 = vmatpush2.bf16.xpose.msra.mxu0 0
        %2638 = vmatprep.subr.bf16.mxu0 0
        %2639 = vmatpush2.bf16.xpose.msra.mxu0 0
        %2640 = vmatprep.subr.bf16.mxu0 0
        %2641 = vmatpush2.bf16.xpose.msra.mxu0 0
        %2642 = vmatprep.subr.bf16.mxu0 0
        %2643 = vmatpush2.bf16.xpose.msra.mxu0 0
        %2644 = vmatprep.subr.bf16.mxu0 0
        %2645 = vmatpush2.bf16.xpose.msra.mxu0 0
        %2646 = vmatprep.mubr.bf16.mxu0 0
        %2647 = vmatmul.mubr.bf16.gmra.mxu0 %v2606
        %v2648 = vpop.f32.mrf.mxu0
        %v2649 = vadd.f32 %v2532, %v2648
        %v2650 = vpop.f32.mrf.mxu0
        %v2651 = vpop.f32.mrf.mxu0
        %v2652 = vadd.f32 %v2533, %v2651
        %v2653 = vpop.f32.mrf.mxu0
        %2654 = vdwg.mxu0
        %v2659 = vunpack.c.l.b16 %v2506
        %v2660 = vunpack.c.l.b16 %v2507
        %v2661 = vunpack.c.l.b16 %v2508
        %v2662 = vunpack.c.l.b16 %v2509
        %v2663 = vpack.c.b16 %v2660, %v2659
        %v2664 = vpack.c.b16 %v2662, %v2661
        %v2666 = vsel %vm2544, %v2494, 0
        %v2669 = vsel %vm2544, %v2663, 0
        %v2672 = vsel %vm2544, %v2664, 0
        %2674 = vmatprep.subr.bf16.mxu0 0
        %2675 = vmatpush1.bf16.xpose.msra.mxu0 0
        %2676 = vmatprep.subr.bf16.mxu0 0
        %2677 = vmatpush1.bf16.xpose.msra.mxu0 0
        %2678 = vmatprep.subr.bf16.mxu0 0
        %2679 = vmatpush1.bf16.xpose.msra.mxu0 0
        %2680 = vmatprep.subr.bf16.mxu0 0
        %2681 = vmatpush1.bf16.xpose.msra.mxu0 0
        %2682 = vmatprep.subr.bf16.mxu0 0
        %2683 = vmatpush1.bf16.xpose.msra.mxu0 0
        %2684 = vmatprep.subr.bf16.mxu0 0
        %2685 = vmatpush1.bf16.xpose.msra.mxu0 0
        %2686 = vmatprep.subr.bf16.mxu0 0
        %2687 = vmatpush1.bf16.xpose.msra.mxu0 %v2672
        %2688 = vmatprep.subr.bf16.mxu0 0
        %2689 = vmatpush1.bf16.xpose.msra.mxu0 %v2669
        %2690 = vmatprep.subr.bf16.mxu0 0
        %2691 = vmatpush2.bf16.xpose.msra.mxu0 0
        %2692 = vmatprep.subr.bf16.mxu0 0
        %2693 = vmatpush2.bf16.xpose.msra.mxu0 0
        %2694 = vmatprep.subr.bf16.mxu0 0
        %2695 = vmatpush2.bf16.xpose.msra.mxu0 0
        %2696 = vmatprep.subr.bf16.mxu0 0
        %2697 = vmatpush2.bf16.xpose.msra.mxu0 0
        %2698 = vmatprep.subr.bf16.mxu0 0
        %2699 = vmatpush2.bf16.xpose.msra.mxu0 0
        %2700 = vmatprep.subr.bf16.mxu0 0
        %2701 = vmatpush2.bf16.xpose.msra.mxu0 0
        %2702 = vmatprep.subr.bf16.mxu0 0
        %2703 = vmatpush2.bf16.xpose.msra.mxu0 0
        %2704 = vmatprep.subr.bf16.mxu0 0
        %2705 = vmatpush2.bf16.xpose.msra.mxu0 0
        %2706 = vmatprep.mubr.bf16.mxu0 0
        %2707 = vmatmul.mubr.bf16.gmra.mxu0 %v2666
        %v2708 = vpop.f32.mrf.mxu0
        %v2709 = vadd.f32 %v2532, %v2708
        %v2710 = vpop.f32.mrf.mxu0
        %v2711 = vpop.f32.mrf.mxu0
        %v2712 = vadd.f32 %v2533, %v2711
        %v2713 = vpop.f32.mrf.mxu0
        %2714 = vdwg.mxu0
        %v2719 = vunpack.c.l.b16 %v2510
        %v2720 = vunpack.c.l.b16 %v2511
        %v2721 = vunpack.c.l.b16 %v2512
        %v2722 = vunpack.c.l.b16 %v2513
        %v2723 = vpack.c.b16 %v2720, %v2719
        %v2724 = vpack.c.b16 %v2722, %v2721
        %v2726 = vsel %vm2544, %v2497, 0
        %v2729 = vsel %vm2544, %v2723, 0
        %v2732 = vsel %vm2544, %v2724, 0
        %2734 = vmatprep.subr.bf16.mxu0 0
        %2735 = vmatpush1.bf16.xpose.msra.mxu0 0
        %2736 = vmatprep.subr.bf16.mxu0 0
        %2737 = vmatpush1.bf16.xpose.msra.mxu0 0
        %2738 = vmatprep.subr.bf16.mxu0 0
        %2739 = vmatpush1.bf16.xpose.msra.mxu0 0
        %2740 = vmatprep.subr.bf16.mxu0 0
        %2741 = vmatpush1.bf16.xpose.msra.mxu0 0
        %2742 = vmatprep.subr.bf16.mxu0 0
        %2743 = vmatpush1.bf16.xpose.msra.mxu0 0
        %2744 = vmatprep.subr.bf16.mxu0 0
        %2745 = vmatpush1.bf16.xpose.msra.mxu0 0
        %2746 = vmatprep.subr.bf16.mxu0 0
        %2747 = vmatpush1.bf16.xpose.msra.mxu0 %v2732
        %2748 = vmatprep.subr.bf16.mxu0 0
        %2749 = vmatpush1.bf16.xpose.msra.mxu0 %v2729
        %2750 = vmatprep.subr.bf16.mxu0 0
        %2751 = vmatpush2.bf16.xpose.msra.mxu0 0
        %2752 = vmatprep.subr.bf16.mxu0 0
        %2753 = vmatpush2.bf16.xpose.msra.mxu0 0
        %2754 = vmatprep.subr.bf16.mxu0 0
        %2755 = vmatpush2.bf16.xpose.msra.mxu0 0
        %2756 = vmatprep.subr.bf16.mxu0 0
        %2757 = vmatpush2.bf16.xpose.msra.mxu0 0
        %2758 = vmatprep.subr.bf16.mxu0 0
        %2759 = vmatpush2.bf16.xpose.msra.mxu0 0
        %2760 = vmatprep.subr.bf16.mxu0 0
        %2761 = vmatpush2.bf16.xpose.msra.mxu0 0
        %2762 = vmatprep.subr.bf16.mxu0 0
        %2763 = vmatpush2.bf16.xpose.msra.mxu0 0
        %2764 = vmatprep.subr.bf16.mxu0 0
        %2765 = vmatpush2.bf16.xpose.msra.mxu0 0
        %2766 = vmatprep.mubr.bf16.mxu0 0
        %2767 = vmatmul.mubr.bf16.gmra.mxu0 %v2726
        %v2768 = vpop.f32.mrf.mxu0
        %v2769 = vadd.f32 %v2532, %v2768
        %v2770 = vpop.f32.mrf.mxu0
        %v2771 = vpop.f32.mrf.mxu0
        %v2772 = vadd.f32 %v2533, %v2771
        %v2773 = vpop.f32.mrf.mxu0
        %2774 = vdwg.mxu0
        %v2775 = vsel %vm2179, %v2589, -inf
        %2776 = vmax.xlane.f32.xlu0 %v2775
        %v2777 = vpop.xlane.xlu0 %2776
        %v2778 = vsel %vm2179, %v2592, -inf
        %2779 = vmax.xlane.f32.xlu0 %v2778
        %v2780 = vpop.xlane.xlu0 %2779
        %v2781 = vsel %vm2179, %v2649, -inf
        %2782 = vmax.xlane.f32.xlu0 %v2781
        %v2783 = vpop.xlane.xlu0 %2782
        %v2784 = vsel %vm2179, %v2652, -inf
        %2785 = vmax.xlane.f32.xlu0 %v2784
        %v2786 = vpop.xlane.xlu0 %2785
        %v2787 = vsel %vm2179, %v2709, -inf
        %2788 = vmax.xlane.f32.xlu0 %v2787
        %v2789 = vpop.xlane.xlu0 %2788
        %v2790 = vsel %vm2179, %v2712, -inf
        %2791 = vmax.xlane.f32.xlu0 %v2790
        %v2792 = vpop.xlane.xlu0 %2791
        %v2793 = vsel %vm2179, %v2769, -inf
        %2794 = vmax.xlane.f32.xlu0 %v2793
        %v2795 = vpop.xlane.xlu0 %2794
        %v2796 = vsel %vm2179, %v2772, -inf
        %2797 = vmax.xlane.f32.xlu0 %v2796
        %v2798 = vpop.xlane.xlu0 %2797
        %v2799 = vsub.f32 %v2589, %v2777
        %v2800 = vsub.f32 %v2592, %v2780
        %v2801 = vsub.f32 %v2649, %v2783
        %v2802 = vsub.f32 %v2652, %v2786
        %v2803 = vsub.f32 %v2709, %v2789
        %v2804 = vsub.f32 %v2712, %v2792
        %v2805 = vsub.f32 %v2769, %v2795
        %v2806 = vsub.f32 %v2772, %v2798
        %v2807 = vmul.f32 %v2799, 1.442695
        %v2808 = vpow.pop %v2807
        %v2809 = vmul.f32 %v2800, 1.442695
        %v2810 = vpow.pop %v2809
        %v2811 = vmul.f32 %v2801, 1.442695
        %v2812 = vpow.pop %v2811
        %v2813 = vmul.f32 %v2802, 1.442695
        %v2814 = vpow.pop %v2813
        %v2815 = vmul.f32 %v2803, 1.442695
        %v2816 = vpow.pop %v2815
        %v2817 = vmul.f32 %v2804, 1.442695
        %v2818 = vpow.pop %v2817
        %v2819 = vmul.f32 %v2805, 1.442695
        %v2820 = vpow.pop %v2819
        %v2821 = vmul.f32 %v2806, 1.442695
        %v2822 = vpow.pop %v2821
        %v2823 = vsel %vm2179, %v2808, 0.0
        %2824 = vadd.xlane.f32.xlu0 %v2823
        %v2825 = vpop.xlane.xlu0 %2824
        %v2826 = vsel %vm2179, %v2810, 0.0
        %2827 = vadd.xlane.f32.xlu0 %v2826
        %v2828 = vpop.xlane.xlu0 %2827
        %v2829 = vsel %vm2179, %v2812, 0.0
        %2830 = vadd.xlane.f32.xlu0 %v2829
        %v2831 = vpop.xlane.xlu0 %2830
        %v2832 = vsel %vm2179, %v2814, 0.0
        %2833 = vadd.xlane.f32.xlu0 %v2832
        %v2834 = vpop.xlane.xlu0 %2833
        %v2835 = vsel %vm2179, %v2816, 0.0
        %2836 = vadd.xlane.f32.xlu0 %v2835
        %v2837 = vpop.xlane.xlu0 %2836
        %v2838 = vsel %vm2179, %v2818, 0.0
        %2839 = vadd.xlane.f32.xlu0 %v2838
        %v2840 = vpop.xlane.xlu0 %2839
        %v2841 = vsel %vm2179, %v2820, 0.0
        %2842 = vadd.xlane.f32.xlu0 %v2841
        %v2843 = vpop.xlane.xlu0 %2842
        %v2844 = vsel %vm2179, %v2822, 0.0
        %2845 = vadd.xlane.f32.xlu0 %v2844
        %v2846 = vpop.xlane.xlu0 %2845
        %v2847 = vpack.c.bf16 %v2810, %v2808
        %v2848 = vpack.c.bf16 %v2814, %v2812
        %v2849 = vpack.c.bf16 %v2818, %v2816
        %v2850 = vpack.c.bf16 %v2822, %v2820
        %v2855 = vunpack.c.l.b16 %v2514
        %v2856 = vunpack.c.l.b16 %v2515
        %v2857 = vunpack.c.l.b16 %v2516
        %v2858 = vunpack.c.l.b16 %v2517
        %v2859 = vpack.c.b16 %v2856, %v2855
        %v2860 = vpack.c.b16 %v2858, %v2857
        %v2864 = vsel %vm2179, %v2847, 0
        %2866 = vmatprep.subr.bf16.mxu0 0
        %2867 = vmatpush1.bf16.msra.mxu0 0
        %2868 = vmatprep.subr.bf16.mxu0 0
        %2869 = vmatpush1.bf16.msra.mxu0 0
        %2870 = vmatprep.subr.bf16.mxu0 0
        %2871 = vmatpush1.bf16.msra.mxu0 0
        %2872 = vmatprep.subr.bf16.mxu0 0
        %2873 = vmatpush1.bf16.msra.mxu0 0
        %2874 = vmatprep.subr.bf16.mxu0 0
        %2875 = vmatpush1.bf16.msra.mxu0 0
        %2876 = vmatprep.subr.bf16.mxu0 0
        %2877 = vmatpush1.bf16.msra.mxu0 0
        %2878 = vmatprep.subr.bf16.mxu0 0
        %2879 = vmatpush1.bf16.msra.mxu0 %v2860
        %2880 = vmatprep.subr.bf16.mxu0 0
        %2881 = vmatpush1.bf16.msra.mxu0 %v2859
        %2882 = vmatprep.subr.bf16.mxu0 0
        %2883 = vmatpush2.bf16.msra.mxu0 0
        %2884 = vmatprep.subr.bf16.mxu0 0
        %2885 = vmatpush2.bf16.msra.mxu0 0
        %2886 = vmatprep.subr.bf16.mxu0 0
        %2887 = vmatpush2.bf16.msra.mxu0 0
        %2888 = vmatprep.subr.bf16.mxu0 0
        %2889 = vmatpush2.bf16.msra.mxu0 0
        %2890 = vmatprep.subr.bf16.mxu0 0
        %2891 = vmatpush2.bf16.msra.mxu0 0
        %2892 = vmatprep.subr.bf16.mxu0 0
        %2893 = vmatpush2.bf16.msra.mxu0 0
        %2894 = vmatprep.subr.bf16.mxu0 0
        %2895 = vmatpush2.bf16.msra.mxu0 0
        %2896 = vmatprep.subr.bf16.mxu0 0
        %2897 = vmatpush2.bf16.msra.mxu0 0
        %2898 = vmatprep.mubr.bf16.mxu0 0
        %2899 = vmatmul.mubr.bf16.gmra.mxu0 %v2864
        %v2900 = vpop.f32.mrf.mxu0
        %v2901 = vadd.f32 0.0, %v2900
        %v2902 = vpop.f32.mrf.mxu0
        %v2903 = vpop.f32.mrf.mxu0
        %v2904 = vadd.f32 0.0, %v2903
        %v2905 = vpop.f32.mrf.mxu0
        %2906 = vdwg.mxu0
        %v2911 = vunpack.c.l.b16 %v2518
        %v2912 = vunpack.c.l.b16 %v2519
        %v2913 = vunpack.c.l.b16 %v2520
        %v2914 = vunpack.c.l.b16 %v2521
        %v2915 = vpack.c.b16 %v2912, %v2911
        %v2916 = vpack.c.b16 %v2914, %v2913
        %v2920 = vsel %vm2179, %v2848, 0
        %2922 = vmatprep.subr.bf16.mxu0 0
        %2923 = vmatpush1.bf16.msra.mxu0 0
        %2924 = vmatprep.subr.bf16.mxu0 0
        %2925 = vmatpush1.bf16.msra.mxu0 0
        %2926 = vmatprep.subr.bf16.mxu0 0
        %2927 = vmatpush1.bf16.msra.mxu0 0
        %2928 = vmatprep.subr.bf16.mxu0 0
        %2929 = vmatpush1.bf16.msra.mxu0 0
        %2930 = vmatprep.subr.bf16.mxu0 0
        %2931 = vmatpush1.bf16.msra.mxu0 0
        %2932 = vmatprep.subr.bf16.mxu0 0
        %2933 = vmatpush1.bf16.msra.mxu0 0
        %2934 = vmatprep.subr.bf16.mxu0 0
        %2935 = vmatpush1.bf16.msra.mxu0 %v2916
        %2936 = vmatprep.subr.bf16.mxu0 0
        %2937 = vmatpush1.bf16.msra.mxu0 %v2915
        %2938 = vmatprep.subr.bf16.mxu0 0
        %2939 = vmatpush2.bf16.msra.mxu0 0
        %2940 = vmatprep.subr.bf16.mxu0 0
        %2941 = vmatpush2.bf16.msra.mxu0 0
        %2942 = vmatprep.subr.bf16.mxu0 0
        %2943 = vmatpush2.bf16.msra.mxu0 0
        %2944 = vmatprep.subr.bf16.mxu0 0
        %2945 = vmatpush2.bf16.msra.mxu0 0
        %2946 = vmatprep.subr.bf16.mxu0 0
        %2947 = vmatpush2.bf16.msra.mxu0 0
        %2948 = vmatprep.subr.bf16.mxu0 0
        %2949 = vmatpush2.bf16.msra.mxu0 0
        %2950 = vmatprep.subr.bf16.mxu0 0
        %2951 = vmatpush2.bf16.msra.mxu0 0
        %2952 = vmatprep.subr.bf16.mxu0 0
        %2953 = vmatpush2.bf16.msra.mxu0 0
        %2954 = vmatprep.mubr.bf16.mxu0 0
        %2955 = vmatmul.mubr.bf16.gmra.mxu0 %v2920
        %v2956 = vpop.f32.mrf.mxu0
        %v2957 = vadd.f32 0.0, %v2956
        %v2958 = vpop.f32.mrf.mxu0
        %v2959 = vpop.f32.mrf.mxu0
        %v2960 = vadd.f32 0.0, %v2959
        %v2961 = vpop.f32.mrf.mxu0
        %2962 = vdwg.mxu0
        %v2967 = vunpack.c.l.b16 %v2522
        %v2968 = vunpack.c.l.b16 %v2523
        %v2969 = vunpack.c.l.b16 %v2524
        %v2970 = vunpack.c.l.b16 %v2525
        %v2971 = vpack.c.b16 %v2968, %v2967
        %v2972 = vpack.c.b16 %v2970, %v2969
        %v2976 = vsel %vm2179, %v2849, 0
        %2978 = vmatprep.subr.bf16.mxu0 0
        %2979 = vmatpush1.bf16.msra.mxu0 0
        %2980 = vmatprep.subr.bf16.mxu0 0
        %2981 = vmatpush1.bf16.msra.mxu0 0
        %2982 = vmatprep.subr.bf16.mxu0 0
        %2983 = vmatpush1.bf16.msra.mxu0 0
        %2984 = vmatprep.subr.bf16.mxu0 0
        %2985 = vmatpush1.bf16.msra.mxu0 0
        %2986 = vmatprep.subr.bf16.mxu0 0
        %2987 = vmatpush1.bf16.msra.mxu0 0
        %2988 = vmatprep.subr.bf16.mxu0 0
        %2989 = vmatpush1.bf16.msra.mxu0 0
        %2990 = vmatprep.subr.bf16.mxu0 0
        %2991 = vmatpush1.bf16.msra.mxu0 %v2972
        %2992 = vmatprep.subr.bf16.mxu0 0
        %2993 = vmatpush1.bf16.msra.mxu0 %v2971
        %2994 = vmatprep.subr.bf16.mxu0 0
        %2995 = vmatpush2.bf16.msra.mxu0 0
        %2996 = vmatprep.subr.bf16.mxu0 0
        %2997 = vmatpush2.bf16.msra.mxu0 0
        %2998 = vmatprep.subr.bf16.mxu0 0
        %2999 = vmatpush2.bf16.msra.mxu0 0
        %3000 = vmatprep.subr.bf16.mxu0 0
        %3001 = vmatpush2.bf16.msra.mxu0 0
        %3002 = vmatprep.subr.bf16.mxu0 0
        %3003 = vmatpush2.bf16.msra.mxu0 0
        %3004 = vmatprep.subr.bf16.mxu0 0
        %3005 = vmatpush2.bf16.msra.mxu0 0
        %3006 = vmatprep.subr.bf16.mxu0 0
        %3007 = vmatpush2.bf16.msra.mxu0 0
        %3008 = vmatprep.subr.bf16.mxu0 0
        %3009 = vmatpush2.bf16.msra.mxu0 0
        %3010 = vmatprep.mubr.bf16.mxu0 0
        %3011 = vmatmul.mubr.bf16.gmra.mxu0 %v2976
        %v3012 = vpop.f32.mrf.mxu0
        %v3013 = vadd.f32 0.0, %v3012
        %v3014 = vpop.f32.mrf.mxu0
        %v3015 = vpop.f32.mrf.mxu0
        %v3016 = vadd.f32 0.0, %v3015
        %v3017 = vpop.f32.mrf.mxu0
        %3018 = vdwg.mxu0
        %v3023 = vunpack.c.l.b16 %v2526
        %v3024 = vunpack.c.l.b16 %v2527
        %v3025 = vunpack.c.l.b16 %v2528
        %v3026 = vunpack.c.l.b16 %v2529
        %v3027 = vpack.c.b16 %v3024, %v3023
        %v3028 = vpack.c.b16 %v3026, %v3025
        %v3032 = vsel %vm2179, %v2850, 0
        %3034 = vmatprep.subr.bf16.mxu0 0
        %3035 = vmatpush1.bf16.msra.mxu0 0
        %3036 = vmatprep.subr.bf16.mxu0 0
        %3037 = vmatpush1.bf16.msra.mxu0 0
        %3038 = vmatprep.subr.bf16.mxu0 0
        %3039 = vmatpush1.bf16.msra.mxu0 0
        %3040 = vmatprep.subr.bf16.mxu0 0
        %3041 = vmatpush1.bf16.msra.mxu0 0
        %3042 = vmatprep.subr.bf16.mxu0 0
        %3043 = vmatpush1.bf16.msra.mxu0 0
        %3044 = vmatprep.subr.bf16.mxu0 0
        %3045 = vmatpush1.bf16.msra.mxu0 0
        %3046 = vmatprep.subr.bf16.mxu0 0
        %3047 = vmatpush1.bf16.msra.mxu0 %v3028
        %3048 = vmatprep.subr.bf16.mxu0 0
        %3049 = vmatpush1.bf16.msra.mxu0 %v3027
        %3050 = vmatprep.subr.bf16.mxu0 0
        %3051 = vmatpush2.bf16.msra.mxu0 0
        %3052 = vmatprep.subr.bf16.mxu0 0
        %3053 = vmatpush2.bf16.msra.mxu0 0
        %3054 = vmatprep.subr.bf16.mxu0 0
        %3055 = vmatpush2.bf16.msra.mxu0 0
        %3056 = vmatprep.subr.bf16.mxu0 0
        %3057 = vmatpush2.bf16.msra.mxu0 0
        %3058 = vmatprep.subr.bf16.mxu0 0
        %3059 = vmatpush2.bf16.msra.mxu0 0
        %3060 = vmatprep.subr.bf16.mxu0 0
        %3061 = vmatpush2.bf16.msra.mxu0 0
        %3062 = vmatprep.subr.bf16.mxu0 0
        %3063 = vmatpush2.bf16.msra.mxu0 0
        %3064 = vmatprep.subr.bf16.mxu0 0
        %3065 = vmatpush2.bf16.msra.mxu0 0
        %3066 = vmatprep.mubr.bf16.mxu0 0
        %3067 = vmatmul.mubr.bf16.gmra.mxu0 %v3032
        %v3068 = vpop.f32.mrf.mxu0
        %v3069 = vadd.f32 0.0, %v3068
        %v3070 = vpop.f32.mrf.mxu0
        %v3071 = vpop.f32.mrf.mxu0
        %v3072 = vadd.f32 0.0, %v3071
        %v3073 = vpop.f32.mrf.mxu0
        %3074 = vdwg.mxu0
        %v3075 = vrcp.pop %v2825
        %v3076 = vrcp.pop %v2828
        %v3077 = vrcp.pop %v2831
        %v3078 = vrcp.pop %v2834
        %v3079 = vrcp.pop %v2837
        %v3080 = vrcp.pop %v2840
        %v3081 = vrcp.pop %v2843
        %v3082 = vrcp.pop %v2846
        %v3083 = vmul.f32 %v2901, %v3075
        %v3084 = vmul.f32 %v2904, %v3076
        %v3085 = vmul.f32 %v2957, %v3077
        %v3086 = vmul.f32 %v2960, %v3078
        %v3087 = vmul.f32 %v3013, %v3079
        %v3088 = vmul.f32 %v3016, %v3080
        %v3089 = vmul.f32 %v3069, %v3081
        %v3090 = vmul.f32 %v3072, %v3082
        %v3091 = vpack.c.bf16 %v3084, %v3083
        %v3092 = vpack.c.bf16 %v3086, %v3085
        %v3093 = vpack.c.bf16 %v3088, %v3087
        %v3094 = vpack.c.bf16 %v3090, %v3089
        %v3095 = vld [vmem:[#allocation11] sm:$0xf]
        %v3096 = vld [vmem:[#allocation11 + $0x4] sm:$0xf]
        %v3097 = vld [vmem:[#allocation11 + $0x8] sm:$0xf]
        %v3098 = vld [vmem:[#allocation11 + $0xc] sm:$0xf]
        %v3100 = vsel %vm2544, %v3091, 0
        %vm3102 = vcmask 1043456
        %v3104 = vsel %vm3102, %v3095, 0
        %3106 = vmatprep.subr.bf16.mxu0 0
        %3107 = vmatpush1.bf16.msra.mxu0 0
        %3108 = vmatprep.subr.bf16.mxu0 0
        %3109 = vmatpush1.bf16.msra.mxu0 0
        %3110 = vmatprep.subr.bf16.mxu0 0
        %3111 = vmatpush1.bf16.msra.mxu0 0
        %3112 = vmatprep.subr.bf16.mxu0 0
        %3113 = vmatpush1.bf16.msra.mxu0 0
        %3114 = vmatprep.subr.bf16.mxu0 0
        %3115 = vmatpush1.bf16.msra.mxu0 0
        %3116 = vmatprep.subr.bf16.mxu0 0
        %3117 = vmatpush1.bf16.msra.mxu0 0
        %3118 = vmatprep.subr.bf16.mxu0 0
        %3119 = vmatpush1.bf16.msra.mxu0 0
        %3120 = vmatprep.subr.bf16.mxu0 0
        %3121 = vmatpush1.bf16.msra.mxu0 %v3104
        %3122 = vmatprep.subr.bf16.mxu0 0
        %3123 = vmatpush2.bf16.msra.mxu0 0
        %3124 = vmatprep.subr.bf16.mxu0 0
        %3125 = vmatpush2.bf16.msra.mxu0 0
        %3126 = vmatprep.subr.bf16.mxu0 0
        %3127 = vmatpush2.bf16.msra.mxu0 0
        %3128 = vmatprep.subr.bf16.mxu0 0
        %3129 = vmatpush2.bf16.msra.mxu0 0
        %3130 = vmatprep.subr.bf16.mxu0 0
        %3131 = vmatpush2.bf16.msra.mxu0 0
        %3132 = vmatprep.subr.bf16.mxu0 0
        %3133 = vmatpush2.bf16.msra.mxu0 0
        %3134 = vmatprep.subr.bf16.mxu0 0
        %3135 = vmatpush2.bf16.msra.mxu0 0
        %3136 = vmatprep.subr.bf16.mxu0 0
        %3137 = vmatpush2.bf16.msra.mxu0 0
        %3138 = vmatprep.mubr.bf16.mxu0 0
        %3139 = vmatmul.mubr.bf16.gmra.mxu0 %v3100
        %v3140 = vpop.f32.mrf.mxu0
        %v3141 = vadd.f32 0.0, %v3140
        %v3142 = vpop.f32.mrf.mxu0
        %v3143 = vpop.f32.mrf.mxu0
        %v3144 = vadd.f32 0.0, %v3143
        %v3145 = vpop.f32.mrf.mxu0
        %3146 = vdwg.mxu0
        %v3148 = vsel %vm2544, %v3092, 0
        %v3151 = vsel %vm3102, %v3096, 0
        %3153 = vmatprep.subr.bf16.mxu0 0
        %3154 = vmatpush1.bf16.msra.mxu0 0
        %3155 = vmatprep.subr.bf16.mxu0 0
        %3156 = vmatpush1.bf16.msra.mxu0 0
        %3157 = vmatprep.subr.bf16.mxu0 0
        %3158 = vmatpush1.bf16.msra.mxu0 0
        %3159 = vmatprep.subr.bf16.mxu0 0
        %3160 = vmatpush1.bf16.msra.mxu0 0
        %3161 = vmatprep.subr.bf16.mxu0 0
        %3162 = vmatpush1.bf16.msra.mxu0 0
        %3163 = vmatprep.subr.bf16.mxu0 0
        %3164 = vmatpush1.bf16.msra.mxu0 0
        %3165 = vmatprep.subr.bf16.mxu0 0
        %3166 = vmatpush1.bf16.msra.mxu0 0
        %3167 = vmatprep.subr.bf16.mxu0 0
        %3168 = vmatpush1.bf16.msra.mxu0 %v3151
        %3169 = vmatprep.subr.bf16.mxu0 0
        %3170 = vmatpush2.bf16.msra.mxu0 0
        %3171 = vmatprep.subr.bf16.mxu0 0
        %3172 = vmatpush2.bf16.msra.mxu0 0
        %3173 = vmatprep.subr.bf16.mxu0 0
        %3174 = vmatpush2.bf16.msra.mxu0 0
        %3175 = vmatprep.subr.bf16.mxu0 0
        %3176 = vmatpush2.bf16.msra.mxu0 0
        %3177 = vmatprep.subr.bf16.mxu0 0
        %3178 = vmatpush2.bf16.msra.mxu0 0
        %3179 = vmatprep.subr.bf16.mxu0 0
        %3180 = vmatpush2.bf16.msra.mxu0 0
        %3181 = vmatprep.subr.bf16.mxu0 0
        %3182 = vmatpush2.bf16.msra.mxu0 0
        %3183 = vmatprep.subr.bf16.mxu0 0
        %3184 = vmatpush2.bf16.msra.mxu0 0
        %3185 = vmatprep.mubr.bf16.mxu0 0
        %3186 = vmatmul.mubr.bf16.gmra.mxu0 %v3148
        %v3187 = vpop.f32.mrf.mxu0
        %v3188 = vadd.f32 0.0, %v3187
        %v3189 = vpop.f32.mrf.mxu0
        %v3190 = vpop.f32.mrf.mxu0
        %v3191 = vadd.f32 0.0, %v3190
        %v3192 = vpop.f32.mrf.mxu0
        %3193 = vdwg.mxu0
        %v3195 = vsel %vm2544, %v3093, 0
        %v3198 = vsel %vm3102, %v3097, 0
        %3200 = vmatprep.subr.bf16.mxu0 0
        %3201 = vmatpush1.bf16.msra.mxu0 0
        %3202 = vmatprep.subr.bf16.mxu0 0
        %3203 = vmatpush1.bf16.msra.mxu0 0
        %3204 = vmatprep.subr.bf16.mxu0 0
        %3205 = vmatpush1.bf16.msra.mxu0 0
        %3206 = vmatprep.subr.bf16.mxu0 0
        %3207 = vmatpush1.bf16.msra.mxu0 0
        %3208 = vmatprep.subr.bf16.mxu0 0
        %3209 = vmatpush1.bf16.msra.mxu0 0
        %3210 = vmatprep.subr.bf16.mxu0 0
        %3211 = vmatpush1.bf16.msra.mxu0 0
        %3212 = vmatprep.subr.bf16.mxu0 0
        %3213 = vmatpush1.bf16.msra.mxu0 0
        %3214 = vmatprep.subr.bf16.mxu0 0
        %3215 = vmatpush1.bf16.msra.mxu0 %v3198
        %3216 = vmatprep.subr.bf16.mxu0 0
        %3217 = vmatpush2.bf16.msra.mxu0 0
        %3218 = vmatprep.subr.bf16.mxu0 0
        %3219 = vmatpush2.bf16.msra.mxu0 0
        %3220 = vmatprep.subr.bf16.mxu0 0
        %3221 = vmatpush2.bf16.msra.mxu0 0
        %3222 = vmatprep.subr.bf16.mxu0 0
        %3223 = vmatpush2.bf16.msra.mxu0 0
        %3224 = vmatprep.subr.bf16.mxu0 0
        %3225 = vmatpush2.bf16.msra.mxu0 0
        %3226 = vmatprep.subr.bf16.mxu0 0
        %3227 = vmatpush2.bf16.msra.mxu0 0
        %3228 = vmatprep.subr.bf16.mxu0 0
        %3229 = vmatpush2.bf16.msra.mxu0 0
        %3230 = vmatprep.subr.bf16.mxu0 0
        %3231 = vmatpush2.bf16.msra.mxu0 0
        %3232 = vmatprep.mubr.bf16.mxu0 0
        %3233 = vmatmul.mubr.bf16.gmra.mxu0 %v3195
        %v3234 = vpop.f32.mrf.mxu0
        %v3235 = vadd.f32 0.0, %v3234
        %v3236 = vpop.f32.mrf.mxu0
        %v3237 = vpop.f32.mrf.mxu0
        %v3238 = vadd.f32 0.0, %v3237
        %v3239 = vpop.f32.mrf.mxu0
        %3240 = vdwg.mxu0
        %v3242 = vsel %vm2544, %v3094, 0
        %v3245 = vsel %vm3102, %v3098, 0
        %3247 = vmatprep.subr.bf16.mxu0 0
        %3248 = vmatpush1.bf16.msra.mxu0 0
        %3249 = vmatprep.subr.bf16.mxu0 0
        %3250 = vmatpush1.bf16.msra.mxu0 0
        %3251 = vmatprep.subr.bf16.mxu0 0
        %3252 = vmatpush1.bf16.msra.mxu0 0
        %3253 = vmatprep.subr.bf16.mxu0 0
        %3254 = vmatpush1.bf16.msra.mxu0 0
        %3255 = vmatprep.subr.bf16.mxu0 0
        %3256 = vmatpush1.bf16.msra.mxu0 0
        %3257 = vmatprep.subr.bf16.mxu0 0
        %3258 = vmatpush1.bf16.msra.mxu0 0
        %3259 = vmatprep.subr.bf16.mxu0 0
        %3260 = vmatpush1.bf16.msra.mxu0 0
        %3261 = vmatprep.subr.bf16.mxu0 0
        %3262 = vmatpush1.bf16.msra.mxu0 %v3245
        %3263 = vmatprep.subr.bf16.mxu0 0
        %3264 = vmatpush2.bf16.msra.mxu0 0
        %3265 = vmatprep.subr.bf16.mxu0 0
        %3266 = vmatpush2.bf16.msra.mxu0 0
        %3267 = vmatprep.subr.bf16.mxu0 0
        %3268 = vmatpush2.bf16.msra.mxu0 0
        %3269 = vmatprep.subr.bf16.mxu0 0
        %3270 = vmatpush2.bf16.msra.mxu0 0
        %3271 = vmatprep.subr.bf16.mxu0 0
        %3272 = vmatpush2.bf16.msra.mxu0 0
        %3273 = vmatprep.subr.bf16.mxu0 0
        %3274 = vmatpush2.bf16.msra.mxu0 0
        %3275 = vmatprep.subr.bf16.mxu0 0
        %3276 = vmatpush2.bf16.msra.mxu0 0
        %3277 = vmatprep.subr.bf16.mxu0 0
        %3278 = vmatpush2.bf16.msra.mxu0 0
        %3279 = vmatprep.mubr.bf16.mxu0 0
        %3280 = vmatmul.mubr.bf16.gmra.mxu0 %v3242
        %v3281 = vpop.f32.mrf.mxu0
        %v3282 = vadd.f32 0.0, %v3281
        %v3283 = vpop.f32.mrf.mxu0
        %v3284 = vpop.f32.mrf.mxu0
        %v3285 = vadd.f32 0.0, %v3284
        %v3286 = vpop.f32.mrf.mxu0
        %3287 = vdwg.mxu0
        %v3288 = vsel %vm2179, %v3141, 0.0
        %v3289 = vsel %vm2179, %v3188, 0.0
        %v3290 = vadd.f32 %v3288, %v3289
        %v3291 = vsel %vm2179, %v3235, 0.0
        %v3292 = vadd.f32 %v3290, %v3291
        %v3293 = vsel %vm2179, %v3282, 0.0
        %v3294 = vadd.f32 %v3292, %v3293
        %v3295 = vsel %vm2179, %v3144, 0.0
        %v3296 = vsel %vm2179, %v3191, 0.0
        %v3297 = vadd.f32 %v3295, %v3296
        %v3298 = vsel %vm2179, %v3238, 0.0
        %v3299 = vadd.f32 %v3297, %v3298
        %v3300 = vsel %vm2179, %v3285, 0.0
        %v3301 = vadd.f32 %v3299, %v3300
        %v3302 = vld [vmem:[%s9] sm:$0x1]
        %v3304 = vlaneseq
        %v3305 = vshrl.u32 %v3304, 7
        %v3306 = vsub.s32 0, %v3305
        %v3307 = vrot.slane %v3302, %v3306
        %v3309 = vadd.f32 %v3294, %v3307
        %v3310 = vadd.f32 %v3301, %v3307
        %s3311 = scalar_lea.vmem %s614, %s704 [#allocation5]
        %v3312 = vld [vmem:[%s3311] sm:$0xff]
        %v3313 = vld [vmem:[%s3311 + $0x8] sm:$0xff]
        %v3314 = vadd.f32 %v3312, %v3309
        %v3315 = vadd.f32 %v3313, %v3310
        %v3316 = vld [vmem:[%s12] sm:$0x1]
        %v3317 = vld [vmem:[%s13] sm:$0x1]
        %v3318 = vsel %vm2179, %v3314, 0.0
        %3319 = vadd.xlane.f32.xlu0 %v3318
        %v3320 = vpop.xlane.xlu0 %3319
        %v3321 = vsel %vm2179, %v3315, 0.0
        %3322 = vadd.xlane.f32.xlu0 %v3321
        %v3323 = vpop.xlane.xlu0 %3322
        %v3324 = vrcp.pop 32.0
        %v3325 = vmul.f32 %v3320, %v3324
        %v3326 = vmul.f32 %v3323, %v3324
        %v3327 = vsub.f32 %v3314, %v3325
        %v3328 = vsub.f32 %v3315, %v3326
        %v3329 = vmul.f32 %v3327, %v3327
        %v3330 = vmul.f32 %v3328, %v3328
        %v3331 = vsel %vm2179, %v3329, 0.0
        %3332 = vadd.xlane.f32.xlu0 %v3331
        %v3333 = vpop.xlane.xlu0 %3332
        %v3334 = vsel %vm2179, %v3330, 0.0
        %3335 = vadd.xlane.f32.xlu0 %v3334
        %v3336 = vpop.xlane.xlu0 %3335
        %v3337 = vmul.f32 %v3333, %v3324
        %v3338 = vmul.f32 %v3336, %v3324
        %v3339 = vadd.f32 %v3337, 1e-06
        %v3340 = vadd.f32 %v3338, 1e-06
        %v3341 = vrsqrt.pop %v3339
        %v3342 = vrsqrt.pop %v3340
        %v3343 = vmul.f32 %v3327, %v3341
        %v3344 = vmul.f32 %v3328, %v3342
        %v3346 = vlaneseq
        %v3347 = vshrl.u32 %v3346, 7
        %v3348 = vsub.s32 0, %v3347
        %v3349 = vrot.slane %v3316, %v3348
        %v3351 = vmul.f32 %v3343, %v3349
        %v3352 = vmul.f32 %v3344, %v3349
        %v3354 = vlaneseq
        %v3355 = vshrl.u32 %v3354, 7
        %v3356 = vsub.s32 0, %v3355
        %v3357 = vrot.slane %v3317, %v3356
        %v3359 = vadd.f32 %v3351, %v3357
        %v3360 = vadd.f32 %v3352, %v3357
        %v3361 = vpack.c.bf16 %v3360, %v3359
        %v3362 = vld [vmem:[#allocation13] sm:$0xf]
        %v3363 = vld [vmem:[#allocation13 + $0x4] sm:$0xf]
        %v3364 = vld [vmem:[#allocation13 + $0x8] sm:$0xf]
        %v3365 = vld [vmem:[#allocation13 + $0xc] sm:$0xf]
        %v3366 = vld [vmem:[%s15] sm:$0x1]
        %v3368 = vlaneseq
        %v3369 = vshrl.u32 %v3368, 7
        %v3370 = vsub.s32 0, %v3369
        %v3371 = vrot.slane %v3366, %v3370
        %v3377 = vunpack.c.l.b16 %v3362
        %v3378 = vunpack.c.l.b16 %v3363
        %v3379 = vunpack.c.l.b16 %v3364
        %v3380 = vunpack.c.l.b16 %v3365
        %v3381 = vpack.c.b16 %v3378, %v3377
        %v3382 = vpack.c.b16 %v3380, %v3379
        %v3386 = vsel %vm2179, %v3361, 0
        %3388 = vmatprep.subr.bf16.mxu0 0
        %3389 = vmatpush1.bf16.msra.mxu0 0
        %3390 = vmatprep.subr.bf16.mxu0 0
        %3391 = vmatpush1.bf16.msra.mxu0 0
        %3392 = vmatprep.subr.bf16.mxu0 0
        %3393 = vmatpush1.bf16.msra.mxu0 0
        %3394 = vmatprep.subr.bf16.mxu0 0
        %3395 = vmatpush1.bf16.msra.mxu0 0
        %3396 = vmatprep.subr.bf16.mxu0 0
        %3397 = vmatpush1.bf16.msra.mxu0 0
        %3398 = vmatprep.subr.bf16.mxu0 0
        %3399 = vmatpush1.bf16.msra.mxu0 0
        %3400 = vmatprep.subr.bf16.mxu0 0
        %3401 = vmatpush1.bf16.msra.mxu0 %v3382
        %3402 = vmatprep.subr.bf16.mxu0 0
        %3403 = vmatpush1.bf16.msra.mxu0 %v3381
        %3404 = vmatprep.subr.bf16.mxu0 0
        %3405 = vmatpush2.bf16.msra.mxu0 0
        %3406 = vmatprep.subr.bf16.mxu0 0
        %3407 = vmatpush2.bf16.msra.mxu0 0
        %3408 = vmatprep.subr.bf16.mxu0 0
        %3409 = vmatpush2.bf16.msra.mxu0 0
        %3410 = vmatprep.subr.bf16.mxu0 0
        %3411 = vmatpush2.bf16.msra.mxu0 0
        %3412 = vmatprep.subr.bf16.mxu0 0
        %3413 = vmatpush2.bf16.msra.mxu0 0
        %3414 = vmatprep.subr.bf16.mxu0 0
        %3415 = vmatpush2.bf16.msra.mxu0 0
        %3416 = vmatprep.subr.bf16.mxu0 0
        %3417 = vmatpush2.bf16.msra.mxu0 0
        %3418 = vmatprep.subr.bf16.mxu0 0
        %3419 = vmatpush2.bf16.msra.mxu0 0
        %3420 = vmatprep.mubr.bf16.mxu0 0
        %3421 = vmatmul.mubr.bf16.gmra.mxu0 %v3386
        %v3422 = vpop.f32.mrf.mxu0
        %v3423 = vadd.f32 %v3371, %v3422
        %v3424 = vpop.f32.mrf.mxu0
        %v3425 = vpop.f32.mrf.mxu0
        %v3426 = vadd.f32 %v3371, %v3425
        %v3427 = vpop.f32.mrf.mxu0
        %3428 = vdwg.mxu0
        %v3429 = vmax.f32 %v3423, 0.0
        %v3430 = vmax.f32 %v3426, 0.0
        %v3431 = vpack.c.bf16 %v3430, %v3429
        %v3432 = vld [vmem:[%s16] sm:$0xf]
        %v3433 = vld [vmem:[%s16 + $0x4] sm:$0xf]
        %v3434 = vld [vmem:[%s16 + $0x8] sm:$0xf]
        %v3435 = vld [vmem:[%s16 + $0xc] sm:$0xf]
        %v3436 = vld [vmem:[%s16 + $0x10] sm:$0xf]
        %v3437 = vld [vmem:[%s16 + $0x14] sm:$0xf]
        %v3438 = vld [vmem:[%s16 + $0x18] sm:$0xf]
        %v3439 = vld [vmem:[%s16 + $0x1c] sm:$0xf]
        %v3440 = vld [vmem:[%s17] sm:$0x1]
        %v3442 = vlaneseq
        %v3443 = vshrl.u32 %v3442, 7
        %v3444 = vsub.s32 0, %v3443
        %v3445 = vrot.slane %v3440, %v3444
        %v3455 = vunpack.c.l.b16 %v3432
        %v3456 = vunpack.c.l.b16 %v3433
        %v3457 = vunpack.c.l.b16 %v3434
        %v3458 = vunpack.c.l.b16 %v3435
        %v3459 = vunpack.c.l.b16 %v3436
        %v3460 = vunpack.c.l.b16 %v3437
        %v3461 = vunpack.c.l.b16 %v3438
        %v3462 = vunpack.c.l.b16 %v3439
        %v3463 = vpack.c.b16 %v3456, %v3455
        %v3464 = vpack.c.b16 %v3458, %v3457
        %v3465 = vpack.c.b16 %v3460, %v3459
        %v3466 = vpack.c.b16 %v3462, %v3461
        %vm3471 = vcmask 523264
        %v3473 = vsel %vm3471, %v3431, 0
        %3475 = vmatprep.subr.bf16.mxu0 0
        %3476 = vmatpush1.bf16.msra.mxu0 0
        %3477 = vmatprep.subr.bf16.mxu0 0
        %3478 = vmatpush1.bf16.msra.mxu0 0
        %3479 = vmatprep.subr.bf16.mxu0 0
        %3480 = vmatpush1.bf16.msra.mxu0 0
        %3481 = vmatprep.subr.bf16.mxu0 0
        %3482 = vmatpush1.bf16.msra.mxu0 0
        %3483 = vmatprep.subr.bf16.mxu0 0
        %3484 = vmatpush1.bf16.msra.mxu0 %v3466
        %3485 = vmatprep.subr.bf16.mxu0 0
        %3486 = vmatpush1.bf16.msra.mxu0 %v3465
        %3487 = vmatprep.subr.bf16.mxu0 0
        %3488 = vmatpush1.bf16.msra.mxu0 %v3464
        %3489 = vmatprep.subr.bf16.mxu0 0
        %3490 = vmatpush1.bf16.msra.mxu0 %v3463
        %3491 = vmatprep.subr.bf16.mxu0 0
        %3492 = vmatpush2.bf16.msra.mxu0 0
        %3493 = vmatprep.subr.bf16.mxu0 0
        %3494 = vmatpush2.bf16.msra.mxu0 0
        %3495 = vmatprep.subr.bf16.mxu0 0
        %3496 = vmatpush2.bf16.msra.mxu0 0
        %3497 = vmatprep.subr.bf16.mxu0 0
        %3498 = vmatpush2.bf16.msra.mxu0 0
        %3499 = vmatprep.subr.bf16.mxu0 0
        %3500 = vmatpush2.bf16.msra.mxu0 0
        %3501 = vmatprep.subr.bf16.mxu0 0
        %3502 = vmatpush2.bf16.msra.mxu0 0
        %3503 = vmatprep.subr.bf16.mxu0 0
        %3504 = vmatpush2.bf16.msra.mxu0 0
        %3505 = vmatprep.subr.bf16.mxu0 0
        %3506 = vmatpush2.bf16.msra.mxu0 0
        %3507 = vmatprep.mubr.bf16.mxu0 0
        %3508 = vmatmul.mubr.bf16.gmra.mxu0 %v3473
        %v3509 = vpop.f32.mrf.mxu0
        %v3510 = vadd.f32 %v3445, %v3509
        %v3511 = vpop.f32.mrf.mxu0
        %v3512 = vpop.f32.mrf.mxu0
        %v3513 = vadd.f32 %v3445, %v3512
        %v3514 = vpop.f32.mrf.mxu0
        %3515 = vdwg.mxu0
        %v3516 = vadd.f32 %v3314, %v3510
        %v3517 = vadd.f32 %v3315, %v3513
        %3518 = vst.msk [vmem:[%s691] sm:$0xff] %vm2179, %v3516
        %3519 = vst.msk [vmem:[%s691 + $0x8] sm:$0xff] %vm2179, %v3517
        %s3520 = sand.u32 %s449, 1
        %s3521 = scalar_lea.sflag [#allocation7], %s3520
        %s3522 = sand.u32 %s449, 1
        %s3523 = smul.addr %s3522, 16
        %s3524 = scalar_lea.vmem [#allocation14], %s3523
        // Predicated region
        $region117: #{tpu_custom_call.1} parent=91 // pred_check
          %p3525 = pneg %p459
        $region118: #{tpu_custom_call.1} parent=91 // pred_check_branch
          %3527 = sbr.rel (%p3525) target = $region120
        $region119: #{tpu_custom_call.1} parent=91 // pred_region
          %s3528 = smul.u32 2, %s42
          %s3530 = ssub.s32 256, 256
          %3531 = vsyncadd %s3521, %s3530
          %s3532 = smul.addr %s41, 4
          %s3533 = sadd.s32 %s3528, %s3532
          %s3534 = smul.addr %s3533, 128
          %s3535 = scalar_lea.hbm %s18, %s3534
          %s3536 = sshll.u32 %s3524, 4
          %s3537 = int_to_ptr.vmem [resolvable:$true] %s3536
          %3542 = dma.vmem_to_hbm [thread:$0]  %s3537, 256, %s3535, %s3521, 128, 128, 8
        $region120: #{tpu_custom_call.1} parent=91 // pred_fallthru
          _
      $region92: #{tpu_custom_call.1} parent=5 // pred_fallthru
        _
      %p3543 = scmp.le.s32.totalorder 2, %s32
      // Predicated region
      $region121: #{tpu_custom_call.1} parent=5 // pred_check
        %p3544 = pneg %p3543
      $region122: #{tpu_custom_call.1} parent=5 // pred_check_branch
        %3546 = sbr.rel (%p3544) target = $region124
      $region123: #{tpu_custom_call.1} parent=5 // pred_region
        %s3547 = ssub.s32 %s32, 2
        // Predicated region
        $region125: #{tpu_custom_call.1} parent=123 // pred_check
          %p3548 = pneg %p465
        $region126: #{tpu_custom_call.1} parent=123 // pred_check_branch
          %3550 = sbr.rel (%p3548) target = $region128
        $region127: #{tpu_custom_call.1} parent=123 // pred_region
          %s3551 = sand.u32 %s450, 1
          %s3552 = scalar_lea.sflag [#allocation7], %s3551
          %s3553 = sand.u32 %s450, 1
          %s3554 = smul.addr %s3553, 16
          %s3555 = scalar_lea.vmem [#allocation14], %s3554
          %3556 = dma.done %s3552, 256
        $region128: #{tpu_custom_call.1} parent=123 // pred_fallthru
          _
      $region124: #{tpu_custom_call.1} parent=5 // pred_fallthru
        _
    $region6: #{tpu_custom_call.1} parent=1 // loop_footer
      %s36 = sadd.s32 1, %s32
    $region7: #{tpu_custom_call.1} parent=1 // loop_footer_branch
      %31 = sbr.rel target = $region3
    $region8: #{tpu_custom_call.1} parent=1 // loop_exit
      _
    %3557 = vsyncpa [#allocation6], 1
    %s3558 = scalar_lea.sflag [#allocation6], 1
    %3559 = vsyncpa %s3558, 1
    %3560 = vsyncpa [#allocation9], 1
    %3561 = vsyncpa [#allocation12], 1
    %3562 = vsyncpa [#allocation7], 1
    %s3563 = scalar_lea.sflag [#allocation7], 1
    %3564 = vsyncpa %s3563, 1

// kernel: tpu_custom_call.1
$region0: #{tpu_custom_call.1}
  #allocation0 [shape = 'u32[]', space=smem, size = 0x4, offset = 0x4, fixed_abs, tag = 'smem constant byte address 0x4 - core index']
  #allocation1 [shape = 'u32[144,128]{1,0:T(1,128)}', space=vmem, size = 0x12000, scoped, tag = 'internal scratch']
  #allocation2 [shape = 'f32[32,32]{1,0:T(8,128)}', space=vmem, size = 0x4000, scoped, tag = 'scratch operand']
  #allocation3 [shape = 'bf16[4,32,8]{2,1,0:T(8,128)(2,1)}', space=vmem, size = 0x8000, scoped, tag = 'scratch operand']
  #allocation4 [shape = 'bf16[4,32,8]{2,1,0:T(8,128)(2,1)}', space=vmem, size = 0x8000, scoped, tag = 'scratch operand']
  %s0 = inlined_call_operand.hbm [shape: f32[2,32,32], index: 0, kind: input, shape index: {}]
  %s1 = inlined_call_operand.vmem [shape: bf16[2,32,32], index: 1, kind: input, shape index: {}]
  %s2 = inlined_call_operand.vmem [shape: bf16[32,32], index: 2, kind: input, shape index: {}]
  %s3 = inlined_call_operand.vmem [shape: f32[1,32], index: 3, kind: input, shape index: {}]
  %s4 = inlined_call_operand.hbm [shape: bf16[32,32], index: 4, kind: input, shape index: {}]
  %s5 = inlined_call_operand.vmem [shape: f32[1,32], index: 5, kind: input, shape index: {}]
  %s6 = inlined_call_operand.hbm [shape: bf16[32,32], index: 6, kind: input, shape index: {}]
  %s7 = inlined_call_operand.vmem [shape: f32[1,32], index: 7, kind: input, shape index: {}]
  %s8 = inlined_call_operand.hbm [shape: bf16[4,8,32], index: 8, kind: input, shape index: {}]
  %s9 = inlined_call_operand.vmem [shape: f32[1,32], index: 9, kind: input, shape index: {}]
  %s10 = inlined_call_operand.vmem [shape: f32[1,32], index: 10, kind: input, shape index: {}]
  %s11 = inlined_call_operand.vmem [shape: f32[1,32], index: 11, kind: input, shape index: {}]
  %s12 = inlined_call_operand.vmem [shape: f32[1,32], index: 12, kind: input, shape index: {}]
  %s13 = inlined_call_operand.vmem [shape: f32[1,32], index: 13, kind: input, shape index: {}]
  %s14 = inlined_call_operand.hbm [shape: bf16[32,64], index: 14, kind: input, shape index: {}]
  %s15 = inlined_call_operand.vmem [shape: f32[1,64], index: 15, kind: input, shape index: {}]
  %s16 = inlined_call_operand.vmem [shape: bf16[64,32], index: 16, kind: input, shape index: {}]
  %s17 = inlined_call_operand.vmem [shape: f32[1,32], index: 17, kind: input, shape index: {}]
  %s18 = inlined_call_operand.hbm [shape: f32[2,32,32], index: 18, kind: output, shape index: {}]
  %s19 = sld [smem:[#allocation0]]
  $region129: #{tpu_custom_call.1} parent=0
    _
  %s21 = ssub.s32 1, %s19
  %s22 = scalar_select 0, %s21, %s19
  $region1: #{tpu_custom_call.1} parent=0
    #allocation5 [shape = 'u8[32768]{0}', space=vmem, size = 0x8000, scoped, tag = 'input window, operand 0']
    #allocation6 [shape = 's32[2]{0}', space=sflag, size = 0x8, scoped, tag = 'scoped memory for tpu_custom_call.1']
    #allocation7 [shape = 's32[2]{0}', space=sflag, size = 0x8, scoped, tag = 'scoped memory for tpu_custom_call.1']
    #allocation8 [shape = 'u8[8192]{0}', space=vmem, size = 0x2000, scoped, tag = 'input window, operand 4, single buffered']
    #allocation9 [shape = 's32[1]{0}', space=sflag, size = 0x4, scoped, tag = 'scoped memory for tpu_custom_call.1']
    #allocation10 [shape = 'u8[8192]{0}', space=vmem, size = 0x2000, scoped, tag = 'input window, operand 6, single buffered']
    #allocation11 [shape = 'u8[8192]{0}', space=vmem, size = 0x2000, scoped, tag = 'input window, operand 8, single buffered']
    #allocation12 [shape = 's32[1]{0}', space=sflag, size = 0x4, scoped, tag = 'scoped memory for tpu_custom_call.1']
    #allocation13 [shape = 'u8[8192]{0}', space=vmem, size = 0x2000, scoped, tag = 'input window, operand 14, single buffered']
    #allocation14 [shape = 'u8[16384]{0}', space=vmem, size = 0x4000, scoped, tag = 'output window, operand 0']
    %23 = vsyncpa [#allocation6], 0
    %s24 = scalar_lea.sflag [#allocation6], 1
    %25 = vsyncpa %s24, 0
    %26 = vsyncpa [#allocation9], 0
    %27 = vsyncpa [#allocation12], 0
    %28 = vsyncpa [#allocation7], 0
    %s29 = scalar_lea.sflag [#allocation7], 1
    %30 = vsyncpa %s29, 0
    loop: start=0, step=1, limit=6
    $region2: #{tpu_custom_call.1} parent=1 // loop_pre_header
      _
    $region3: #{tpu_custom_call.1} parent=1 // loop_header
      %s32 = sphi 0, %s36
      %p33 = scmp.ge.s32.totalorder %s32, 6
      %s39 = sphi 0, %s51
      %s40 = sphi 0, %s47
      %s41 = sphi 0, %s39
      %s42 = sphi 0, %s40
      %s43 = sphi 0, %s41
      %s44 = sphi 0, %s42
      %s54 = sphi 0, %s56
      %s57 = sphi 0, %s54
      %s58 = sphi 0, %s57
      %s74 = sphi 0, %s58
      %s82 = sphi 0, %s84
      %s85 = sphi 0, %s82
      %s86 = sphi 0, %s85
      %s102 = sphi 0, %s86
      %s106 = sphi 0, %s106
      %s108 = sphi 0, %s106
      %s109 = sphi 0, %s108
      %s123 = sphi 0, %s109
      %s127 = sphi 0, %s127
      %s129 = sphi 0, %s127
      %s130 = sphi 0, %s129
      %s144 = sphi 0, %s130
      %s148 = sphi 0, %s148
      %s150 = sphi 0, %s148
      %s151 = sphi 0, %s150
      %s165 = sphi 0, %s151
      %s169 = sphi 0, %s169
      %s171 = sphi 0, %s169
      %s172 = sphi 0, %s171
      %s186 = sphi 0, %s172
      %s190 = sphi 0, %s190
      %s192 = sphi 0, %s190
      %s193 = sphi 0, %s192
      %s207 = sphi 0, %s193
      %s211 = sphi 0, %s211
      %s213 = sphi 0, %s211
      %s214 = sphi 0, %s213
      %s228 = sphi 0, %s214
      %s232 = sphi 0, %s232
      %s234 = sphi 0, %s232
      %s235 = sphi 0, %s234
      %s249 = sphi 0, %s235
      %s253 = sphi 0, %s253
      %s255 = sphi 0, %s253
      %s256 = sphi 0, %s255
      %s270 = sphi 0, %s256
      %s274 = sphi 0, %s274
      %s276 = sphi 0, %s274
      %s277 = sphi 0, %s276
      %s291 = sphi 0, %s277
      %s295 = sphi 0, %s295
      %s297 = sphi 0, %s295
      %s298 = sphi 0, %s297
      %s312 = sphi 0, %s298
      %s316 = sphi 0, %s316
      %s318 = sphi 0, %s316
      %s319 = sphi 0, %s318
      %s333 = sphi 0, %s319
      %s337 = sphi 0, %s337
      %s339 = sphi 0, %s337
      %s340 = sphi 0, %s339
      %s354 = sphi 0, %s340
      %s358 = sphi 0, %s358
      %s360 = sphi 0, %s358
      %s361 = sphi 0, %s360
      %s375 = sphi 0, %s361
      %s379 = sphi 0, %s379
      %s381 = sphi 0, %s379
      %s382 = sphi 0, %s381
      %s396 = sphi 0, %s382
      %s400 = sphi 0, %s400
      %s402 = sphi 0, %s400
      %s403 = sphi 0, %s402
      %s417 = sphi 0, %s403
      %s421 = sphi 0, %s421
      %s423 = sphi 0, %s421
      %s424 = sphi 0, %s423
      %s438 = sphi 0, %s424
      %s446 = sphi 0, %s448
      %s449 = sphi 0, %s446
      %s450 = sphi 0, %s449
      %s466 = sphi 0, %s450
    $region4: #{tpu_custom_call.1} parent=1 // loop_header_branch
      %35 = sbr.rel (%p33) target = $region8
    $region5: #{tpu_custom_call.1} parent=1 // loop_body
      %s37 = ssub.s32 %s32, 1
      %s38 = ssub.s32 %s32, 2
      %s45 = sadd.s32 1, %s40
      %p46 = scmp.ge.s32.totalorder %s45, 2
      %s47 = scalar_select %p46, 0, %s45
      %s48 = sadd.s32 1, %s39
      %s49 = scalar_select %p46, %s48, %s39
      %p50 = scmp.ge.s32.totalorder %s49, 2
      %s51 = scalar_select %p50, 0, %s49
      %s52 = ssub.s32 %s39, %s51
      %p53 = scmp.eq.s32.totalorder %s52, 0
      %s55 = sadd.s32 %s54, 1
      %s56 = scalar_select %p53, %s54, %s55
      %p59 = pneg %p53
      %p60 = scmp.eq.s32.totalorder %s32, 3
      %p61 = por %p59, %p60
      %p62 = scmp.ne.s32.totalorder %s54, %s57
      %p63 = scmp.eq.s32.totalorder %s32, 0
      %p64 = por %p62, %p63
      %p65 = scmp.ne.s32.totalorder %s54, %s57
      %p66 = scmp.eq.s32.totalorder %s37, 3
      %p67 = por %p65, %p66
      %p68 = scmp.ne.s32.totalorder %s57, %s58
      %p69 = scmp.eq.s32.totalorder %s37, 0
      %p70 = por %p68, %p69
      %p71 = scmp.ne.s32.totalorder %s57, %s58
      %p72 = scmp.eq.s32.totalorder %s38, 3
      %p73 = por %p71, %p72
      %p75 = scmp.ne.s32.totalorder %s58, %s74
      %p76 = scmp.eq.s32.totalorder %s38, 0
      %p77 = por %p75, %p76
      %s78 = ssub.s32 %s39, %s51
      %s79 = ssub.s32 %s40, %s47
      %s80 = sor.u32 %s78, %s79
      %p81 = scmp.eq.s32.totalorder %s80, 0
      %s83 = sadd.s32 %s82, 1
      %s84 = scalar_select %p81, %s82, %s83
      %p87 = pneg %p81
      %p88 = scmp.eq.s32.totalorder %s32, 3
      %p89 = por %p87, %p88
      %p90 = scmp.ne.s32.totalorder %s82, %s85
      %p91 = scmp.eq.s32.totalorder %s32, 0
      %p92 = por %p90, %p91
      %p93 = scmp.ne.s32.totalorder %s82, %s85
      %p94 = scmp.eq.s32.totalorder %s37, 3
      %p95 = por %p93, %p94
      %p96 = scmp.ne.s32.totalorder %s85, %s86
      %p97 = scmp.eq.s32.totalorder %s37, 0
      %p98 = por %p96, %p97
      %p99 = scmp.ne.s32.totalorder %s85, %s86
      %p100 = scmp.eq.s32.totalorder %s38, 3
      %p101 = por %p99, %p100
      %p103 = scmp.ne.s32.totalorder %s86, %s102
      %p104 = scmp.eq.s32.totalorder %s38, 0
      %p105 = por %p103, %p104
      %s107 = sadd.s32 %s106, 1
      %p110 = scmp.eq.s32.totalorder %s32, 3
      %p111 = scmp.ne.s32.totalorder %s106, %s108
      %p112 = scmp.eq.s32.totalorder %s32, 0
      %p113 = por %p111, %p112
      %p114 = scmp.ne.s32.totalorder %s106, %s108
      %p115 = scmp.eq.s32.totalorder %s37, 3
      %p116 = por %p114, %p115
      %p117 = scmp.ne.s32.totalorder %s108, %s109
      %p118 = scmp.eq.s32.totalorder %s37, 0
      %p119 = por %p117, %p118
      %p120 = scmp.ne.s32.totalorder %s108, %s109
      %p121 = scmp.eq.s32.totalorder %s38, 3
      %p122 = por %p120, %p121
      %p124 = scmp.ne.s32.totalorder %s109, %s123
      %p125 = scmp.eq.s32.totalorder %s38, 0
      %p126 = por %p124, %p125
      %s128 = sadd.s32 %s127, 1
      %p131 = scmp.eq.s32.totalorder %s32, 3
      %p132 = scmp.ne.s32.totalorder %s127, %s129
      %p133 = scmp.eq.s32.totalorder %s32, 0
      %p134 = por %p132, %p133
      %p135 = scmp.ne.s32.totalorder %s127, %s129
      %p136 = scmp.eq.s32.totalorder %s37, 3
      %p137 = por %p135, %p136
      %p138 = scmp.ne.s32.totalorder %s129, %s130
      %p139 = scmp.eq.s32.totalorder %s37, 0
      %p140 = por %p138, %p139
      %p141 = scmp.ne.s32.totalorder %s129, %s130
      %p142 = scmp.eq.s32.totalorder %s38, 3
      %p143 = por %p141, %p142
      %p145 = scmp.ne.s32.totalorder %s130, %s144
      %p146 = scmp.eq.s32.totalorder %s38, 0
      %p147 = por %p145, %p146
      %s149 = sadd.s32 %s148, 1
      %p152 = scmp.eq.s32.totalorder %s32, 3
      %p153 = scmp.ne.s32.totalorder %s148, %s150
      %p154 = scmp.eq.s32.totalorder %s32, 0
      %p155 = por %p153, %p154
      %p156 = scmp.ne.s32.totalorder %s148, %s150
      %p157 = scmp.eq.s32.totalorder %s37, 3
      %p158 = por %p156, %p157
      %p159 = scmp.ne.s32.totalorder %s150, %s151
      %p160 = scmp.eq.s32.totalorder %s37, 0
      %p161 = por %p159, %p160
      %p162 = scmp.ne.s32.totalorder %s150, %s151
      %p163 = scmp.eq.s32.totalorder %s38, 3
      %p164 = por %p162, %p163
      %p166 = scmp.ne.s32.totalorder %s151, %s165
      %p167 = scmp.eq.s32.totalorder %s38, 0
      %p168 = por %p166, %p167
      %s170 = sadd.s32 %s169, 1
      %p173 = scmp.eq.s32.totalorder %s32, 3
      %p174 = scmp.ne.s32.totalorder %s169, %s171
      %p175 = scmp.eq.s32.totalorder %s32, 0
      %p176 = por %p174, %p175
      %p177 = scmp.ne.s32.totalorder %s169, %s171
      %p178 = scmp.eq.s32.totalorder %s37, 3
      %p179 = por %p177, %p178
      %p180 = scmp.ne.s32.totalorder %s171, %s172
      %p181 = scmp.eq.s32.totalorder %s37, 0
      %p182 = por %p180, %p181
      %p183 = scmp.ne.s32.totalorder %s171, %s172
      %p184 = scmp.eq.s32.totalorder %s38, 3
      %p185 = por %p183, %p184
      %p187 = scmp.ne.s32.totalorder %s172, %s186
      %p188 = scmp.eq.s32.totalorder %s38, 0
      %p189 = por %p187, %p188
      %s191 = sadd.s32 %s190, 1
      %p194 = scmp.eq.s32.totalorder %s32, 3
      %p195 = scmp.ne.s32.totalorder %s190, %s192
      %p196 = scmp.eq.s32.totalorder %s32, 0
      %p197 = por %p195, %p196
      %p198 = scmp.ne.s32.totalorder %s190, %s192
      %p199 = scmp.eq.s32.totalorder %s37, 3
      %p200 = por %p198, %p199
      %p201 = scmp.ne.s32.totalorder %s192, %s193
      %p202 = scmp.eq.s32.totalorder %s37, 0
      %p203 = por %p201, %p202
      %p204 = scmp.ne.s32.totalorder %s192, %s193
      %p205 = scmp.eq.s32.totalorder %s38, 3
      %p206 = por %p204, %p205
      %p208 = scmp.ne.s32.totalorder %s193, %s207
      %p209 = scmp.eq.s32.totalorder %s38, 0
      %p210 = por %p208, %p209
      %s212 = sadd.s32 %s211, 1
      %p215 = scmp.eq.s32.totalorder %s32, 3
      %p216 = scmp.ne.s32.totalorder %s211, %s213
      %p217 = scmp.eq.s32.totalorder %s32, 0
      %p218 = por %p216, %p217
      %p219 = scmp.ne.s32.totalorder %s211, %s213
      %p220 = scmp.eq.s32.totalorder %s37, 3
      %p221 = por %p219, %p220
      %p222 = scmp.ne.s32.totalorder %s213, %s214
      %p223 = scmp.eq.s32.totalorder %s37, 0
      %p224 = por %p222, %p223
      %p225 = scmp.ne.s32.totalorder %s213, %s214
      %p226 = scmp.eq.s32.totalorder %s38, 3
      %p227 = por %p225, %p226
      %p229 = scmp.ne.s32.totalorder %s214, %s228
      %p230 = scmp.eq.s32.totalorder %s38, 0
      %p231 = por %p229, %p230
      %s233 = sadd.s32 %s232, 1
      %p236 = scmp.eq.s32.totalorder %s32, 3
      %p237 = scmp.ne.s32.totalorder %s232, %s234
      %p238 = scmp.eq.s32.totalorder %s32, 0
      %p239 = por %p237, %p238
      %p240 = scmp.ne.s32.totalorder %s232, %s234
      %p241 = scmp.eq.s32.totalorder %s37, 3
      %p242 = por %p240, %p241
      %p243 = scmp.ne.s32.totalorder %s234, %s235
      %p244 = scmp.eq.s32.totalorder %s37, 0
      %p245 = por %p243, %p244
      %p246 = scmp.ne.s32.totalorder %s234, %s235
      %p247 = scmp.eq.s32.totalorder %s38, 3
      %p248 = por %p246, %p247
      %p250 = scmp.ne.s32.totalorder %s235, %s249
      %p251 = scmp.eq.s32.totalorder %s38, 0
      %p252 = por %p250, %p251
      %s254 = sadd.s32 %s253, 1
      %p257 = scmp.eq.s32.totalorder %s32, 3
      %p258 = scmp.ne.s32.totalorder %s253, %s255
      %p259 = scmp.eq.s32.totalorder %s32, 0
      %p260 = por %p258, %p259
      %p261 = scmp.ne.s32.totalorder %s253, %s255
      %p262 = scmp.eq.s32.totalorder %s37, 3
      %p263 = por %p261, %p262
      %p264 = scmp.ne.s32.totalorder %s255, %s256
      %p265 = scmp.eq.s32.totalorder %s37, 0
      %p266 = por %p264, %p265
      %p267 = scmp.ne.s32.totalorder %s255, %s256
      %p268 = scmp.eq.s32.totalorder %s38, 3
      %p269 = por %p267, %p268
      %p271 = scmp.ne.s32.totalorder %s256, %s270
      %p272 = scmp.eq.s32.totalorder %s38, 0
      %p273 = por %p271, %p272
      %s275 = sadd.s32 %s274, 1
      %p278 = scmp.eq.s32.totalorder %s32, 3
      %p279 = scmp.ne.s32.totalorder %s274, %s276
      %p280 = scmp.eq.s32.totalorder %s32, 0
      %p281 = por %p279, %p280
      %p282 = scmp.ne.s32.totalorder %s274, %s276
      %p283 = scmp.eq.s32.totalorder %s37, 3
      %p284 = por %p282, %p283
      %p285 = scmp.ne.s32.totalorder %s276, %s277
      %p286 = scmp.eq.s32.totalorder %s37, 0
      %p287 = por %p285, %p286
      %p288 = scmp.ne.s32.totalorder %s276, %s277
      %p289 = scmp.eq.s32.totalorder %s38, 3
      %p290 = por %p288, %p289
      %p292 = scmp.ne.s32.totalorder %s277, %s291
      %p293 = scmp.eq.s32.totalorder %s38, 0
      %p294 = por %p292, %p293
      %s296 = sadd.s32 %s295, 1
      %p299 = scmp.eq.s32.totalorder %s32, 3
      %p300 = scmp.ne.s32.totalorder %s295, %s297
      %p301 = scmp.eq.s32.totalorder %s32, 0
      %p302 = por %p300, %p301
      %p303 = scmp.ne.s32.totalorder %s295, %s297
      %p304 = scmp.eq.s32.totalorder %s37, 3
      %p305 = por %p303, %p304
      %p306 = scmp.ne.s32.totalorder %s297, %s298
      %p307 = scmp.eq.s32.totalorder %s37, 0
      %p308 = por %p306, %p307
      %p309 = scmp.ne.s32.totalorder %s297, %s298
      %p310 = scmp.eq.s32.totalorder %s38, 3
      %p311 = por %p309, %p310
      %p313 = scmp.ne.s32.totalorder %s298, %s312
      %p314 = scmp.eq.s32.totalorder %s38, 0
      %p315 = por %p313, %p314
      %s317 = sadd.s32 %s316, 1
      %p320 = scmp.eq.s32.totalorder %s32, 3
      %p321 = scmp.ne.s32.totalorder %s316, %s318
      %p322 = scmp.eq.s32.totalorder %s32, 0
      %p323 = por %p321, %p322
      %p324 = scmp.ne.s32.totalorder %s316, %s318
      %p325 = scmp.eq.s32.totalorder %s37, 3
      %p326 = por %p324, %p325
      %p327 = scmp.ne.s32.totalorder %s318, %s319
      %p328 = scmp.eq.s32.totalorder %s37, 0
      %p329 = por %p327, %p328
      %p330 = scmp.ne.s32.totalorder %s318, %s319
      %p331 = scmp.eq.s32.totalorder %s38, 3
      %p332 = por %p330, %p331
      %p334 = scmp.ne.s32.totalorder %s319, %s333
      %p335 = scmp.eq.s32.totalorder %s38, 0
      %p336 = por %p334, %p335
      %s338 = sadd.s32 %s337, 1
      %p341 = scmp.eq.s32.totalorder %s32, 3
      %p342 = scmp.ne.s32.totalorder %s337, %s339
      %p343 = scmp.eq.s32.totalorder %s32, 0
      %p344 = por %p342, %p343
      %p345 = scmp.ne.s32.totalorder %s337, %s339
      %p346 = scmp.eq.s32.totalorder %s37, 3
      %p347 = por %p345, %p346
      %p348 = scmp.ne.s32.totalorder %s339, %s340
      %p349 = scmp.eq.s32.totalorder %s37, 0
      %p350 = por %p348, %p349
      %p351 = scmp.ne.s32.totalorder %s339, %s340
      %p352 = scmp.eq.s32.totalorder %s38, 3
      %p353 = por %p351, %p352
      %p355 = scmp.ne.s32.totalorder %s340, %s354
      %p356 = scmp.eq.s32.totalorder %s38, 0
      %p357 = por %p355, %p356
      %s359 = sadd.s32 %s358, 1
      %p362 = scmp.eq.s32.totalorder %s32, 3
      %p363 = scmp.ne.s32.totalorder %s358, %s360
      %p364 = scmp.eq.s32.totalorder %s32, 0
      %p365 = por %p363, %p364
      %p366 = scmp.ne.s32.totalorder %s358, %s360
      %p367 = scmp.eq.s32.totalorder %s37, 3
      %p368 = por %p366, %p367
      %p369 = scmp.ne.s32.totalorder %s360, %s361
      %p370 = scmp.eq.s32.totalorder %s37, 0
      %p371 = por %p369, %p370
      %p372 = scmp.ne.s32.totalorder %s360, %s361
      %p373 = scmp.eq.s32.totalorder %s38, 3
      %p374 = por %p372, %p373
      %p376 = scmp.ne.s32.totalorder %s361, %s375
      %p377 = scmp.eq.s32.totalorder %s38, 0
      %p378 = por %p376, %p377
      %s380 = sadd.s32 %s379, 1
      %p383 = scmp.eq.s32.totalorder %s32, 3
      %p384 = scmp.ne.s32.totalorder %s379, %s381
      %p385 = scmp.eq.s32.totalorder %s32, 0
      %p386 = por %p384, %p385
      %p387 = scmp.ne.s32.totalorder %s379, %s381
      %p388 = scmp.eq.s32.totalorder %s37, 3
      %p389 = por %p387, %p388
      %p390 = scmp.ne.s32.totalorder %s381, %s382
      %p391 = scmp.eq.s32.totalorder %s37, 0
      %p392 = por %p390, %p391
      %p393 = scmp.ne.s32.totalorder %s381, %s382
      %p394 = scmp.eq.s32.totalorder %s38, 3
      %p395 = por %p393, %p394
      %p397 = scmp.ne.s32.totalorder %s382, %s396
      %p398 = scmp.eq.s32.totalorder %s38, 0
      %p399 = por %p397, %p398
      %s401 = sadd.s32 %s400, 1
      %p404 = scmp.eq.s32.totalorder %s32, 3
      %p405 = scmp.ne.s32.totalorder %s400, %s402
      %p406 = scmp.eq.s32.totalorder %s32, 0
      %p407 = por %p405, %p406
      %p408 = scmp.ne.s32.totalorder %s400, %s402
      %p409 = scmp.eq.s32.totalorder %s37, 3
      %p410 = por %p408, %p409
      %p411 = scmp.ne.s32.totalorder %s402, %s403
      %p412 = scmp.eq.s32.totalorder %s37, 0
      %p413 = por %p411, %p412
      %p414 = scmp.ne.s32.totalorder %s402, %s403
      %p415 = scmp.eq.s32.totalorder %s38, 3
      %p416 = por %p414, %p415
      %p418 = scmp.ne.s32.totalorder %s403, %s417
      %p419 = scmp.eq.s32.totalorder %s38, 0
      %p420 = por %p418, %p419
      %s422 = sadd.s32 %s421, 1
      %p425 = scmp.eq.s32.totalorder %s32, 3
      %p426 = scmp.ne.s32.totalorder %s421, %s423
      %p427 = scmp.eq.s32.totalorder %s32, 0
      %p428 = por %p426, %p427
      %p429 = scmp.ne.s32.totalorder %s421, %s423
      %p430 = scmp.eq.s32.totalorder %s37, 3
      %p431 = por %p429, %p430
      %p432 = scmp.ne.s32.totalorder %s423, %s424
      %p433 = scmp.eq.s32.totalorder %s37, 0
      %p434 = por %p432, %p433
      %p435 = scmp.ne.s32.totalorder %s423, %s424
      %p436 = scmp.eq.s32.totalorder %s38, 3
      %p437 = por %p435, %p436
      %p439 = scmp.ne.s32.totalorder %s424, %s438
      %p440 = scmp.eq.s32.totalorder %s38, 0
      %p441 = por %p439, %p440
      %s442 = ssub.s32 %s39, %s51
      %s443 = ssub.s32 %s40, %s47
      %s444 = sor.u32 %s442, %s443
      %p445 = scmp.eq.s32.totalorder %s444, 0
      %s447 = sadd.s32 %s446, 1
      %s448 = scalar_select %p445, %s446, %s447
      %p451 = pneg %p445
      %p452 = scmp.eq.s32.totalorder %s32, 3
      %p453 = por %p451, %p452
      %p454 = scmp.ne.s32.totalorder %s446, %s449
      %p455 = scmp.eq.s32.totalorder %s32, 0
      %p456 = por %p454, %p455
      %p457 = scmp.ne.s32.totalorder %s446, %s449
      %p458 = scmp.eq.s32.totalorder %s37, 3
      %p459 = por %p457, %p458
      %p460 = scmp.ne.s32.totalorder %s449, %s450
      %p461 = scmp.eq.s32.totalorder %s37, 0
      %p462 = por %p460, %p461
      %p463 = scmp.ne.s32.totalorder %s449, %s450
      %p464 = scmp.eq.s32.totalorder %s38, 3
      %p465 = por %p463, %p464
      %p467 = scmp.ne.s32.totalorder %s450, %s466
      %p468 = scmp.eq.s32.totalorder %s38, 0
      %p469 = por %p467, %p468
      %p470 = scmp.le.s32.totalorder 1, %s32
      %p471 = scmp.lt.s32.totalorder %s32, 5
      %p472 = pnand %p470, %p471
      %p473 = pneg %p472
      // Predicated region
      $region9: #{tpu_custom_call.1} parent=5 // pred_check
        _
      $region10: #{tpu_custom_call.1} parent=5 // pred_check_branch
        %475 = sbr.rel (%p472) target = $region12
      $region11: #{tpu_custom_call.1} parent=5 // pred_region
        %s476 = ssub.s32 %s32, 1
        // Predicated region
        $region13: #{tpu_custom_call.1} parent=11 // pred_check
          %p477 = pneg %p119
        $region14: #{tpu_custom_call.1} parent=11 // pred_check_branch
          %479 = sbr.rel (%p477) target = $region16
        $region15: #{tpu_custom_call.1} parent=11 // pred_region
          _
        $region16: #{tpu_custom_call.1} parent=11 // pred_fallthru
          _
        // Predicated region
        $region17: #{tpu_custom_call.1} parent=11 // pred_check
          %p480 = pneg %p140
        $region18: #{tpu_custom_call.1} parent=11 // pred_check_branch
          %482 = sbr.rel (%p480) target = $region20
        $region19: #{tpu_custom_call.1} parent=11 // pred_region
          _
        $region20: #{tpu_custom_call.1} parent=11 // pred_fallthru
          _
        // Predicated region
        $region21: #{tpu_custom_call.1} parent=11 // pred_check
          %p483 = pneg %p161
        $region22: #{tpu_custom_call.1} parent=11 // pred_check_branch
          %485 = sbr.rel (%p483) target = $region24
        $region23: #{tpu_custom_call.1} parent=11 // pred_region
          %s487 = ssub.s32 256, 256
          %488 = vsyncadd [#allocation9], %s487
          %s489 = sshll.u32 [#allocation8], 4
          %s490 = int_to_ptr.vmem [resolvable:$true] %s489
          %495 = dma.hbm_to_vmem [thread:$0]  %s4, 256, %s490, [#allocation9], 64, 64, 4
        $region24: #{tpu_custom_call.1} parent=11 // pred_fallthru
          _
        // Predicated region
        $region25: #{tpu_custom_call.1} parent=11 // pred_check
          %p496 = pneg %p182
        $region26: #{tpu_custom_call.1} parent=11 // pred_check_branch
          %498 = sbr.rel (%p496) target = $region28
        $region27: #{tpu_custom_call.1} parent=11 // pred_region
          _
        $region28: #{tpu_custom_call.1} parent=11 // pred_fallthru
          _
        // Predicated region
        $region29: #{tpu_custom_call.1} parent=11 // pred_check
          %p499 = pneg %p203
        $region30: #{tpu_custom_call.1} parent=11 // pred_check_branch
          %501 = sbr.rel (%p499) target = $region32
        $region31: #{tpu_custom_call.1} parent=11 // pred_region
          %s503 = ssub.s32 256, 256
          %504 = vsyncadd [#allocation9], %s503
          %s505 = sshll.u32 [#allocation10], 4
          %s506 = int_to_ptr.vmem [resolvable:$true] %s505
          %511 = dma.hbm_to_vmem [thread:$0]  %s6, 256, %s506, [#allocation9], 64, 64, 4
        $region32: #{tpu_custom_call.1} parent=11 // pred_fallthru
          _
        // Predicated region
        $region33: #{tpu_custom_call.1} parent=11 // pred_check
          %p512 = pneg %p224
        $region34: #{tpu_custom_call.1} parent=11 // pred_check_branch
          %514 = sbr.rel (%p512) target = $region36
        $region35: #{tpu_custom_call.1} parent=11 // pred_region
          _
        $region36: #{tpu_custom_call.1} parent=11 // pred_fallthru
          _
        // Predicated region
        $region37: #{tpu_custom_call.1} parent=11 // pred_check
          %p515 = pneg %p245
        $region38: #{tpu_custom_call.1} parent=11 // pred_check_branch
          %517 = sbr.rel (%p515) target = $region40
        $region39: #{tpu_custom_call.1} parent=11 // pred_region
          %s519 = ssub.s32 256, 256
          %520 = vsyncadd [#allocation12], %s519
          %s521 = sshll.u32 [#allocation11], 4
          %s522 = int_to_ptr.vmem [resolvable:$true] %s521
          %527 = dma.hbm_to_vmem [thread:$0]  %s8, 256, %s522, [#allocation12], 64, 64, 4
        $region40: #{tpu_custom_call.1} parent=11 // pred_fallthru
          _
        // Predicated region
        $region41: #{tpu_custom_call.1} parent=11 // pred_check
          %p528 = pneg %p266
        $region42: #{tpu_custom_call.1} parent=11 // pred_check_branch
          %530 = sbr.rel (%p528) target = $region44
        $region43: #{tpu_custom_call.1} parent=11 // pred_region
          _
        $region44: #{tpu_custom_call.1} parent=11 // pred_fallthru
          _
        // Predicated region
        $region45: #{tpu_custom_call.1} parent=11 // pred_check
          %p531 = pneg %p287
        $region46: #{tpu_custom_call.1} parent=11 // pred_check_branch
          %533 = sbr.rel (%p531) target = $region48
        $region47: #{tpu_custom_call.1} parent=11 // pred_region
          _
        $region48: #{tpu_custom_call.1} parent=11 // pred_fallthru
          _
        // Predicated region
        $region49: #{tpu_custom_call.1} parent=11 // pred_check
          %p534 = pneg %p308
        $region50: #{tpu_custom_call.1} parent=11 // pred_check_branch
          %536 = sbr.rel (%p534) target = $region52
        $region51: #{tpu_custom_call.1} parent=11 // pred_region
          _
        $region52: #{tpu_custom_call.1} parent=11 // pred_fallthru
          _
        // Predicated region
        $region53: #{tpu_custom_call.1} parent=11 // pred_check
          %p537 = pneg %p329
        $region54: #{tpu_custom_call.1} parent=11 // pred_check_branch
          %539 = sbr.rel (%p537) target = $region56
        $region55: #{tpu_custom_call.1} parent=11 // pred_region
          _
        $region56: #{tpu_custom_call.1} parent=11 // pred_fallthru
          _
        // Predicated region
        $region57: #{tpu_custom_call.1} parent=11 // pred_check
          %p540 = pneg %p350
        $region58: #{tpu_custom_call.1} parent=11 // pred_check_branch
          %542 = sbr.rel (%p540) target = $region60
        $region59: #{tpu_custom_call.1} parent=11 // pred_region
          _
        $region60: #{tpu_custom_call.1} parent=11 // pred_fallthru
          _
        // Predicated region
        $region61: #{tpu_custom_call.1} parent=11 // pred_check
          %p543 = pneg %p371
        $region62: #{tpu_custom_call.1} parent=11 // pred_check_branch
          %545 = sbr.rel (%p543) target = $region64
        $region63: #{tpu_custom_call.1} parent=11 // pred_region
          %s547 = ssub.s32 256, 256
          %548 = vsyncadd [#allocation12], %s547
          %s549 = sshll.u32 [#allocation13], 4
          %s550 = int_to_ptr.vmem [resolvable:$true] %s549
          %555 = dma.hbm_to_vmem [thread:$0]  %s14, 256, %s550, [#allocation12], 64, 64, 4
        $region64: #{tpu_custom_call.1} parent=11 // pred_fallthru
          _
        // Predicated region
        $region65: #{tpu_custom_call.1} parent=11 // pred_check
          %p556 = pneg %p392
        $region66: #{tpu_custom_call.1} parent=11 // pred_check_branch
          %558 = sbr.rel (%p556) target = $region68
        $region67: #{tpu_custom_call.1} parent=11 // pred_region
          _
        $region68: #{tpu_custom_call.1} parent=11 // pred_fallthru
          _
        // Predicated region
        $region69: #{tpu_custom_call.1} parent=11 // pred_check
          %p559 = pneg %p413
        $region70: #{tpu_custom_call.1} parent=11 // pred_check_branch
          %561 = sbr.rel (%p559) target = $region72
        $region71: #{tpu_custom_call.1} parent=11 // pred_region
          _
        $region72: #{tpu_custom_call.1} parent=11 // pred_fallthru
          _
        // Predicated region
        $region73: #{tpu_custom_call.1} parent=11 // pred_check
          %p562 = pneg %p434
        $region74: #{tpu_custom_call.1} parent=11 // pred_check_branch
          %564 = sbr.rel (%p562) target = $region76
        $region75: #{tpu_custom_call.1} parent=11 // pred_region
          _
        $region76: #{tpu_custom_call.1} parent=11 // pred_fallthru
          _
      $region12: #{tpu_custom_call.1} parent=5 // pred_fallthru
        _
      %p565 = scmp.lt.s32.totalorder %s32, 4
      // Predicated region
      $region77: #{tpu_custom_call.1} parent=5 // pred_check
        %p566 = pneg %p565
      $region78: #{tpu_custom_call.1} parent=5 // pred_check_branch
        %568 = sbr.rel (%p566) target = $region80
      $region79: #{tpu_custom_call.1} parent=5 // pred_region
        // Predicated region
        $region81: #{tpu_custom_call.1} parent=79 // pred_check
          %p569 = pneg %p64
        $region82: #{tpu_custom_call.1} parent=79 // pred_check_branch
          %571 = sbr.rel (%p569) target = $region84
        $region83: #{tpu_custom_call.1} parent=79 // pred_region
          %s572 = sand.u32 %s54, 1
          %s573 = scalar_lea.sflag [#allocation6], %s572
          %s574 = sand.u32 %s54, 1
          %s575 = smul.addr %s574, 32
          %s576 = scalar_lea.vmem [#allocation5], %s575
          %s578 = ssub.s32 512, 512
          %579 = vsyncadd %s573, %s578
          %s580 = smul.addr %s39, 4
          %s581 = smul.addr %s580, 128
          %s582 = scalar_lea.hbm %s0, %s581
          %s583 = sshll.u32 %s576, 4
          %s584 = int_to_ptr.vmem [resolvable:$true] %s583
          %589 = dma.hbm_to_vmem [thread:$0]  %s582, 512, %s584, %s573, 128, 128, 8
        $region84: #{tpu_custom_call.1} parent=79 // pred_fallthru
          _
        // Predicated region
        $region85: #{tpu_custom_call.1} parent=79 // pred_check
          %p590 = pneg %p92
        $region86: #{tpu_custom_call.1} parent=79 // pred_check_branch
          %592 = sbr.rel (%p590) target = $region88
        $region87: #{tpu_custom_call.1} parent=79 // pred_region
          %s593 = smul.u32 2, %s40
          %p594 = scmp.lt.s32.totalorder %s39, 1
          %s595 = scalar_select %p594, %s39, 1
          %p596 = scmp.lt.s32.totalorder %s593, 3
          %s597 = scalar_select %p596, %s593, 3
          %s598 = smul.addr %s595, 4
          %s599 = sadd.s32 %s597, %s598
          %s600 = smul.addr %s599, 4
          %s601 = scalar_lea.vmem %s1, %s600
          %s602 = smul.u32 2, %s40
        $region88: #{tpu_custom_call.1} parent=79 // pred_fallthru
          _
      $region80: #{tpu_custom_call.1} parent=5 // pred_fallthru
        _
      %p603 = scmp.le.s32.totalorder 1, %s32
      %p604 = scmp.lt.s32.totalorder %s32, 5
      %p605 = pnand %p603, %p604
      %p606 = pneg %p605
      // Predicated region
      $region89: #{tpu_custom_call.1} parent=5 // pred_check
        _
      $region90: #{tpu_custom_call.1} parent=5 // pred_check_branch
        %608 = sbr.rel (%p605) target = $region92
      $region91: #{tpu_custom_call.1} parent=5 // pred_region
        %s609 = ssub.s32 %s32, 1
        %s610 = sand.u32 %s57, 1
        %s611 = scalar_lea.sflag [#allocation6], %s610
        %s612 = sand.u32 %s57, 1
        %s613 = smul.addr %s612, 32
        %s614 = scalar_lea.vmem [#allocation5], %s613
        // Predicated region
        $region93: #{tpu_custom_call.1} parent=91 // pred_check
          %p615 = pneg %p70
        $region94: #{tpu_custom_call.1} parent=91 // pred_check_branch
          %617 = sbr.rel (%p615) target = $region96
        $region95: #{tpu_custom_call.1} parent=91 // pred_region
          %618 = dma.done %s611, 512
        $region96: #{tpu_custom_call.1} parent=91 // pred_fallthru
          _
        // Predicated region
        $region97: #{tpu_custom_call.1} parent=91 // pred_check
          %p619 = pneg %p161
        $region98: #{tpu_custom_call.1} parent=91 // pred_check_branch
          %621 = sbr.rel (%p619) target = $region100
        $region99: #{tpu_custom_call.1} parent=91 // pred_region
          %622 = dma.done [#allocation9], 256
        $region100: #{tpu_custom_call.1} parent=91 // pred_fallthru
          _
        // Predicated region
        $region101: #{tpu_custom_call.1} parent=91 // pred_check
          %p623 = pneg %p203
        $region102: #{tpu_custom_call.1} parent=91 // pred_check_branch
          %625 = sbr.rel (%p623) target = $region104
        $region103: #{tpu_custom_call.1} parent=91 // pred_region
          %626 = dma.done [#allocation9], 256
        $region104: #{tpu_custom_call.1} parent=91 // pred_fallthru
          _
        // Predicated region
        $region105: #{tpu_custom_call.1} parent=91 // pred_check
          %p627 = pneg %p245
        $region106: #{tpu_custom_call.1} parent=91 // pred_check_branch
          %629 = sbr.rel (%p627) target = $region108
        $region107: #{tpu_custom_call.1} parent=91 // pred_region
          %630 = dma.done [#allocation12], 256
        $region108: #{tpu_custom_call.1} parent=91 // pred_fallthru
          _
        // Predicated region
        $region109: #{tpu_custom_call.1} parent=91 // pred_check
          %p631 = pneg %p371
        $region110: #{tpu_custom_call.1} parent=91 // pred_check_branch
          %633 = sbr.rel (%p631) target = $region112
        $region111: #{tpu_custom_call.1} parent=91 // pred_region
          %634 = dma.done [#allocation12], 256
        $region112: #{tpu_custom_call.1} parent=91 // pred_fallthru
          _
        %s635 = sand.u32 %s57, 1
        %s636 = scalar_lea.sflag [#allocation6], %s635
        %s637 = sand.u32 %s57, 1
        %s638 = smul.addr %s637, 32
        %s639 = scalar_lea.vmem [#allocation5], %s638
        %p640 = pneg %p70
        %p641 = pneg %p67
        %s642 = smul.u32 2, %s42
        %p643 = scmp.lt.s32.totalorder %s41, 1
        %s644 = scalar_select %p643, %s41, 1
        %p645 = scmp.lt.s32.totalorder %s642, 3
        %s646 = scalar_select %p645, %s642, 3
        %s647 = smul.addr %s644, 4
        %s648 = sadd.s32 %s646, %s647
        %s649 = smul.addr %s648, 4
        %s650 = scalar_lea.vmem %s1, %s649
        %p651 = pneg %p98
        %p652 = pneg %p95
        %p653 = pneg %p119
        %p654 = pneg %p116
        %p655 = pneg %p140
        %p656 = pneg %p137
        %p657 = pneg %p161
        %p658 = pneg %p158
        %p659 = pneg %p182
        %p660 = pneg %p179
        %p661 = pneg %p203
        %p662 = pneg %p200
        %p663 = pneg %p224
        %p664 = pneg %p221
        %p665 = pneg %p245
        %p666 = pneg %p242
        %p667 = pneg %p266
        %p668 = pneg %p263
        %p669 = pneg %p287
        %p670 = pneg %p284
        %p671 = pneg %p308
        %p672 = pneg %p305
        %p673 = pneg %p329
        %p674 = pneg %p326
        %p675 = pneg %p350
        %p676 = pneg %p347
        %p677 = pneg %p371
        %p678 = pneg %p368
        %p679 = pneg %p392
        %p680 = pneg %p389
        %p681 = pneg %p413
        %p682 = pneg %p410
        %p683 = pneg %p434
        %p684 = pneg %p431
        %p685 = pneg %p462
        %p686 = pneg %p459
        %s687 = sand.u32 %s449, 1
        %s688 = scalar_lea.sflag [#allocation7], %s687
        %s689 = sand.u32 %s449, 1
        %s690 = smul.addr %s689, 16
        %s691 = scalar_lea.vmem [#allocation14], %s690
        %s692 = smul.u32 2, %s42
        %p693 = scmp.lt.s32.totalorder %s41, 1
        %s694 = scalar_select %p693, %s41, 1
        %p695 = scmp.lt.s32.totalorder %s692, 3
        %s696 = scalar_select %p695, %s692, 3
        %s697 = smul.addr %s694, 4
        %s698 = sadd.s32 %s696, %s697
        %s699 = smul.addr %s698, 4
        %s700 = scalar_lea.vmem %s1, %s699
        %s701 = smul.u32 2, %s42
        %s702 = smul.u32 2, %s42
        %s704 = smul.u32 %s42, 16
        %p705 = scmp.eq.s32.totalorder %s42, 0
        // Predicated region
        $region113: #{tpu_custom_call.1} parent=91 // pred_check
          %p706 = pneg %p705
        $region114: #{tpu_custom_call.1} parent=91 // pred_check_branch
          %708 = sbr.rel (%p706) target = $region116
        $region115: #{tpu_custom_call.1} parent=91 // pred_region
          %v709 = vld [vmem:[%s614] sm:$0xff]
          %v710 = vld [vmem:[%s614 + $0x8] sm:$0xff]
          %v711 = vld [vmem:[%s614 + $0x10] sm:$0xff]
          %v712 = vld [vmem:[%s614 + $0x18] sm:$0xff]
          %v713 = vld [vmem:[%s10] sm:$0x1]
          %v714 = vld [vmem:[%s11] sm:$0x1]
          %vm715 = vcmask 261120
          %v716 = vsel %vm715, %v709, 0.0
          %717 = vadd.xlane.f32.xlu0 %v716
          %v718 = vpop.xlane.xlu0 %717
          %v719 = vsel %vm715, %v710, 0.0
          %720 = vadd.xlane.f32.xlu0 %v719
          %v721 = vpop.xlane.xlu0 %720
          %v722 = vsel %vm715, %v711, 0.0
          %723 = vadd.xlane.f32.xlu0 %v722
          %v724 = vpop.xlane.xlu0 %723
          %v725 = vsel %vm715, %v712, 0.0
          %726 = vadd.xlane.f32.xlu0 %v725
          %v727 = vpop.xlane.xlu0 %726
          %v728 = vrcp.pop 32.0
          %v729 = vmul.f32 %v718, %v728
          %v730 = vmul.f32 %v721, %v728
          %v731 = vmul.f32 %v724, %v728
          %v732 = vmul.f32 %v727, %v728
          %v733 = vsub.f32 %v709, %v729
          %v734 = vsub.f32 %v710, %v730
          %v735 = vsub.f32 %v711, %v731
          %v736 = vsub.f32 %v712, %v732
          %v737 = vmul.f32 %v733, %v733
          %v738 = vmul.f32 %v734, %v734
          %v739 = vmul.f32 %v735, %v735
          %v740 = vmul.f32 %v736, %v736
          %v741 = vsel %vm715, %v737, 0.0
          %742 = vadd.xlane.f32.xlu0 %v741
          %v743 = vpop.xlane.xlu0 %742
          %v744 = vsel %vm715, %v738, 0.0
          %745 = vadd.xlane.f32.xlu0 %v744
          %v746 = vpop.xlane.xlu0 %745
          %v747 = vsel %vm715, %v739, 0.0
          %748 = vadd.xlane.f32.xlu0 %v747
          %v749 = vpop.xlane.xlu0 %748
          %v750 = vsel %vm715, %v740, 0.0
          %751 = vadd.xlane.f32.xlu0 %v750
          %v752 = vpop.xlane.xlu0 %751
          %v753 = vmul.f32 %v743, %v728
          %v754 = vmul.f32 %v746, %v728
          %v755 = vmul.f32 %v749, %v728
          %v756 = vmul.f32 %v752, %v728
          %v757 = vadd.f32 %v753, 1e-06
          %v758 = vadd.f32 %v754, 1e-06
          %v759 = vadd.f32 %v755, 1e-06
          %v760 = vadd.f32 %v756, 1e-06
          %v761 = vrsqrt.pop %v757
          %v762 = vrsqrt.pop %v758
          %v763 = vrsqrt.pop %v759
          %v764 = vrsqrt.pop %v760
          %v765 = vmul.f32 %v733, %v761
          %v766 = vmul.f32 %v734, %v762
          %v767 = vmul.f32 %v735, %v763
          %v768 = vmul.f32 %v736, %v764
          %v770 = vlaneseq
          %v771 = vshrl.u32 %v770, 7
          %v772 = vsub.s32 0, %v771
          %v773 = vrot.slane %v713, %v772
          %v775 = vmul.f32 %v765, %v773
          %v776 = vmul.f32 %v766, %v773
          %v777 = vmul.f32 %v767, %v773
          %v778 = vmul.f32 %v768, %v773
          %v780 = vlaneseq
          %v781 = vshrl.u32 %v780, 7
          %v782 = vsub.s32 0, %v781
          %v783 = vrot.slane %v714, %v782
          %v785 = vadd.f32 %v775, %v783
          %v786 = vadd.f32 %v776, %v783
          %v787 = vadd.f32 %v777, %v783
          %v788 = vadd.f32 %v778, %v783
          %789 = vst.msk [vmem:[#allocation2] sm:$0xff] %vm715, %v785
          %790 = vst.msk [vmem:[#allocation2 + $0x8] sm:$0xff] %vm715, %v786
          %791 = vst.msk [vmem:[#allocation2 + $0x10] sm:$0xff] %vm715, %v787
          %792 = vst.msk [vmem:[#allocation2 + $0x18] sm:$0xff] %vm715, %v788
          %v793 = vpack.c.bf16 %v786, %v785
          %v794 = vpack.c.bf16 %v788, %v787
          %v795 = vld [vmem:[#allocation8] sm:$0xf]
          %v796 = vld [vmem:[#allocation8 + $0x4] sm:$0xf]
          %v797 = vld [vmem:[#allocation8 + $0x8] sm:$0xf]
          %v798 = vld [vmem:[#allocation8 + $0xc] sm:$0xf]
          %v799 = vld [vmem:[%s5] sm:$0x1]
          %v801 = vlaneseq
          %v802 = vshrl.u32 %v801, 7
          %v803 = vsub.s32 0, %v802
          %v804 = vrot.slane %v799, %v803
          %v810 = vunpack.c.l.b16 %v795
          %v811 = vunpack.c.l.b16 %v796
          %v812 = vunpack.c.l.b16 %v797
          %v813 = vunpack.c.l.b16 %v798
          %v814 = vpack.c.b16 %v811, %v810
          %v815 = vpack.c.b16 %v813, %v812
          %v819 = vsel %vm715, %v793, 0
          %v822 = vsel %vm715, %v794, 0
          %824 = vmatprep.subr.bf16.mxu0 0
          %825 = vmatpush1.bf16.msra.mxu0 0
          %826 = vmatprep.subr.bf16.mxu0 0
          %827 = vmatpush1.bf16.msra.mxu0 0
          %828 = vmatprep.subr.bf16.mxu0 0
          %829 = vmatpush1.bf16.msra.mxu0 0
          %830 = vmatprep.subr.bf16.mxu0 0
          %831 = vmatpush1.bf16.msra.mxu0 0
          %832 = vmatprep.subr.bf16.mxu0 0
          %833 = vmatpush1.bf16.msra.mxu0 0
          %834 = vmatprep.subr.bf16.mxu0 0
          %835 = vmatpush1.bf16.msra.mxu0 0
          %836 = vmatprep.subr.bf16.mxu0 0
          %837 = vmatpush1.bf16.msra.mxu0 %v815
          %838 = vmatprep.subr.bf16.mxu0 0
          %839 = vmatpush1.bf16.msra.mxu0 %v814
          %840 = vmatprep.subr.bf16.mxu0 0
          %841 = vmatpush2.bf16.msra.mxu0 0
          %842 = vmatprep.subr.bf16.mxu0 0
          %843 = vmatpush2.bf16.msra.mxu0 0
          %844 = vmatprep.subr.bf16.mxu0 0
          %845 = vmatpush2.bf16.msra.mxu0 0
          %846 = vmatprep.subr.bf16.mxu0 0
          %847 = vmatpush2.bf16.msra.mxu0 0
          %848 = vmatprep.subr.bf16.mxu0 0
          %849 = vmatpush2.bf16.msra.mxu0 0
          %850 = vmatprep.subr.bf16.mxu0 0
          %851 = vmatpush2.bf16.msra.mxu0 0
          %852 = vmatprep.subr.bf16.mxu0 0
          %853 = vmatpush2.bf16.msra.mxu0 0
          %854 = vmatprep.subr.bf16.mxu0 0
          %855 = vmatpush2.bf16.msra.mxu0 0
          %856 = vmatprep.mubr.bf16.mxu0 0
          %857 = vmatmul.mubr.bf16.gmra.mxu0 %v819
          %v858 = vpop.f32.mrf.mxu0
          %v859 = vadd.f32 %v804, %v858
          %v860 = vpop.f32.mrf.mxu0
          %v861 = vpop.f32.mrf.mxu0
          %v862 = vadd.f32 %v804, %v861
          %v863 = vpop.f32.mrf.mxu0
          %864 = vmatprep.mubr.bf16.mxu0 0
          %865 = vmatmul.mubr.bf16.gmra.mxu0 %v822
          %v866 = vpop.f32.mrf.mxu0
          %v867 = vadd.f32 %v804, %v866
          %v868 = vpop.f32.mrf.mxu0
          %v869 = vpop.f32.mrf.mxu0
          %v870 = vadd.f32 %v804, %v869
          %v871 = vpop.f32.mrf.mxu0
          %872 = vdwg.mxu0
          %v873 = vpack.c.bf16 %v862, %v859
          %v874 = vpack.c.bf16 %v870, %v867
          %v875 = vld [vmem:[#allocation10] sm:$0xf]
          %v876 = vld [vmem:[#allocation10 + $0x4] sm:$0xf]
          %v877 = vld [vmem:[#allocation10 + $0x8] sm:$0xf]
          %v878 = vld [vmem:[#allocation10 + $0xc] sm:$0xf]
          %v879 = vld [vmem:[%s7] sm:$0x1]
          %v881 = vlaneseq
          %v882 = vshrl.u32 %v881, 7
          %v883 = vsub.s32 0, %v882
          %v884 = vrot.slane %v879, %v883
          %v890 = vunpack.c.l.b16 %v875
          %v891 = vunpack.c.l.b16 %v876
          %v892 = vunpack.c.l.b16 %v877
          %v893 = vunpack.c.l.b16 %v878
          %v894 = vpack.c.b16 %v891, %v890
          %v895 = vpack.c.b16 %v893, %v892
          %898 = vmatprep.subr.bf16.mxu0 0
          %899 = vmatpush1.bf16.msra.mxu0 0
          %900 = vmatprep.subr.bf16.mxu0 0
          %901 = vmatpush1.bf16.msra.mxu0 0
          %902 = vmatprep.subr.bf16.mxu0 0
          %903 = vmatpush1.bf16.msra.mxu0 0
          %904 = vmatprep.subr.bf16.mxu0 0
          %905 = vmatpush1.bf16.msra.mxu0 0
          %906 = vmatprep.subr.bf16.mxu0 0
          %907 = vmatpush1.bf16.msra.mxu0 0
          %908 = vmatprep.subr.bf16.mxu0 0
          %909 = vmatpush1.bf16.msra.mxu0 0
          %910 = vmatprep.subr.bf16.mxu0 0
          %911 = vmatpush1.bf16.msra.mxu0 %v895
          %912 = vmatprep.subr.bf16.mxu0 0
          %913 = vmatpush1.bf16.msra.mxu0 %v894
          %914 = vmatprep.subr.bf16.mxu0 0
          %915 = vmatpush2.bf16.msra.mxu0 0
          %916 = vmatprep.subr.bf16.mxu0 0
          %917 = vmatpush2.bf16.msra.mxu0 0
          %918 = vmatprep.subr.bf16.mxu0 0
          %919 = vmatpush2.bf16.msra.mxu0 0
          %920 = vmatprep.subr.bf16.mxu0 0
          %921 = vmatpush2.bf16.msra.mxu0 0
          %922 = vmatprep.subr.bf16.mxu0 0
          %923 = vmatpush2.bf16.msra.mxu0 0
          %924 = vmatprep.subr.bf16.mxu0 0
          %925 = vmatpush2.bf16.msra.mxu0 0
          %926 = vmatprep.subr.bf16.mxu0 0
          %927 = vmatpush2.bf16.msra.mxu0 0
          %928 = vmatprep.subr.bf16.mxu0 0
          %929 = vmatpush2.bf16.msra.mxu0 0
          %930 = vmatprep.mubr.bf16.mxu0 0
          %931 = vmatmul.mubr.bf16.gmra.mxu0 %v819
          %v932 = vpop.f32.mrf.mxu0
          %v933 = vadd.f32 %v884, %v932
          %v934 = vpop.f32.mrf.mxu0
          %v935 = vpop.f32.mrf.mxu0
          %v936 = vadd.f32 %v884, %v935
          %v937 = vpop.f32.mrf.mxu0
          %938 = vmatprep.mubr.bf16.mxu0 0
          %939 = vmatmul.mubr.bf16.gmra.mxu0 %v822
          %v940 = vpop.f32.mrf.mxu0
          %v941 = vadd.f32 %v884, %v940
          %v942 = vpop.f32.mrf.mxu0
          %v943 = vpop.f32.mrf.mxu0
          %v944 = vadd.f32 %v884, %v943
          %v945 = vpop.f32.mrf.mxu0
          %946 = vdwg.mxu0
          %v947 = vpack.c.bf16 %v936, %v933
          %v948 = vpack.c.bf16 %v944, %v941
          %951 = vrot.lane.b32.xlu0 %v873, 120
          %v952 = vpop.permute.xlu0 %951
          %953 = vrot.lane.b32.xlu0 %v874, 120
          %v954 = vpop.permute.xlu0 %953
          %955 = vrot.lane.b32.xlu0 %v873, 112
          %v956 = vpop.permute.xlu0 %955
          %957 = vrot.lane.b32.xlu0 %v874, 112
          %v958 = vpop.permute.xlu0 %957
          %959 = vrot.lane.b32.xlu0 %v873, 104
          %v960 = vpop.permute.xlu0 %959
          %961 = vrot.lane.b32.xlu0 %v874, 104
          %v962 = vpop.permute.xlu0 %961
          %v965 = vpack.i.b16 %v952, %v873
          %v967 = vshrl.u32 %v873, 16
          %v968 = vshrl.u32 %v952, 16
          %v969 = vpack.i.b16 %v968, %v967
          %v973 = vpack.i.b16 %v960, %v956
          %v975 = vshrl.u32 %v956, 16
          %v976 = vshrl.u32 %v960, 16
          %v977 = vpack.i.b16 %v976, %v975
          %v980 = vpack.i.b16 0, 0
          %v982 = vshrl.u32 0, 16
          %v983 = vpack.i.b16 %v982, %v982
          %v987 = vpack.i.b16 %v954, %v874
          %v989 = vshrl.u32 %v874, 16
          %v990 = vshrl.u32 %v954, 16
          %v991 = vpack.i.b16 %v990, %v989
          %v995 = vpack.i.b16 %v962, %v958
          %v997 = vshrl.u32 %v958, 16
          %v998 = vshrl.u32 %v962, 16
          %v999 = vpack.i.b16 %v998, %v997
          %v1001 = vcombine.high %v965, %v980
          %v1003 = vunpack.c.l.s4 1983009808
          %v1004 = vunpack.c.0.s8 %v1003
          %v1005 = vlaneseq
          %v1006 = vshrl.u32 %v1005, 7
          %v1007 = vsub.s32 %v1004, %v1006
          %v1008 = vrot.slane %v965, %v1007
          %v1010 = vunpack.c.l.s4 1983009808
          %v1011 = vunpack.c.0.s8 %v1010
          %v1012 = vlaneseq
          %v1013 = vshrl.u32 %v1012, 7
          %v1014 = vsub.s32 %v1011, %v1013
          %v1015 = vrot.slane %v1001, %v1014
          %v1016 = vcombine.high %v973, %v980
          %v1018 = vunpack.c.l.s4 1983009808
          %v1019 = vunpack.c.0.s8 %v1018
          %v1020 = vlaneseq
          %v1021 = vshrl.u32 %v1020, 7
          %v1022 = vsub.s32 %v1019, %v1021
          %v1023 = vrot.slane %v973, %v1022
          %v1025 = vunpack.c.l.s4 1983009808
          %v1026 = vunpack.c.0.s8 %v1025
          %v1027 = vlaneseq
          %v1028 = vshrl.u32 %v1027, 7
          %v1029 = vsub.s32 %v1026, %v1028
          %v1030 = vrot.slane %v1016, %v1029
          %v1031 = vcombine.low %v1008, %v1023
          %v1032 = vcombine.high %v1008, %v1023
          %v1034 = vunpack.c.l.s4 1934713408
          %v1035 = vunpack.c.0.s8 %v1034
          %v1036 = vlaneseq
          %v1037 = vshrl.u32 %v1036, 7
          %v1038 = vsub.s32 %v1035, %v1037
          %v1039 = vrot.slane %v1031, %v1038
          %v1041 = vunpack.c.l.s4 1934713408
          %v1042 = vunpack.c.0.s8 %v1041
          %v1043 = vlaneseq
          %v1044 = vshrl.u32 %v1043, 7
          %v1045 = vsub.s32 %v1042, %v1044
          %v1046 = vrot.slane %v1032, %v1045
          %v1047 = vcombine.low %v1015, %v1030
          %v1048 = vcombine.high %v1015, %v1030
          %v1050 = vunpack.c.l.s4 1934713408
          %v1051 = vunpack.c.0.s8 %v1050
          %v1052 = vlaneseq
          %v1053 = vshrl.u32 %v1052, 7
          %v1054 = vsub.s32 %v1051, %v1053
          %v1055 = vrot.slane %v1047, %v1054
          %v1057 = vunpack.c.l.s4 1934713408
          %v1058 = vunpack.c.0.s8 %v1057
          %v1059 = vlaneseq
          %v1060 = vshrl.u32 %v1059, 7
          %v1061 = vsub.s32 %v1058, %v1060
          %v1062 = vrot.slane %v1048, %v1061
          %v1063 = vcombine.high %v1039, 0
          %v1064 = vcombine.high %v1046, 0
          %v1065 = vcombine.high %v1055, 0
          %v1066 = vcombine.high %v1062, 0
          %v1067 = vcombine.high %v969, %v983
          %v1069 = vunpack.c.l.s4 1983009808
          %v1070 = vunpack.c.0.s8 %v1069
          %v1071 = vlaneseq
          %v1072 = vshrl.u32 %v1071, 7
          %v1073 = vsub.s32 %v1070, %v1072
          %v1074 = vrot.slane %v969, %v1073
          %v1076 = vunpack.c.l.s4 1983009808
          %v1077 = vunpack.c.0.s8 %v1076
          %v1078 = vlaneseq
          %v1079 = vshrl.u32 %v1078, 7
          %v1080 = vsub.s32 %v1077, %v1079
          %v1081 = vrot.slane %v1067, %v1080
          %v1082 = vcombine.high %v977, %v983
          %v1084 = vunpack.c.l.s4 1983009808
          %v1085 = vunpack.c.0.s8 %v1084
          %v1086 = vlaneseq
          %v1087 = vshrl.u32 %v1086, 7
          %v1088 = vsub.s32 %v1085, %v1087
          %v1089 = vrot.slane %v977, %v1088
          %v1091 = vunpack.c.l.s4 1983009808
          %v1092 = vunpack.c.0.s8 %v1091
          %v1093 = vlaneseq
          %v1094 = vshrl.u32 %v1093, 7
          %v1095 = vsub.s32 %v1092, %v1094
          %v1096 = vrot.slane %v1082, %v1095
          %v1097 = vcombine.low %v1074, %v1089
          %v1098 = vcombine.high %v1074, %v1089
          %v1100 = vunpack.c.l.s4 1934713408
          %v1101 = vunpack.c.0.s8 %v1100
          %v1102 = vlaneseq
          %v1103 = vshrl.u32 %v1102, 7
          %v1104 = vsub.s32 %v1101, %v1103
          %v1105 = vrot.slane %v1097, %v1104
          %v1107 = vunpack.c.l.s4 1934713408
          %v1108 = vunpack.c.0.s8 %v1107
          %v1109 = vlaneseq
          %v1110 = vshrl.u32 %v1109, 7
          %v1111 = vsub.s32 %v1108, %v1110
          %v1112 = vrot.slane %v1098, %v1111
          %v1113 = vcombine.low %v1081, %v1096
          %v1114 = vcombine.high %v1081, %v1096
          %v1116 = vunpack.c.l.s4 1934713408
          %v1117 = vunpack.c.0.s8 %v1116
          %v1118 = vlaneseq
          %v1119 = vshrl.u32 %v1118, 7
          %v1120 = vsub.s32 %v1117, %v1119
          %v1121 = vrot.slane %v1113, %v1120
          %v1123 = vunpack.c.l.s4 1934713408
          %v1124 = vunpack.c.0.s8 %v1123
          %v1125 = vlaneseq
          %v1126 = vshrl.u32 %v1125, 7
          %v1127 = vsub.s32 %v1124, %v1126
          %v1128 = vrot.slane %v1114, %v1127
          %v1129 = vcombine.high %v1105, 0
          %v1130 = vcombine.high %v1112, 0
          %v1131 = vcombine.high %v1121, 0
          %v1132 = vcombine.high %v1128, 0
          %v1133 = vcombine.high %v987, %v980
          %v1135 = vunpack.c.l.s4 1983009808
          %v1136 = vunpack.c.0.s8 %v1135
          %v1137 = vlaneseq
          %v1138 = vshrl.u32 %v1137, 7
          %v1139 = vsub.s32 %v1136, %v1138
          %v1140 = vrot.slane %v987, %v1139
          %v1142 = vunpack.c.l.s4 1983009808
          %v1143 = vunpack.c.0.s8 %v1142
          %v1144 = vlaneseq
          %v1145 = vshrl.u32 %v1144, 7
          %v1146 = vsub.s32 %v1143, %v1145
          %v1147 = vrot.slane %v1133, %v1146
          %v1148 = vcombine.high %v995, %v980
          %v1150 = vunpack.c.l.s4 1983009808
          %v1151 = vunpack.c.0.s8 %v1150
          %v1152 = vlaneseq
          %v1153 = vshrl.u32 %v1152, 7
          %v1154 = vsub.s32 %v1151, %v1153
          %v1155 = vrot.slane %v995, %v1154
          %v1157 = vunpack.c.l.s4 1983009808
          %v1158 = vunpack.c.0.s8 %v1157
          %v1159 = vlaneseq
          %v1160 = vshrl.u32 %v1159, 7
          %v1161 = vsub.s32 %v1158, %v1160
          %v1162 = vrot.slane %v1148, %v1161
          %v1163 = vcombine.low %v1140, %v1155
          %v1164 = vcombine.high %v1140, %v1155
          %v1166 = vunpack.c.l.s4 1934713408
          %v1167 = vunpack.c.0.s8 %v1166
          %v1168 = vlaneseq
          %v1169 = vshrl.u32 %v1168, 7
          %v1170 = vsub.s32 %v1167, %v1169
          %v1171 = vrot.slane %v1163, %v1170
          %v1173 = vunpack.c.l.s4 1934713408
          %v1174 = vunpack.c.0.s8 %v1173
          %v1175 = vlaneseq
          %v1176 = vshrl.u32 %v1175, 7
          %v1177 = vsub.s32 %v1174, %v1176
          %v1178 = vrot.slane %v1164, %v1177
          %v1179 = vcombine.low %v1147, %v1162
          %v1180 = vcombine.high %v1147, %v1162
          %v1182 = vunpack.c.l.s4 1934713408
          %v1183 = vunpack.c.0.s8 %v1182
          %v1184 = vlaneseq
          %v1185 = vshrl.u32 %v1184, 7
          %v1186 = vsub.s32 %v1183, %v1185
          %v1187 = vrot.slane %v1179, %v1186
          %v1189 = vunpack.c.l.s4 1934713408
          %v1190 = vunpack.c.0.s8 %v1189
          %v1191 = vlaneseq
          %v1192 = vshrl.u32 %v1191, 7
          %v1193 = vsub.s32 %v1190, %v1192
          %v1194 = vrot.slane %v1180, %v1193
          %v1195 = vcombine.high %v1171, 0
          %v1196 = vcombine.high %v1178, 0
          %v1197 = vcombine.high %v1187, 0
          %v1198 = vcombine.high %v1194, 0
          %v1199 = vcombine.high %v991, %v983
          %v1201 = vunpack.c.l.s4 1983009808
          %v1202 = vunpack.c.0.s8 %v1201
          %v1203 = vlaneseq
          %v1204 = vshrl.u32 %v1203, 7
          %v1205 = vsub.s32 %v1202, %v1204
          %v1206 = vrot.slane %v991, %v1205
          %v1208 = vunpack.c.l.s4 1983009808
          %v1209 = vunpack.c.0.s8 %v1208
          %v1210 = vlaneseq
          %v1211 = vshrl.u32 %v1210, 7
          %v1212 = vsub.s32 %v1209, %v1211
          %v1213 = vrot.slane %v1199, %v1212
          %v1214 = vcombine.high %v999, %v983
          %v1216 = vunpack.c.l.s4 1983009808
          %v1217 = vunpack.c.0.s8 %v1216
          %v1218 = vlaneseq
          %v1219 = vshrl.u32 %v1218, 7
          %v1220 = vsub.s32 %v1217, %v1219
          %v1221 = vrot.slane %v999, %v1220
          %v1223 = vunpack.c.l.s4 1983009808
          %v1224 = vunpack.c.0.s8 %v1223
          %v1225 = vlaneseq
          %v1226 = vshrl.u32 %v1225, 7
          %v1227 = vsub.s32 %v1224, %v1226
          %v1228 = vrot.slane %v1214, %v1227
          %v1229 = vcombine.low %v1206, %v1221
          %v1230 = vcombine.high %v1206, %v1221
          %v1232 = vunpack.c.l.s4 1934713408
          %v1233 = vunpack.c.0.s8 %v1232
          %v1234 = vlaneseq
          %v1235 = vshrl.u32 %v1234, 7
          %v1236 = vsub.s32 %v1233, %v1235
          %v1237 = vrot.slane %v1229, %v1236
          %v1239 = vunpack.c.l.s4 1934713408
          %v1240 = vunpack.c.0.s8 %v1239
          %v1241 = vlaneseq
          %v1242 = vshrl.u32 %v1241, 7
          %v1243 = vsub.s32 %v1240, %v1242
          %v1244 = vrot.slane %v1230, %v1243
          %v1245 = vcombine.low %v1213, %v1228
          %v1246 = vcombine.high %v1213, %v1228
          %v1248 = vunpack.c.l.s4 1934713408
          %v1249 = vunpack.c.0.s8 %v1248
          %v1250 = vlaneseq
          %v1251 = vshrl.u32 %v1250, 7
          %v1252 = vsub.s32 %v1249, %v1251
          %v1253 = vrot.slane %v1245, %v1252
          %v1255 = vunpack.c.l.s4 1934713408
          %v1256 = vunpack.c.0.s8 %v1255
          %v1257 = vlaneseq
          %v1258 = vshrl.u32 %v1257, 7
          %v1259 = vsub.s32 %v1256, %v1258
          %v1260 = vrot.slane %v1246, %v1259
          %v1261 = vcombine.high %v1237, 0
          %v1262 = vcombine.high %v1244, 0
          %v1263 = vcombine.high %v1253, 0
          %v1264 = vcombine.high %v1260, 0
          %v1265 = vcombine.low %v1039, %v1046
          %v1267 = vunpack.c.l.s4 1983009808
          %v1268 = vunpack.c.0.s8 %v1267
          %v1269 = vlaneseq
          %v1270 = vshrl.u32 %v1269, 7
          %v1271 = vsub.s32 %v1268, %v1270
          %v1272 = vrot.slane %v1265, %v1271
          %v1273 = vcombine.low %v1063, %v1064
          %v1275 = vunpack.c.l.s4 1983009808
          %v1276 = vunpack.c.0.s8 %v1275
          %v1277 = vlaneseq
          %v1278 = vshrl.u32 %v1277, 7
          %v1279 = vsub.s32 %v1276, %v1278
          %v1280 = vrot.slane %v1273, %v1279
          %v1281 = vcombine.low %v1055, %v1062
          %v1283 = vunpack.c.l.s4 1983009808
          %v1284 = vunpack.c.0.s8 %v1283
          %v1285 = vlaneseq
          %v1286 = vshrl.u32 %v1285, 7
          %v1287 = vsub.s32 %v1284, %v1286
          %v1288 = vrot.slane %v1281, %v1287
          %v1289 = vcombine.low %v1065, %v1066
          %v1291 = vunpack.c.l.s4 1983009808
          %v1292 = vunpack.c.0.s8 %v1291
          %v1293 = vlaneseq
          %v1294 = vshrl.u32 %v1293, 7
          %v1295 = vsub.s32 %v1292, %v1294
          %v1296 = vrot.slane %v1289, %v1295
          %v1297 = vcombine.low %v1272, %v1280
          %v1299 = vunpack.c.l.s4 1934713408
          %v1300 = vunpack.c.0.s8 %v1299
          %v1301 = vlaneseq
          %v1302 = vshrl.u32 %v1301, 7
          %v1303 = vsub.s32 %v1300, %v1302
          %v1304 = vrot.slane %v1297, %v1303
          %v1305 = vcombine.low %v1288, %v1296
          %v1307 = vunpack.c.l.s4 1934713408
          %v1308 = vunpack.c.0.s8 %v1307
          %v1309 = vlaneseq
          %v1310 = vshrl.u32 %v1309, 7
          %v1311 = vsub.s32 %v1308, %v1310
          %v1312 = vrot.slane %v1305, %v1311
          %v1313 = vcombine.low %v1304, %v1312
          %v1314 = vcombine.high %v1304, %v1312
          %v1315 = vcombine.low %v1105, %v1112
          %v1317 = vunpack.c.l.s4 1983009808
          %v1318 = vunpack.c.0.s8 %v1317
          %v1319 = vlaneseq
          %v1320 = vshrl.u32 %v1319, 7
          %v1321 = vsub.s32 %v1318, %v1320
          %v1322 = vrot.slane %v1315, %v1321
          %v1323 = vcombine.low %v1129, %v1130
          %v1325 = vunpack.c.l.s4 1983009808
          %v1326 = vunpack.c.0.s8 %v1325
          %v1327 = vlaneseq
          %v1328 = vshrl.u32 %v1327, 7
          %v1329 = vsub.s32 %v1326, %v1328
          %v1330 = vrot.slane %v1323, %v1329
          %v1331 = vcombine.low %v1121, %v1128
          %v1333 = vunpack.c.l.s4 1983009808
          %v1334 = vunpack.c.0.s8 %v1333
          %v1335 = vlaneseq
          %v1336 = vshrl.u32 %v1335, 7
          %v1337 = vsub.s32 %v1334, %v1336
          %v1338 = vrot.slane %v1331, %v1337
          %v1339 = vcombine.low %v1131, %v1132
          %v1341 = vunpack.c.l.s4 1983009808
          %v1342 = vunpack.c.0.s8 %v1341
          %v1343 = vlaneseq
          %v1344 = vshrl.u32 %v1343, 7
          %v1345 = vsub.s32 %v1342, %v1344
          %v1346 = vrot.slane %v1339, %v1345
          %v1347 = vcombine.low %v1322, %v1330
          %v1349 = vunpack.c.l.s4 1934713408
          %v1350 = vunpack.c.0.s8 %v1349
          %v1351 = vlaneseq
          %v1352 = vshrl.u32 %v1351, 7
          %v1353 = vsub.s32 %v1350, %v1352
          %v1354 = vrot.slane %v1347, %v1353
          %v1355 = vcombine.low %v1338, %v1346
          %v1357 = vunpack.c.l.s4 1934713408
          %v1358 = vunpack.c.0.s8 %v1357
          %v1359 = vlaneseq
          %v1360 = vshrl.u32 %v1359, 7
          %v1361 = vsub.s32 %v1358, %v1360
          %v1362 = vrot.slane %v1355, %v1361
          %v1363 = vcombine.low %v1354, %v1362
          %v1364 = vcombine.high %v1354, %v1362
          %v1365 = vcombine.low %v1171, %v1178
          %v1367 = vunpack.c.l.s4 1983009808
          %v1368 = vunpack.c.0.s8 %v1367
          %v1369 = vlaneseq
          %v1370 = vshrl.u32 %v1369, 7
          %v1371 = vsub.s32 %v1368, %v1370
          %v1372 = vrot.slane %v1365, %v1371
          %v1373 = vcombine.low %v1195, %v1196
          %v1375 = vunpack.c.l.s4 1983009808
          %v1376 = vunpack.c.0.s8 %v1375
          %v1377 = vlaneseq
          %v1378 = vshrl.u32 %v1377, 7
          %v1379 = vsub.s32 %v1376, %v1378
          %v1380 = vrot.slane %v1373, %v1379
          %v1381 = vcombine.low %v1187, %v1194
          %v1383 = vunpack.c.l.s4 1983009808
          %v1384 = vunpack.c.0.s8 %v1383
          %v1385 = vlaneseq
          %v1386 = vshrl.u32 %v1385, 7
          %v1387 = vsub.s32 %v1384, %v1386
          %v1388 = vrot.slane %v1381, %v1387
          %v1389 = vcombine.low %v1197, %v1198
          %v1391 = vunpack.c.l.s4 1983009808
          %v1392 = vunpack.c.0.s8 %v1391
          %v1393 = vlaneseq
          %v1394 = vshrl.u32 %v1393, 7
          %v1395 = vsub.s32 %v1392, %v1394
          %v1396 = vrot.slane %v1389, %v1395
          %v1397 = vcombine.low %v1372, %v1380
          %v1399 = vunpack.c.l.s4 1934713408
          %v1400 = vunpack.c.0.s8 %v1399
          %v1401 = vlaneseq
          %v1402 = vshrl.u32 %v1401, 7
          %v1403 = vsub.s32 %v1400, %v1402
          %v1404 = vrot.slane %v1397, %v1403
          %v1405 = vcombine.low %v1388, %v1396
          %v1407 = vunpack.c.l.s4 1934713408
          %v1408 = vunpack.c.0.s8 %v1407
          %v1409 = vlaneseq
          %v1410 = vshrl.u32 %v1409, 7
          %v1411 = vsub.s32 %v1408, %v1410
          %v1412 = vrot.slane %v1405, %v1411
          %v1413 = vcombine.low %v1404, %v1412
          %v1414 = vcombine.high %v1404, %v1412
          %v1415 = vcombine.low %v1237, %v1244
          %v1417 = vunpack.c.l.s4 1983009808
          %v1418 = vunpack.c.0.s8 %v1417
          %v1419 = vlaneseq
          %v1420 = vshrl.u32 %v1419, 7
          %v1421 = vsub.s32 %v1418, %v1420
          %v1422 = vrot.slane %v1415, %v1421
          %v1423 = vcombine.low %v1261, %v1262
          %v1425 = vunpack.c.l.s4 1983009808
          %v1426 = vunpack.c.0.s8 %v1425
          %v1427 = vlaneseq
          %v1428 = vshrl.u32 %v1427, 7
          %v1429 = vsub.s32 %v1426, %v1428
          %v1430 = vrot.slane %v1423, %v1429
          %v1431 = vcombine.low %v1253, %v1260
          %v1433 = vunpack.c.l.s4 1983009808
          %v1434 = vunpack.c.0.s8 %v1433
          %v1435 = vlaneseq
          %v1436 = vshrl.u32 %v1435, 7
          %v1437 = vsub.s32 %v1434, %v1436
          %v1438 = vrot.slane %v1431, %v1437
          %v1439 = vcombine.low %v1263, %v1264
          %v1441 = vunpack.c.l.s4 1983009808
          %v1442 = vunpack.c.0.s8 %v1441
          %v1443 = vlaneseq
          %v1444 = vshrl.u32 %v1443, 7
          %v1445 = vsub.s32 %v1442, %v1444
          %v1446 = vrot.slane %v1439, %v1445
          %v1447 = vcombine.low %v1422, %v1430
          %v1449 = vunpack.c.l.s4 1934713408
          %v1450 = vunpack.c.0.s8 %v1449
          %v1451 = vlaneseq
          %v1452 = vshrl.u32 %v1451, 7
          %v1453 = vsub.s32 %v1450, %v1452
          %v1454 = vrot.slane %v1447, %v1453
          %v1455 = vcombine.low %v1438, %v1446
          %v1457 = vunpack.c.l.s4 1934713408
          %v1458 = vunpack.c.0.s8 %v1457
          %v1459 = vlaneseq
          %v1460 = vshrl.u32 %v1459, 7
          %v1461 = vsub.s32 %v1458, %v1460
          %v1462 = vrot.slane %v1455, %v1461
          %v1463 = vcombine.low %v1454, %v1462
          %v1464 = vcombine.high %v1454, %v1462
          %v1467 = vpack.i.b16 %v1363, %v1313
          %v1468 = vshrl.u32 %v1313, 16
          %v1469 = vshrl.u32 %v1363, 16
          %v1470 = vpack.i.b16 %v1469, %v1468
          %v1473 = vpack.i.b16 %v1364, %v1314
          %v1474 = vshrl.u32 %v1314, 16
          %v1475 = vshrl.u32 %v1364, 16
          %v1476 = vpack.i.b16 %v1475, %v1474
          %v1479 = vpack.i.b16 %v1463, %v1413
          %v1480 = vshrl.u32 %v1413, 16
          %v1481 = vshrl.u32 %v1463, 16
          %v1482 = vpack.i.b16 %v1481, %v1480
          %v1485 = vpack.i.b16 %v1464, %v1414
          %v1486 = vshrl.u32 %v1414, 16
          %v1487 = vshrl.u32 %v1464, 16
          %v1488 = vpack.i.b16 %v1487, %v1486
          %v1489 = vunpack.c.l.b16 %v1467
          %v1490 = vunpack.c.h.b16 %v1467
          %v1491 = vunpack.c.l.b16 %v1479
          %v1492 = vunpack.c.h.b16 %v1479
          %v1493 = vunpack.c.l.b16 %v1470
          %v1494 = vunpack.c.h.b16 %v1470
          %v1495 = vunpack.c.l.b16 %v1482
          %v1496 = vunpack.c.h.b16 %v1482
          %v1497 = vunpack.c.l.b16 %v1473
          %v1498 = vunpack.c.h.b16 %v1473
          %v1499 = vunpack.c.l.b16 %v1485
          %v1500 = vunpack.c.h.b16 %v1485
          %v1501 = vunpack.c.l.b16 %v1476
          %v1502 = vunpack.c.h.b16 %v1476
          %v1503 = vunpack.c.l.b16 %v1488
          %v1504 = vunpack.c.h.b16 %v1488
          %v1505 = vpack.c.b16 %v1489, %v1489
          %v1506 = vpack.c.b16 %v1490, %v1490
          %v1507 = vpack.c.b16 %v1491, %v1491
          %v1508 = vpack.c.b16 %v1492, %v1492
          %v1509 = vpack.c.b16 %v1493, %v1493
          %v1510 = vpack.c.b16 %v1494, %v1494
          %v1511 = vpack.c.b16 %v1495, %v1495
          %v1512 = vpack.c.b16 %v1496, %v1496
          %v1513 = vpack.c.b16 %v1497, %v1497
          %v1514 = vpack.c.b16 %v1498, %v1498
          %v1515 = vpack.c.b16 %v1499, %v1499
          %v1516 = vpack.c.b16 %v1500, %v1500
          %v1517 = vpack.c.b16 %v1501, %v1501
          %v1518 = vpack.c.b16 %v1502, %v1502
          %v1519 = vpack.c.b16 %v1503, %v1503
          %v1520 = vpack.c.b16 %v1504, %v1504
          %vm1537 = vcmask 60416
          %1538 = vst.msk [vmem:[#allocation3] sm:$0xf] %vm1537, %v1505
          %1539 = vst.msk [vmem:[#allocation3 + $0x4] sm:$0xf] %vm1537, %v1506
          %1540 = vst.msk [vmem:[#allocation3 + $0x8] sm:$0xf] %vm1537, %v1507
          %1541 = vst.msk [vmem:[#allocation3 + $0xc] sm:$0xf] %vm1537, %v1508
          %1542 = vst.msk [vmem:[#allocation3 + $0x10] sm:$0xf] %vm1537, %v1509
          %1543 = vst.msk [vmem:[#allocation3 + $0x14] sm:$0xf] %vm1537, %v1510
          %1544 = vst.msk [vmem:[#allocation3 + $0x18] sm:$0xf] %vm1537, %v1511
          %1545 = vst.msk [vmem:[#allocation3 + $0x1c] sm:$0xf] %vm1537, %v1512
          %1546 = vst.msk [vmem:[#allocation3 + $0x20] sm:$0xf] %vm1537, %v1513
          %1547 = vst.msk [vmem:[#allocation3 + $0x24] sm:$0xf] %vm1537, %v1514
          %1548 = vst.msk [vmem:[#allocation3 + $0x28] sm:$0xf] %vm1537, %v1515
          %1549 = vst.msk [vmem:[#allocation3 + $0x2c] sm:$0xf] %vm1537, %v1516
          %1550 = vst.msk [vmem:[#allocation3 + $0x30] sm:$0xf] %vm1537, %v1517
          %1551 = vst.msk [vmem:[#allocation3 + $0x34] sm:$0xf] %vm1537, %v1518
          %1552 = vst.msk [vmem:[#allocation3 + $0x38] sm:$0xf] %vm1537, %v1519
          %1553 = vst.msk [vmem:[#allocation3 + $0x3c] sm:$0xf] %vm1537, %v1520
          %1556 = vrot.lane.b32.xlu0 %v947, 120
          %v1557 = vpop.permute.xlu0 %1556
          %1558 = vrot.lane.b32.xlu0 %v948, 120
          %v1559 = vpop.permute.xlu0 %1558
          %1560 = vrot.lane.b32.xlu0 %v947, 112
          %v1561 = vpop.permute.xlu0 %1560
          %1562 = vrot.lane.b32.xlu0 %v948, 112
          %v1563 = vpop.permute.xlu0 %1562
          %1564 = vrot.lane.b32.xlu0 %v947, 104
          %v1565 = vpop.permute.xlu0 %1564
          %1566 = vrot.lane.b32.xlu0 %v948, 104
          %v1567 = vpop.permute.xlu0 %1566
          %v1570 = vpack.i.b16 %v1557, %v947
          %v1572 = vshrl.u32 %v947, 16
          %v1573 = vshrl.u32 %v1557, 16
          %v1574 = vpack.i.b16 %v1573, %v1572
          %v1578 = vpack.i.b16 %v1565, %v1561
          %v1580 = vshrl.u32 %v1561, 16
          %v1581 = vshrl.u32 %v1565, 16
          %v1582 = vpack.i.b16 %v1581, %v1580
          %v1586 = vpack.i.b16 %v1559, %v948
          %v1588 = vshrl.u32 %v948, 16
          %v1589 = vshrl.u32 %v1559, 16
          %v1590 = vpack.i.b16 %v1589, %v1588
          %v1594 = vpack.i.b16 %v1567, %v1563
          %v1596 = vshrl.u32 %v1563, 16
          %v1597 = vshrl.u32 %v1567, 16
          %v1598 = vpack.i.b16 %v1597, %v1596
          %v1600 = vcombine.high %v1570, %v980
          %v1602 = vunpack.c.l.s4 1983009808
          %v1603 = vunpack.c.0.s8 %v1602
          %v1604 = vlaneseq
          %v1605 = vshrl.u32 %v1604, 7
          %v1606 = vsub.s32 %v1603, %v1605
          %v1607 = vrot.slane %v1570, %v1606
          %v1609 = vunpack.c.l.s4 1983009808
          %v1610 = vunpack.c.0.s8 %v1609
          %v1611 = vlaneseq
          %v1612 = vshrl.u32 %v1611, 7
          %v1613 = vsub.s32 %v1610, %v1612
          %v1614 = vrot.slane %v1600, %v1613
          %v1615 = vcombine.high %v1578, %v980
          %v1617 = vunpack.c.l.s4 1983009808
          %v1618 = vunpack.c.0.s8 %v1617
          %v1619 = vlaneseq
          %v1620 = vshrl.u32 %v1619, 7
          %v1621 = vsub.s32 %v1618, %v1620
          %v1622 = vrot.slane %v1578, %v1621
          %v1624 = vunpack.c.l.s4 1983009808
          %v1625 = vunpack.c.0.s8 %v1624
          %v1626 = vlaneseq
          %v1627 = vshrl.u32 %v1626, 7
          %v1628 = vsub.s32 %v1625, %v1627
          %v1629 = vrot.slane %v1615, %v1628
          %v1630 = vcombine.low %v1607, %v1622
          %v1631 = vcombine.high %v1607, %v1622
          %v1633 = vunpack.c.l.s4 1934713408
          %v1634 = vunpack.c.0.s8 %v1633
          %v1635 = vlaneseq
          %v1636 = vshrl.u32 %v1635, 7
          %v1637 = vsub.s32 %v1634, %v1636
          %v1638 = vrot.slane %v1630, %v1637
          %v1640 = vunpack.c.l.s4 1934713408
          %v1641 = vunpack.c.0.s8 %v1640
          %v1642 = vlaneseq
          %v1643 = vshrl.u32 %v1642, 7
          %v1644 = vsub.s32 %v1641, %v1643
          %v1645 = vrot.slane %v1631, %v1644
          %v1646 = vcombine.low %v1614, %v1629
          %v1647 = vcombine.high %v1614, %v1629
          %v1649 = vunpack.c.l.s4 1934713408
          %v1650 = vunpack.c.0.s8 %v1649
          %v1651 = vlaneseq
          %v1652 = vshrl.u32 %v1651, 7
          %v1653 = vsub.s32 %v1650, %v1652
          %v1654 = vrot.slane %v1646, %v1653
          %v1656 = vunpack.c.l.s4 1934713408
          %v1657 = vunpack.c.0.s8 %v1656
          %v1658 = vlaneseq
          %v1659 = vshrl.u32 %v1658, 7
          %v1660 = vsub.s32 %v1657, %v1659
          %v1661 = vrot.slane %v1647, %v1660
          %v1662 = vcombine.high %v1638, 0
          %v1663 = vcombine.high %v1645, 0
          %v1664 = vcombine.high %v1654, 0
          %v1665 = vcombine.high %v1661, 0
          %v1666 = vcombine.high %v1574, %v983
          %v1668 = vunpack.c.l.s4 1983009808
          %v1669 = vunpack.c.0.s8 %v1668
          %v1670 = vlaneseq
          %v1671 = vshrl.u32 %v1670, 7
          %v1672 = vsub.s32 %v1669, %v1671
          %v1673 = vrot.slane %v1574, %v1672
          %v1675 = vunpack.c.l.s4 1983009808
          %v1676 = vunpack.c.0.s8 %v1675
          %v1677 = vlaneseq
          %v1678 = vshrl.u32 %v1677, 7
          %v1679 = vsub.s32 %v1676, %v1678
          %v1680 = vrot.slane %v1666, %v1679
          %v1681 = vcombine.high %v1582, %v983
          %v1683 = vunpack.c.l.s4 1983009808
          %v1684 = vunpack.c.0.s8 %v1683
          %v1685 = vlaneseq
          %v1686 = vshrl.u32 %v1685, 7
          %v1687 = vsub.s32 %v1684, %v1686
          %v1688 = vrot.slane %v1582, %v1687
          %v1690 = vunpack.c.l.s4 1983009808
          %v1691 = vunpack.c.0.s8 %v1690
          %v1692 = vlaneseq
          %v1693 = vshrl.u32 %v1692, 7
          %v1694 = vsub.s32 %v1691, %v1693
          %v1695 = vrot.slane %v1681, %v1694
          %v1696 = vcombine.low %v1673, %v1688
          %v1697 = vcombine.high %v1673, %v1688
          %v1699 = vunpack.c.l.s4 1934713408
          %v1700 = vunpack.c.0.s8 %v1699
          %v1701 = vlaneseq
          %v1702 = vshrl.u32 %v1701, 7
          %v1703 = vsub.s32 %v1700, %v1702
          %v1704 = vrot.slane %v1696, %v1703
          %v1706 = vunpack.c.l.s4 1934713408
          %v1707 = vunpack.c.0.s8 %v1706
          %v1708 = vlaneseq
          %v1709 = vshrl.u32 %v1708, 7
          %v1710 = vsub.s32 %v1707, %v1709
          %v1711 = vrot.slane %v1697, %v1710
          %v1712 = vcombine.low %v1680, %v1695
          %v1713 = vcombine.high %v1680, %v1695
          %v1715 = vunpack.c.l.s4 1934713408
          %v1716 = vunpack.c.0.s8 %v1715
          %v1717 = vlaneseq
          %v1718 = vshrl.u32 %v1717, 7
          %v1719 = vsub.s32 %v1716, %v1718
          %v1720 = vrot.slane %v1712, %v1719
          %v1722 = vunpack.c.l.s4 1934713408
          %v1723 = vunpack.c.0.s8 %v1722
          %v1724 = vlaneseq
          %v1725 = vshrl.u32 %v1724, 7
          %v1726 = vsub.s32 %v1723, %v1725
          %v1727 = vrot.slane %v1713, %v1726
          %v1728 = vcombine.high %v1704, 0
          %v1729 = vcombine.high %v1711, 0
          %v1730 = vcombine.high %v1720, 0
          %v1731 = vcombine.high %v1727, 0
          %v1732 = vcombine.high %v1586, %v980
          %v1734 = vunpack.c.l.s4 1983009808
          %v1735 = vunpack.c.0.s8 %v1734
          %v1736 = vlaneseq
          %v1737 = vshrl.u32 %v1736, 7
          %v1738 = vsub.s32 %v1735, %v1737
          %v1739 = vrot.slane %v1586, %v1738
          %v1741 = vunpack.c.l.s4 1983009808
          %v1742 = vunpack.c.0.s8 %v1741
          %v1743 = vlaneseq
          %v1744 = vshrl.u32 %v1743, 7
          %v1745 = vsub.s32 %v1742, %v1744
          %v1746 = vrot.slane %v1732, %v1745
          %v1747 = vcombine.high %v1594, %v980
          %v1749 = vunpack.c.l.s4 1983009808
          %v1750 = vunpack.c.0.s8 %v1749
          %v1751 = vlaneseq
          %v1752 = vshrl.u32 %v1751, 7
          %v1753 = vsub.s32 %v1750, %v1752
          %v1754 = vrot.slane %v1594, %v1753
          %v1756 = vunpack.c.l.s4 1983009808
          %v1757 = vunpack.c.0.s8 %v1756
          %v1758 = vlaneseq
          %v1759 = vshrl.u32 %v1758, 7
          %v1760 = vsub.s32 %v1757, %v1759
          %v1761 = vrot.slane %v1747, %v1760
          %v1762 = vcombine.low %v1739, %v1754
          %v1763 = vcombine.high %v1739, %v1754
          %v1765 = vunpack.c.l.s4 1934713408
          %v1766 = vunpack.c.0.s8 %v1765
          %v1767 = vlaneseq
          %v1768 = vshrl.u32 %v1767, 7
          %v1769 = vsub.s32 %v1766, %v1768
          %v1770 = vrot.slane %v1762, %v1769
          %v1772 = vunpack.c.l.s4 1934713408
          %v1773 = vunpack.c.0.s8 %v1772
          %v1774 = vlaneseq
          %v1775 = vshrl.u32 %v1774, 7
          %v1776 = vsub.s32 %v1773, %v1775
          %v1777 = vrot.slane %v1763, %v1776
          %v1778 = vcombine.low %v1746, %v1761
          %v1779 = vcombine.high %v1746, %v1761
          %v1781 = vunpack.c.l.s4 1934713408
          %v1782 = vunpack.c.0.s8 %v1781
          %v1783 = vlaneseq
          %v1784 = vshrl.u32 %v1783, 7
          %v1785 = vsub.s32 %v1782, %v1784
          %v1786 = vrot.slane %v1778, %v1785
          %v1788 = vunpack.c.l.s4 1934713408
          %v1789 = vunpack.c.0.s8 %v1788
          %v1790 = vlaneseq
          %v1791 = vshrl.u32 %v1790, 7
          %v1792 = vsub.s32 %v1789, %v1791
          %v1793 = vrot.slane %v1779, %v1792
          %v1794 = vcombine.high %v1770, 0
          %v1795 = vcombine.high %v1777, 0
          %v1796 = vcombine.high %v1786, 0
          %v1797 = vcombine.high %v1793, 0
          %v1798 = vcombine.high %v1590, %v983
          %v1800 = vunpack.c.l.s4 1983009808
          %v1801 = vunpack.c.0.s8 %v1800
          %v1802 = vlaneseq
          %v1803 = vshrl.u32 %v1802, 7
          %v1804 = vsub.s32 %v1801, %v1803
          %v1805 = vrot.slane %v1590, %v1804
          %v1807 = vunpack.c.l.s4 1983009808
          %v1808 = vunpack.c.0.s8 %v1807
          %v1809 = vlaneseq
          %v1810 = vshrl.u32 %v1809, 7
          %v1811 = vsub.s32 %v1808, %v1810
          %v1812 = vrot.slane %v1798, %v1811
          %v1813 = vcombine.high %v1598, %v983
          %v1815 = vunpack.c.l.s4 1983009808
          %v1816 = vunpack.c.0.s8 %v1815
          %v1817 = vlaneseq
          %v1818 = vshrl.u32 %v1817, 7
          %v1819 = vsub.s32 %v1816, %v1818
          %v1820 = vrot.slane %v1598, %v1819
          %v1822 = vunpack.c.l.s4 1983009808
          %v1823 = vunpack.c.0.s8 %v1822
          %v1824 = vlaneseq
          %v1825 = vshrl.u32 %v1824, 7
          %v1826 = vsub.s32 %v1823, %v1825
          %v1827 = vrot.slane %v1813, %v1826
          %v1828 = vcombine.low %v1805, %v1820
          %v1829 = vcombine.high %v1805, %v1820
          %v1831 = vunpack.c.l.s4 1934713408
          %v1832 = vunpack.c.0.s8 %v1831
          %v1833 = vlaneseq
          %v1834 = vshrl.u32 %v1833, 7
          %v1835 = vsub.s32 %v1832, %v1834
          %v1836 = vrot.slane %v1828, %v1835
          %v1838 = vunpack.c.l.s4 1934713408
          %v1839 = vunpack.c.0.s8 %v1838
          %v1840 = vlaneseq
          %v1841 = vshrl.u32 %v1840, 7
          %v1842 = vsub.s32 %v1839, %v1841
          %v1843 = vrot.slane %v1829, %v1842
          %v1844 = vcombine.low %v1812, %v1827
          %v1845 = vcombine.high %v1812, %v1827
          %v1847 = vunpack.c.l.s4 1934713408
          %v1848 = vunpack.c.0.s8 %v1847
          %v1849 = vlaneseq
          %v1850 = vshrl.u32 %v1849, 7
          %v1851 = vsub.s32 %v1848, %v1850
          %v1852 = vrot.slane %v1844, %v1851
          %v1854 = vunpack.c.l.s4 1934713408
          %v1855 = vunpack.c.0.s8 %v1854
          %v1856 = vlaneseq
          %v1857 = vshrl.u32 %v1856, 7
          %v1858 = vsub.s32 %v1855, %v1857
          %v1859 = vrot.slane %v1845, %v1858
          %v1860 = vcombine.high %v1836, 0
          %v1861 = vcombine.high %v1843, 0
          %v1862 = vcombine.high %v1852, 0
          %v1863 = vcombine.high %v1859, 0
          %v1864 = vcombine.low %v1638, %v1645
          %v1866 = vunpack.c.l.s4 1983009808
          %v1867 = vunpack.c.0.s8 %v1866
          %v1868 = vlaneseq
          %v1869 = vshrl.u32 %v1868, 7
          %v1870 = vsub.s32 %v1867, %v1869
          %v1871 = vrot.slane %v1864, %v1870
          %v1872 = vcombine.low %v1662, %v1663
          %v1874 = vunpack.c.l.s4 1983009808
          %v1875 = vunpack.c.0.s8 %v1874
          %v1876 = vlaneseq
          %v1877 = vshrl.u32 %v1876, 7
          %v1878 = vsub.s32 %v1875, %v1877
          %v1879 = vrot.slane %v1872, %v1878
          %v1880 = vcombine.low %v1654, %v1661
          %v1882 = vunpack.c.l.s4 1983009808
          %v1883 = vunpack.c.0.s8 %v1882
          %v1884 = vlaneseq
          %v1885 = vshrl.u32 %v1884, 7
          %v1886 = vsub.s32 %v1883, %v1885
          %v1887 = vrot.slane %v1880, %v1886
          %v1888 = vcombine.low %v1664, %v1665
          %v1890 = vunpack.c.l.s4 1983009808
          %v1891 = vunpack.c.0.s8 %v1890
          %v1892 = vlaneseq
          %v1893 = vshrl.u32 %v1892, 7
          %v1894 = vsub.s32 %v1891, %v1893
          %v1895 = vrot.slane %v1888, %v1894
          %v1896 = vcombine.low %v1871, %v1879
          %v1898 = vunpack.c.l.s4 1934713408
          %v1899 = vunpack.c.0.s8 %v1898
          %v1900 = vlaneseq
          %v1901 = vshrl.u32 %v1900, 7
          %v1902 = vsub.s32 %v1899, %v1901
          %v1903 = vrot.slane %v1896, %v1902
          %v1904 = vcombine.low %v1887, %v1895
          %v1906 = vunpack.c.l.s4 1934713408
          %v1907 = vunpack.c.0.s8 %v1906
          %v1908 = vlaneseq
          %v1909 = vshrl.u32 %v1908, 7
          %v1910 = vsub.s32 %v1907, %v1909
          %v1911 = vrot.slane %v1904, %v1910
          %v1912 = vcombine.low %v1903, %v1911
          %v1913 = vcombine.high %v1903, %v1911
          %v1914 = vcombine.low %v1704, %v1711
          %v1916 = vunpack.c.l.s4 1983009808
          %v1917 = vunpack.c.0.s8 %v1916
          %v1918 = vlaneseq
          %v1919 = vshrl.u32 %v1918, 7
          %v1920 = vsub.s32 %v1917, %v1919
          %v1921 = vrot.slane %v1914, %v1920
          %v1922 = vcombine.low %v1728, %v1729
          %v1924 = vunpack.c.l.s4 1983009808
          %v1925 = vunpack.c.0.s8 %v1924
          %v1926 = vlaneseq
          %v1927 = vshrl.u32 %v1926, 7
          %v1928 = vsub.s32 %v1925, %v1927
          %v1929 = vrot.slane %v1922, %v1928
          %v1930 = vcombine.low %v1720, %v1727
          %v1932 = vunpack.c.l.s4 1983009808
          %v1933 = vunpack.c.0.s8 %v1932
          %v1934 = vlaneseq
          %v1935 = vshrl.u32 %v1934, 7
          %v1936 = vsub.s32 %v1933, %v1935
          %v1937 = vrot.slane %v1930, %v1936
          %v1938 = vcombine.low %v1730, %v1731
          %v1940 = vunpack.c.l.s4 1983009808
          %v1941 = vunpack.c.0.s8 %v1940
          %v1942 = vlaneseq
          %v1943 = vshrl.u32 %v1942, 7
          %v1944 = vsub.s32 %v1941, %v1943
          %v1945 = vrot.slane %v1938, %v1944
          %v1946 = vcombine.low %v1921, %v1929
          %v1948 = vunpack.c.l.s4 1934713408
          %v1949 = vunpack.c.0.s8 %v1948
          %v1950 = vlaneseq
          %v1951 = vshrl.u32 %v1950, 7
          %v1952 = vsub.s32 %v1949, %v1951
          %v1953 = vrot.slane %v1946, %v1952
          %v1954 = vcombine.low %v1937, %v1945
          %v1956 = vunpack.c.l.s4 1934713408
          %v1957 = vunpack.c.0.s8 %v1956
          %v1958 = vlaneseq
          %v1959 = vshrl.u32 %v1958, 7
          %v1960 = vsub.s32 %v1957, %v1959
          %v1961 = vrot.slane %v1954, %v1960
          %v1962 = vcombine.low %v1953, %v1961
          %v1963 = vcombine.high %v1953, %v1961
          %v1964 = vcombine.low %v1770, %v1777
          %v1966 = vunpack.c.l.s4 1983009808
          %v1967 = vunpack.c.0.s8 %v1966
          %v1968 = vlaneseq
          %v1969 = vshrl.u32 %v1968, 7
          %v1970 = vsub.s32 %v1967, %v1969
          %v1971 = vrot.slane %v1964, %v1970
          %v1972 = vcombine.low %v1794, %v1795
          %v1974 = vunpack.c.l.s4 1983009808
          %v1975 = vunpack.c.0.s8 %v1974
          %v1976 = vlaneseq
          %v1977 = vshrl.u32 %v1976, 7
          %v1978 = vsub.s32 %v1975, %v1977
          %v1979 = vrot.slane %v1972, %v1978
          %v1980 = vcombine.low %v1786, %v1793
          %v1982 = vunpack.c.l.s4 1983009808
          %v1983 = vunpack.c.0.s8 %v1982
          %v1984 = vlaneseq
          %v1985 = vshrl.u32 %v1984, 7
          %v1986 = vsub.s32 %v1983, %v1985
          %v1987 = vrot.slane %v1980, %v1986
          %v1988 = vcombine.low %v1796, %v1797
          %v1990 = vunpack.c.l.s4 1983009808
          %v1991 = vunpack.c.0.s8 %v1990
          %v1992 = vlaneseq
          %v1993 = vshrl.u32 %v1992, 7
          %v1994 = vsub.s32 %v1991, %v1993
          %v1995 = vrot.slane %v1988, %v1994
          %v1996 = vcombine.low %v1971, %v1979
          %v1998 = vunpack.c.l.s4 1934713408
          %v1999 = vunpack.c.0.s8 %v1998
          %v2000 = vlaneseq
          %v2001 = vshrl.u32 %v2000, 7
          %v2002 = vsub.s32 %v1999, %v2001
          %v2003 = vrot.slane %v1996, %v2002
          %v2004 = vcombine.low %v1987, %v1995
          %v2006 = vunpack.c.l.s4 1934713408
          %v2007 = vunpack.c.0.s8 %v2006
          %v2008 = vlaneseq
          %v2009 = vshrl.u32 %v2008, 7
          %v2010 = vsub.s32 %v2007, %v2009
          %v2011 = vrot.slane %v2004, %v2010
          %v2012 = vcombine.low %v2003, %v2011
          %v2013 = vcombine.high %v2003, %v2011
          %v2014 = vcombine.low %v1836, %v1843
          %v2016 = vunpack.c.l.s4 1983009808
          %v2017 = vunpack.c.0.s8 %v2016
          %v2018 = vlaneseq
          %v2019 = vshrl.u32 %v2018, 7
          %v2020 = vsub.s32 %v2017, %v2019
          %v2021 = vrot.slane %v2014, %v2020
          %v2022 = vcombine.low %v1860, %v1861
          %v2024 = vunpack.c.l.s4 1983009808
          %v2025 = vunpack.c.0.s8 %v2024
          %v2026 = vlaneseq
          %v2027 = vshrl.u32 %v2026, 7
          %v2028 = vsub.s32 %v2025, %v2027
          %v2029 = vrot.slane %v2022, %v2028
          %v2030 = vcombine.low %v1852, %v1859
          %v2032 = vunpack.c.l.s4 1983009808
          %v2033 = vunpack.c.0.s8 %v2032
          %v2034 = vlaneseq
          %v2035 = vshrl.u32 %v2034, 7
          %v2036 = vsub.s32 %v2033, %v2035
          %v2037 = vrot.slane %v2030, %v2036
          %v2038 = vcombine.low %v1862, %v1863
          %v2040 = vunpack.c.l.s4 1983009808
          %v2041 = vunpack.c.0.s8 %v2040
          %v2042 = vlaneseq
          %v2043 = vshrl.u32 %v2042, 7
          %v2044 = vsub.s32 %v2041, %v2043
          %v2045 = vrot.slane %v2038, %v2044
          %v2046 = vcombine.low %v2021, %v2029
          %v2048 = vunpack.c.l.s4 1934713408
          %v2049 = vunpack.c.0.s8 %v2048
          %v2050 = vlaneseq
          %v2051 = vshrl.u32 %v2050, 7
          %v2052 = vsub.s32 %v2049, %v2051
          %v2053 = vrot.slane %v2046, %v2052
          %v2054 = vcombine.low %v2037, %v2045
          %v2056 = vunpack.c.l.s4 1934713408
          %v2057 = vunpack.c.0.s8 %v2056
          %v2058 = vlaneseq
          %v2059 = vshrl.u32 %v2058, 7
          %v2060 = vsub.s32 %v2057, %v2059
          %v2061 = vrot.slane %v2054, %v2060
          %v2062 = vcombine.low %v2053, %v2061
          %v2063 = vcombine.high %v2053, %v2061
          %v2066 = vpack.i.b16 %v1962, %v1912
          %v2067 = vshrl.u32 %v1912, 16
          %v2068 = vshrl.u32 %v1962, 16
          %v2069 = vpack.i.b16 %v2068, %v2067
          %v2072 = vpack.i.b16 %v1963, %v1913
          %v2073 = vshrl.u32 %v1913, 16
          %v2074 = vshrl.u32 %v1963, 16
          %v2075 = vpack.i.b16 %v2074, %v2073
          %v2078 = vpack.i.b16 %v2062, %v2012
          %v2079 = vshrl.u32 %v2012, 16
          %v2080 = vshrl.u32 %v2062, 16
          %v2081 = vpack.i.b16 %v2080, %v2079
          %v2084 = vpack.i.b16 %v2063, %v2013
          %v2085 = vshrl.u32 %v2013, 16
          %v2086 = vshrl.u32 %v2063, 16
          %v2087 = vpack.i.b16 %v2086, %v2085
          %v2088 = vunpack.c.l.b16 %v2066
          %v2089 = vunpack.c.h.b16 %v2066
          %v2090 = vunpack.c.l.b16 %v2078
          %v2091 = vunpack.c.h.b16 %v2078
          %v2092 = vunpack.c.l.b16 %v2069
          %v2093 = vunpack.c.h.b16 %v2069
          %v2094 = vunpack.c.l.b16 %v2081
          %v2095 = vunpack.c.h.b16 %v2081
          %v2096 = vunpack.c.l.b16 %v2072
          %v2097 = vunpack.c.h.b16 %v2072
          %v2098 = vunpack.c.l.b16 %v2084
          %v2099 = vunpack.c.h.b16 %v2084
          %v2100 = vunpack.c.l.b16 %v2075
          %v2101 = vunpack.c.h.b16 %v2075
          %v2102 = vunpack.c.l.b16 %v2087
          %v2103 = vunpack.c.h.b16 %v2087
          %v2104 = vpack.c.b16 %v2088, %v2088
          %v2105 = vpack.c.b16 %v2089, %v2089
          %v2106 = vpack.c.b16 %v2090, %v2090
          %v2107 = vpack.c.b16 %v2091, %v2091
          %v2108 = vpack.c.b16 %v2092, %v2092
          %v2109 = vpack.c.b16 %v2093, %v2093
          %v2110 = vpack.c.b16 %v2094, %v2094
          %v2111 = vpack.c.b16 %v2095, %v2095
          %v2112 = vpack.c.b16 %v2096, %v2096
          %v2113 = vpack.c.b16 %v2097, %v2097
          %v2114 = vpack.c.b16 %v2098, %v2098
          %v2115 = vpack.c.b16 %v2099, %v2099
          %v2116 = vpack.c.b16 %v2100, %v2100
          %v2117 = vpack.c.b16 %v2101, %v2101
          %v2118 = vpack.c.b16 %v2102, %v2102
          %v2119 = vpack.c.b16 %v2103, %v2103
          %2136 = vst.msk [vmem:[#allocation4] sm:$0xf] %vm1537, %v2104
          %2137 = vst.msk [vmem:[#allocation4 + $0x4] sm:$0xf] %vm1537, %v2105
          %2138 = vst.msk [vmem:[#allocation4 + $0x8] sm:$0xf] %vm1537, %v2106
          %2139 = vst.msk [vmem:[#allocation4 + $0xc] sm:$0xf] %vm1537, %v2107
          %2140 = vst.msk [vmem:[#allocation4 + $0x10] sm:$0xf] %vm1537, %v2108
          %2141 = vst.msk [vmem:[#allocation4 + $0x14] sm:$0xf] %vm1537, %v2109
          %2142 = vst.msk [vmem:[#allocation4 + $0x18] sm:$0xf] %vm1537, %v2110
          %2143 = vst.msk [vmem:[#allocation4 + $0x1c] sm:$0xf] %vm1537, %v2111
          %2144 = vst.msk [vmem:[#allocation4 + $0x20] sm:$0xf] %vm1537, %v2112
          %2145 = vst.msk [vmem:[#allocation4 + $0x24] sm:$0xf] %vm1537, %v2113
          %2146 = vst.msk [vmem:[#allocation4 + $0x28] sm:$0xf] %vm1537, %v2114
          %2147 = vst.msk [vmem:[#allocation4 + $0x2c] sm:$0xf] %vm1537, %v2115
          %2148 = vst.msk [vmem:[#allocation4 + $0x30] sm:$0xf] %vm1537, %v2116
          %2149 = vst.msk [vmem:[#allocation4 + $0x34] sm:$0xf] %vm1537, %v2117
          %2150 = vst.msk [vmem:[#allocation4 + $0x38] sm:$0xf] %vm1537, %v2118
          %2151 = vst.msk [vmem:[#allocation4 + $0x3c] sm:$0xf] %vm1537, %v2119
        $region116: #{tpu_custom_call.1} parent=91 // pred_fallthru
          _
        %s2152 = scalar_lea.vmem [#allocation2], %s704
        %v2153 = vld [vmem:[%s2152] sm:$0xff]
        %v2154 = vld [vmem:[%s2152 + $0x8] sm:$0xff]
        %v2155 = vpack.c.bf16 %v2154, %v2153
        %v2156 = vld [vmem:[%s2] sm:$0xf]
        %v2157 = vld [vmem:[%s2 + $0x4] sm:$0xf]
        %v2158 = vld [vmem:[%s2 + $0x8] sm:$0xf]
        %v2159 = vld [vmem:[%s2 + $0xc] sm:$0xf]
        %v2160 = vld [vmem:[%s3] sm:$0x1]
        %v2162 = vlaneseq
        %v2163 = vshrl.u32 %v2162, 7
        %v2164 = vsub.s32 0, %v2163
        %v2165 = vrot.slane %v2160, %v2164
        %v2171 = vunpack.c.l.b16 %v2156
        %v2172 = vunpack.c.l.b16 %v2157
        %v2173 = vunpack.c.l.b16 %v2158
        %v2174 = vunpack.c.l.b16 %v2159
        %v2175 = vpack.c.b16 %v2172, %v2171
        %v2176 = vpack.c.b16 %v2174, %v2173
        %vm2179 = vcmask 261120
        %v2181 = vsel %vm2179, %v2155, 0
        %2183 = vmatprep.subr.bf16.mxu0 0
        %2184 = vmatpush1.bf16.msra.mxu0 0
        %2185 = vmatprep.subr.bf16.mxu0 0
        %2186 = vmatpush1.bf16.msra.mxu0 0
        %2187 = vmatprep.subr.bf16.mxu0 0
        %2188 = vmatpush1.bf16.msra.mxu0 0
        %2189 = vmatprep.subr.bf16.mxu0 0
        %2190 = vmatpush1.bf16.msra.mxu0 0
        %2191 = vmatprep.subr.bf16.mxu0 0
        %2192 = vmatpush1.bf16.msra.mxu0 0
        %2193 = vmatprep.subr.bf16.mxu0 0
        %2194 = vmatpush1.bf16.msra.mxu0 0
        %2195 = vmatprep.subr.bf16.mxu0 0
        %2196 = vmatpush1.bf16.msra.mxu0 %v2176
        %2197 = vmatprep.subr.bf16.mxu0 0
        %2198 = vmatpush1.bf16.msra.mxu0 %v2175
        %2199 = vmatprep.subr.bf16.mxu0 0
        %2200 = vmatpush2.bf16.msra.mxu0 0
        %2201 = vmatprep.subr.bf16.mxu0 0
        %2202 = vmatpush2.bf16.msra.mxu0 0
        %2203 = vmatprep.subr.bf16.mxu0 0
        %2204 = vmatpush2.bf16.msra.mxu0 0
        %2205 = vmatprep.subr.bf16.mxu0 0
        %2206 = vmatpush2.bf16.msra.mxu0 0
        %2207 = vmatprep.subr.bf16.mxu0 0
        %2208 = vmatpush2.bf16.msra.mxu0 0
        %2209 = vmatprep.subr.bf16.mxu0 0
        %2210 = vmatpush2.bf16.msra.mxu0 0
        %2211 = vmatprep.subr.bf16.mxu0 0
        %2212 = vmatpush2.bf16.msra.mxu0 0
        %2213 = vmatprep.subr.bf16.mxu0 0
        %2214 = vmatpush2.bf16.msra.mxu0 0
        %2215 = vmatprep.mubr.bf16.mxu0 0
        %2216 = vmatmul.mubr.bf16.gmra.mxu0 %v2181
        %v2217 = vpop.f32.mrf.mxu0
        %v2218 = vadd.f32 %v2165, %v2217
        %v2219 = vpop.f32.mrf.mxu0
        %v2220 = vpop.f32.mrf.mxu0
        %v2221 = vadd.f32 %v2165, %v2220
        %v2222 = vpop.f32.mrf.mxu0
        %2223 = vdwg.mxu0
        %v2224 = vpack.c.bf16 %v2221, %v2218
        %2226 = vrot.lane.b32.xlu0 %v2224, 120
        %v2227 = vpop.permute.xlu0 %2226
        %2228 = vrot.lane.b32.xlu0 %v2224, 112
        %v2229 = vpop.permute.xlu0 %2228
        %2230 = vrot.lane.b32.xlu0 %v2224, 104
        %v2231 = vpop.permute.xlu0 %2230
        %v2234 = vpack.i.b16 %v2227, %v2224
        %v2236 = vshrl.u32 %v2224, 16
        %v2237 = vshrl.u32 %v2227, 16
        %v2238 = vpack.i.b16 %v2237, %v2236
        %v2242 = vpack.i.b16 %v2231, %v2229
        %v2244 = vshrl.u32 %v2229, 16
        %v2245 = vshrl.u32 %v2231, 16
        %v2246 = vpack.i.b16 %v2245, %v2244
        %v2249 = vpack.i.b16 0, 0
        %v2251 = vshrl.u32 0, 16
        %v2252 = vpack.i.b16 %v2251, %v2251
        %v2254 = vcombine.high %v2234, %v2249
        %v2256 = vunpack.c.l.s4 1983009808
        %v2257 = vunpack.c.0.s8 %v2256
        %v2258 = vlaneseq
        %v2259 = vshrl.u32 %v2258, 7
        %v2260 = vsub.s32 %v2257, %v2259
        %v2261 = vrot.slane %v2234, %v2260
        %v2263 = vunpack.c.l.s4 1983009808
        %v2264 = vunpack.c.0.s8 %v2263
        %v2265 = vlaneseq
        %v2266 = vshrl.u32 %v2265, 7
        %v2267 = vsub.s32 %v2264, %v2266
        %v2268 = vrot.slane %v2254, %v2267
        %v2269 = vcombine.high %v2242, %v2249
        %v2271 = vunpack.c.l.s4 1983009808
        %v2272 = vunpack.c.0.s8 %v2271
        %v2273 = vlaneseq
        %v2274 = vshrl.u32 %v2273, 7
        %v2275 = vsub.s32 %v2272, %v2274
        %v2276 = vrot.slane %v2242, %v2275
        %v2278 = vunpack.c.l.s4 1983009808
        %v2279 = vunpack.c.0.s8 %v2278
        %v2280 = vlaneseq
        %v2281 = vshrl.u32 %v2280, 7
        %v2282 = vsub.s32 %v2279, %v2281
        %v2283 = vrot.slane %v2269, %v2282
        %v2284 = vcombine.low %v2261, %v2276
        %v2285 = vcombine.high %v2261, %v2276
        %v2287 = vunpack.c.l.s4 1934713408
        %v2288 = vunpack.c.0.s8 %v2287
        %v2289 = vlaneseq
        %v2290 = vshrl.u32 %v2289, 7
        %v2291 = vsub.s32 %v2288, %v2290
        %v2292 = vrot.slane %v2284, %v2291
        %v2294 = vunpack.c.l.s4 1934713408
        %v2295 = vunpack.c.0.s8 %v2294
        %v2296 = vlaneseq
        %v2297 = vshrl.u32 %v2296, 7
        %v2298 = vsub.s32 %v2295, %v2297
        %v2299 = vrot.slane %v2285, %v2298
        %v2300 = vcombine.low %v2268, %v2283
        %v2301 = vcombine.high %v2268, %v2283
        %v2303 = vunpack.c.l.s4 1934713408
        %v2304 = vunpack.c.0.s8 %v2303
        %v2305 = vlaneseq
        %v2306 = vshrl.u32 %v2305, 7
        %v2307 = vsub.s32 %v2304, %v2306
        %v2308 = vrot.slane %v2300, %v2307
        %v2310 = vunpack.c.l.s4 1934713408
        %v2311 = vunpack.c.0.s8 %v2310
        %v2312 = vlaneseq
        %v2313 = vshrl.u32 %v2312, 7
        %v2314 = vsub.s32 %v2311, %v2313
        %v2315 = vrot.slane %v2301, %v2314
        %v2316 = vcombine.high %v2292, 0
        %v2317 = vcombine.high %v2299, 0
        %v2318 = vcombine.high %v2308, 0
        %v2319 = vcombine.high %v2315, 0
        %v2320 = vcombine.high %v2238, %v2252
        %v2322 = vunpack.c.l.s4 1983009808
        %v2323 = vunpack.c.0.s8 %v2322
        %v2324 = vlaneseq
        %v2325 = vshrl.u32 %v2324, 7
        %v2326 = vsub.s32 %v2323, %v2325
        %v2327 = vrot.slane %v2238, %v2326
        %v2329 = vunpack.c.l.s4 1983009808
        %v2330 = vunpack.c.0.s8 %v2329
        %v2331 = vlaneseq
        %v2332 = vshrl.u32 %v2331, 7
        %v2333 = vsub.s32 %v2330, %v2332
        %v2334 = vrot.slane %v2320, %v2333
        %v2335 = vcombine.high %v2246, %v2252
        %v2337 = vunpack.c.l.s4 1983009808
        %v2338 = vunpack.c.0.s8 %v2337
        %v2339 = vlaneseq
        %v2340 = vshrl.u32 %v2339, 7
        %v2341 = vsub.s32 %v2338, %v2340
        %v2342 = vrot.slane %v2246, %v2341
        %v2344 = vunpack.c.l.s4 1983009808
        %v2345 = vunpack.c.0.s8 %v2344
        %v2346 = vlaneseq
        %v2347 = vshrl.u32 %v2346, 7
        %v2348 = vsub.s32 %v2345, %v2347
        %v2349 = vrot.slane %v2335, %v2348
        %v2350 = vcombine.low %v2327, %v2342
        %v2351 = vcombine.high %v2327, %v2342
        %v2353 = vunpack.c.l.s4 1934713408
        %v2354 = vunpack.c.0.s8 %v2353
        %v2355 = vlaneseq
        %v2356 = vshrl.u32 %v2355, 7
        %v2357 = vsub.s32 %v2354, %v2356
        %v2358 = vrot.slane %v2350, %v2357
        %v2360 = vunpack.c.l.s4 1934713408
        %v2361 = vunpack.c.0.s8 %v2360
        %v2362 = vlaneseq
        %v2363 = vshrl.u32 %v2362, 7
        %v2364 = vsub.s32 %v2361, %v2363
        %v2365 = vrot.slane %v2351, %v2364
        %v2366 = vcombine.low %v2334, %v2349
        %v2367 = vcombine.high %v2334, %v2349
        %v2369 = vunpack.c.l.s4 1934713408
        %v2370 = vunpack.c.0.s8 %v2369
        %v2371 = vlaneseq
        %v2372 = vshrl.u32 %v2371, 7
        %v2373 = vsub.s32 %v2370, %v2372
        %v2374 = vrot.slane %v2366, %v2373
        %v2376 = vunpack.c.l.s4 1934713408
        %v2377 = vunpack.c.0.s8 %v2376
        %v2378 = vlaneseq
        %v2379 = vshrl.u32 %v2378, 7
        %v2380 = vsub.s32 %v2377, %v2379
        %v2381 = vrot.slane %v2367, %v2380
        %v2382 = vcombine.high %v2358, 0
        %v2383 = vcombine.high %v2365, 0
        %v2384 = vcombine.high %v2374, 0
        %v2385 = vcombine.high %v2381, 0
        %v2386 = vcombine.low %v2292, %v2299
        %v2388 = vunpack.c.l.s4 1983009808
        %v2389 = vunpack.c.0.s8 %v2388
        %v2390 = vlaneseq
        %v2391 = vshrl.u32 %v2390, 7
        %v2392 = vsub.s32 %v2389, %v2391
        %v2393 = vrot.slane %v2386, %v2392
        %v2394 = vcombine.low %v2316, %v2317
        %v2396 = vunpack.c.l.s4 1983009808
        %v2397 = vunpack.c.0.s8 %v2396
        %v2398 = vlaneseq
        %v2399 = vshrl.u32 %v2398, 7
        %v2400 = vsub.s32 %v2397, %v2399
        %v2401 = vrot.slane %v2394, %v2400
        %v2402 = vcombine.low %v2308, %v2315
        %v2404 = vunpack.c.l.s4 1983009808
        %v2405 = vunpack.c.0.s8 %v2404
        %v2406 = vlaneseq
        %v2407 = vshrl.u32 %v2406, 7
        %v2408 = vsub.s32 %v2405, %v2407
        %v2409 = vrot.slane %v2402, %v2408
        %v2410 = vcombine.low %v2318, %v2319
        %v2412 = vunpack.c.l.s4 1983009808
        %v2413 = vunpack.c.0.s8 %v2412
        %v2414 = vlaneseq
        %v2415 = vshrl.u32 %v2414, 7
        %v2416 = vsub.s32 %v2413, %v2415
        %v2417 = vrot.slane %v2410, %v2416
        %v2418 = vcombine.low %v2393, %v2401
        %v2420 = vunpack.c.l.s4 1934713408
        %v2421 = vunpack.c.0.s8 %v2420
        %v2422 = vlaneseq
        %v2423 = vshrl.u32 %v2422, 7
        %v2424 = vsub.s32 %v2421, %v2423
        %v2425 = vrot.slane %v2418, %v2424
        %v2426 = vcombine.low %v2409, %v2417
        %v2428 = vunpack.c.l.s4 1934713408
        %v2429 = vunpack.c.0.s8 %v2428
        %v2430 = vlaneseq
        %v2431 = vshrl.u32 %v2430, 7
        %v2432 = vsub.s32 %v2429, %v2431
        %v2433 = vrot.slane %v2426, %v2432
        %v2434 = vcombine.low %v2425, %v2433
        %v2435 = vcombine.high %v2425, %v2433
        %v2436 = vcombine.low %v2358, %v2365
        %v2438 = vunpack.c.l.s4 1983009808
        %v2439 = vunpack.c.0.s8 %v2438
        %v2440 = vlaneseq
        %v2441 = vshrl.u32 %v2440, 7
        %v2442 = vsub.s32 %v2439, %v2441
        %v2443 = vrot.slane %v2436, %v2442
        %v2444 = vcombine.low %v2382, %v2383
        %v2446 = vunpack.c.l.s4 1983009808
        %v2447 = vunpack.c.0.s8 %v2446
        %v2448 = vlaneseq
        %v2449 = vshrl.u32 %v2448, 7
        %v2450 = vsub.s32 %v2447, %v2449
        %v2451 = vrot.slane %v2444, %v2450
        %v2452 = vcombine.low %v2374, %v2381
        %v2454 = vunpack.c.l.s4 1983009808
        %v2455 = vunpack.c.0.s8 %v2454
        %v2456 = vlaneseq
        %v2457 = vshrl.u32 %v2456, 7
        %v2458 = vsub.s32 %v2455, %v2457
        %v2459 = vrot.slane %v2452, %v2458
        %v2460 = vcombine.low %v2384, %v2385
        %v2462 = vunpack.c.l.s4 1983009808
        %v2463 = vunpack.c.0.s8 %v2462
        %v2464 = vlaneseq
        %v2465 = vshrl.u32 %v2464, 7
        %v2466 = vsub.s32 %v2463, %v2465
        %v2467 = vrot.slane %v2460, %v2466
        %v2468 = vcombine.low %v2443, %v2451
        %v2470 = vunpack.c.l.s4 1934713408
        %v2471 = vunpack.c.0.s8 %v2470
        %v2472 = vlaneseq
        %v2473 = vshrl.u32 %v2472, 7
        %v2474 = vsub.s32 %v2471, %v2473
        %v2475 = vrot.slane %v2468, %v2474
        %v2476 = vcombine.low %v2459, %v2467
        %v2478 = vunpack.c.l.s4 1934713408
        %v2479 = vunpack.c.0.s8 %v2478
        %v2480 = vlaneseq
        %v2481 = vshrl.u32 %v2480, 7
        %v2482 = vsub.s32 %v2479, %v2481
        %v2483 = vrot.slane %v2476, %v2482
        %v2484 = vcombine.low %v2475, %v2483
        %v2485 = vcombine.high %v2475, %v2483
        %v2488 = vpack.i.b16 %v2484, %v2434
        %v2489 = vshrl.u32 %v2434, 16
        %v2490 = vshrl.u32 %v2484, 16
        %v2491 = vpack.i.b16 %v2490, %v2489
        %v2494 = vpack.i.b16 %v2485, %v2435
        %v2495 = vshrl.u32 %v2435, 16
        %v2496 = vshrl.u32 %v2485, 16
        %v2497 = vpack.i.b16 %v2496, %v2495
        %v2498 = vld [vmem:[#allocation3] sm:$0xf]
        %v2499 = vld [vmem:[#allocation3 + $0x4] sm:$0xf]
        %v2500 = vld [vmem:[#allocation3 + $0x8] sm:$0xf]
        %v2501 = vld [vmem:[#allocation3 + $0xc] sm:$0xf]
        %v2502 = vld [vmem:[#allocation3 + $0x10] sm:$0xf]
        %v2503 = vld [vmem:[#allocation3 + $0x14] sm:$0xf]
        %v2504 = vld [vmem:[#allocation3 + $0x18] sm:$0xf]
        %v2505 = vld [vmem:[#allocation3 + $0x1c] sm:$0xf]
        %v2506 = vld [vmem:[#allocation3 + $0x20] sm:$0xf]
        %v2507 = vld [vmem:[#allocation3 + $0x24] sm:$0xf]
        %v2508 = vld [vmem:[#allocation3 + $0x28] sm:$0xf]
        %v2509 = vld [vmem:[#allocation3 + $0x2c] sm:$0xf]
        %v2510 = vld [vmem:[#allocation3 + $0x30] sm:$0xf]
        %v2511 = vld [vmem:[#allocation3 + $0x34] sm:$0xf]
        %v2512 = vld [vmem:[#allocation3 + $0x38] sm:$0xf]
        %v2513 = vld [vmem:[#allocation3 + $0x3c] sm:$0xf]
        %v2514 = vld [vmem:[#allocation4] sm:$0xf]
        %v2515 = vld [vmem:[#allocation4 + $0x4] sm:$0xf]
        %v2516 = vld [vmem:[#allocation4 + $0x8] sm:$0xf]
        %v2517 = vld [vmem:[#allocation4 + $0xc] sm:$0xf]
        %v2518 = vld [vmem:[#allocation4 + $0x10] sm:$0xf]
        %v2519 = vld [vmem:[#allocation4 + $0x14] sm:$0xf]
        %v2520 = vld [vmem:[#allocation4 + $0x18] sm:$0xf]
        %v2521 = vld [vmem:[#allocation4 + $0x1c] sm:$0xf]
        %v2522 = vld [vmem:[#allocation4 + $0x20] sm:$0xf]
        %v2523 = vld [vmem:[#allocation4 + $0x24] sm:$0xf]
        %v2524 = vld [vmem:[#allocation4 + $0x28] sm:$0xf]
        %v2525 = vld [vmem:[#allocation4 + $0x2c] sm:$0xf]
        %v2526 = vld [vmem:[#allocation4 + $0x30] sm:$0xf]
        %v2527 = vld [vmem:[#allocation4 + $0x34] sm:$0xf]
        %v2528 = vld [vmem:[#allocation4 + $0x38] sm:$0xf]
        %v2529 = vld [vmem:[#allocation4 + $0x3c] sm:$0xf]
        %v2530 = vld [vmem:[%s700] sm:$0xf]
        %v2531 = vld [vmem:[%s700 + $0x4] sm:$0xf]
        %v2532 = vunpack.c.l.bf16 %v2530
        %v2533 = vunpack.c.l.bf16 %v2531
        %v2538 = vunpack.c.l.b16 %v2498
        %v2539 = vunpack.c.l.b16 %v2499
        %v2540 = vunpack.c.l.b16 %v2500
        %v2541 = vunpack.c.l.b16 %v2501
        %v2542 = vpack.c.b16 %v2539, %v2538
        %v2543 = vpack.c.b16 %v2541, %v2540
        %vm2544 = vcmask 64512
        %v2546 = vsel %vm2544, %v2488, 0
        %v2549 = vsel %vm2544, %v2542, 0
        %v2552 = vsel %vm2544, %v2543, 0
        %2554 = vmatprep.subr.bf16.mxu0 0
        %2555 = vmatpush1.bf16.xpose.msra.mxu0 0
        %2556 = vmatprep.subr.bf16.mxu0 0
        %2557 = vmatpush1.bf16.xpose.msra.mxu0 0
        %2558 = vmatprep.subr.bf16.mxu0 0
        %2559 = vmatpush1.bf16.xpose.msra.mxu0 0
        %2560 = vmatprep.subr.bf16.mxu0 0
        %2561 = vmatpush1.bf16.xpose.msra.mxu0 0
        %2562 = vmatprep.subr.bf16.mxu0 0
        %2563 = vmatpush1.bf16.xpose.msra.mxu0 0
        %2564 = vmatprep.subr.bf16.mxu0 0
        %2565 = vmatpush1.bf16.xpose.msra.mxu0 0
        %2566 = vmatprep.subr.bf16.mxu0 0
        %2567 = vmatpush1.bf16.xpose.msra.mxu0 %v2552
        %2568 = vmatprep.subr.bf16.mxu0 0
        %2569 = vmatpush1.bf16.xpose.msra.mxu0 %v2549
        %2570 = vmatprep.subr.bf16.mxu0 0
        %2571 = vmatpush2.bf16.xpose.msra.mxu0 0
        %2572 = vmatprep.subr.bf16.mxu0 0
        %2573 = vmatpush2.bf16.xpose.msra.mxu0 0
        %2574 = vmatprep.subr.bf16.mxu0 0
        %2575 = vmatpush2.bf16.xpose.msra.mxu0 0
        %2576 = vmatprep.subr.bf16.mxu0 0
        %2577 = vmatpush2.bf16.xpose.msra.mxu0 0
        %2578 = vmatprep.subr.bf16.mxu0 0
        %2579 = vmatpush2.bf16.xpose.msra.mxu0 0
        %2580 = vmatprep.subr.bf16.mxu0 0
        %2581 = vmatpush2.bf16.xpose.msra.mxu0 0
        %2582 = vmatprep.subr.bf16.mxu0 0
        %2583 = vmatpush2.bf16.xpose.msra.mxu0 0
        %2584 = vmatprep.subr.bf16.mxu0 0
        %2585 = vmatpush2.bf16.xpose.msra.mxu0 0
        %2586 = vmatprep.mubr.bf16.mxu0 0
        %2587 = vmatmul.mubr.bf16.gmra.mxu0 %v2546
        %v2588 = vpop.f32.mrf.mxu0
        %v2589 = vadd.f32 %v2532, %v2588
        %v2590 = vpop.f32.mrf.mxu0
        %v2591 = vpop.f32.mrf.mxu0
        %v2592 = vadd.f32 %v2533, %v2591
        %v2593 = vpop.f32.mrf.mxu0
        %2594 = vdwg.mxu0
        %v2599 = vunpack.c.l.b16 %v2502
        %v2600 = vunpack.c.l.b16 %v2503
        %v2601 = vunpack.c.l.b16 %v2504
        %v2602 = vunpack.c.l.b16 %v2505
        %v2603 = vpack.c.b16 %v2600, %v2599
        %v2604 = vpack.c.b16 %v2602, %v2601
        %v2606 = vsel %vm2544, %v2491, 0
        %v2609 = vsel %vm2544, %v2603, 0
        %v2612 = vsel %vm2544, %v2604, 0
        %2614 = vmatprep.subr.bf16.mxu0 0
        %2615 = vmatpush1.bf16.xpose.msra.mxu0 0
        %2616 = vmatprep.subr.bf16.mxu0 0
        %2617 = vmatpush1.bf16.xpose.msra.mxu0 0
        %2618 = vmatprep.subr.bf16.mxu0 0
        %2619 = vmatpush1.bf16.xpose.msra.mxu0 0
        %2620 = vmatprep.subr.bf16.mxu0 0
        %2621 = vmatpush1.bf16.xpose.msra.mxu0 0
        %2622 = vmatprep.subr.bf16.mxu0 0
        %2623 = vmatpush1.bf16.xpose.msra.mxu0 0
        %2624 = vmatprep.subr.bf16.mxu0 0
        %2625 = vmatpush1.bf16.xpose.msra.mxu0 0
        %2626 = vmatprep.subr.bf16.mxu0 0
        %2627 = vmatpush1.bf16.xpose.msra.mxu0 %v2612
        %2628 = vmatprep.subr.bf16.mxu0 0
        %2629 = vmatpush1.bf16.xpose.msra.mxu0 %v2609
        %2630 = vmatprep.subr.bf16.mxu0 0
        %2631 = vmatpush2.bf16.xpose.msra.mxu0 0
        %2632 = vmatprep.subr.bf16.mxu0 0
        %2633 = vmatpush2.bf16.xpose.msra.mxu0 0
        %2634 = vmatprep.subr.bf16.mxu0 0
        %2635 = vmatpush2.bf16.xpose.msra.mxu0 0
        %2636 = vmatprep.subr.bf16.mxu0 0
        %2637 = vmatpush2.bf16.xpose.msra.mxu0 0
        %2638 = vmatprep.subr.bf16.mxu0 0
        %2639 = vmatpush2.bf16.xpose.msra.mxu0 0
        %2640 = vmatprep.subr.bf16.mxu0 0
        %2641 = vmatpush2.bf16.xpose.msra.mxu0 0
        %2642 = vmatprep.subr.bf16.mxu0 0
        %2643 = vmatpush2.bf16.xpose.msra.mxu0 0
        %2644 = vmatprep.subr.bf16.mxu0 0
        %2645 = vmatpush2.bf16.xpose.msra.mxu0 0
        %2646 = vmatprep.mubr.bf16.mxu0 0
        %2647 = vmatmul.mubr.bf16.gmra.mxu0 %v2606
        %v2648 = vpop.f32.mrf.mxu0
        %v2649 = vadd.f32 %v2532, %v2648
        %v2650 = vpop.f32.mrf.mxu0
        %v2651 = vpop.f32.mrf.mxu0
        %v2652 = vadd.f32 %v2533, %v2651
        %v2653 = vpop.f32.mrf.mxu0
        %2654 = vdwg.mxu0
        %v2659 = vunpack.c.l.b16 %v2506
        %v2660 = vunpack.c.l.b16 %v2507
        %v2661 = vunpack.c.l.b16 %v2508
        %v2662 = vunpack.c.l.b16 %v2509
        %v2663 = vpack.c.b16 %v2660, %v2659
        %v2664 = vpack.c.b16 %v2662, %v2661
        %v2666 = vsel %vm2544, %v2494, 0
        %v2669 = vsel %vm2544, %v2663, 0
        %v2672 = vsel %vm2544, %v2664, 0
        %2674 = vmatprep.subr.bf16.mxu0 0
        %2675 = vmatpush1.bf16.xpose.msra.mxu0 0
        %2676 = vmatprep.subr.bf16.mxu0 0
        %2677 = vmatpush1.bf16.xpose.msra.mxu0 0
        %2678 = vmatprep.subr.bf16.mxu0 0
        %2679 = vmatpush1.bf16.xpose.msra.mxu0 0
        %2680 = vmatprep.subr.bf16.mxu0 0
        %2681 = vmatpush1.bf16.xpose.msra.mxu0 0
        %2682 = vmatprep.subr.bf16.mxu0 0
        %2683 = vmatpush1.bf16.xpose.msra.mxu0 0
        %2684 = vmatprep.subr.bf16.mxu0 0
        %2685 = vmatpush1.bf16.xpose.msra.mxu0 0
        %2686 = vmatprep.subr.bf16.mxu0 0
        %2687 = vmatpush1.bf16.xpose.msra.mxu0 %v2672
        %2688 = vmatprep.subr.bf16.mxu0 0
        %2689 = vmatpush1.bf16.xpose.msra.mxu0 %v2669
        %2690 = vmatprep.subr.bf16.mxu0 0
        %2691 = vmatpush2.bf16.xpose.msra.mxu0 0
        %2692 = vmatprep.subr.bf16.mxu0 0
        %2693 = vmatpush2.bf16.xpose.msra.mxu0 0
        %2694 = vmatprep.subr.bf16.mxu0 0
        %2695 = vmatpush2.bf16.xpose.msra.mxu0 0
        %2696 = vmatprep.subr.bf16.mxu0 0
        %2697 = vmatpush2.bf16.xpose.msra.mxu0 0
        %2698 = vmatprep.subr.bf16.mxu0 0
        %2699 = vmatpush2.bf16.xpose.msra.mxu0 0
        %2700 = vmatprep.subr.bf16.mxu0 0
        %2701 = vmatpush2.bf16.xpose.msra.mxu0 0
        %2702 = vmatprep.subr.bf16.mxu0 0
        %2703 = vmatpush2.bf16.xpose.msra.mxu0 0
        %2704 = vmatprep.subr.bf16.mxu0 0
        %2705 = vmatpush2.bf16.xpose.msra.mxu0 0
        %2706 = vmatprep.mubr.bf16.mxu0 0
        %2707 = vmatmul.mubr.bf16.gmra.mxu0 %v2666
        %v2708 = vpop.f32.mrf.mxu0
        %v2709 = vadd.f32 %v2532, %v2708
        %v2710 = vpop.f32.mrf.mxu0
        %v2711 = vpop.f32.mrf.mxu0
        %v2712 = vadd.f32 %v2533, %v2711
        %v2713 = vpop.f32.mrf.mxu0
        %2714 = vdwg.mxu0
        %v2719 = vunpack.c.l.b16 %v2510
        %v2720 = vunpack.c.l.b16 %v2511
        %v2721 = vunpack.c.l.b16 %v2512
        %v2722 = vunpack.c.l.b16 %v2513
        %v2723 = vpack.c.b16 %v2720, %v2719
        %v2724 = vpack.c.b16 %v2722, %v2721
        %v2726 = vsel %vm2544, %v2497, 0
        %v2729 = vsel %vm2544, %v2723, 0
        %v2732 = vsel %vm2544, %v2724, 0
        %2734 = vmatprep.subr.bf16.mxu0 0
        %2735 = vmatpush1.bf16.xpose.msra.mxu0 0
        %2736 = vmatprep.subr.bf16.mxu0 0
        %2737 = vmatpush1.bf16.xpose.msra.mxu0 0
        %2738 = vmatprep.subr.bf16.mxu0 0
        %2739 = vmatpush1.bf16.xpose.msra.mxu0 0
        %2740 = vmatprep.subr.bf16.mxu0 0
        %2741 = vmatpush1.bf16.xpose.msra.mxu0 0
        %2742 = vmatprep.subr.bf16.mxu0 0
        %2743 = vmatpush1.bf16.xpose.msra.mxu0 0
        %2744 = vmatprep.subr.bf16.mxu0 0
        %2745 = vmatpush1.bf16.xpose.msra.mxu0 0
        %2746 = vmatprep.subr.bf16.mxu0 0
        %2747 = vmatpush1.bf16.xpose.msra.mxu0 %v2732
        %2748 = vmatprep.subr.bf16.mxu0 0
        %2749 = vmatpush1.bf16.xpose.msra.mxu0 %v2729
        %2750 = vmatprep.subr.bf16.mxu0 0
        %2751 = vmatpush2.bf16.xpose.msra.mxu0 0
        %2752 = vmatprep.subr.bf16.mxu0 0
        %2753 = vmatpush2.bf16.xpose.msra.mxu0 0
        %2754 = vmatprep.subr.bf16.mxu0 0
        %2755 = vmatpush2.bf16.xpose.msra.mxu0 0
        %2756 = vmatprep.subr.bf16.mxu0 0
        %2757 = vmatpush2.bf16.xpose.msra.mxu0 0
        %2758 = vmatprep.subr.bf16.mxu0 0
        %2759 = vmatpush2.bf16.xpose.msra.mxu0 0
        %2760 = vmatprep.subr.bf16.mxu0 0
        %2761 = vmatpush2.bf16.xpose.msra.mxu0 0
        %2762 = vmatprep.subr.bf16.mxu0 0
        %2763 = vmatpush2.bf16.xpose.msra.mxu0 0
        %2764 = vmatprep.subr.bf16.mxu0 0
        %2765 = vmatpush2.bf16.xpose.msra.mxu0 0
        %2766 = vmatprep.mubr.bf16.mxu0 0
        %2767 = vmatmul.mubr.bf16.gmra.mxu0 %v2726
        %v2768 = vpop.f32.mrf.mxu0
        %v2769 = vadd.f32 %v2532, %v2768
        %v2770 = vpop.f32.mrf.mxu0
        %v2771 = vpop.f32.mrf.mxu0
        %v2772 = vadd.f32 %v2533, %v2771
        %v2773 = vpop.f32.mrf.mxu0
        %2774 = vdwg.mxu0
        %v2775 = vsel %vm2179, %v2589, -inf
        %2776 = vmax.xlane.f32.xlu0 %v2775
        %v2777 = vpop.xlane.xlu0 %2776
        %v2778 = vsel %vm2179, %v2592, -inf
        %2779 = vmax.xlane.f32.xlu0 %v2778
        %v2780 = vpop.xlane.xlu0 %2779
        %v2781 = vsel %vm2179, %v2649, -inf
        %2782 = vmax.xlane.f32.xlu0 %v2781
        %v2783 = vpop.xlane.xlu0 %2782
        %v2784 = vsel %vm2179, %v2652, -inf
        %2785 = vmax.xlane.f32.xlu0 %v2784
        %v2786 = vpop.xlane.xlu0 %2785
        %v2787 = vsel %vm2179, %v2709, -inf
        %2788 = vmax.xlane.f32.xlu0 %v2787
        %v2789 = vpop.xlane.xlu0 %2788
        %v2790 = vsel %vm2179, %v2712, -inf
        %2791 = vmax.xlane.f32.xlu0 %v2790
        %v2792 = vpop.xlane.xlu0 %2791
        %v2793 = vsel %vm2179, %v2769, -inf
        %2794 = vmax.xlane.f32.xlu0 %v2793
        %v2795 = vpop.xlane.xlu0 %2794
        %v2796 = vsel %vm2179, %v2772, -inf
        %2797 = vmax.xlane.f32.xlu0 %v2796
        %v2798 = vpop.xlane.xlu0 %2797
        %v2799 = vsub.f32 %v2589, %v2777
        %v2800 = vsub.f32 %v2592, %v2780
        %v2801 = vsub.f32 %v2649, %v2783
        %v2802 = vsub.f32 %v2652, %v2786
        %v2803 = vsub.f32 %v2709, %v2789
        %v2804 = vsub.f32 %v2712, %v2792
        %v2805 = vsub.f32 %v2769, %v2795
        %v2806 = vsub.f32 %v2772, %v2798
        %v2807 = vmul.f32 %v2799, 1.442695
        %v2808 = vpow.pop %v2807
        %v2809 = vmul.f32 %v2800, 1.442695
        %v2810 = vpow.pop %v2809
        %v2811 = vmul.f32 %v2801, 1.442695
        %v2812 = vpow.pop %v2811
        %v2813 = vmul.f32 %v2802, 1.442695
        %v2814 = vpow.pop %v2813
        %v2815 = vmul.f32 %v2803, 1.442695
        %v2816 = vpow.pop %v2815
        %v2817 = vmul.f32 %v2804, 1.442695
        %v2818 = vpow.pop %v2817
        %v2819 = vmul.f32 %v2805, 1.442695
        %v2820 = vpow.pop %v2819
        %v2821 = vmul.f32 %v2806, 1.442695
        %v2822 = vpow.pop %v2821
        %v2823 = vsel %vm2179, %v2808, 0.0
        %2824 = vadd.xlane.f32.xlu0 %v2823
        %v2825 = vpop.xlane.xlu0 %2824
        %v2826 = vsel %vm2179, %v2810, 0.0
        %2827 = vadd.xlane.f32.xlu0 %v2826
        %v2828 = vpop.xlane.xlu0 %2827
        %v2829 = vsel %vm2179, %v2812, 0.0
        %2830 = vadd.xlane.f32.xlu0 %v2829
        %v2831 = vpop.xlane.xlu0 %2830
        %v2832 = vsel %vm2179, %v2814, 0.0
        %2833 = vadd.xlane.f32.xlu0 %v2832
        %v2834 = vpop.xlane.xlu0 %2833
        %v2835 = vsel %vm2179, %v2816, 0.0
        %2836 = vadd.xlane.f32.xlu0 %v2835
        %v2837 = vpop.xlane.xlu0 %2836
        %v2838 = vsel %vm2179, %v2818, 0.0
        %2839 = vadd.xlane.f32.xlu0 %v2838
        %v2840 = vpop.xlane.xlu0 %2839
        %v2841 = vsel %vm2179, %v2820, 0.0
        %2842 = vadd.xlane.f32.xlu0 %v2841
        %v2843 = vpop.xlane.xlu0 %2842
        %v2844 = vsel %vm2179, %v2822, 0.0
        %2845 = vadd.xlane.f32.xlu0 %v2844
        %v2846 = vpop.xlane.xlu0 %2845
        %v2847 = vpack.c.bf16 %v2810, %v2808
        %v2848 = vpack.c.bf16 %v2814, %v2812
        %v2849 = vpack.c.bf16 %v2818, %v2816
        %v2850 = vpack.c.bf16 %v2822, %v2820
        %v2855 = vunpack.c.l.b16 %v2514
        %v2856 = vunpack.c.l.b16 %v2515
        %v2857 = vunpack.c.l.b16 %v2516
        %v2858 = vunpack.c.l.b16 %v2517
        %v2859 = vpack.c.b16 %v2856, %v2855
        %v2860 = vpack.c.b16 %v2858, %v2857
        %v2864 = vsel %vm2179, %v2847, 0
        %2866 = vmatprep.subr.bf16.mxu0 0
        %2867 = vmatpush1.bf16.msra.mxu0 0
        %2868 = vmatprep.subr.bf16.mxu0 0
        %2869 = vmatpush1.bf16.msra.mxu0 0
        %2870 = vmatprep.subr.bf16.mxu0 0
        %2871 = vmatpush1.bf16.msra.mxu0 0
        %2872 = vmatprep.subr.bf16.mxu0 0
        %2873 = vmatpush1.bf16.msra.mxu0 0
        %2874 = vmatprep.subr.bf16.mxu0 0
        %2875 = vmatpush1.bf16.msra.mxu0 0
        %2876 = vmatprep.subr.bf16.mxu0 0
        %2877 = vmatpush1.bf16.msra.mxu0 0
        %2878 = vmatprep.subr.bf16.mxu0 0
        %2879 = vmatpush1.bf16.msra.mxu0 %v2860
        %2880 = vmatprep.subr.bf16.mxu0 0
        %2881 = vmatpush1.bf16.msra.mxu0 %v2859
        %2882 = vmatprep.subr.bf16.mxu0 0
        %2883 = vmatpush2.bf16.msra.mxu0 0
        %2884 = vmatprep.subr.bf16.mxu0 0
        %2885 = vmatpush2.bf16.msra.mxu0 0
        %2886 = vmatprep.subr.bf16.mxu0 0
        %2887 = vmatpush2.bf16.msra.mxu0 0
        %2888 = vmatprep.subr.bf16.mxu0 0
        %2889 = vmatpush2.bf16.msra.mxu0 0
        %2890 = vmatprep.subr.bf16.mxu0 0
        %2891 = vmatpush2.bf16.msra.mxu0 0
        %2892 = vmatprep.subr.bf16.mxu0 0
        %2893 = vmatpush2.bf16.msra.mxu0 0
        %2894 = vmatprep.subr.bf16.mxu0 0
        %2895 = vmatpush2.bf16.msra.mxu0 0
        %2896 = vmatprep.subr.bf16.mxu0 0
        %2897 = vmatpush2.bf16.msra.mxu0 0
        %2898 = vmatprep.mubr.bf16.mxu0 0
        %2899 = vmatmul.mubr.bf16.gmra.mxu0 %v2864
        %v2900 = vpop.f32.mrf.mxu0
        %v2901 = vadd.f32 0.0, %v2900
        %v2902 = vpop.f32.mrf.mxu0
        %v2903 = vpop.f32.mrf.mxu0
        %v2904 = vadd.f32 0.0, %v2903
        %v2905 = vpop.f32.mrf.mxu0
        %2906 = vdwg.mxu0
        %v2911 = vunpack.c.l.b16 %v2518
        %v2912 = vunpack.c.l.b16 %v2519
        %v2913 = vunpack.c.l.b16 %v2520
        %v2914 = vunpack.c.l.b16 %v2521
        %v2915 = vpack.c.b16 %v2912, %v2911
        %v2916 = vpack.c.b16 %v2914, %v2913
        %v2920 = vsel %vm2179, %v2848, 0
        %2922 = vmatprep.subr.bf16.mxu0 0
        %2923 = vmatpush1.bf16.msra.mxu0 0
        %2924 = vmatprep.subr.bf16.mxu0 0
        %2925 = vmatpush1.bf16.msra.mxu0 0
        %2926 = vmatprep.subr.bf16.mxu0 0
        %2927 = vmatpush1.bf16.msra.mxu0 0
        %2928 = vmatprep.subr.bf16.mxu0 0
        %2929 = vmatpush1.bf16.msra.mxu0 0
        %2930 = vmatprep.subr.bf16.mxu0 0
        %2931 = vmatpush1.bf16.msra.mxu0 0
        %2932 = vmatprep.subr.bf16.mxu0 0
        %2933 = vmatpush1.bf16.msra.mxu0 0
        %2934 = vmatprep.subr.bf16.mxu0 0
        %2935 = vmatpush1.bf16.msra.mxu0 %v2916
        %2936 = vmatprep.subr.bf16.mxu0 0
        %2937 = vmatpush1.bf16.msra.mxu0 %v2915
        %2938 = vmatprep.subr.bf16.mxu0 0
        %2939 = vmatpush2.bf16.msra.mxu0 0
        %2940 = vmatprep.subr.bf16.mxu0 0
        %2941 = vmatpush2.bf16.msra.mxu0 0
        %2942 = vmatprep.subr.bf16.mxu0 0
        %2943 = vmatpush2.bf16.msra.mxu0 0
        %2944 = vmatprep.subr.bf16.mxu0 0
        %2945 = vmatpush2.bf16.msra.mxu0 0
        %2946 = vmatprep.subr.bf16.mxu0 0
        %2947 = vmatpush2.bf16.msra.mxu0 0
        %2948 = vmatprep.subr.bf16.mxu0 0
        %2949 = vmatpush2.bf16.msra.mxu0 0
        %2950 = vmatprep.subr.bf16.mxu0 0
        %2951 = vmatpush2.bf16.msra.mxu0 0
        %2952 = vmatprep.subr.bf16.mxu0 0
        %2953 = vmatpush2.bf16.msra.mxu0 0
        %2954 = vmatprep.mubr.bf16.mxu0 0
        %2955 = vmatmul.mubr.bf16.gmra.mxu0 %v2920
        %v2956 = vpop.f32.mrf.mxu0
        %v2957 = vadd.f32 0.0, %v2956
        %v2958 = vpop.f32.mrf.mxu0
        %v2959 = vpop.f32.mrf.mxu0
        %v2960 = vadd.f32 0.0, %v2959
        %v2961 = vpop.f32.mrf.mxu0
        %2962 = vdwg.mxu0
        %v2967 = vunpack.c.l.b16 %v2522
        %v2968 = vunpack.c.l.b16 %v2523
        %v2969 = vunpack.c.l.b16 %v2524
        %v2970 = vunpack.c.l.b16 %v2525
        %v2971 = vpack.c.b16 %v2968, %v2967
        %v2972 = vpack.c.b16 %v2970, %v2969
        %v2976 = vsel %vm2179, %v2849, 0
        %2978 = vmatprep.subr.bf16.mxu0 0
        %2979 = vmatpush1.bf16.msra.mxu0 0
        %2980 = vmatprep.subr.bf16.mxu0 0
        %2981 = vmatpush1.bf16.msra.mxu0 0
        %2982 = vmatprep.subr.bf16.mxu0 0
        %2983 = vmatpush1.bf16.msra.mxu0 0
        %2984 = vmatprep.subr.bf16.mxu0 0
        %2985 = vmatpush1.bf16.msra.mxu0 0
        %2986 = vmatprep.subr.bf16.mxu0 0
        %2987 = vmatpush1.bf16.msra.mxu0 0
        %2988 = vmatprep.subr.bf16.mxu0 0
        %2989 = vmatpush1.bf16.msra.mxu0 0
        %2990 = vmatprep.subr.bf16.mxu0 0
        %2991 = vmatpush1.bf16.msra.mxu0 %v2972
        %2992 = vmatprep.subr.bf16.mxu0 0
        %2993 = vmatpush1.bf16.msra.mxu0 %v2971
        %2994 = vmatprep.subr.bf16.mxu0 0
        %2995 = vmatpush2.bf16.msra.mxu0 0
        %2996 = vmatprep.subr.bf16.mxu0 0
        %2997 = vmatpush2.bf16.msra.mxu0 0
        %2998 = vmatprep.subr.bf16.mxu0 0
        %2999 = vmatpush2.bf16.msra.mxu0 0
        %3000 = vmatprep.subr.bf16.mxu0 0
        %3001 = vmatpush2.bf16.msra.mxu0 0
        %3002 = vmatprep.subr.bf16.mxu0 0
        %3003 = vmatpush2.bf16.msra.mxu0 0
        %3004 = vmatprep.subr.bf16.mxu0 0
        %3005 = vmatpush2.bf16.msra.mxu0 0
        %3006 = vmatprep.subr.bf16.mxu0 0
        %3007 = vmatpush2.bf16.msra.mxu0 0
        %3008 = vmatprep.subr.bf16.mxu0 0
        %3009 = vmatpush2.bf16.msra.mxu0 0
        %3010 = vmatprep.mubr.bf16.mxu0 0
        %3011 = vmatmul.mubr.bf16.gmra.mxu0 %v2976
        %v3012 = vpop.f32.mrf.mxu0
        %v3013 = vadd.f32 0.0, %v3012
        %v3014 = vpop.f32.mrf.mxu0
        %v3015 = vpop.f32.mrf.mxu0
        %v3016 = vadd.f32 0.0, %v3015
        %v3017 = vpop.f32.mrf.mxu0
        %3018 = vdwg.mxu0
        %v3023 = vunpack.c.l.b16 %v2526
        %v3024 = vunpack.c.l.b16 %v2527
        %v3025 = vunpack.c.l.b16 %v2528
        %v3026 = vunpack.c.l.b16 %v2529
        %v3027 = vpack.c.b16 %v3024, %v3023
        %v3028 = vpack.c.b16 %v3026, %v3025
        %v3032 = vsel %vm2179, %v2850, 0
        %3034 = vmatprep.subr.bf16.mxu0 0
        %3035 = vmatpush1.bf16.msra.mxu0 0
        %3036 = vmatprep.subr.bf16.mxu0 0
        %3037 = vmatpush1.bf16.msra.mxu0 0
        %3038 = vmatprep.subr.bf16.mxu0 0
        %3039 = vmatpush1.bf16.msra.mxu0 0
        %3040 = vmatprep.subr.bf16.mxu0 0
        %3041 = vmatpush1.bf16.msra.mxu0 0
        %3042 = vmatprep.subr.bf16.mxu0 0
        %3043 = vmatpush1.bf16.msra.mxu0 0
        %3044 = vmatprep.subr.bf16.mxu0 0
        %3045 = vmatpush1.bf16.msra.mxu0 0
        %3046 = vmatprep.subr.bf16.mxu0 0
        %3047 = vmatpush1.bf16.msra.mxu0 %v3028
        %3048 = vmatprep.subr.bf16.mxu0 0
        %3049 = vmatpush1.bf16.msra.mxu0 %v3027
        %3050 = vmatprep.subr.bf16.mxu0 0
        %3051 = vmatpush2.bf16.msra.mxu0 0
        %3052 = vmatprep.subr.bf16.mxu0 0
        %3053 = vmatpush2.bf16.msra.mxu0 0
        %3054 = vmatprep.subr.bf16.mxu0 0
        %3055 = vmatpush2.bf16.msra.mxu0 0
        %3056 = vmatprep.subr.bf16.mxu0 0
        %3057 = vmatpush2.bf16.msra.mxu0 0
        %3058 = vmatprep.subr.bf16.mxu0 0
        %3059 = vmatpush2.bf16.msra.mxu0 0
        %3060 = vmatprep.subr.bf16.mxu0 0
        %3061 = vmatpush2.bf16.msra.mxu0 0
        %3062 = vmatprep.subr.bf16.mxu0 0
        %3063 = vmatpush2.bf16.msra.mxu0 0
        %3064 = vmatprep.subr.bf16.mxu0 0
        %3065 = vmatpush2.bf16.msra.mxu0 0
        %3066 = vmatprep.mubr.bf16.mxu0 0
        %3067 = vmatmul.mubr.bf16.gmra.mxu0 %v3032
        %v3068 = vpop.f32.mrf.mxu0
        %v3069 = vadd.f32 0.0, %v3068
        %v3070 = vpop.f32.mrf.mxu0
        %v3071 = vpop.f32.mrf.mxu0
        %v3072 = vadd.f32 0.0, %v3071
        %v3073 = vpop.f32.mrf.mxu0
        %3074 = vdwg.mxu0
        %v3075 = vrcp.pop %v2825
        %v3076 = vrcp.pop %v2828
        %v3077 = vrcp.pop %v2831
        %v3078 = vrcp.pop %v2834
        %v3079 = vrcp.pop %v2837
        %v3080 = vrcp.pop %v2840
        %v3081 = vrcp.pop %v2843
        %v3082 = vrcp.pop %v2846
        %v3083 = vmul.f32 %v2901, %v3075
        %v3084 = vmul.f32 %v2904, %v3076
        %v3085 = vmul.f32 %v2957, %v3077
        %v3086 = vmul.f32 %v2960, %v3078
        %v3087 = vmul.f32 %v3013, %v3079
        %v3088 = vmul.f32 %v3016, %v3080
        %v3089 = vmul.f32 %v3069, %v3081
        %v3090 = vmul.f32 %v3072, %v3082
        %v3091 = vpack.c.bf16 %v3084, %v3083
        %v3092 = vpack.c.bf16 %v3086, %v3085
        %v3093 = vpack.c.bf16 %v3088, %v3087
        %v3094 = vpack.c.bf16 %v3090, %v3089
        %v3095 = vld [vmem:[#allocation11] sm:$0xf]
        %v3096 = vld [vmem:[#allocation11 + $0x4] sm:$0xf]
        %v3097 = vld [vmem:[#allocation11 + $0x8] sm:$0xf]
        %v3098 = vld [vmem:[#allocation11 + $0xc] sm:$0xf]
        %v3100 = vsel %vm2544, %v3091, 0
        %vm3102 = vcmask 1043456
        %v3104 = vsel %vm3102, %v3095, 0
        %3106 = vmatprep.subr.bf16.mxu0 0
        %3107 = vmatpush1.bf16.msra.mxu0 0
        %3108 = vmatprep.subr.bf16.mxu0 0
        %3109 = vmatpush1.bf16.msra.mxu0 0
        %3110 = vmatprep.subr.bf16.mxu0 0
        %3111 = vmatpush1.bf16.msra.mxu0 0
        %3112 = vmatprep.subr.bf16.mxu0 0
        %3113 = vmatpush1.bf16.msra.mxu0 0
        %3114 = vmatprep.subr.bf16.mxu0 0
        %3115 = vmatpush1.bf16.msra.mxu0 0
        %3116 = vmatprep.subr.bf16.mxu0 0
        %3117 = vmatpush1.bf16.msra.mxu0 0
        %3118 = vmatprep.subr.bf16.mxu0 0
        %3119 = vmatpush1.bf16.msra.mxu0 0
        %3120 = vmatprep.subr.bf16.mxu0 0
        %3121 = vmatpush1.bf16.msra.mxu0 %v3104
        %3122 = vmatprep.subr.bf16.mxu0 0
        %3123 = vmatpush2.bf16.msra.mxu0 0
        %3124 = vmatprep.subr.bf16.mxu0 0
        %3125 = vmatpush2.bf16.msra.mxu0 0
        %3126 = vmatprep.subr.bf16.mxu0 0
        %3127 = vmatpush2.bf16.msra.mxu0 0
        %3128 = vmatprep.subr.bf16.mxu0 0
        %3129 = vmatpush2.bf16.msra.mxu0 0
        %3130 = vmatprep.subr.bf16.mxu0 0
        %3131 = vmatpush2.bf16.msra.mxu0 0
        %3132 = vmatprep.subr.bf16.mxu0 0
        %3133 = vmatpush2.bf16.msra.mxu0 0
        %3134 = vmatprep.subr.bf16.mxu0 0
        %3135 = vmatpush2.bf16.msra.mxu0 0
        %3136 = vmatprep.subr.bf16.mxu0 0
        %3137 = vmatpush2.bf16.msra.mxu0 0
        %3138 = vmatprep.mubr.bf16.mxu0 0
        %3139 = vmatmul.mubr.bf16.gmra.mxu0 %v3100
        %v3140 = vpop.f32.mrf.mxu0
        %v3141 = vadd.f32 0.0, %v3140
        %v3142 = vpop.f32.mrf.mxu0
        %v3143 = vpop.f32.mrf.mxu0
        %v3144 = vadd.f32 0.0, %v3143
        %v3145 = vpop.f32.mrf.mxu0
        %3146 = vdwg.mxu0
        %v3148 = vsel %vm2544, %v3092, 0
        %v3151 = vsel %vm3102, %v3096, 0
        %3153 = vmatprep.subr.bf16.mxu0 0
        %3154 = vmatpush1.bf16.msra.mxu0 0
        %3155 = vmatprep.subr.bf16.mxu0 0
        %3156 = vmatpush1.bf16.msra.mxu0 0
        %3157 = vmatprep.subr.bf16.mxu0 0
        %3158 = vmatpush1.bf16.msra.mxu0 0
        %3159 = vmatprep.subr.bf16.mxu0 0
        %3160 = vmatpush1.bf16.msra.mxu0 0
        %3161 = vmatprep.subr.bf16.mxu0 0
        %3162 = vmatpush1.bf16.msra.mxu0 0
        %3163 = vmatprep.subr.bf16.mxu0 0
        %3164 = vmatpush1.bf16.msra.mxu0 0
        %3165 = vmatprep.subr.bf16.mxu0 0
        %3166 = vmatpush1.bf16.msra.mxu0 0
        %3167 = vmatprep.subr.bf16.mxu0 0
        %3168 = vmatpush1.bf16.msra.mxu0 %v3151
        %3169 = vmatprep.subr.bf16.mxu0 0
        %3170 = vmatpush2.bf16.msra.mxu0 0
        %3171 = vmatprep.subr.bf16.mxu0 0
        %3172 = vmatpush2.bf16.msra.mxu0 0
        %3173 = vmatprep.subr.bf16.mxu0 0
        %3174 = vmatpush2.bf16.msra.mxu0 0
        %3175 = vmatprep.subr.bf16.mxu0 0
        %3176 = vmatpush2.bf16.msra.mxu0 0
        %3177 = vmatprep.subr.bf16.mxu0 0
        %3178 = vmatpush2.bf16.msra.mxu0 0
        %3179 = vmatprep.subr.bf16.mxu0 0
        %3180 = vmatpush2.bf16.msra.mxu0 0
        %3181 = vmatprep.subr.bf16.mxu0 0
        %3182 = vmatpush2.bf16.msra.mxu0 0
        %3183 = vmatprep.subr.bf16.mxu0 0
        %3184 = vmatpush2.bf16.msra.mxu0 0
        %3185 = vmatprep.mubr.bf16.mxu0 0
        %3186 = vmatmul.mubr.bf16.gmra.mxu0 %v3148
        %v3187 = vpop.f32.mrf.mxu0
        %v3188 = vadd.f32 0.0, %v3187
        %v3189 = vpop.f32.mrf.mxu0
        %v3190 = vpop.f32.mrf.mxu0
        %v3191 = vadd.f32 0.0, %v3190
        %v3192 = vpop.f32.mrf.mxu0
        %3193 = vdwg.mxu0
        %v3195 = vsel %vm2544, %v3093, 0
        %v3198 = vsel %vm3102, %v3097, 0
        %3200 = vmatprep.subr.bf16.mxu0 0
        %3201 = vmatpush1.bf16.msra.mxu0 0
        %3202 = vmatprep.subr.bf16.mxu0 0
        %3203 = vmatpush1.bf16.msra.mxu0 0
        %3204 = vmatprep.subr.bf16.mxu0 0
        %3205 = vmatpush1.bf16.msra.mxu0 0
        %3206 = vmatprep.subr.bf16.mxu0 0
        %3207 = vmatpush1.bf16.msra.mxu0 0
        %3208 = vmatprep.subr.bf16.mxu0 0
        %3209 = vmatpush1.bf16.msra.mxu0 0
        %3210 = vmatprep.subr.bf16.mxu0 0
        %3211 = vmatpush1.bf16.msra.mxu0 0
        %3212 = vmatprep.subr.bf16.mxu0 0
        %3213 = vmatpush1.bf16.msra.mxu0 0
        %3214 = vmatprep.subr.bf16.mxu0 0
        %3215 = vmatpush1.bf16.msra.mxu0 %v3198
        %3216 = vmatprep.subr.bf16.mxu0 0
        %3217 = vmatpush2.bf16.msra.mxu0 0
        %3218 = vmatprep.subr.bf16.mxu0 0
        %3219 = vmatpush2.bf16.msra.mxu0 0
        %3220 = vmatprep.subr.bf16.mxu0 0
        %3221 = vmatpush2.bf16.msra.mxu0 0
        %3222 = vmatprep.subr.bf16.mxu0 0
        %3223 = vmatpush2.bf16.msra.mxu0 0
        %3224 = vmatprep.subr.bf16.mxu0 0
        %3225 = vmatpush2.bf16.msra.mxu0 0
        %3226 = vmatprep.subr.bf16.mxu0 0
        %3227 = vmatpush2.bf16.msra.mxu0 0
        %3228 = vmatprep.subr.bf16.mxu0 0
        %3229 = vmatpush2.bf16.msra.mxu0 0
        %3230 = vmatprep.subr.bf16.mxu0 0
        %3231 = vmatpush2.bf16.msra.mxu0 0
        %3232 = vmatprep.mubr.bf16.mxu0 0
        %3233 = vmatmul.mubr.bf16.gmra.mxu0 %v3195
        %v3234 = vpop.f32.mrf.mxu0
        %v3235 = vadd.f32 0.0, %v3234
        %v3236 = vpop.f32.mrf.mxu0
        %v3237 = vpop.f32.mrf.mxu0
        %v3238 = vadd.f32 0.0, %v3237
        %v3239 = vpop.f32.mrf.mxu0
        %3240 = vdwg.mxu0
        %v3242 = vsel %vm2544, %v3094, 0
        %v3245 = vsel %vm3102, %v3098, 0
        %3247 = vmatprep.subr.bf16.mxu0 0
        %3248 = vmatpush1.bf16.msra.mxu0 0
        %3249 = vmatprep.subr.bf16.mxu0 0
        %3250 = vmatpush1.bf16.msra.mxu0 0
        %3251 = vmatprep.subr.bf16.mxu0 0
        %3252 = vmatpush1.bf16.msra.mxu0 0
        %3253 = vmatprep.subr.bf16.mxu0 0
        %3254 = vmatpush1.bf16.msra.mxu0 0
        %3255 = vmatprep.subr.bf16.mxu0 0
        %3256 = vmatpush1.bf16.msra.mxu0 0
        %3257 = vmatprep.subr.bf16.mxu0 0
        %3258 = vmatpush1.bf16.msra.mxu0 0
        %3259 = vmatprep.subr.bf16.mxu0 0
        %3260 = vmatpush1.bf16.msra.mxu0 0
        %3261 = vmatprep.subr.bf16.mxu0 0
        %3262 = vmatpush1.bf16.msra.mxu0 %v3245
        %3263 = vmatprep.subr.bf16.mxu0 0
        %3264 = vmatpush2.bf16.msra.mxu0 0
        %3265 = vmatprep.subr.bf16.mxu0 0
        %3266 = vmatpush2.bf16.msra.mxu0 0
        %3267 = vmatprep.subr.bf16.mxu0 0
        %3268 = vmatpush2.bf16.msra.mxu0 0
        %3269 = vmatprep.subr.bf16.mxu0 0
        %3270 = vmatpush2.bf16.msra.mxu0 0
        %3271 = vmatprep.subr.bf16.mxu0 0
        %3272 = vmatpush2.bf16.msra.mxu0 0
        %3273 = vmatprep.subr.bf16.mxu0 0
        %3274 = vmatpush2.bf16.msra.mxu0 0
        %3275 = vmatprep.subr.bf16.mxu0 0
        %3276 = vmatpush2.bf16.msra.mxu0 0
        %3277 = vmatprep.subr.bf16.mxu0 0
        %3278 = vmatpush2.bf16.msra.mxu0 0
        %3279 = vmatprep.mubr.bf16.mxu0 0
        %3280 = vmatmul.mubr.bf16.gmra.mxu0 %v3242
        %v3281 = vpop.f32.mrf.mxu0
        %v3282 = vadd.f32 0.0, %v3281
        %v3283 = vpop.f32.mrf.mxu0
        %v3284 = vpop.f32.mrf.mxu0
        %v3285 = vadd.f32 0.0, %v3284
        %v3286 = vpop.f32.mrf.mxu0
        %3287 = vdwg.mxu0
        %v3288 = vsel %vm2179, %v3141, 0.0
        %v3289 = vsel %vm2179, %v3188, 0.0
        %v3290 = vadd.f32 %v3288, %v3289
        %v3291 = vsel %vm2179, %v3235, 0.0
        %v3292 = vadd.f32 %v3290, %v3291
        %v3293 = vsel %vm2179, %v3282, 0.0
        %v3294 = vadd.f32 %v3292, %v3293
        %v3295 = vsel %vm2179, %v3144, 0.0
        %v3296 = vsel %vm2179, %v3191, 0.0
        %v3297 = vadd.f32 %v3295, %v3296
        %v3298 = vsel %vm2179, %v3238, 0.0
        %v3299 = vadd.f32 %v3297, %v3298
        %v3300 = vsel %vm2179, %v3285, 0.0
        %v3301 = vadd.f32 %v3299, %v3300
        %v3302 = vld [vmem:[%s9] sm:$0x1]
        %v3304 = vlaneseq
        %v3305 = vshrl.u32 %v3304, 7
        %v3306 = vsub.s32 0, %v3305
        %v3307 = vrot.slane %v3302, %v3306
        %v3309 = vadd.f32 %v3294, %v3307
        %v3310 = vadd.f32 %v3301, %v3307
        %s3311 = scalar_lea.vmem %s614, %s704 [#allocation5]
        %v3312 = vld [vmem:[%s3311] sm:$0xff]
        %v3313 = vld [vmem:[%s3311 + $0x8] sm:$0xff]
        %v3314 = vadd.f32 %v3312, %v3309
        %v3315 = vadd.f32 %v3313, %v3310
        %v3316 = vld [vmem:[%s12] sm:$0x1]
        %v3317 = vld [vmem:[%s13] sm:$0x1]
        %v3318 = vsel %vm2179, %v3314, 0.0
        %3319 = vadd.xlane.f32.xlu0 %v3318
        %v3320 = vpop.xlane.xlu0 %3319
        %v3321 = vsel %vm2179, %v3315, 0.0
        %3322 = vadd.xlane.f32.xlu0 %v3321
        %v3323 = vpop.xlane.xlu0 %3322
        %v3324 = vrcp.pop 32.0
        %v3325 = vmul.f32 %v3320, %v3324
        %v3326 = vmul.f32 %v3323, %v3324
        %v3327 = vsub.f32 %v3314, %v3325
        %v3328 = vsub.f32 %v3315, %v3326
        %v3329 = vmul.f32 %v3327, %v3327
        %v3330 = vmul.f32 %v3328, %v3328
        %v3331 = vsel %vm2179, %v3329, 0.0
        %3332 = vadd.xlane.f32.xlu0 %v3331
        %v3333 = vpop.xlane.xlu0 %3332
        %v3334 = vsel %vm2179, %v3330, 0.0
        %3335 = vadd.xlane.f32.xlu0 %v3334
        %v3336 = vpop.xlane.xlu0 %3335
        %v3337 = vmul.f32 %v3333, %v3324
        %v3338 = vmul.f32 %v3336, %v3324
        %v3339 = vadd.f32 %v3337, 1e-06
        %v3340 = vadd.f32 %v3338, 1e-06
        %v3341 = vrsqrt.pop %v3339
        %v3342 = vrsqrt.pop %v3340
        %v3343 = vmul.f32 %v3327, %v3341
        %v3344 = vmul.f32 %v3328, %v3342
        %v3346 = vlaneseq
        %v3347 = vshrl.u32 %v3346, 7
        %v3348 = vsub.s32 0, %v3347
        %v3349 = vrot.slane %v3316, %v3348
        %v3351 = vmul.f32 %v3343, %v3349
        %v3352 = vmul.f32 %v3344, %v3349
        %v3354 = vlaneseq
        %v3355 = vshrl.u32 %v3354, 7
        %v3356 = vsub.s32 0, %v3355
        %v3357 = vrot.slane %v3317, %v3356
        %v3359 = vadd.f32 %v3351, %v3357
        %v3360 = vadd.f32 %v3352, %v3357
        %v3361 = vpack.c.bf16 %v3360, %v3359
        %v3362 = vld [vmem:[#allocation13] sm:$0xf]
        %v3363 = vld [vmem:[#allocation13 + $0x4] sm:$0xf]
        %v3364 = vld [vmem:[#allocation13 + $0x8] sm:$0xf]
        %v3365 = vld [vmem:[#allocation13 + $0xc] sm:$0xf]
        %v3366 = vld [vmem:[%s15] sm:$0x1]
        %v3368 = vlaneseq
        %v3369 = vshrl.u32 %v3368, 7
        %v3370 = vsub.s32 0, %v3369
        %v3371 = vrot.slane %v3366, %v3370
        %v3377 = vunpack.c.l.b16 %v3362
        %v3378 = vunpack.c.l.b16 %v3363
        %v3379 = vunpack.c.l.b16 %v3364
        %v3380 = vunpack.c.l.b16 %v3365
        %v3381 = vpack.c.b16 %v3378, %v3377
        %v3382 = vpack.c.b16 %v3380, %v3379
        %v3386 = vsel %vm2179, %v3361, 0
        %3388 = vmatprep.subr.bf16.mxu0 0
        %3389 = vmatpush1.bf16.msra.mxu0 0
        %3390 = vmatprep.subr.bf16.mxu0 0
        %3391 = vmatpush1.bf16.msra.mxu0 0
        %3392 = vmatprep.subr.bf16.mxu0 0
        %3393 = vmatpush1.bf16.msra.mxu0 0
        %3394 = vmatprep.subr.bf16.mxu0 0
        %3395 = vmatpush1.bf16.msra.mxu0 0
        %3396 = vmatprep.subr.bf16.mxu0 0
        %3397 = vmatpush1.bf16.msra.mxu0 0
        %3398 = vmatprep.subr.bf16.mxu0 0
        %3399 = vmatpush1.bf16.msra.mxu0 0
        %3400 = vmatprep.subr.bf16.mxu0 0
        %3401 = vmatpush1.bf16.msra.mxu0 %v3382
        %3402 = vmatprep.subr.bf16.mxu0 0
        %3403 = vmatpush1.bf16.msra.mxu0 %v3381
        %3404 = vmatprep.subr.bf16.mxu0 0
        %3405 = vmatpush2.bf16.msra.mxu0 0
        %3406 = vmatprep.subr.bf16.mxu0 0
        %3407 = vmatpush2.bf16.msra.mxu0 0
        %3408 = vmatprep.subr.bf16.mxu0 0
        %3409 = vmatpush2.bf16.msra.mxu0 0
        %3410 = vmatprep.subr.bf16.mxu0 0
        %3411 = vmatpush2.bf16.msra.mxu0 0
        %3412 = vmatprep.subr.bf16.mxu0 0
        %3413 = vmatpush2.bf16.msra.mxu0 0
        %3414 = vmatprep.subr.bf16.mxu0 0
        %3415 = vmatpush2.bf16.msra.mxu0 0
        %3416 = vmatprep.subr.bf16.mxu0 0
        %3417 = vmatpush2.bf16.msra.mxu0 0
        %3418 = vmatprep.subr.bf16.mxu0 0
        %3419 = vmatpush2.bf16.msra.mxu0 0
        %3420 = vmatprep.mubr.bf16.mxu0 0
        %3421 = vmatmul.mubr.bf16.gmra.mxu0 %v3386
        %v3422 = vpop.f32.mrf.mxu0
        %v3423 = vadd.f32 %v3371, %v3422
        %v3424 = vpop.f32.mrf.mxu0
        %v3425 = vpop.f32.mrf.mxu0
        %v3426 = vadd.f32 %v3371, %v3425
        %v3427 = vpop.f32.mrf.mxu0
        %3428 = vdwg.mxu0
        %v3429 = vmax.f32 %v3423, 0.0
        %v3430 = vmax.f32 %v3426, 0.0
        %v3431 = vpack.c.bf16 %v3430, %v3429
        %v3432 = vld [vmem:[%s16] sm:$0xf]
        %v3433 = vld [vmem:[%s16 + $0x4] sm:$0xf]
        %v3434 = vld [vmem:[%s16 + $0x8] sm:$0xf]
        %v3435 = vld [vmem:[%s16 + $0xc] sm:$0xf]
        %v3436 = vld [vmem:[%s16 + $0x10] sm:$0xf]
        %v3437 = vld [vmem:[%s16 + $0x14] sm:$0xf]
        %v3438 = vld [vmem:[%s16 + $0x18] sm:$0xf]
        %v3439 = vld [vmem:[%s16 + $0x1c] sm:$0xf]
        %v3440 = vld [vmem:[%s17] sm:$0x1]
        %v3442 = vlaneseq
        %v3443 = vshrl.u32 %v3442, 7
        %v3444 = vsub.s32 0, %v3443
        %v3445 = vrot.slane %v3440, %v3444
        %v3455 = vunpack.c.l.b16 %v3432
        %v3456 = vunpack.c.l.b16 %v3433
        %v3457 = vunpack.c.l.b16 %v3434
        %v3458 = vunpack.c.l.b16 %v3435
        %v3459 = vunpack.c.l.b16 %v3436
        %v3460 = vunpack.c.l.b16 %v3437
        %v3461 = vunpack.c.l.b16 %v3438
        %v3462 = vunpack.c.l.b16 %v3439
        %v3463 = vpack.c.b16 %v3456, %v3455
        %v3464 = vpack.c.b16 %v3458, %v3457
        %v3465 = vpack.c.b16 %v3460, %v3459
        %v3466 = vpack.c.b16 %v3462, %v3461
        %vm3471 = vcmask 523264
        %v3473 = vsel %vm3471, %v3431, 0
        %3475 = vmatprep.subr.bf16.mxu0 0
        %3476 = vmatpush1.bf16.msra.mxu0 0
        %3477 = vmatprep.subr.bf16.mxu0 0
        %3478 = vmatpush1.bf16.msra.mxu0 0
        %3479 = vmatprep.subr.bf16.mxu0 0
        %3480 = vmatpush1.bf16.msra.mxu0 0
        %3481 = vmatprep.subr.bf16.mxu0 0
        %3482 = vmatpush1.bf16.msra.mxu0 0
        %3483 = vmatprep.subr.bf16.mxu0 0
        %3484 = vmatpush1.bf16.msra.mxu0 %v3466
        %3485 = vmatprep.subr.bf16.mxu0 0
        %3486 = vmatpush1.bf16.msra.mxu0 %v3465
        %3487 = vmatprep.subr.bf16.mxu0 0
        %3488 = vmatpush1.bf16.msra.mxu0 %v3464
        %3489 = vmatprep.subr.bf16.mxu0 0
        %3490 = vmatpush1.bf16.msra.mxu0 %v3463
        %3491 = vmatprep.subr.bf16.mxu0 0
        %3492 = vmatpush2.bf16.msra.mxu0 0
        %3493 = vmatprep.subr.bf16.mxu0 0
        %3494 = vmatpush2.bf16.msra.mxu0 0
        %3495 = vmatprep.subr.bf16.mxu0 0
        %3496 = vmatpush2.bf16.msra.mxu0 0
        %3497 = vmatprep.subr.bf16.mxu0 0
        %3498 = vmatpush2.bf16.msra.mxu0 0
        %3499 = vmatprep.subr.bf16.mxu0 0
        %3500 = vmatpush2.bf16.msra.mxu0 0
        %3501 = vmatprep.subr.bf16.mxu0 0
        %3502 = vmatpush2.bf16.msra.mxu0 0
        %3503 = vmatprep.subr.bf16.mxu0 0
        %3504 = vmatpush2.bf16.msra.mxu0 0
        %3505 = vmatprep.subr.bf16.mxu0 0
        %3506 = vmatpush2.bf16.msra.mxu0 0
        %3507 = vmatprep.mubr.bf16.mxu0 0
        %3508 = vmatmul.mubr.bf16.gmra.mxu0 %v3473
        %v3509 = vpop.f32.mrf.mxu0
        %v3510 = vadd.f32 %v3445, %v3509
        %v3511 = vpop.f32.mrf.mxu0
        %v3512 = vpop.f32.mrf.mxu0
        %v3513 = vadd.f32 %v3445, %v3512
        %v3514 = vpop.f32.mrf.mxu0
        %3515 = vdwg.mxu0
        %v3516 = vadd.f32 %v3314, %v3510
        %v3517 = vadd.f32 %v3315, %v3513
        %3518 = vst.msk [vmem:[%s691] sm:$0xff] %vm2179, %v3516
        %3519 = vst.msk [vmem:[%s691 + $0x8] sm:$0xff] %vm2179, %v3517
        %s3520 = sand.u32 %s449, 1
        %s3521 = scalar_lea.sflag [#allocation7], %s3520
        %s3522 = sand.u32 %s449, 1
        %s3523 = smul.addr %s3522, 16
        %s3524 = scalar_lea.vmem [#allocation14], %s3523
        // Predicated region
        $region117: #{tpu_custom_call.1} parent=91 // pred_check
          %p3525 = pneg %p459
        $region118: #{tpu_custom_call.1} parent=91 // pred_check_branch
          %3527 = sbr.rel (%p3525) target = $region120
        $region119: #{tpu_custom_call.1} parent=91 // pred_region
          %s3528 = smul.u32 2, %s42
          %s3530 = ssub.s32 256, 256
          %3531 = vsyncadd %s3521, %s3530
          %s3532 = smul.addr %s41, 4
          %s3533 = sadd.s32 %s3528, %s3532
          %s3534 = smul.addr %s3533, 128
          %s3535 = scalar_lea.hbm %s18, %s3534
          %s3536 = sshll.u32 %s3524, 4
          %s3537 = int_to_ptr.vmem [resolvable:$true] %s3536
          %3542 = dma.vmem_to_hbm [thread:$0]  %s3537, 256, %s3535, %s3521, 128, 128, 8
        $region120: #{tpu_custom_call.1} parent=91 // pred_fallthru
          _
      $region92: #{tpu_custom_call.1} parent=5 // pred_fallthru
        _
      %p3543 = scmp.le.s32.totalorder 2, %s32
      // Predicated region
      $region121: #{tpu_custom_call.1} parent=5 // pred_check
        %p3544 = pneg %p3543
      $region122: #{tpu_custom_call.1} parent=5 // pred_check_branch
        %3546 = sbr.rel (%p3544) target = $region124
      $region123: #{tpu_custom_call.1} parent=5 // pred_region
        %s3547 = ssub.s32 %s32, 2
        // Predicated region
        $region125: #{tpu_custom_call.1} parent=123 // pred_check
          %p3548 = pneg %p465
        $region126: #{tpu_custom_call.1} parent=123 // pred_check_branch
          %3550 = sbr.rel (%p3548) target = $region128
        $region127: #{tpu_custom_call.1} parent=123 // pred_region
          %s3551 = sand.u32 %s450, 1
          %s3552 = scalar_lea.sflag [#allocation7], %s3551
          %s3553 = sand.u32 %s450, 1
          %s3554 = smul.addr %s3553, 16
          %s3555 = scalar_lea.vmem [#allocation14], %s3554
          %3556 = dma.done %s3552, 256
        $region128: #{tpu_custom_call.1} parent=123 // pred_fallthru
          _
      $region124: #{tpu_custom_call.1} parent=5 // pred_fallthru
        _
    $region6: #{tpu_custom_call.1} parent=1 // loop_footer
      %s36 = sadd.s32 1, %s32
    $region7: #{tpu_custom_call.1} parent=1 // loop_footer_branch
      %31 = sbr.rel target = $region3
    $region8: #{tpu_custom_call.1} parent=1 // loop_exit
      _
    %3557 = vsyncpa [#allocation6], 1
    %s3558 = scalar_lea.sflag [#allocation6], 1
    %3559 = vsyncpa %s3558, 1
    %3560 = vsyncpa [#allocation9], 1
    %3561 = vsyncpa [#allocation12], 1
    %3562 = vsyncpa [#allocation7], 1
    %s3563 = scalar_lea.sflag [#allocation7], 1
    %3564 = vsyncpa %s3563, 1

</llo_original>
